<compile_context>
chip_gen: v7x
topology: tpu7x:2x2x1
jax: 0.10.0
libtpu: 0.0.40
codegen_flags: <defaults>
</compile_context>

<pallas_src>
import functools

import jax
import jax.numpy as jnp
from jax.experimental import pallas as pl
from jax.experimental.pallas import tpu as pltpu

_W_TILE = 16                      # bf16 sublane tile: keeps (Ho, Wt, C) <-> (Ho*Wt, C) layout-preserving
_VMEM_LIMIT = 40 * 1024 * 1024    # <= 40 MiB: safe headroom on v7x (64 MiB VMEM) and on v5e/v6e
_KPACK = True                     # overwritten in __main__ by the lowering probe below


def _round_up(v, m):
    return (v + m - 1) // m * m


def _out_dim(d, k, s, p):
    return (d + 2 * p - k) // s + 1


# ---------------------------------------------------------------------------
# Pallas kernel factory: fused sparse-conv (K-packed taps) + BN affine
#                        + optional residual + ReLU + active-mask + empty-plane skip
# ---------------------------------------------------------------------------
def _make_conv_kernel(taps, kd, Ho, Wt, cin, has_res, kpack):
    """taps: static list of (dz, dy, dx, phase, row_off, col_off).

    Tap order matches the host-side weight reshape (kd, kh, kw, Cin, Cout) ->
    (kd*kh*kw*Cin, Cout), so the concatenated (M, T*Cin) operand lines up with it.
    """
    M = Ho * Wt

    def kernel(cnt_ref, *refs):
        x_refs = refs[:kd]                        # kd depth-plane views of the input
        w_ref = refs[kd]                          # (T*Cin, Cout) bf16, resident
        scale_ref = refs[kd + 1]                  # (1, Cout) f32  (BN gamma / sqrt(var+eps))
        shift_ref = refs[kd + 2]                  # (1, Cout) f32  (BN shift + conv_bias*scale)
        mask_ref = refs[kd + 3]                   # (1, 1, M, 1) bf16 active-output mask
        res_ref = refs[kd + 4] if has_res else None
        o_ref = refs[-1]                          # (1, 1, M, Cout) bf16

        b = pl.program_id(0)
        z = pl.program_id(1)
        active = cnt_ref[b * pl.num_programs(1) + z] > 0

        @pl.when(active)
        def _():
            pieces = []
            for (dz, dy, dx, ph, oy, ox) in taps:                 # static, fully unrolled
                xs = x_refs[dz][ph, 0, oy:oy + Ho, ox:ox + Wt, :]  # (Ho, Wt, Cin) bf16
                pieces.append(xs.reshape(M, cin))
            if kpack:
                # K-packed: one large-K MXU matmul instead of T tiny K=Cin dots.
                xs_cat = jnp.concatenate(pieces, axis=-1)          # (M, T*Cin)
                acc = jnp.dot(xs_cat, w_ref[...],
                              preferred_element_type=jnp.float32)
            else:
                # Fallback path (probe said unaligned lane-dim concat is unsupported).
                acc = None
                for t, xs in enumerate(pieces):
                    part = jnp.dot(xs, w_ref[t * cin:(t + 1) * cin, :],
                                   preferred_element_type=jnp.float32)
                    acc = part if acc is None else acc + part

            y = acc * scale_ref[...] + shift_ref[...]   # BN affine on the f32 accumulator
            if has_res:
                y = y + res_ref[0, 0].astype(jnp.float32)   # residual add (pre-ReLU)
            y = jnp.maximum(y, 0.0)                     # ReLU
            y = y * mask_ref[0, 0]                      # zero inactive output sites
            o_ref[...] = y.reshape(o_ref.shape).astype(o_ref.dtype)

        @pl.when(jnp.logical_not(active))
        def _():
            # No active output voxel in this (b, z) plane: skip all taps/matmuls.
            o_ref[...] = jnp.zeros(o_ref.shape, o_ref.dtype)

    return kernel


def _x_index_map(b, z, cnt, *, dz, sd):
    del cnt  # scalar-prefetch ref, unused by the index map
    return (b, sd * z + dz, 0, 0, 0)


# ---------------------------------------------------------------------------
# Operand construction: pad (and phase-decompose for stride-2 H/W) the dense
# activation so every kernel tap is a static in-kernel slice of one depth plane.
# The input may already carry zeroed W-tile pad columns from a previous layer.
# ---------------------------------------------------------------------------
def _build_conv_operand(x, ksize, stride, padding):
    kd, kh, kw = ksize
    sd, sh, sw = stride
    pd, ph, pw = padding
    B, D, H, W, C = x.shape
    Do = (D + 2 * pd - kd) // sd + 1
    Ho = (H + 2 * ph - kh) // sh + 1
    Wo = (W + 2 * pw - kw) // sw + 1
    Wt = _round_up(Wo, _W_TILE)

    if sh == 1 and sw == 1:
        # stride-1 in H/W (SubMConv3d layers and conv_out).
        xop = jnp.pad(x, ((0, 0), (pd, pd), (ph, ph),
                          (pw, pw + (Wt - Wo)), (0, 0)))
        n_ph = 1
        Hq, Wq = H + 2 * ph, (kw - 1) + Wt
        taps = [(dz, dy, dx, 0, dy, dx)
                for dz in range(kd) for dy in range(kh) for dx in range(kw)]
    else:
        # stride-2 in H/W (SparseConv3d downsample): 4 even/odd phases make every tap
        # a stride-1 (phase, row_off, col_off) slice.
        assert (sh, sw) == (2, 2) and (kh, kw) == (3, 3) and (ph, pw) == (1, 1)
        xpad = jnp.pad(x, ((0, 0), (pd, pd), (ph, ph), (pw, pw), (0, 0)))
        n_ph = 4
        Hq, Wq = Ho + 1, Wt + 1
        phases = []
        for py in (0, 1):
            for px in (0, 1):
                p = xpad[:, :, py::2, px::2, :]
                p = jnp.pad(p, ((0, 0), (0, 0),
                                (0, Hq - p.shape[2]),
                                (0, Wq - p.shape[3]), (0, 0)))
                phases.append(p)
        xop = jnp.stack(phases, axis=1).reshape(B * 4, D + 2 * pd, Hq, Wq, C)
        taps = [(dz, dy, dx, 2 * (dy % 2) + (dx % 2), dy // 2, dx // 2)
                for dz in range(kd) for dy in range(kh) for dx in range(kw)]

    return xop, taps, n_ph, (Do, Ho, Wo, Wt), (Hq, Wq)


# ---------------------------------------------------------------------------
# Fused sparse conv + BN(eval affine) + [residual] + ReLU + active-mask
# ---------------------------------------------------------------------------
def _sparse_conv_bn_relu(x, out_mask, p, ksize, stride, padding, residual=None):
    """Returns the activation in the W-padded carry layout (B, Do, Ho, Wt, Cout);
    pad columns are zero via the active mask, so they can be fed to the next layer
    unchanged and only the final outputs need a slice."""
    kd, kh, kw = ksize
    x = x.astype(jnp.bfloat16)
    B = x.shape[0]
    cin = x.shape[-1]
    cout = p['w'].shape[-1]
    xop, taps, n_ph, (Do, Ho, Wo, Wt), (Hq, Wq) = _build_conv_operand(
        x, ksize, stride, padding)
    sd = stride[0]
    M = Ho * Wt
    T = kd * kh * kw

    # Host-side parameter prep: K-packed weight, f32 scale/shift (conv bias folded).
    w2 = p['w'].reshape(T * cin, cout).astype(jnp.bfloat16)
    scale = p['scale'].reshape(1, cout).astype(jnp.float32)
    shift = p['shift'] if p['bias'] is None else p['shift'] + p['bias'] * p['scale']
    shift = shift.reshape(1, cout).astype(jnp.float32)

    # Active-output mask (bf16), W-padded to Wt, flattened onto the kernel's M axis;
    # per-(b, z) active counts for the scalar-prefetch empty-plane skip.
    wm = out_mask.shape[3]
    mpad = jnp.pad(out_mask, ((0, 0), (0, 0), (0, 0), (0, Wt - wm)))
    mask_op = mpad.reshape(B, Do, M, 1).astype(jnp.bfloat16)
    counts = (out_mask.reshape(B, Do, -1).sum(axis=-1) > 0).astype(jnp.int32).reshape(-1)

    has_res = residual is not None
    kernel = _make_conv_kernel(taps, kd, Ho, Wt, cin, has_res, _KPACK)

    in_specs = [pl.BlockSpec((n_ph, 1, Hq, Wq, cin),
                             functools.partial(_x_index_map, dz=i, sd=sd))
                for i in range(kd)]
    in_specs += [
        pl.BlockSpec((T * cin, cout), lambda b, z, cnt: (0, 0)),   # resident weights
        pl.BlockSpec((1, cout), lambda b, z, cnt: (0, 0)),
        pl.BlockSpec((1, cout), lambda b, z, cnt: (0, 0)),
        pl.BlockSpec((1, 1, M, 1), lambda b, z, cnt: (b, z, 0, 0)),
    ]
    args = [xop] * kd + [w2, scale, shift, mask_op]
    if has_res:
        args.append(residual.astype(jnp.bfloat16).reshape(B, Do, M, cout))
        in_specs.append(pl.BlockSpec((1, 1, M, cout), lambda b, z, cnt: (b, z, 0, 0)))

    out = pl.pallas_call(
        kernel,
        out_shape=jax.ShapeDtypeStruct((B, Do, M, cout), jnp.bfloat16),
        grid_spec=pltpu.PrefetchScalarGridSpec(
            num_scalar_prefetch=1,
            grid=(B, Do),
            in_specs=in_specs,
            out_specs=pl.BlockSpec((1, 1, M, cout), lambda b, z, cnt: (b, z, 0, 0)),
        ),
        compiler_params=pltpu.CompilerParams(
            dimension_semantics=("parallel", "parallel"),
            vmem_limit_bytes=_VMEM_LIMIT),
    )(counts, *args)

    # Keep the W-tile pad (zeroed by the mask); reshape is free (row-major view).
    return out.reshape(B, Do, Ho, Wt, cout)


def _downsample_mask(mask, ksize, stride, padding):
    """SparseConv3d output site is active iff any input in its receptive field is active."""
    kd, kh, kw = ksize
    sd, sh, sw = stride
    pd, ph, pw = padding
    return jax.lax.reduce_window(
        mask, 0.0, jax.lax.max,
        window_dimensions=(1, kd, kh, kw),
        window_strides=(1, sd, sh, sw),
        padding=((0, 0), (pd, pd), (ph, ph), (pw, pw)))


def _sparse_basic_block(x, mask, p):
    # conv1 -> bn1 -> relu ; conv2 -> bn2 -> (+identity) -> relu ; SubM keeps the active set.
    out = _sparse_conv_bn_relu(x, mask, p['c1'], (3, 3, 3), (1, 1, 1), (1, 1, 1))
    out = _sparse_conv_bn_relu(out, mask, p['c2'], (3, 3, 3), (1, 1, 1), (1, 1, 1),
                               residual=x)
    return out


# ---------------------------------------------------------------------------
# Parameter initialization (deterministic, synthetic)
# ---------------------------------------------------------------------------
def _conv_bn_params(key, cin, cout, ksize, bias):
    k1, k2, k3, k4 = jax.random.split(key, 4)
    kd, kh, kw = ksize
    w = 0.05 * jax.random.normal(k1, (kd, kh, kw, cin, cout), jnp.float32)
    gamma = 1.0 + 0.1 * jax.random.normal(k2, (cout,), jnp.float32)
    beta = 0.1 * jax.random.normal(k3, (cout,), jnp.float32)
    eps = 1e-3  # nn.BatchNorm1d(eps=0.001); eval mode: running_mean=0, running_var=1
    scale = gamma / jnp.sqrt(1.0 + eps)
    shift = beta
    b = 0.05 * jax.random.normal(k4, (cout,), jnp.float32) if bias else None
    return {'w': w, 'scale': scale, 'shift': shift, 'bias': b}


def _basic_block_params(key, c):
    k1, k2 = jax.random.split(key)
    return {'c1': _conv_bn_params(k1, c, c, (3, 3, 3), True),
            'c2': _conv_bn_params(k2, c, c, (3, 3, 3), True)}


def init_params(key, input_channels):
    ks = jax.random.split(key, 16)
    return {
        'conv_input': _conv_bn_params(ks[0], input_channels, 16, (3, 3, 3), False),
        'conv1': [_basic_block_params(ks[1], 16), _basic_block_params(ks[2], 16)],
        'conv2_down': _conv_bn_params(ks[3], 16, 32, (3, 3, 3), False),
        'conv2': [_basic_block_params(ks[4], 32), _basic_block_params(ks[5], 32)],
        'conv3_down': _conv_bn_params(ks[6], 32, 64, (3, 3, 3), False),
        'conv3': [_basic_block_params(ks[7], 64), _basic_block_params(ks[8], 64)],
        'conv4_down': _conv_bn_params(ks[9], 64, 128, (3, 3, 3), False),
        'conv4': [_basic_block_params(ks[10], 128), _basic_block_params(ks[11], 128)],
        'conv_out': _conv_bn_params(ks[12], 128, 128, (3, 1, 1), False),
    }


# ---------------------------------------------------------------------------
# Forward pass of VoxelResBackBone8x
# ---------------------------------------------------------------------------
def voxel_res_backbone_8x(params, voxel_features, voxel_coords, batch_size,
                          sparse_shape):
    D, H, W = sparse_shape
    C = voxel_features.shape[1]
    dense = jnp.zeros((batch_size, D, H, W, C), jnp.float32)
    mask = jnp.zeros((batch_size, D, H, W), jnp.float32)
    b, z, y, xx = (voxel_coords[:, 0], voxel_coords[:, 1],
                   voxel_coords[:, 2], voxel_coords[:, 3])
    dense = dense.at[b, z, y, xx].set(voxel_features)
    mask = mask.at[b, z, y, xx].set(1.0)
    x = dense.astype(jnp.bfloat16)

    # conv_input: SubMConv3d(C, 16, 3, padding=1) + BN + ReLU
    x = _sparse_conv_bn_relu(x, mask, params['conv_input'],
                             (3, 3, 3), (1, 1, 1), (1, 1, 1))

    # conv1: two SparseBasicBlock(16)
    for bp in params['conv1']:
        x = _sparse_basic_block(x, mask, bp)
    x_conv1, mask1 = x, mask

    def down_stage(xin, min_, pdown, blocks, padding):
        mnew = _downsample_mask(min_, (3, 3, 3), (2, 2, 2), padding)
        xo = _sparse_conv_bn_relu(xin, mnew, pdown, (3, 3, 3), (2, 2, 2), padding)
        for bp in blocks:
            xo = _sparse_basic_block(xo, mnew, bp)
        return xo, mnew

    x_conv2, mask2 = down_stage(x_conv1, mask1, params['conv2_down'],
                                params['conv2'], (1, 1, 1))
    x_conv3, mask3 = down_stage(x_conv2, mask2, params['conv3_down'],
                                params['conv3'], (1, 1, 1))
    x_conv4, mask4 = down_stage(x_conv3, mask3, params['conv4_down'],
                                params['conv4'], (0, 1, 1))

    # conv_out: SparseConv3d(128, 128, (3,1,1), stride=(2,1,1), padding=0) + BN + ReLU
    mask_out = _downsample_mask(mask4, (3, 1, 1), (2, 1, 1), (0, 0, 0))
    out = _sparse_conv_bn_relu(x_conv4, mask_out, params['conv_out'],
                               (3, 1, 1), (2, 1, 1), (0, 0, 0))

    # true (unpadded) W per stage — only the returned views strip the W-tile pad.
    W1 = W
    W2 = _out_dim(W1, 3, 2, 1)
    W3 = _out_dim(W2, 3, 2, 1)
    W4 = _out_dim(W3, 3, 2, 1)

    return {
        'encoded_spconv_tensor': out[..., :W4, :],
        'encoded_spconv_tensor_stride': 8,
        'multi_scale_3d_features': {
            'x_conv1': x_conv1[..., :W1, :],
            'x_conv2': x_conv2[..., :W2, :],
            'x_conv3': x_conv3[..., :W3, :],
            'x_conv4': x_conv4[..., :W4, :],
        },
        'active_masks': {'m1': mask1, 'm2': mask2, 'm3': mask3, 'm4': mask4,
                         'm_out': mask_out},
    }


# ---------------------------------------------------------------------------
# Startup probe + pure-JAX reference for the fused conv (numerical validation)
# ---------------------------------------------------------------------------
def _probe_kpack_support():
    """Verify that an unaligned minor-dim concatenate feeding an MXU dot lowers and
    runs on this jax/libtpu build; otherwise fall back to per-tap accumulation."""
    def k(a_ref, w_ref, o_ref):
        xs = jnp.concatenate([a_ref[...]] * 27, axis=-1)   # (16, 108): 27 x 4-lane pieces
        o_ref[...] = jnp.dot(xs, w_ref[...], preferred_element_type=jnp.float32)
    try:
        a = jnp.ones((16, 4), jnp.bfloat16)
        w = jnp.ones((108, 16), jnp.bfloat16)
        out = pl.pallas_call(
            k, out_shape=jax.ShapeDtypeStruct((16, 16), jnp.float32))(a, w)
        jax.block_until_ready(out)
        return bool(jnp.isfinite(out).all())
    except Exception:   # any lowering/compile failure -> use the proven fallback path
        return False


def _dense_conv_ref(x, p, out_mask, stride, padding, residual=None):
    """f32 reference: dense conv + bias + BN affine + residual + ReLU + mask."""
    dn = jax.lax.conv_dimension_numbers(x.shape, p['w'].shape,
                                        ('NDHWC', 'DHWIO', 'NDHWC'))
    pad = [(q, q) for q in padding]
    y = jax.lax.conv_general_dilated(x.astype(jnp.float32), p['w'], stride, pad,
                                     dimension_numbers=dn)
    if p['bias'] is not None:
        y = y + p['bias']
    y = y * p['scale'] + p['shift']
    if residual is not None:
        y = y + residual.astype(jnp.float32)
    return jnp.maximum(y, 0.0) * out_mask[..., None]


# ---------------------------------------------------------------------------
if __name__ == "__main__":
    _KPACK = _probe_kpack_support()

    # --- numerical self-check of the fused conv kernel vs lax.conv_general_dilated ---
    ck = jax.random.split(jax.random.PRNGKey(1), 4)
    B0, D0, H0, W0, Ci, Co = 2, 6, 8, 16, 16, 32
    xm = jax.random.normal(ck[0], (B0, D0, H0, W0, Ci), jnp.float32)
    m0 = (jax.random.uniform(ck[1], (B0, D0, H0, W0)) < 0.5).astype(jnp.float32)
    m0 = m0.at[:, 1].set(0.0)                 # a fully-empty plane exercises the skip path
    xm = xm * m0[..., None]
    p0 = _conv_bn_params(ck[2], Ci, Co, (3, 3, 3), True)
    r0 = 0.5 * jax.random.normal(ck[3], (B0, D0, H0, W0, Co), jnp.float32) * m0[..., None]

    got = _sparse_conv_bn_relu(xm, m0, p0, (3, 3, 3), (1, 1, 1), (1, 1, 1), residual=r0)
    want = _dense_conv_ref(xm, p0, m0, (1, 1, 1), (1, 1, 1), residual=r0)
    err = float(jnp.max(jnp.abs(got[..., :W0, :].astype(jnp.float32) - want)))
    tol = 0.03 + 0.02 * float(jnp.max(jnp.abs(want)))
    assert err < tol, f"subm conv mismatch: {err} >= {tol}"

    m1 = _downsample_mask(m0, (3, 3, 3), (2, 2, 2), (1, 1, 1))
    got2 = _sparse_conv_bn_relu(xm, m1, p0, (3, 3, 3), (2, 2, 2), (1, 1, 1))
    want2 = _dense_conv_ref(xm, p0, m1, (2, 2, 2), (1, 1, 1))
    W1t = _out_dim(W0, 3, 2, 1)
    err2 = float(jnp.max(jnp.abs(got2[..., :W1t, :].astype(jnp.float32) - want2)))
    tol2 = 0.03 + 0.02 * float(jnp.max(jnp.abs(want2)))
    assert err2 < tol2, f"spconv downsample mismatch: {err2} >= {tol2}"

    # --- full backbone forward at small shapes ---
    key = jax.random.PRNGKey(0)
    grid_size = [16, 16, 24]                      # (X, Y, Z) voxel grid
    sparse_shape = (grid_size[2] + 1, grid_size[1], grid_size[0])   # (25, 16, 16)
    batch_size = 2
    input_channels = 4
    n_vox_per_batch = 64

    kp, kf, kc1, kc2 = jax.random.split(key, 4)
    params = init_params(kp, input_channels)

    # deterministic, non-colliding active voxel coordinates per batch element
    coords = []
    for bi, kc in enumerate([kc1, kc2]):
        lin = jax.random.choice(kc, grid_size[2] * grid_size[1] * grid_size[0],
                                (n_vox_per_batch,), replace=False)
        zc = lin // (grid_size[1] * grid_size[0])
        yc = (lin // grid_size[0]) % grid_size[1]
        xc = lin % grid_size[0]
        bcol = jnp.full_like(zc, bi)
        coords.append(jnp.stack([bcol, zc, yc, xc], axis=1))
    voxel_coords = jnp.concatenate(coords, axis=0).astype(jnp.int32)
    voxel_features = jax.random.normal(
        kf, (voxel_coords.shape[0], input_channels), jnp.float32)

    fwd = jax.jit(functools.partial(voxel_res_backbone_8x,
                                    batch_size=batch_size,
                                    sparse_shape=sparse_shape))
    out = fwd(params, voxel_features, voxel_coords)
    jax.block_until_ready(out)

    enc = out['encoded_spconv_tensor']
    assert enc.shape == (batch_size, 1, 2, 2, 128), enc.shape
    assert out['multi_scale_3d_features']['x_conv4'].shape == (batch_size, 3, 2, 2, 128)
    assert bool(jnp.isfinite(enc.astype(jnp.float32)).all())
    print("KERNEL_OK")
</pallas_src>

<mosaic_0001>
module attributes {stable_mosaic.version = 11 : i64} {
  func.func @k(%arg0: memref<16x4xbf16, #tpu.memory_space<vmem>>, %arg1: memref<108x16xbf16, #tpu.memory_space<vmem>>, %arg2: memref<16x16xf32, #tpu.memory_space<vmem>>) attributes {dimension_semantics = [], scalar_prefetch = 0 : i64, scratch_operands = 0 : i64, tpu.core_type = #tpu.core_type<tc>} {
    %c0 = arith.constant 0 : index
    %c0_0 = arith.constant 0 : index
    %0 = vector.load %arg0[%c0, %c0_0] : memref<16x4xbf16, #tpu.memory_space<vmem>>, vector<16x4xbf16>
    %1 = tpu.concatenate %0, %0, %0, %0, %0, %0, %0, %0, %0, %0, %0, %0, %0, %0, %0, %0 in 1 : vector<16x4xbf16>, vector<16x4xbf16>, vector<16x4xbf16>, vector<16x4xbf16>, vector<16x4xbf16>, vector<16x4xbf16>, vector<16x4xbf16>, vector<16x4xbf16>, vector<16x4xbf16>, vector<16x4xbf16>, vector<16x4xbf16>, vector<16x4xbf16>, vector<16x4xbf16>, vector<16x4xbf16>, vector<16x4xbf16>, vector<16x4xbf16> -> vector<16x64xbf16>
    %2 = tpu.concatenate %0, %0, %0, %0, %0, %0, %0, %0, %0, %0, %0 in 1 : vector<16x4xbf16>, vector<16x4xbf16>, vector<16x4xbf16>, vector<16x4xbf16>, vector<16x4xbf16>, vector<16x4xbf16>, vector<16x4xbf16>, vector<16x4xbf16>, vector<16x4xbf16>, vector<16x4xbf16>, vector<16x4xbf16> -> vector<16x44xbf16>
    %3 = tpu.concatenate %1, %2 in 1 : vector<16x64xbf16>, vector<16x44xbf16> -> vector<16x108xbf16>
    %c0_1 = arith.constant 0 : index
    %c0_2 = arith.constant 0 : index
    %4 = vector.load %arg1[%c0_1, %c0_2] : memref<108x16xbf16, #tpu.memory_space<vmem>>, vector<108x16xbf16>
    %cst = arith.constant dense<0.000000e+00> : vector<16x16xf32>
    %5 = tpu.matmul %3, %4, %cst {dimension_numbers = #tpu.dot_dimension_numbers<[1], [0], [0], [1], [0, 0, 1, 1], [], []>} : vector<16x108xbf16>, vector<108x16xbf16>, vector<16x16xf32> -> vector<16x16xf32>
    %c0_3 = arith.constant 0 : index
    %c0_4 = arith.constant 0 : index
    %6 = vector.load %arg2[%c0_3, %c0_4] : memref<16x16xf32, #tpu.memory_space<vmem>>, vector<16x16xf32>
    tpu.vector_store %arg2[%c0_3, %c0_4], %5 {strides = array<i32>} : memref<16x16xf32, #tpu.memory_space<vmem>>, vector<16x16xf32>,
    return
  }
}

module attributes {stable_mosaic.version = 11 : i64} {
  func.func @kernel(%arg0: i32, %arg1: i32, %arg2: memref<12xi32, #tpu.memory_space<smem>>, %arg3: memref<1x1x10x18x16xbf16, #tpu.memory_space<vmem>>, %arg4: memref<1x1x10x18x16xbf16, #tpu.memory_space<vmem>>, %arg5: memref<1x1x10x18x16xbf16, #tpu.memory_space<vmem>>, %arg6: memref<432x32xbf16, #tpu.memory_space<vmem>>, %arg7: memref<1x32xf32, #tpu.memory_space<vmem>>, %arg8: memref<1x32xf32, #tpu.memory_space<vmem>>, %arg9: memref<1x1x128x1xbf16, #tpu.memory_space<vmem>>, %arg10: memref<1x1x128x32xbf16, #tpu.memory_space<vmem>>, %arg11: memref<1x1x128x32xbf16, #tpu.memory_space<vmem>>) attributes {dimension_semantics = [#tpu.dimension_semantics<parallel>, #tpu.dimension_semantics<parallel>], iteration_bounds = array<i64: 2, 6>, scalar_prefetch = 1 : i64, scratch_operands = 0 : i64, tpu.core_type = #tpu.core_type<tc>, window_params = [{transform_indices = @transform_0, window_bounds = array<i64: 1, 1, 10, 18, 16>}, {transform_indices = @transform_1, window_bounds = array<i64: 1, 1, 10, 18, 16>}, {transform_indices = @transform_2, window_bounds = array<i64: 1, 1, 10, 18, 16>}, {pipeline_mode = #tpu.pipeline_mode<synchronous>, transform_indices = @transform_3, window_bounds = array<i64: 432, 32>}, {pipeline_mode = #tpu.pipeline_mode<synchronous>, transform_indices = @transform_4, window_bounds = array<i64: 1, 32>}, {pipeline_mode = #tpu.pipeline_mode<synchronous>, transform_indices = @transform_5, window_bounds = array<i64: 1, 32>}, {transform_indices = @transform_6, window_bounds = array<i64: 1, 1, 128, 1>}, {transform_indices = @transform_7, window_bounds = array<i64: 1, 1, 128, 32>}, {transform_indices = @transform_8, window_bounds = array<i64: 1, 1, 128, 32>}]} {
    %c6_i32 = arith.constant 6 : i32
    %0 = arith.muli %arg0, %c6_i32 : i32
    %1 = arith.addi %0, %arg1 : i32
    %2 = arith.index_cast %1 : i32 to index
    %3 = memref.load %arg2[%2] : memref<12xi32, #tpu.memory_space<smem>>
    %c0_i32 = arith.constant 0 : i32
    %4 = arith.cmpi sgt, %3, %c0_i32 : i32
    %5 = arith.extui %4 : i1 to i32
    %c0_i32_0 = arith.constant 0 : i32
    %6 = arith.cmpi ne, %5, %c0_i32_0 : i32
    scf.if %6 {
      %c0 = arith.constant 0 : index
      %c0_2 = arith.constant 0 : index
      %c0_3 = arith.constant 0 : index
      %c0_4 = arith.constant 0 : index
      %c0_5 = arith.constant 0 : index
      %10 = vector.load %arg3[%c0, %c0_2, %c0_3, %c0_4, %c0_5] : memref<1x1x10x18x16xbf16, #tpu.memory_space<vmem>>, vector<1x1x8x16x16xbf16>
      %11 = vector.shape_cast %10 : vector<1x1x8x16x16xbf16> to vector<8x16x16xbf16>
      %12 = vector.shape_cast %11 : vector<8x16x16xbf16> to vector<128x16xbf16>
      %c0_6 = arith.constant 0 : index
      %c0_7 = arith.constant 0 : index
      %c0_8 = arith.constant 0 : index
      %c1 = arith.constant 1 : index
      %c0_9 = arith.constant 0 : index
      %13 = vector.load %arg3[%c0_6, %c0_7, %c0_8, %c1, %c0_9] : memref<1x1x10x18x16xbf16, #tpu.memory_space<vmem>>, vector<1x1x8x16x16xbf16>
      %14 = vector.shape_cast %13 : vector<1x1x8x16x16xbf16> to vector<8x16x16xbf16>
      %15 = vector.shape_cast %14 : vector<8x16x16xbf16> to vector<128x16xbf16>
      %c0_10 = arith.constant 0 : index
      %c0_11 = arith.constant 0 : index
      %c0_12 = arith.constant 0 : index
      %c2 = arith.constant 2 : index
      %c0_13 = arith.constant 0 : index
      %16 = vector.load %arg3[%c0_10, %c0_11, %c0_12, %c2, %c0_13] : memref<1x1x10x18x16xbf16, #tpu.memory_space<vmem>>, vector<1x1x8x16x16xbf16>
      %17 = vector.shape_cast %16 : vector<1x1x8x16x16xbf16> to vector<8x16x16xbf16>
      %18 = vector.shape_cast %17 : vector<8x16x16xbf16> to vector<128x16xbf16>
      %c0_14 = arith.constant 0 : index
      %c0_15 = arith.constant 0 : index
      %c1_16 = arith.constant 1 : index
      %c0_17 = arith.constant 0 : index
      %c0_18 = arith.constant 0 : index
      %19 = vector.load %arg3[%c0_14, %c0_15, %c1_16, %c0_17, %c0_18] : memref<1x1x10x18x16xbf16, #tpu.memory_space<vmem>>, vector<1x1x8x16x16xbf16>
      %20 = vector.shape_cast %19 : vector<1x1x8x16x16xbf16> to vector<8x16x16xbf16>
      %21 = vector.shape_cast %20 : vector<8x16x16xbf16> to vector<128x16xbf16>
      %c0_19 = arith.constant 0 : index
      %c0_20 = arith.constant 0 : index
      %c1_21 = arith.constant 1 : index
      %c1_22 = arith.constant 1 : index
      %c0_23 = arith.constant 0 : index
      %22 = vector.load %arg3[%c0_19, %c0_20, %c1_21, %c1_22, %c0_23] : memref<1x1x10x18x16xbf16, #tpu.memory_space<vmem>>, vector<1x1x8x16x16xbf16>
      %23 = vector.shape_cast %22 : vector<1x1x8x16x16xbf16> to vector<8x16x16xbf16>
      %24 = vector.shape_cast %23 : vector<8x16x16xbf16> to vector<128x16xbf16>
      %c0_24 = arith.constant 0 : index
      %c0_25 = arith.constant 0 : index
      %c1_26 = arith.constant 1 : index
      %c2_27 = arith.constant 2 : index
      %c0_28 = arith.constant 0 : index
      %25 = vector.load %arg3[%c0_24, %c0_25, %c1_26, %c2_27, %c0_28] : memref<1x1x10x18x16xbf16, #tpu.memory_space<vmem>>, vector<1x1x8x16x16xbf16>
      %26 = vector.shape_cast %25 : vector<1x1x8x16x16xbf16> to vector<8x16x16xbf16>
      %27 = vector.shape_cast %26 : vector<8x16x16xbf16> to vector<128x16xbf16>
      %c0_29 = arith.constant 0 : index
      %c0_30 = arith.constant 0 : index
      %c2_31 = arith.constant 2 : index
      %c0_32 = arith.constant 0 : index
      %c0_33 = arith.constant 0 : index
      %28 = vector.load %arg3[%c0_29, %c0_30, %c2_31, %c0_32, %c0_33] : memref<1x1x10x18x16xbf16, #tpu.memory_space<vmem>>, vector<1x1x8x16x16xbf16>
      %29 = vector.shape_cast %28 : vector<1x1x8x16x16xbf16> to vector<8x16x16xbf16>
      %30 = vector.shape_cast %29 : vector<8x16x16xbf16> to vector<128x16xbf16>
      %c0_34 = arith.constant 0 : index
      %c0_35 = arith.constant 0 : index
      %c2_36 = arith.constant 2 : index
      %c1_37 = arith.constant 1 : index
      %c0_38 = arith.constant 0 : index
      %31 = vector.load %arg3[%c0_34, %c0_35, %c2_36, %c1_37, %c0_38] : memref<1x1x10x18x16xbf16, #tpu.memory_space<vmem>>, vector<1x1x8x16x16xbf16>
      %32 = vector.shape_cast %31 : vector<1x1x8x16x16xbf16> to vector<8x16x16xbf16>
      %33 = vector.shape_cast %32 : vector<8x16x16xbf16> to vector<128x16xbf16>
      %c0_39 = arith.constant 0 : index
      %c0_40 = arith.constant 0 : index
      %c2_41 = arith.constant 2 : index
      %c2_42 = arith.constant 2 : index
      %c0_43 = arith.constant 0 : index
      %34 = vector.load %arg3[%c0_39, %c0_40, %c2_41, %c2_42, %c0_43] : memref<1x1x10x18x16xbf16, #tpu.memory_space<vmem>>, vector<1x1x8x16x16xbf16>
      %35 = vector.shape_cast %34 : vector<1x1x8x16x16xbf16> to vector<8x16x16xbf16>
      %36 = vector.shape_cast %35 : vector<8x16x16xbf16> to vector<128x16xbf16>
      %c0_44 = arith.constant 0 : index
      %c0_45 = arith.constant 0 : index
      %c0_46 = arith.constant 0 : index
      %c0_47 = arith.constant 0 : index
      %c0_48 = arith.constant 0 : index
      %37 = vector.load %arg4[%c0_44, %c0_45, %c0_46, %c0_47, %c0_48] : memref<1x1x10x18x16xbf16, #tpu.memory_space<vmem>>, vector<1x1x8x16x16xbf16>
      %38 = vector.shape_cast %37 : vector<1x1x8x16x16xbf16> to vector<8x16x16xbf16>
      %39 = vector.shape_cast %38 : vector<8x16x16xbf16> to vector<128x16xbf16>
      %c0_49 = arith.constant 0 : index
      %c0_50 = arith.constant 0 : index
      %c0_51 = arith.constant 0 : index
      %c1_52 = arith.constant 1 : index
      %c0_53 = arith.constant 0 : index
      %40 = vector.load %arg4[%c0_49, %c0_50, %c0_51, %c1_52, %c0_53] : memref<1x1x10x18x16xbf16, #tpu.memory_space<vmem>>, vector<1x1x8x16x16xbf16>
      %41 = vector.shape_cast %40 : vector<1x1x8x16x16xbf16> to vector<8x16x16xbf16>
      %42 = vector.shape_cast %41 : vector<8x16x16xbf16> to vector<128x16xbf16>
      %c0_54 = arith.constant 0 : index
      %c0_55 = arith.constant 0 : index
      %c0_56 = arith.constant 0 : index
      %c2_57 = arith.constant 2 : index
      %c0_58 = arith.constant 0 : index
      %43 = vector.load %arg4[%c0_54, %c0_55, %c0_56, %c2_57, %c0_58] : memref<1x1x10x18x16xbf16, #tpu.memory_space<vmem>>, vector<1x1x8x16x16xbf16>
      %44 = vector.shape_cast %43 : vector<1x1x8x16x16xbf16> to vector<8x16x16xbf16>
      %45 = vector.shape_cast %44 : vector<8x16x16xbf16> to vector<128x16xbf16>
      %c0_59 = arith.constant 0 : index
      %c0_60 = arith.constant 0 : index
      %c1_61 = arith.constant 1 : index
      %c0_62 = arith.constant 0 : index
      %c0_63 = arith.constant 0 : index
      %46 = vector.load %arg4[%c0_59, %c0_60, %c1_61, %c0_62, %c0_63] : memref<1x1x10x18x16xbf16, #tpu.memory_space<vmem>>, vector<1x1x8x16x16xbf16>
      %47 = vector.shape_cast %46 : vector<1x1x8x16x16xbf16> to vector<8x16x16xbf16>
      %48 = vector.shape_cast %47 : vector<8x16x16xbf16> to vector<128x16xbf16>
      %c0_64 = arith.constant 0 : index
      %c0_65 = arith.constant 0 : index
      %c1_66 = arith.constant 1 : index
      %c1_67 = arith.constant 1 : index
      %c0_68 = arith.constant 0 : index
      %49 = vector.load %arg4[%c0_64, %c0_65, %c1_66, %c1_67, %c0_68] : memref<1x1x10x18x16xbf16, #tpu.memory_space<vmem>>, vector<1x1x8x16x16xbf16>
      %50 = vector.shape_cast %49 : vector<1x1x8x16x16xbf16> to vector<8x16x16xbf16>
      %51 = vector.shape_cast %50 : vector<8x16x16xbf16> to vector<128x16xbf16>
      %c0_69 = arith.constant 0 : index
      %c0_70 = arith.constant 0 : index
      %c1_71 = arith.constant 1 : index
      %c2_72 = arith.constant 2 : index
      %c0_73 = arith.constant 0 : index
      %52 = vector.load %arg4[%c0_69, %c0_70, %c1_71, %c2_72, %c0_73] : memref<1x1x10x18x16xbf16, #tpu.memory_space<vmem>>, vector<1x1x8x16x16xbf16>
      %53 = vector.shape_cast %52 : vector<1x1x8x16x16xbf16> to vector<8x16x16xbf16>
      %54 = vector.shape_cast %53 : vector<8x16x16xbf16> to vector<128x16xbf16>
      %c0_74 = arith.constant 0 : index
      %c0_75 = arith.constant 0 : index
      %c2_76 = arith.constant 2 : index
      %c0_77 = arith.constant 0 : index
      %c0_78 = arith.constant 0 : index
      %55 = vector.load %arg4[%c0_74, %c0_75, %c2_76, %c0_77, %c0_78] : memref<1x1x10x18x16xbf16, #tpu.memory_space<vmem>>, vector<1x1x8x16x16xbf16>
      %56 = vector.shape_cast %55 : vector<1x1x8x16x16xbf16> to vector<8x16x16xbf16>
      %57 = vector.shape_cast %56 : vector<8x16x16xbf16> to vector<128x16xbf16>
      %c0_79 = arith.constant 0 : index
      %c0_80 = arith.constant 0 : index
      %c2_81 = arith.constant 2 : index
      %c1_82 = arith.constant 1 : index
      %c0_83 = arith.constant 0 : index
      %58 = vector.load %arg4[%c0_79, %c0_80, %c2_81, %c1_82, %c0_83] : memref<1x1x10x18x16xbf16, #tpu.memory_space<vmem>>, vector<1x1x8x16x16xbf16>
      %59 = vector.shape_cast %58 : vector<1x1x8x16x16xbf16> to vector<8x16x16xbf16>
      %60 = vector.shape_cast %59 : vector<8x16x16xbf16> to vector<128x16xbf16>
      %c0_84 = arith.constant 0 : index
      %c0_85 = arith.constant 0 : index
      %c2_86 = arith.constant 2 : index
      %c2_87 = arith.constant 2 : index
      %c0_88 = arith.constant 0 : index
      %61 = vector.load %arg4[%c0_84, %c0_85, %c2_86, %c2_87, %c0_88] : memref<1x1x10x18x16xbf16, #tpu.memory_space<vmem>>, vector<1x1x8x16x16xbf16>
      %62 = vector.shape_cast %61 : vector<1x1x8x16x16xbf16> to vector<8x16x16xbf16>
      %63 = vector.shape_cast %62 : vector<8x16x16xbf16> to vector<128x16xbf16>
      %c0_89 = arith.constant 0 : index
      %c0_90 = arith.constant 0 : index
      %c0_91 = arith.constant 0 : index
      %c0_92 = arith.constant 0 : index
      %c0_93 = arith.constant 0 : index
      %64 = vector.load %arg5[%c0_89, %c0_90, %c0_91, %c0_92, %c0_93] : memref<1x1x10x18x16xbf16, #tpu.memory_space<vmem>>, vector<1x1x8x16x16xbf16>
      %65 = vector.shape_cast %64 : vector<1x1x8x16x16xbf16> to vector<8x16x16xbf16>
      %66 = vector.shape_cast %65 : vector<8x16x16xbf16> to vector<128x16xbf16>
      %c0_94 = arith.constant 0 : index
      %c0_95 = arith.constant 0 : index
      %c0_96 = arith.constant 0 : index
      %c1_97 = arith.constant 1 : index
      %c0_98 = arith.constant 0 : index
      %67 = vector.load %arg5[%c0_94, %c0_95, %c0_96, %c1_97, %c0_98] : memref<1x1x10x18x16xbf16, #tpu.memory_space<vmem>>, vector<1x1x8x16x16xbf16>
      %68 = vector.shape_cast %67 : vector<1x1x8x16x16xbf16> to vector<8x16x16xbf16>
      %69 = vector.shape_cast %68 : vector<8x16x16xbf16> to vector<128x16xbf16>
      %c0_99 = arith.constant 0 : index
      %c0_100 = arith.constant 0 : index
      %c0_101 = arith.constant 0 : index
      %c2_102 = arith.constant 2 : index
      %c0_103 = arith.constant 0 : index
      %70 = vector.load %arg5[%c0_99, %c0_100, %c0_101, %c2_102, %c0_103] : memref<1x1x10x18x16xbf16, #tpu.memory_space<vmem>>, vector<1x1x8x16x16xbf16>
      %71 = vector.shape_cast %70 : vector<1x1x8x16x16xbf16> to vector<8x16x16xbf16>
      %72 = vector.shape_cast %71 : vector<8x16x16xbf16> to vector<128x16xbf16>
      %c0_104 = arith.constant 0 : index
      %c0_105 = arith.constant 0 : index
      %c1_106 = arith.constant 1 : index
      %c0_107 = arith.constant 0 : index
      %c0_108 = arith.constant 0 : index
      %73 = vector.load %arg5[%c0_104, %c0_105, %c1_106, %c0_107, %c0_108] : memref<1x1x10x18x16xbf16, #tpu.memory_space<vmem>>, vector<1x1x8x16x16xbf16>
      %74 = vector.shape_cast %73 : vector<1x1x8x16x16xbf16> to vector<8x16x16xbf16>
      %75 = vector.shape_cast %74 : vector<8x16x16xbf16> to vector<128x16xbf16>
      %c0_109 = arith.constant 0 : index
      %c0_110 = arith.constant 0 : index
      %c1_111 = arith.constant 1 : index
      %c1_112 = arith.constant 1 : index
      %c0_113 = arith.constant 0 : index
      %76 = vector.load %arg5[%c0_109, %c0_110, %c1_111, %c1_112, %c0_113] : memref<1x1x10x18x16xbf16, #tpu.memory_space<vmem>>, vector<1x1x8x16x16xbf16>
      %77 = vector.shape_cast %76 : vector<1x1x8x16x16xbf16> to vector<8x16x16xbf16>
      %78 = vector.shape_cast %77 : vector<8x16x16xbf16> to vector<128x16xbf16>
      %c0_114 = arith.constant 0 : index
      %c0_115 = arith.constant 0 : index
      %c1_116 = arith.constant 1 : index
      %c2_117 = arith.constant 2 : index
      %c0_118 = arith.constant 0 : index
      %79 = vector.load %arg5[%c0_114, %c0_115, %c1_116, %c2_117, %c0_118] : memref<1x1x10x18x16xbf16, #tpu.memory_space<vmem>>, vector<1x1x8x16x16xbf16>
      %80 = vector.shape_cast %79 : vector<1x1x8x16x16xbf16> to vector<8x16x16xbf16>
      %81 = vector.shape_cast %80 : vector<8x16x16xbf16> to vector<128x16xbf16>
      %c0_119 = arith.constant 0 : index
      %c0_120 = arith.constant 0 : index
      %c2_121 = arith.constant 2 : index
      %c0_122 = arith.constant 0 : index
      %c0_123 = arith.constant 0 : index
      %82 = vector.load %arg5[%c0_119, %c0_120, %c2_121, %c0_122, %c0_123] : memref<1x1x10x18x16xbf16, #tpu.memory_space<vmem>>, vector<1x1x8x16x16xbf16>
      %83 = vector.shape_cast %82 : vector<1x1x8x16x16xbf16> to vector<8x16x16xbf16>
      %84 = vector.shape_cast %83 : vector<8x16x16xbf16> to vector<128x16xbf16>
      %c0_124 = arith.constant 0 : index
      %c0_125 = arith.constant 0 : index
      %c2_126 = arith.constant 2 : index
      %c1_127 = arith.constant 1 : index
      %c0_128 = arith.constant 0 : index
      %85 = vector.load %arg5[%c0_124, %c0_125, %c2_126, %c1_127, %c0_128] : memref<1x1x10x18x16xbf16, #tpu.memory_space<vmem>>, vector<1x1x8x16x16xbf16>
      %86 = vector.shape_cast %85 : vector<1x1x8x16x16xbf16> to vector<8x16x16xbf16>
      %87 = vector.shape_cast %86 : vector<8x16x16xbf16> to vector<128x16xbf16>
      %c0_129 = arith.constant 0 : index
      %c0_130 = arith.constant 0 : index
      %c2_131 = arith.constant 2 : index
      %c2_132 = arith.constant 2 : index
      %c0_133 = arith.constant 0 : index
      %88 = vector.load %arg5[%c0_129, %c0_130, %c2_131, %c2_132, %c0_133] : memref<1x1x10x18x16xbf16, #tpu.memory_space<vmem>>, vector<1x1x8x16x16xbf16>
      %89 = vector.shape_cast %88 : vector<1x1x8x16x16xbf16> to vector<8x16x16xbf16>
      %90 = vector.shape_cast %89 : vector<8x16x16xbf16> to vector<128x16xbf16>
      %c0_134 = arith.constant 0 : index
      %c0_135 = arith.constant 0 : index
      %91 = vector.load %arg6[%c0_134, %c0_135] : memref<432x32xbf16, #tpu.memory_space<vmem>>, vector<16x32xbf16>
      %cst = arith.constant dense<0.000000e+00> : vector<128x32xf32>
      %92 = tpu.matmul %12, %91, %cst {dimension_numbers = #tpu.dot_dimension_numbers<[1], [0], [0], [1], [0, 0, 1, 1], [], []>} : vector<128x16xbf16>, vector<16x32xbf16>, vector<128x32xf32> -> vector<128x32xf32>
      %c16 = arith.constant 16 : index
      %c0_136 = arith.constant 0 : index
      %93 = vector.load %arg6[%c16, %c0_136] : memref<432x32xbf16, #tpu.memory_space<vmem>>, vector<16x32xbf16>
      %cst_137 = arith.constant dense<0.000000e+00> : vector<128x32xf32>
      %94 = tpu.matmul %15, %93, %cst_137 {dimension_numbers = #tpu.dot_dimension_numbers<[1], [0], [0], [1], [0, 0, 1, 1], [], []>} : vector<128x16xbf16>, vector<16x32xbf16>, vector<128x32xf32> -> vector<128x32xf32>
      %95 = arith.addf %92, %94 : vector<128x32xf32>
      %c32 = arith.constant 32 : index
      %c0_138 = arith.constant 0 : index
      %96 = vector.load %arg6[%c32, %c0_138] : memref<432x32xbf16, #tpu.memory_space<vmem>>, vector<16x32xbf16>
      %cst_139 = arith.constant dense<0.000000e+00> : vector<128x32xf32>
      %97 = tpu.matmul %18, %96, %cst_139 {dimension_numbers = #tpu.dot_dimension_numbers<[1], [0], [0], [1], [0, 0, 1, 1], [], []>} : vector<128x16xbf16>, vector<16x32xbf16>, vector<128x32xf32> -> vector<128x32xf32>
      %98 = arith.addf %95, %97 : vector<128x32xf32>
      %c48 = arith.constant 48 : index
      %c0_140 = arith.constant 0 : index
      %99 = vector.load %arg6[%c48, %c0_140] : memref<432x32xbf16, #tpu.memory_space<vmem>>, vector<16x32xbf16>
      %cst_141 = arith.constant dense<0.000000e+00> : vector<128x32xf32>
      %100 = tpu.matmul %21, %99, %cst_141 {dimension_numbers = #tpu.dot_dimension_numbers<[1], [0], [0], [1], [0, 0, 1, 1], [], []>} : vector<128x16xbf16>, vector<16x32xbf16>, vector<128x32xf32> -> vector<128x32xf32>
      %101 = arith.addf %98, %100 : vector<128x32xf32>
      %c64 = arith.constant 64 : index
      %c0_142 = arith.constant 0 : index
      %102 = vector.load %arg6[%c64, %c0_142] : memref<432x32xbf16, #tpu.memory_space<vmem>>, vector<16x32xbf16>
      %cst_143 = arith.constant dense<0.000000e+00> : vector<128x32xf32>
      %103 = tpu.matmul %24, %102, %cst_143 {dimension_numbers = #tpu.dot_dimension_numbers<[1], [0], [0], [1], [0, 0, 1, 1], [], []>} : vector<128x16xbf16>, vector<16x32xbf16>, vector<128x32xf32> -> vector<128x32xf32>
      %104 = arith.addf %101, %103 : vector<128x32xf32>
      %c80 = arith.constant 80 : index
      %c0_144 = arith.constant 0 : index
      %105 = vector.load %arg6[%c80, %c0_144] : memref<432x32xbf16, #tpu.memory_space<vmem>>, vector<16x32xbf16>
      %cst_145 = arith.constant dense<0.000000e+00> : vector<128x32xf32>
      %106 = tpu.matmul %27, %105, %cst_145 {dimension_numbers = #tpu.dot_dimension_numbers<[1], [0], [0], [1], [0, 0, 1, 1], [], []>} : vector<128x16xbf16>, vector<16x32xbf16>, vector<128x32xf32> -> vector<128x32xf32>
      %107 = arith.addf %104, %106 : vector<128x32xf32>
      %c96 = arith.constant 96 : index
      %c0_146 = arith.constant 0 : index
      %108 = vector.load %arg6[%c96, %c0_146] : memref<432x32xbf16, #tpu.memory_space<vmem>>, vector<16x32xbf16>
      %cst_147 = arith.constant dense<0.000000e+00> : vector<128x32xf32>
      %109 = tpu.matmul %30, %108, %cst_147 {dimension_numbers = #tpu.dot_dimension_numbers<[1], [0], [0], [1], [0, 0, 1, 1], [], []>} : vector<128x16xbf16>, vector<16x32xbf16>, vector<128x32xf32> -> vector<128x32xf32>
      %110 = arith.addf %107, %109 : vector<128x32xf32>
      %c112 = arith.constant 112 : index
      %c0_148 = arith.constant 0 : index
      %111 = vector.load %arg6[%c112, %c0_148] : memref<432x32xbf16, #tpu.memory_space<vmem>>, vector<16x32xbf16>
      %cst_149 = arith.constant dense<0.000000e+00> : vector<128x32xf32>
      %112 = tpu.matmul %33, %111, %cst_149 {dimension_numbers = #tpu.dot_dimension_numbers<[1], [0], [0], [1], [0, 0, 1, 1], [], []>} : vector<128x16xbf16>, vector<16x32xbf16>, vector<128x32xf32> -> vector<128x32xf32>
      %113 = arith.addf %110, %112 : vector<128x32xf32>
      %c128 = arith.constant 128 : index
      %c0_150 = arith.constant 0 : index
      %114 = vector.load %arg6[%c128, %c0_150] : memref<432x32xbf16, #tpu.memory_space<vmem>>, vector<16x32xbf16>
      %cst_151 = arith.constant dense<0.000000e+00> : vector<128x32xf32>
      %115 = tpu.matmul %36, %114, %cst_151 {dimension_numbers = #tpu.dot_dimension_numbers<[1], [0], [0], [1], [0, 0, 1, 1], [], []>} : vector<128x16xbf16>, vector<16x32xbf16>, vector<128x32xf32> -> vector<128x32xf32>
      %116 = arith.addf %113, %115 : vector<128x32xf32>
      %c144 = arith.constant 144 : index
      %c0_152 = arith.constant 0 : index
      %117 = vector.load %arg6[%c144, %c0_152] : memref<432x32xbf16, #tpu.memory_space<vmem>>, vector<16x32xbf16>
      %cst_153 = arith.constant dense<0.000000e+00> : vector<128x32xf32>
      %118 = tpu.matmul %39, %117, %cst_153 {dimension_numbers = #tpu.dot_dimension_numbers<[1], [0], [0], [1], [0, 0, 1, 1], [], []>} : vector<128x16xbf16>, vector<16x32xbf16>, vector<128x32xf32> -> vector<128x32xf32>
      %119 = arith.addf %116, %118 : vector<128x32xf32>
      %c160 = arith.constant 160 : index
      %c0_154 = arith.constant 0 : index
      %120 = vector.load %arg6[%c160, %c0_154] : memref<432x32xbf16, #tpu.memory_space<vmem>>, vector<16x32xbf16>
      %cst_155 = arith.constant dense<0.000000e+00> : vector<128x32xf32>
      %121 = tpu.matmul %42, %120, %cst_155 {dimension_numbers = #tpu.dot_dimension_numbers<[1], [0], [0], [1], [0, 0, 1, 1], [], []>} : vector<128x16xbf16>, vector<16x32xbf16>, vector<128x32xf32> -> vector<128x32xf32>
      %122 = arith.addf %119, %121 : vector<128x32xf32>
      %c176 = arith.constant 176 : index
      %c0_156 = arith.constant 0 : index
      %123 = vector.load %arg6[%c176, %c0_156] : memref<432x32xbf16, #tpu.memory_space<vmem>>, vector<16x32xbf16>
      %cst_157 = arith.constant dense<0.000000e+00> : vector<128x32xf32>
      %124 = tpu.matmul %45, %123, %cst_157 {dimension_numbers = #tpu.dot_dimension_numbers<[1], [0], [0], [1], [0, 0, 1, 1], [], []>} : vector<128x16xbf16>, vector<16x32xbf16>, vector<128x32xf32> -> vector<128x32xf32>
      %125 = arith.addf %122, %124 : vector<128x32xf32>
      %c192 = arith.constant 192 : index
      %c0_158 = arith.constant 0 : index
      %126 = vector.load %arg6[%c192, %c0_158] : memref<432x32xbf16, #tpu.memory_space<vmem>>, vector<16x32xbf16>
      %cst_159 = arith.constant dense<0.000000e+00> : vector<128x32xf32>
      %127 = tpu.matmul %48, %126, %cst_159 {dimension_numbers = #tpu.dot_dimension_numbers<[1], [0], [0], [1], [0, 0, 1, 1], [], []>} : vector<128x16xbf16>, vector<16x32xbf16>, vector<128x32xf32> -> vector<128x32xf32>
      %128 = arith.addf %125, %127 : vector<128x32xf32>
      %c208 = arith.constant 208 : index
      %c0_160 = arith.constant 0 : index
      %129 = vector.load %arg6[%c208, %c0_160] : memref<432x32xbf16, #tpu.memory_space<vmem>>, vector<16x32xbf16>
      %cst_161 = arith.constant dense<0.000000e+00> : vector<128x32xf32>
      %130 = tpu.matmul %51, %129, %cst_161 {dimension_numbers = #tpu.dot_dimension_numbers<[1], [0], [0], [1], [0, 0, 1, 1], [], []>} : vector<128x16xbf16>, vector<16x32xbf16>, vector<128x32xf32> -> vector<128x32xf32>
      %131 = arith.addf %128, %130 : vector<128x32xf32>
      %c224 = arith.constant 224 : index
      %c0_162 = arith.constant 0 : index
      %132 = vector.load %arg6[%c224, %c0_162] : memref<432x32xbf16, #tpu.memory_space<vmem>>, vector<16x32xbf16>
      %cst_163 = arith.constant dense<0.000000e+00> : vector<128x32xf32>
      %133 = tpu.matmul %54, %132, %cst_163 {dimension_numbers = #tpu.dot_dimension_numbers<[1], [0], [0], [1], [0, 0, 1, 1], [], []>} : vector<128x16xbf16>, vector<16x32xbf16>, vector<128x32xf32> -> vector<128x32xf32>
      %134 = arith.addf %131, %133 : vector<128x32xf32>
      %c240 = arith.constant 240 : index
      %c0_164 = arith.constant 0 : index
      %135 = vector.load %arg6[%c240, %c0_164] : memref<432x32xbf16, #tpu.memory_space<vmem>>, vector<16x32xbf16>
      %cst_165 = arith.constant dense<0.000000e+00> : vector<128x32xf32>
      %136 = tpu.matmul %57, %135, %cst_165 {dimension_numbers = #tpu.dot_dimension_numbers<[1], [0], [0], [1], [0, 0, 1, 1], [], []>} : vector<128x16xbf16>, vector<16x32xbf16>, vector<128x32xf32> -> vector<128x32xf32>
      %137 = arith.addf %134, %136 : vector<128x32xf32>
      %c256 = arith.constant 256 : index
      %c0_166 = arith.constant 0 : index
      %138 = vector.load %arg6[%c256, %c0_166] : memref<432x32xbf16, #tpu.memory_space<vmem>>, vector<16x32xbf16>
      %cst_167 = arith.constant dense<0.000000e+00> : vector<128x32xf32>
      %139 = tpu.matmul %60, %138, %cst_167 {dimension_numbers = #tpu.dot_dimension_numbers<[1], [0], [0], [1], [0, 0, 1, 1], [], []>} : vector<128x16xbf16>, vector<16x32xbf16>, vector<128x32xf32> -> vector<128x32xf32>
      %140 = arith.addf %137, %139 : vector<128x32xf32>
      %c272 = arith.constant 272 : index
      %c0_168 = arith.constant 0 : index
      %141 = vector.load %arg6[%c272, %c0_168] : memref<432x32xbf16, #tpu.memory_space<vmem>>, vector<16x32xbf16>
      %cst_169 = arith.constant dense<0.000000e+00> : vector<128x32xf32>
      %142 = tpu.matmul %63, %141, %cst_169 {dimension_numbers = #tpu.dot_dimension_numbers<[1], [0], [0], [1], [0, 0, 1, 1], [], []>} : vector<128x16xbf16>, vector<16x32xbf16>, vector<128x32xf32> -> vector<128x32xf32>
      %143 = arith.addf %140, %142 : vector<128x32xf32>
      %c288 = arith.constant 288 : index
      %c0_170 = arith.constant 0 : index
      %144 = vector.load %arg6[%c288, %c0_170] : memref<432x32xbf16, #tpu.memory_space<vmem>>, vector<16x32xbf16>
      %cst_171 = arith.constant dense<0.000000e+00> : vector<128x32xf32>
      %145 = tpu.matmul %66, %144, %cst_171 {dimension_numbers = #tpu.dot_dimension_numbers<[1], [0], [0], [1], [0, 0, 1, 1], [], []>} : vector<128x16xbf16>, vector<16x32xbf16>, vector<128x32xf32> -> vector<128x32xf32>
      %146 = arith.addf %143, %145 : vector<128x32xf32>
      %c304 = arith.constant 304 : index
      %c0_172 = arith.constant 0 : index
      %147 = vector.load %arg6[%c304, %c0_172] : memref<432x32xbf16, #tpu.memory_space<vmem>>, vector<16x32xbf16>
      %cst_173 = arith.constant dense<0.000000e+00> : vector<128x32xf32>
      %148 = tpu.matmul %69, %147, %cst_173 {dimension_numbers = #tpu.dot_dimension_numbers<[1], [0], [0], [1], [0, 0, 1, 1], [], []>} : vector<128x16xbf16>, vector<16x32xbf16>, vector<128x32xf32> -> vector<128x32xf32>
      %149 = arith.addf %146, %148 : vector<128x32xf32>
      %c320 = arith.constant 320 : index
      %c0_174 = arith.constant 0 : index
      %150 = vector.load %arg6[%c320, %c0_174] : memref<432x32xbf16, #tpu.memory_space<vmem>>, vector<16x32xbf16>
      %cst_175 = arith.constant dense<0.000000e+00> : vector<128x32xf32>
      %151 = tpu.matmul %72, %150, %cst_175 {dimension_numbers = #tpu.dot_dimension_numbers<[1], [0], [0], [1], [0, 0, 1, 1], [], []>} : vector<128x16xbf16>, vector<16x32xbf16>, vector<128x32xf32> -> vector<128x32xf32>
      %152 = arith.addf %149, %151 : vector<128x32xf32>
      %c336 = arith.constant 336 : index
      %c0_176 = arith.constant 0 : index
      %153 = vector.load %arg6[%c336, %c0_176] : memref<432x32xbf16, #tpu.memory_space<vmem>>, vector<16x32xbf16>
      %cst_177 = arith.constant dense<0.000000e+00> : vector<128x32xf32>
      %154 = tpu.matmul %75, %153, %cst_177 {dimension_numbers = #tpu.dot_dimension_numbers<[1], [0], [0], [1], [0, 0, 1, 1], [], []>} : vector<128x16xbf16>, vector<16x32xbf16>, vector<128x32xf32> -> vector<128x32xf32>
      %155 = arith.addf %152, %154 : vector<128x32xf32>
      %c352 = arith.constant 352 : index
      %c0_178 = arith.constant 0 : index
      %156 = vector.load %arg6[%c352, %c0_178] : memref<432x32xbf16, #tpu.memory_space<vmem>>, vector<16x32xbf16>
      %cst_179 = arith.constant dense<0.000000e+00> : vector<128x32xf32>
      %157 = tpu.matmul %78, %156, %cst_179 {dimension_numbers = #tpu.dot_dimension_numbers<[1], [0], [0], [1], [0, 0, 1, 1], [], []>} : vector<128x16xbf16>, vector<16x32xbf16>, vector<128x32xf32> -> vector<128x32xf32>
      %158 = arith.addf %155, %157 : vector<128x32xf32>
      %c368 = arith.constant 368 : index
      %c0_180 = arith.constant 0 : index
      %159 = vector.load %arg6[%c368, %c0_180] : memref<432x32xbf16, #tpu.memory_space<vmem>>, vector<16x32xbf16>
      %cst_181 = arith.constant dense<0.000000e+00> : vector<128x32xf32>
      %160 = tpu.matmul %81, %159, %cst_181 {dimension_numbers = #tpu.dot_dimension_numbers<[1], [0], [0], [1], [0, 0, 1, 1], [], []>} : vector<128x16xbf16>, vector<16x32xbf16>, vector<128x32xf32> -> vector<128x32xf32>
      %161 = arith.addf %158, %160 : vector<128x32xf32>
      %c384 = arith.constant 384 : index
      %c0_182 = arith.constant 0 : index
      %162 = vector.load %arg6[%c384, %c0_182] : memref<432x32xbf16, #tpu.memory_space<vmem>>, vector<16x32xbf16>
      %cst_183 = arith.constant dense<0.000000e+00> : vector<128x32xf32>
      %163 = tpu.matmul %84, %162, %cst_183 {dimension_numbers = #tpu.dot_dimension_numbers<[1], [0], [0], [1], [0, 0, 1, 1], [], []>} : vector<128x16xbf16>, vector<16x32xbf16>, vector<128x32xf32> -> vector<128x32xf32>
      %164 = arith.addf %161, %163 : vector<128x32xf32>
      %c400 = arith.constant 400 : index
      %c0_184 = arith.constant 0 : index
      %165 = vector.load %arg6[%c400, %c0_184] : memref<432x32xbf16, #tpu.memory_space<vmem>>, vector<16x32xbf16>
      %cst_185 = arith.constant dense<0.000000e+00> : vector<128x32xf32>
      %166 = tpu.matmul %87, %165, %cst_185 {dimension_numbers = #tpu.dot_dimension_numbers<[1], [0], [0], [1], [0, 0, 1, 1], [], []>} : vector<128x16xbf16>, vector<16x32xbf16>, vector<128x32xf32> -> vector<128x32xf32>
      %167 = arith.addf %164, %166 : vector<128x32xf32>
      %c416 = arith.constant 416 : index
      %c0_186 = arith.constant 0 : index
      %168 = vector.load %arg6[%c416, %c0_186] : memref<432x32xbf16, #tpu.memory_space<vmem>>, vector<16x32xbf16>
      %cst_187 = arith.constant dense<0.000000e+00> : vector<128x32xf32>
      %169 = tpu.matmul %90, %168, %cst_187 {dimension_numbers = #tpu.dot_dimension_numbers<[1], [0], [0], [1], [0, 0, 1, 1], [], []>} : vector<128x16xbf16>, vector<16x32xbf16>, vector<128x32xf32> -> vector<128x32xf32>
      %170 = arith.addf %167, %169 : vector<128x32xf32>
      %c0_188 = arith.constant 0 : index
      %c0_189 = arith.constant 0 : index
      %171 = vector.load %arg7[%c0_188, %c0_189] : memref<1x32xf32, #tpu.memory_space<vmem>>, vector<1x32xf32>
      %172 = vector.broadcast %171 : vector<1x32xf32> to vector<128x32xf32>
      %173 = arith.mulf %170, %172 : vector<128x32xf32>
      %c0_190 = arith.constant 0 : index
      %c0_191 = arith.constant 0 : index
      %174 = vector.load %arg8[%c0_190, %c0_191] : memref<1x32xf32, #tpu.memory_space<vmem>>, vector<1x32xf32>
      %175 = vector.broadcast %174 : vector<1x32xf32> to vector<128x32xf32>
      %176 = arith.addf %173, %175 : vector<128x32xf32>
      %c0_192 = arith.constant 0 : index
      %c0_193 = arith.constant 0 : index
      %c0_194 = arith.constant 0 : index
      %c0_195 = arith.constant 0 : index
      %177 = vector.load %arg10[%c0_192, %c0_193, %c0_194, %c0_195] : memref<1x1x128x32xbf16, #tpu.memory_space<vmem>>, vector<1x1x128x32xbf16>
      %178 = vector.shape_cast %177 : vector<1x1x128x32xbf16> to vector<128x32xbf16>
      %179 = arith.extf %178 : vector<128x32xbf16> to vector<128x32xf32>
      %180 = arith.addf %176, %179 : vector<128x32xf32>
      %cst_196 = arith.constant 0.000000e+00 : f32
      %181 = vector.broadcast %cst_196 : f32 to vector<128x32xf32>
      %182 = arith.maximumf %180, %181 : vector<128x32xf32>
      %c0_197 = arith.constant 0 : index
      %c0_198 = arith.constant 0 : index
      %c0_199 = arith.constant 0 : index
      %c0_200 = arith.constant 0 : index
      %183 = vector.load %arg9[%c0_197, %c0_198, %c0_199, %c0_200] : memref<1x1x128x1xbf16, #tpu.memory_space<vmem>>, vector<1x1x128x1xbf16>
      %184 = vector.shape_cast %183 : vector<1x1x128x1xbf16> to vector<128x1xbf16>
      %185 = arith.extf %184 : vector<128x1xbf16> to vector<128x1xf32>
      %186 = vector.broadcast %185 : vector<128x1xf32> to vector<128x32xf32>
      %187 = arith.mulf %182, %186 : vector<128x32xf32>
      %188 = vector.shape_cast %187 : vector<128x32xf32> to vector<1x1x128x32xf32>
      %189 = arith.truncf %188 : vector<1x1x128x32xf32> to vector<1x1x128x32xbf16>
      %c0_201 = arith.constant 0 : index
      %c0_202 = arith.constant 0 : index
      %c0_203 = arith.constant 0 : index
      %c0_204 = arith.constant 0 : index
      %190 = vector.load %arg11[%c0_201, %c0_202, %c0_203, %c0_204] : memref<1x1x128x32xbf16, #tpu.memory_space<vmem>>, vector<1x1x128x32xbf16>
      tpu.vector_store %arg11[%c0_201, %c0_202, %c0_203, %c0_204], %189 {strides = array<i32>} : memref<1x1x128x32xbf16, #tpu.memory_space<vmem>>, vector<1x1x128x32xbf16>,
    } else {
    }
    %true = arith.constant true
    %7 = arith.xori %4, %true : i1
    %8 = arith.extui %7 : i1 to i32
    %c0_i32_1 = arith.constant 0 : i32
    %9 = arith.cmpi ne, %8, %c0_i32_1 : i32
    scf.if %9 {
      %cst = arith.constant 0.000000e+00 : bf16
      %10 = vector.broadcast %cst : bf16 to vector<1x1x128x32xbf16>
      %c0 = arith.constant 0 : index
      %c0_2 = arith.constant 0 : index
      %c0_3 = arith.constant 0 : index
      %c0_4 = arith.constant 0 : index
      %11 = vector.load %arg11[%c0, %c0_2, %c0_3, %c0_4] : memref<1x1x128x32xbf16, #tpu.memory_space<vmem>>, vector<1x1x128x32xbf16>
      tpu.vector_store %arg11[%c0, %c0_2, %c0_3, %c0_4], %10 {strides = array<i32>} : memref<1x1x128x32xbf16, #tpu.memory_space<vmem>>, vector<1x1x128x32xbf16>,
    } else {
    }
    return
  }
  func.func @transform_0(%arg0: i32, %arg1: i32, %arg2: memref<12xi32, #tpu.memory_space<smem>>) -> (i32, i32, i32, i32, i32) {
    %c1_i32 = arith.constant 1 : i32
    %0 = arith.muli %c1_i32, %arg1 : i32
    %c0_i32 = arith.constant 0 : i32
    %1 = arith.addi %0, %c0_i32 : i32
    %c0_i32_0 = arith.constant 0 : i32
    %c0_i32_1 = arith.constant 0 : i32
    %c0_i32_2 = arith.constant 0 : i32
    %c0_i32_3 = arith.constant 0 : i32
    return %arg0, %1, %c0_i32_0, %c0_i32_1, %c0_i32_2 : i32, i32, i32, i32, i32
  }
  func.func @transform_1(%arg0: i32, %arg1: i32, %arg2: memref<12xi32, #tpu.memory_space<smem>>) -> (i32, i32, i32, i32, i32) {
    %c1_i32 = arith.constant 1 : i32
    %0 = arith.muli %c1_i32, %arg1 : i32
    %c1_i32_0 = arith.constant 1 : i32
    %1 = arith.addi %0, %c1_i32_0 : i32
    %c0_i32 = arith.constant 0 : i32
    %c0_i32_1 = arith.constant 0 : i32
    %c0_i32_2 = arith.constant 0 : i32
    %c0_i32_3 = arith.constant 0 : i32
    return %arg0, %1, %c0_i32, %c0_i32_1, %c0_i32_2 : i32, i32, i32, i32, i32
  }
  func.func @transform_2(%arg0: i32, %arg1: i32, %arg2: memref<12xi32, #tpu.memory_space<smem>>) -> (i32, i32, i32, i32, i32) {
    %c1_i32 = arith.constant 1 : i32
    %0 = arith.muli %c1_i32, %arg1 : i32
    %c2_i32 = arith.constant 2 : i32
    %1 = arith.addi %0, %c2_i32 : i32
    %c0_i32 = arith.constant 0 : i32
    %c0_i32_0 = arith.constant 0 : i32
    %c0_i32_1 = arith.constant 0 : i32
    %c0_i32_2 = arith.constant 0 : i32
    return %arg0, %1, %c0_i32, %c0_i32_0, %c0_i32_1 : i32, i32, i32, i32, i32
  }
  func.func @transform_3(%arg0: i32, %arg1: i32, %arg2: memref<12xi32, #tpu.memory_space<smem>>) -> (i32, i32) {
    %c0_i32 = arith.constant 0 : i32
    %c0_i32_0 = arith.constant 0 : i32
    %c0_i32_1 = arith.constant 0 : i32
    return %c0_i32, %c0_i32_0 : i32, i32
  }
  func.func @transform_4(%arg0: i32, %arg1: i32, %arg2: memref<12xi32, #tpu.memory_space<smem>>) -> (i32, i32) {
    %c0_i32 = arith.constant 0 : i32
    %c0_i32_0 = arith.constant 0 : i32
    %c0_i32_1 = arith.constant 0 : i32
    return %c0_i32, %c0_i32_0 : i32, i32
  }
  func.func @transform_5(%arg0: i32, %arg1: i32, %arg2: memref<12xi32, #tpu.memory_space<smem>>) -> (i32, i32) {
    %c0_i32 = arith.constant 0 : i32
    %c0_i32_0 = arith.constant 0 : i32
    %c0_i32_1 = arith.constant 0 : i32
    return %c0_i32, %c0_i32_0 : i32, i32
  }
  func.func @transform_6(%arg0: i32, %arg1: i32, %arg2: memref<12xi32, #tpu.memory_space<smem>>) -> (i32, i32, i32, i32) {
    %c0_i32 = arith.constant 0 : i32
    %c0_i32_0 = arith.constant 0 : i32
    %c0_i32_1 = arith.constant 0 : i32
    return %arg0, %arg1, %c0_i32, %c0_i32_0 : i32, i32, i32, i32
  }
  func.func @transform_7(%arg0: i32, %arg1: i32, %arg2: memref<12xi32, #tpu.memory_space<smem>>) -> (i32, i32, i32, i32) {
    %c0_i32 = arith.constant 0 : i32
    %c0_i32_0 = arith.constant 0 : i32
    %c0_i32_1 = arith.constant 0 : i32
    return %arg0, %arg1, %c0_i32, %c0_i32_0 : i32, i32, i32, i32
  }
  func.func @transform_8(%arg0: i32, %arg1: i32, %arg2: memref<12xi32, #tpu.memory_space<smem>>) -> (i32, i32, i32, i32) {
    %c0_i32 = arith.constant 0 : i32
    %c0_i32_0 = arith.constant 0 : i32
    %c0_i32_1 = arith.constant 0 : i32
    return %arg0, %arg1, %c0_i32, %c0_i32_0 : i32, i32, i32, i32
  }
}

</mosaic_0001>

<llo_original>
// kernel: tpu_custom_call.1
$region0: #{tpu_custom_call.1}
  #allocation0 [shape = 'u32[]', space=smem, size = 0x4, offset = 0x4, fixed_abs, tag = 'smem constant byte address 0x4 - core index']
  #allocation1 [shape = 'u32[144,128]{1,0:T(1,128)}', space=vmem, size = 0x12000, scoped, tag = 'internal scratch']
  %s0 = inlined_call_operand.vmem [shape: bf16[16,4], index: 0, kind: input, shape index: {}]
  %s1 = inlined_call_operand.vmem [shape: bf16[108,16], index: 1, kind: input, shape index: {}]
  %s2 = inlined_call_operand.hbm [shape: f32[16,16], index: 2, kind: output, shape index: {}]
  %s3 = sld [smem:[#allocation0]]
  $region18: #{tpu_custom_call.1} parent=0
    _
  %s5 = ssub.s32 1, %s3
  %s6 = scalar_select 0, %s5, %s3
  $region1: #{tpu_custom_call.1} parent=0
    #allocation2 [shape = 'u8[8192]{0}', space=vmem, size = 0x2000, scoped, tag = 'output window, operand 0, single buffered']
    #allocation3 [shape = 's32[1]{0}', space=sflag, size = 0x4, scoped, tag = 'scoped memory for tpu_custom_call.1']
    %7 = vsyncpa [#allocation3], 0
    // Predicated region
    $region2: #{tpu_custom_call.1} parent=1 // pred_check
      _
    $region3: #{tpu_custom_call.1} parent=1 // pred_check_branch
      %9 = sbr.rel (0) target = $region5
    $region4: #{tpu_custom_call.1} parent=1 // pred_region
      _
    $region5: #{tpu_custom_call.1} parent=1 // pred_fallthru
      _
    // Predicated region
    $region6: #{tpu_custom_call.1} parent=1 // pred_check
      _
    $region7: #{tpu_custom_call.1} parent=1 // pred_check_branch
      %11 = sbr.rel (0) target = $region9
    $region8: #{tpu_custom_call.1} parent=1 // pred_region
      _
    $region9: #{tpu_custom_call.1} parent=1 // pred_fallthru
      _
    %v13 = vld [vmem:[%s0] sm:$0xf]
    %v14 = vld [vmem:[%s0 + $0x4] sm:$0xf]
    %v17 = vunpack.c.l.b16 %v13
    %v18 = vunpack.c.l.b16 %v14
    %v19 = vpack.c.b16 %v18, %v17
    %20 = vrot.lane.b32.xlu0 %v19, 4
    %v21 = vpop.permute.xlu0 %20
    %22 = vrot.lane.b32.xlu0 %v19, 8
    %v23 = vpop.permute.xlu0 %22
    %24 = vrot.lane.b32.xlu0 %v19, 12
    %v25 = vpop.permute.xlu0 %24
    %26 = vrot.lane.b32.xlu0 %v19, 16
    %v27 = vpop.permute.xlu0 %26
    %28 = vrot.lane.b32.xlu0 %v19, 20
    %v29 = vpop.permute.xlu0 %28
    %30 = vrot.lane.b32.xlu0 %v19, 24
    %v31 = vpop.permute.xlu0 %30
    %32 = vrot.lane.b32.xlu0 %v19, 28
    %v33 = vpop.permute.xlu0 %32
    %34 = vrot.lane.b32.xlu0 %v19, 32
    %v35 = vpop.permute.xlu0 %34
    %36 = vrot.lane.b32.xlu0 %v19, 36
    %v37 = vpop.permute.xlu0 %36
    %38 = vrot.lane.b32.xlu0 %v19, 40
    %v39 = vpop.permute.xlu0 %38
    %40 = vrot.lane.b32.xlu0 %v19, 44
    %v41 = vpop.permute.xlu0 %40
    %42 = vrot.lane.b32.xlu0 %v19, 48
    %v43 = vpop.permute.xlu0 %42
    %44 = vrot.lane.b32.xlu0 %v19, 52
    %v45 = vpop.permute.xlu0 %44
    %46 = vrot.lane.b32.xlu0 %v19, 56
    %v47 = vpop.permute.xlu0 %46
    %48 = vrot.lane.b32.xlu0 %v19, 60
    %v49 = vpop.permute.xlu0 %48
    %vm50 = vcmask 31744
    %v53 = vsel %vm50, %v19, %v21
    %vm54 = vcmask 64512
    %v56 = vsel %vm54, %v53, %v23
    %vm57 = vcmask 97280
    %v59 = vsel %vm57, %v56, %v25
    %vm60 = vcmask 130048
    %v62 = vsel %vm60, %v59, %v27
    %vm63 = vcmask 162816
    %v65 = vsel %vm63, %v62, %v29
    %vm66 = vcmask 195584
    %v68 = vsel %vm66, %v65, %v31
    %vm69 = vcmask 228352
    %v71 = vsel %vm69, %v68, %v33
    %vm72 = vcmask 261120
    %v74 = vsel %vm72, %v71, %v35
    %vm75 = vcmask 293888
    %v77 = vsel %vm75, %v74, %v37
    %vm78 = vcmask 326656
    %v80 = vsel %vm78, %v77, %v39
    %vm81 = vcmask 359424
    %v83 = vsel %vm81, %v80, %v41
    %vm84 = vcmask 392192
    %v86 = vsel %vm84, %v83, %v43
    %vm87 = vcmask 424960
    %v89 = vsel %vm87, %v86, %v45
    %vm90 = vcmask 457728
    %v92 = vsel %vm90, %v89, %v47
    %vm93 = vcmask 490496
    %v95 = vsel %vm93, %v92, %v49
    %97 = vrot.lane.b32.xlu0 %v80, 64
    %v98 = vpop.permute.xlu0 %97
    %vm99 = vcmask 523264
    %v101 = vsel %vm99, %v95, %v98
    %v102 = vld [vmem:[%s1] sm:$0xf]
    %v103 = vld [vmem:[%s1 + $0x4] sm:$0xf]
    %v104 = vld [vmem:[%s1 + $0x8] sm:$0xf]
    %v105 = vld [vmem:[%s1 + $0xc] sm:$0xf]
    %v106 = vld [vmem:[%s1 + $0x10] sm:$0xf]
    %v107 = vld [vmem:[%s1 + $0x14] sm:$0xf]
    %v108 = vld [vmem:[%s1 + $0x18] sm:$0xf]
    %v109 = vld [vmem:[%s1 + $0x1c] sm:$0xf]
    %v110 = vld [vmem:[%s1 + $0x20] sm:$0xf]
    %v111 = vld [vmem:[%s1 + $0x24] sm:$0xf]
    %v112 = vld [vmem:[%s1 + $0x28] sm:$0xf]
    %v113 = vld [vmem:[%s1 + $0x2c] sm:$0xf]
    %v114 = vld [vmem:[%s1 + $0x30] sm:$0xf]
    %v115 = vld [vmem:[%s1 + $0x34] sm:$0x3]
    %v130 = vunpack.c.l.b16 %v102
    %v131 = vunpack.c.l.b16 %v103
    %v132 = vunpack.c.l.b16 %v104
    %v133 = vunpack.c.l.b16 %v105
    %v134 = vunpack.c.l.b16 %v106
    %v135 = vunpack.c.l.b16 %v107
    %v136 = vunpack.c.l.b16 %v108
    %v137 = vunpack.c.l.b16 %v109
    %v138 = vunpack.c.l.b16 %v110
    %v139 = vunpack.c.l.b16 %v111
    %v140 = vunpack.c.l.b16 %v112
    %v141 = vunpack.c.l.b16 %v113
    %v142 = vunpack.c.l.b16 %v114
    %v143 = vunpack.c.l.b16 %v115
    %v144 = vpack.c.b16 %v131, %v130
    %v145 = vpack.c.b16 %v133, %v132
    %v146 = vpack.c.b16 %v135, %v134
    %v147 = vpack.c.b16 %v137, %v136
    %v148 = vpack.c.b16 %v139, %v138
    %v149 = vpack.c.b16 %v141, %v140
    %v150 = vpack.c.b16 %v143, %v142
    %vm157 = vcmask 883712
    %v158 = vsel %vm157, %v101, 0
    %vm160 = vcmask 1045504
    %v162 = vsel %vm160, %v150, 0
    %164 = vmatprep.subr.bf16.mxu0 0
    %165 = vmatpush1.bf16.msra.mxu0 %v144
    %166 = vmatprep.subr.bf16.mxu0 0
    %167 = vmatpush1.bf16.msra.mxu0 %v145
    %168 = vmatprep.subr.bf16.mxu0 0
    %169 = vmatpush1.bf16.msra.mxu0 %v146
    %170 = vmatprep.subr.bf16.mxu0 0
    %171 = vmatpush1.bf16.msra.mxu0 %v147
    %172 = vmatprep.subr.bf16.mxu0 0
    %173 = vmatpush1.bf16.msra.mxu0 %v148
    %174 = vmatprep.subr.bf16.mxu0 0
    %175 = vmatpush1.bf16.msra.mxu0 %v149
    %176 = vmatprep.subr.bf16.mxu0 0
    %177 = vmatpush1.bf16.msra.mxu0 %v162
    %178 = vmatprep.subr.bf16.mxu0 0
    %179 = vmatpush1.bf16.msra.mxu0 0
    %180 = vmatprep.subr.bf16.mxu0 0
    %181 = vmatpush1.bf16.msra.mxu0 0
    %182 = vmatprep.subr.bf16.mxu0 0
    %183 = vmatpush1.bf16.msra.mxu0 0
    %184 = vmatprep.subr.bf16.mxu0 0
    %185 = vmatpush1.bf16.msra.mxu0 0
    %186 = vmatprep.subr.bf16.mxu0 0
    %187 = vmatpush1.bf16.msra.mxu0 0
    %188 = vmatprep.subr.bf16.mxu0 0
    %189 = vmatpush1.bf16.msra.mxu0 0
    %190 = vmatprep.subr.bf16.mxu0 0
    %191 = vmatpush1.bf16.msra.mxu0 0
    %192 = vmatprep.subr.bf16.mxu0 0
    %193 = vmatpush1.bf16.msra.mxu0 0
    %194 = vmatprep.subr.bf16.mxu0 0
    %195 = vmatpush1.bf16.msra.mxu0 0
    %196 = vmatprep.mubr.bf16.mxu0 0
    %197 = vmatmul.mubr.bf16.gmra.mrb[0].mxu0 %v158
    %v198 = vpop.f32.mrb[0].mxu0
    %v199 = vadd.f32 0.0, %v198
    %v200 = vpop.f32.mrb[0].mxu0
    %v201 = vpop.f32.mrb[0].mxu0
    %v202 = vadd.f32 0.0, %v201
    %v203 = vpop.f32.mrb[0].mxu0
    %204 = vdwg.mxu0
    %205 = vst.msk [vmem:[#allocation2] sm:$0xff] %vm60, %v199
    %206 = vst.msk [vmem:[#allocation2 + $0x8] sm:$0xff] %vm60, %v202
    // Predicated region
    $region10: #{tpu_custom_call.1} parent=1 // pred_check
      _
    $region11: #{tpu_custom_call.1} parent=1 // pred_check_branch
      %208 = sbr.rel (0) target = $region13
    $region12: #{tpu_custom_call.1} parent=1 // pred_region
      %s210 = ssub.s32 256, 256
      %211 = vsyncadd [#allocation3], %s210
      %s212 = sshll.u32 [#allocation2], 4
      %s213 = int_to_ptr.vmem [resolvable:$true] %s212
      %218 = dma.vmem_to_hbm [thread:$0]  %s213, 256, %s2, [#allocation3], 128, 128, 8
    $region13: #{tpu_custom_call.1} parent=1 // pred_fallthru
      _
    // Predicated region
    $region14: #{tpu_custom_call.1} parent=1 // pred_check
      _
    $region15: #{tpu_custom_call.1} parent=1 // pred_check_branch
      %220 = sbr.rel (0) target = $region17
    $region16: #{tpu_custom_call.1} parent=1 // pred_region
      %221 = dma.done [#allocation3], 256
    $region17: #{tpu_custom_call.1} parent=1 // pred_fallthru
      _
    %222 = vsyncpa [#allocation3], 1

// kernel: tpu_custom_call.1
$region0: #{tpu_custom_call.1}
  #allocation0 [shape = 'u32[]', space=smem, size = 0x4, offset = 0x4, fixed_abs, tag = 'smem constant byte address 0x4 - core index']
  #allocation1 [shape = 'u32[144,128]{1,0:T(1,128)}', space=vmem, size = 0x12000, scoped, tag = 'internal scratch']
  #allocation2 [shape = 's32[1]{0}', space=sflag, size = 0x4, scoped, tag = 'scoped memory for tpu_custom_call.1']
  #allocation3 [shape = 'u8[512]{0}', space=smem, size = 0x200, scoped, tag = 'prefetched SMEM operand 0']
  %s0 = inlined_call_operand.vmem [shape: s32[12], index: 0, kind: input, shape index: {}]
  %s1 = inlined_call_operand.vmem [shape: bf16[2,8,10,18,16], index: 1, kind: input, shape index: {}]
  %s2 = inlined_call_operand.vmem [shape: bf16[2,8,10,18,16], index: 2, kind: input, shape index: {}]
  %s3 = inlined_call_operand.vmem [shape: bf16[2,8,10,18,16], index: 3, kind: input, shape index: {}]
  %s4 = inlined_call_operand.vmem [shape: bf16[432,32], index: 4, kind: input, shape index: {}]
  %s5 = inlined_call_operand.vmem [shape: f32[1,32], index: 5, kind: input, shape index: {}]
  %s6 = inlined_call_operand.vmem [shape: f32[1,32], index: 6, kind: input, shape index: {}]
  %s7 = inlined_call_operand.vmem [shape: bf16[2,6,128,1], index: 7, kind: input, shape index: {}]
  %s8 = inlined_call_operand.vmem [shape: bf16[2,6,128,32], index: 8, kind: input, shape index: {}]
  %s9 = inlined_call_operand.vmem [shape: bf16[2,6,128,32], index: 9, kind: output, shape index: {}]
  %s10 = sld [smem:[#allocation0]]
  $region73: #{tpu_custom_call.1} parent=0
    _
  %s12 = ssub.s32 1, %s10
  %s13 = scalar_select 0, %s12, %s10
  %s14 = sshll.u32 %s0, 4
  %s15 = int_to_ptr.vmem [resolvable:$true] %s14
  %17 = dma.vmem_to_smem %s15, 16, [#allocation3], [#allocation2]
  %18 = dma.done [#allocation2], 16
  %19 = sfence
  loop: start=0, step=1, limit=14
  $region2: #{tpu_custom_call.1} parent=0 // loop_pre_header
    _
  $region3: #{tpu_custom_call.1} parent=0 // loop_header
    %s21 = sphi 0, %s25
    %p22 = scmp.ge.s32.totalorder %s21, 14
    %s28 = sphi 0, %s40
    %s29 = sphi 0, %s36
    %s30 = sphi 0, %s28
    %s31 = sphi 0, %s29
    %s32 = sphi 0, %s30
    %s33 = sphi 0, %s31
    %s45 = sphi 0, %s47
    %s48 = sphi 0, %s45
    %s49 = sphi 0, %s48
    %s65 = sphi 0, %s49
    %s75 = sphi 0, %s77
    %s78 = sphi 0, %s75
    %s79 = sphi 0, %s78
    %s95 = sphi 0, %s79
    %s105 = sphi 0, %s107
    %s108 = sphi 0, %s105
    %s109 = sphi 0, %s108
    %s125 = sphi 0, %s109
    %s129 = sphi 0, %s129
    %s131 = sphi 0, %s129
    %s132 = sphi 0, %s131
    %s146 = sphi 0, %s132
    %s150 = sphi 0, %s150
    %s152 = sphi 0, %s150
    %s153 = sphi 0, %s152
    %s167 = sphi 0, %s153
    %s171 = sphi 0, %s171
    %s173 = sphi 0, %s171
    %s174 = sphi 0, %s173
    %s188 = sphi 0, %s174
    %s196 = sphi 0, %s198
    %s199 = sphi 0, %s196
    %s200 = sphi 0, %s199
    %s216 = sphi 0, %s200
    %s224 = sphi 0, %s226
    %s227 = sphi 0, %s224
    %s228 = sphi 0, %s227
    %s244 = sphi 0, %s228
    %s252 = sphi 0, %s254
    %s255 = sphi 0, %s252
    %s256 = sphi 0, %s255
    %s272 = sphi 0, %s256
  $region4: #{tpu_custom_call.1} parent=0 // loop_header_branch
    %24 = sbr.rel (%p22) target = $region8
  $region5: #{tpu_custom_call.1} parent=0 // loop_body
    %s26 = ssub.s32 %s21, 1
    %s27 = ssub.s32 %s21, 2
    %s34 = sadd.s32 1, %s29
    %p35 = scmp.ge.s32.totalorder %s34, 6
    %s36 = scalar_select %p35, 0, %s34
    %s37 = sadd.s32 1, %s28
    %s38 = scalar_select %p35, %s37, %s28
    %p39 = scmp.ge.s32.totalorder %s38, 2
    %s40 = scalar_select %p39, 0, %s38
    %s41 = ssub.s32 %s28, %s40
    %s42 = ssub.s32 %s29, %s36
    %s43 = sor.u32 %s41, %s42
    %p44 = scmp.eq.s32.totalorder %s43, 0
    %s46 = sadd.s32 %s45, 1
    %s47 = scalar_select %p44, %s45, %s46
    %p50 = pneg %p44
    %p51 = scmp.eq.s32.totalorder %s21, 11
    %p52 = por %p50, %p51
    %p53 = scmp.ne.s32.totalorder %s45, %s48
    %p54 = scmp.eq.s32.totalorder %s21, 0
    %p55 = por %p53, %p54
    %p56 = scmp.ne.s32.totalorder %s45, %s48
    %p57 = scmp.eq.s32.totalorder %s26, 11
    %p58 = por %p56, %p57
    %p59 = scmp.ne.s32.totalorder %s48, %s49
    %p60 = scmp.eq.s32.totalorder %s26, 0
    %p61 = por %p59, %p60
    %p62 = scmp.ne.s32.totalorder %s48, %s49
    %p63 = scmp.eq.s32.totalorder %s27, 11
    %p64 = por %p62, %p63
    %p66 = scmp.ne.s32.totalorder %s49, %s65
    %p67 = scmp.eq.s32.totalorder %s27, 0
    %p68 = por %p66, %p67
    %s69 = sadd.s32 %s29, 1
    %s70 = sadd.s32 %s36, 1
    %s71 = ssub.s32 %s28, %s40
    %s72 = ssub.s32 %s69, %s70
    %s73 = sor.u32 %s71, %s72
    %p74 = scmp.eq.s32.totalorder %s73, 0
    %s76 = sadd.s32 %s75, 1
    %s77 = scalar_select %p74, %s75, %s76
    %p80 = pneg %p74
    %p81 = scmp.eq.s32.totalorder %s21, 11
    %p82 = por %p80, %p81
    %p83 = scmp.ne.s32.totalorder %s75, %s78
    %p84 = scmp.eq.s32.totalorder %s21, 0
    %p85 = por %p83, %p84
    %p86 = scmp.ne.s32.totalorder %s75, %s78
    %p87 = scmp.eq.s32.totalorder %s26, 11
    %p88 = por %p86, %p87
    %p89 = scmp.ne.s32.totalorder %s78, %s79
    %p90 = scmp.eq.s32.totalorder %s26, 0
    %p91 = por %p89, %p90
    %p92 = scmp.ne.s32.totalorder %s78, %s79
    %p93 = scmp.eq.s32.totalorder %s27, 11
    %p94 = por %p92, %p93
    %p96 = scmp.ne.s32.totalorder %s79, %s95
    %p97 = scmp.eq.s32.totalorder %s27, 0
    %p98 = por %p96, %p97
    %s99 = sadd.s32 %s29, 2
    %s100 = sadd.s32 %s36, 2
    %s101 = ssub.s32 %s28, %s40
    %s102 = ssub.s32 %s99, %s100
    %s103 = sor.u32 %s101, %s102
    %p104 = scmp.eq.s32.totalorder %s103, 0
    %s106 = sadd.s32 %s105, 1
    %s107 = scalar_select %p104, %s105, %s106
    %p110 = pneg %p104
    %p111 = scmp.eq.s32.totalorder %s21, 11
    %p112 = por %p110, %p111
    %p113 = scmp.ne.s32.totalorder %s105, %s108
    %p114 = scmp.eq.s32.totalorder %s21, 0
    %p115 = por %p113, %p114
    %p116 = scmp.ne.s32.totalorder %s105, %s108
    %p117 = scmp.eq.s32.totalorder %s26, 11
    %p118 = por %p116, %p117
    %p119 = scmp.ne.s32.totalorder %s108, %s109
    %p120 = scmp.eq.s32.totalorder %s26, 0
    %p121 = por %p119, %p120
    %p122 = scmp.ne.s32.totalorder %s108, %s109
    %p123 = scmp.eq.s32.totalorder %s27, 11
    %p124 = por %p122, %p123
    %p126 = scmp.ne.s32.totalorder %s109, %s125
    %p127 = scmp.eq.s32.totalorder %s27, 0
    %p128 = por %p126, %p127
    %s130 = sadd.s32 %s129, 1
    %p133 = scmp.eq.s32.totalorder %s21, 11
    %p134 = scmp.ne.s32.totalorder %s129, %s131
    %p135 = scmp.eq.s32.totalorder %s21, 0
    %p136 = por %p134, %p135
    %p137 = scmp.ne.s32.totalorder %s129, %s131
    %p138 = scmp.eq.s32.totalorder %s26, 11
    %p139 = por %p137, %p138
    %p140 = scmp.ne.s32.totalorder %s131, %s132
    %p141 = scmp.eq.s32.totalorder %s26, 0
    %p142 = por %p140, %p141
    %p143 = scmp.ne.s32.totalorder %s131, %s132
    %p144 = scmp.eq.s32.totalorder %s27, 11
    %p145 = por %p143, %p144
    %p147 = scmp.ne.s32.totalorder %s132, %s146
    %p148 = scmp.eq.s32.totalorder %s27, 0
    %p149 = por %p147, %p148
    %s151 = sadd.s32 %s150, 1
    %p154 = scmp.eq.s32.totalorder %s21, 11
    %p155 = scmp.ne.s32.totalorder %s150, %s152
    %p156 = scmp.eq.s32.totalorder %s21, 0
    %p157 = por %p155, %p156
    %p158 = scmp.ne.s32.totalorder %s150, %s152
    %p159 = scmp.eq.s32.totalorder %s26, 11
    %p160 = por %p158, %p159
    %p161 = scmp.ne.s32.totalorder %s152, %s153
    %p162 = scmp.eq.s32.totalorder %s26, 0
    %p163 = por %p161, %p162
    %p164 = scmp.ne.s32.totalorder %s152, %s153
    %p165 = scmp.eq.s32.totalorder %s27, 11
    %p166 = por %p164, %p165
    %p168 = scmp.ne.s32.totalorder %s153, %s167
    %p169 = scmp.eq.s32.totalorder %s27, 0
    %p170 = por %p168, %p169
    %s172 = sadd.s32 %s171, 1
    %p175 = scmp.eq.s32.totalorder %s21, 11
    %p176 = scmp.ne.s32.totalorder %s171, %s173
    %p177 = scmp.eq.s32.totalorder %s21, 0
    %p178 = por %p176, %p177
    %p179 = scmp.ne.s32.totalorder %s171, %s173
    %p180 = scmp.eq.s32.totalorder %s26, 11
    %p181 = por %p179, %p180
    %p182 = scmp.ne.s32.totalorder %s173, %s174
    %p183 = scmp.eq.s32.totalorder %s26, 0
    %p184 = por %p182, %p183
    %p185 = scmp.ne.s32.totalorder %s173, %s174
    %p186 = scmp.eq.s32.totalorder %s27, 11
    %p187 = por %p185, %p186
    %p189 = scmp.ne.s32.totalorder %s174, %s188
    %p190 = scmp.eq.s32.totalorder %s27, 0
    %p191 = por %p189, %p190
    %s192 = ssub.s32 %s28, %s40
    %s193 = ssub.s32 %s29, %s36
    %s194 = sor.u32 %s192, %s193
    %p195 = scmp.eq.s32.totalorder %s194, 0
    %s197 = sadd.s32 %s196, 1
    %s198 = scalar_select %p195, %s196, %s197
    %p201 = pneg %p195
    %p202 = scmp.eq.s32.totalorder %s21, 11
    %p203 = por %p201, %p202
    %p204 = scmp.ne.s32.totalorder %s196, %s199
    %p205 = scmp.eq.s32.totalorder %s21, 0
    %p206 = por %p204, %p205
    %p207 = scmp.ne.s32.totalorder %s196, %s199
    %p208 = scmp.eq.s32.totalorder %s26, 11
    %p209 = por %p207, %p208
    %p210 = scmp.ne.s32.totalorder %s199, %s200
    %p211 = scmp.eq.s32.totalorder %s26, 0
    %p212 = por %p210, %p211
    %p213 = scmp.ne.s32.totalorder %s199, %s200
    %p214 = scmp.eq.s32.totalorder %s27, 11
    %p215 = por %p213, %p214
    %p217 = scmp.ne.s32.totalorder %s200, %s216
    %p218 = scmp.eq.s32.totalorder %s27, 0
    %p219 = por %p217, %p218
    %s220 = ssub.s32 %s28, %s40
    %s221 = ssub.s32 %s29, %s36
    %s222 = sor.u32 %s220, %s221
    %p223 = scmp.eq.s32.totalorder %s222, 0
    %s225 = sadd.s32 %s224, 1
    %s226 = scalar_select %p223, %s224, %s225
    %p229 = pneg %p223
    %p230 = scmp.eq.s32.totalorder %s21, 11
    %p231 = por %p229, %p230
    %p232 = scmp.ne.s32.totalorder %s224, %s227
    %p233 = scmp.eq.s32.totalorder %s21, 0
    %p234 = por %p232, %p233
    %p235 = scmp.ne.s32.totalorder %s224, %s227
    %p236 = scmp.eq.s32.totalorder %s26, 11
    %p237 = por %p235, %p236
    %p238 = scmp.ne.s32.totalorder %s227, %s228
    %p239 = scmp.eq.s32.totalorder %s26, 0
    %p240 = por %p238, %p239
    %p241 = scmp.ne.s32.totalorder %s227, %s228
    %p242 = scmp.eq.s32.totalorder %s27, 11
    %p243 = por %p241, %p242
    %p245 = scmp.ne.s32.totalorder %s228, %s244
    %p246 = scmp.eq.s32.totalorder %s27, 0
    %p247 = por %p245, %p246
    %s248 = ssub.s32 %s28, %s40
    %s249 = ssub.s32 %s29, %s36
    %s250 = sor.u32 %s248, %s249
    %p251 = scmp.eq.s32.totalorder %s250, 0
    %s253 = sadd.s32 %s252, 1
    %s254 = scalar_select %p251, %s252, %s253
    %p257 = pneg %p251
    %p258 = scmp.eq.s32.totalorder %s21, 11
    %p259 = por %p257, %p258
    %p260 = scmp.ne.s32.totalorder %s252, %s255
    %p261 = scmp.eq.s32.totalorder %s21, 0
    %p262 = por %p260, %p261
    %p263 = scmp.ne.s32.totalorder %s252, %s255
    %p264 = scmp.eq.s32.totalorder %s26, 11
    %p265 = por %p263, %p264
    %p266 = scmp.ne.s32.totalorder %s255, %s256
    %p267 = scmp.eq.s32.totalorder %s26, 0
    %p268 = por %p266, %p267
    %p269 = scmp.ne.s32.totalorder %s255, %s256
    %p270 = scmp.eq.s32.totalorder %s27, 11
    %p271 = por %p269, %p270
    %p273 = scmp.ne.s32.totalorder %s256, %s272
    %p274 = scmp.eq.s32.totalorder %s27, 0
    %p275 = por %p273, %p274
    %p276 = scmp.le.s32.totalorder 1, %s21
    %p277 = scmp.lt.s32.totalorder %s21, 13
    %p278 = pnand %p276, %p277
    %p279 = pneg %p278
    // Predicated region
    $region9: #{tpu_custom_call.1} parent=5 // pred_check
      _
    $region10: #{tpu_custom_call.1} parent=5 // pred_check_branch
      %281 = sbr.rel (%p278) target = $region12
    $region11: #{tpu_custom_call.1} parent=5 // pred_region
      %s282 = ssub.s32 %s21, 1
      // Predicated region
      $region13: #{tpu_custom_call.1} parent=11 // pred_check
        %p283 = pneg %p142
      $region14: #{tpu_custom_call.1} parent=11 // pred_check_branch
        %285 = sbr.rel (%p283) target = $region16
      $region15: #{tpu_custom_call.1} parent=11 // pred_region
        _
      $region16: #{tpu_custom_call.1} parent=11 // pred_fallthru
        _
      // Predicated region
      $region17: #{tpu_custom_call.1} parent=11 // pred_check
        %p286 = pneg %p163
      $region18: #{tpu_custom_call.1} parent=11 // pred_check_branch
        %288 = sbr.rel (%p286) target = $region20
      $region19: #{tpu_custom_call.1} parent=11 // pred_region
        _
      $region20: #{tpu_custom_call.1} parent=11 // pred_fallthru
        _
      // Predicated region
      $region21: #{tpu_custom_call.1} parent=11 // pred_check
        %p289 = pneg %p184
      $region22: #{tpu_custom_call.1} parent=11 // pred_check_branch
        %291 = sbr.rel (%p289) target = $region24
      $region23: #{tpu_custom_call.1} parent=11 // pred_region
        _
      $region24: #{tpu_custom_call.1} parent=11 // pred_fallthru
        _
    $region12: #{tpu_custom_call.1} parent=5 // pred_fallthru
      _
    %p292 = scmp.lt.s32.totalorder %s21, 12
    // Predicated region
    $region25: #{tpu_custom_call.1} parent=5 // pred_check
      %p293 = pneg %p292
    $region26: #{tpu_custom_call.1} parent=5 // pred_check_branch
      %295 = sbr.rel (%p293) target = $region28
    $region27: #{tpu_custom_call.1} parent=5 // pred_region
      // Predicated region
      $region29: #{tpu_custom_call.1} parent=27 // pred_check
        %p296 = pneg %p55
      $region30: #{tpu_custom_call.1} parent=27 // pred_check_branch
        %298 = sbr.rel (%p296) target = $region32
      $region31: #{tpu_custom_call.1} parent=27 // pred_region
        %p299 = scmp.lt.s32.totalorder %s28, 1
        %s300 = scalar_select %p299, %s28, 1
        %p301 = scmp.lt.s32.totalorder %s29, 7
        %s302 = scalar_select %p301, %s29, 7
        %s303 = smul.addr %s302, 30
        %s304 = smul.addr %s300, 240
        %s305 = sadd.s32 %s303, %s304
        %s306 = smul.addr %s305, 4
        %s307 = scalar_lea.vmem %s1, %s306
      $region32: #{tpu_custom_call.1} parent=27 // pred_fallthru
        _
      // Predicated region
      $region33: #{tpu_custom_call.1} parent=27 // pred_check
        %p308 = pneg %p85
      $region34: #{tpu_custom_call.1} parent=27 // pred_check_branch
        %310 = sbr.rel (%p308) target = $region36
      $region35: #{tpu_custom_call.1} parent=27 // pred_region
        %s311 = sadd.s32 %s29, 1
        %p312 = scmp.lt.s32.totalorder %s28, 1
        %s313 = scalar_select %p312, %s28, 1
        %p314 = scmp.lt.s32.totalorder %s311, 7
        %s315 = scalar_select %p314, %s311, 7
        %s316 = smul.addr %s315, 30
        %s317 = smul.addr %s313, 240
        %s318 = sadd.s32 %s316, %s317
        %s319 = smul.addr %s318, 4
        %s320 = scalar_lea.vmem %s2, %s319
        %s321 = sadd.s32 %s29, 1
      $region36: #{tpu_custom_call.1} parent=27 // pred_fallthru
        _
      // Predicated region
      $region37: #{tpu_custom_call.1} parent=27 // pred_check
        %p322 = pneg %p115
      $region38: #{tpu_custom_call.1} parent=27 // pred_check_branch
        %324 = sbr.rel (%p322) target = $region40
      $region39: #{tpu_custom_call.1} parent=27 // pred_region
        %s325 = sadd.s32 %s29, 2
        %p326 = scmp.lt.s32.totalorder %s28, 1
        %s327 = scalar_select %p326, %s28, 1
        %p328 = scmp.lt.s32.totalorder %s325, 7
        %s329 = scalar_select %p328, %s325, 7
        %s330 = smul.addr %s329, 30
        %s331 = smul.addr %s327, 240
        %s332 = sadd.s32 %s330, %s331
        %s333 = smul.addr %s332, 4
        %s334 = scalar_lea.vmem %s3, %s333
        %s335 = sadd.s32 %s29, 2
      $region40: #{tpu_custom_call.1} parent=27 // pred_fallthru
        _
      // Predicated region
      $region41: #{tpu_custom_call.1} parent=27 // pred_check
        %p336 = pneg %p206
      $region42: #{tpu_custom_call.1} parent=27 // pred_check_branch
        %338 = sbr.rel (%p336) target = $region44
      $region43: #{tpu_custom_call.1} parent=27 // pred_region
        %p339 = scmp.lt.s32.totalorder %s28, 1
        %s340 = scalar_select %p339, %s28, 1
        %p341 = scmp.lt.s32.totalorder %s29, 5
        %s342 = scalar_select %p341, %s29, 5
        %s343 = smul.addr %s342, 16
        %s344 = smul.addr %s340, 96
        %s345 = sadd.s32 %s343, %s344
        %s346 = smul.addr %s345, 4
        %s347 = scalar_lea.vmem %s7, %s346
      $region44: #{tpu_custom_call.1} parent=27 // pred_fallthru
        _
      // Predicated region
      $region45: #{tpu_custom_call.1} parent=27 // pred_check
        %p348 = pneg %p234
      $region46: #{tpu_custom_call.1} parent=27 // pred_check_branch
        %350 = sbr.rel (%p348) target = $region48
      $region47: #{tpu_custom_call.1} parent=27 // pred_region
        %p351 = scmp.lt.s32.totalorder %s28, 1
        %s352 = scalar_select %p351, %s28, 1
        %p353 = scmp.lt.s32.totalorder %s29, 5
        %s354 = scalar_select %p353, %s29, 5
        %s355 = smul.addr %s354, 16
        %s356 = smul.addr %s352, 96
        %s357 = sadd.s32 %s355, %s356
        %s358 = smul.addr %s357, 4
        %s359 = scalar_lea.vmem %s8, %s358
      $region48: #{tpu_custom_call.1} parent=27 // pred_fallthru
        _
    $region28: #{tpu_custom_call.1} parent=5 // pred_fallthru
      _
    %p360 = scmp.le.s32.totalorder 1, %s21
    %p361 = scmp.lt.s32.totalorder %s21, 13
    %p362 = pnand %p360, %p361
    %p363 = pneg %p362
    // Predicated region
    $region49: #{tpu_custom_call.1} parent=5 // pred_check
      _
    $region50: #{tpu_custom_call.1} parent=5 // pred_check_branch
      %365 = sbr.rel (%p362) target = $region52
    $region51: #{tpu_custom_call.1} parent=5 // pred_region
      %s366 = ssub.s32 %s21, 1
      %p367 = scmp.lt.s32.totalorder %s30, 1
      %s368 = scalar_select %p367, %s30, 1
      %p369 = scmp.lt.s32.totalorder %s31, 7
      %s370 = scalar_select %p369, %s31, 7
      %s371 = smul.addr %s370, 30
      %s372 = smul.addr %s368, 240
      %s373 = sadd.s32 %s371, %s372
      %s374 = smul.addr %s373, 4
      %s375 = scalar_lea.vmem %s1, %s374
      %p376 = pneg %p61
      %p377 = pneg %p58
      %s378 = sadd.s32 %s31, 1
      %p379 = scmp.lt.s32.totalorder %s30, 1
      %s380 = scalar_select %p379, %s30, 1
      %p381 = scmp.lt.s32.totalorder %s378, 7
      %s382 = scalar_select %p381, %s378, 7
      %s383 = smul.addr %s382, 30
      %s384 = smul.addr %s380, 240
      %s385 = sadd.s32 %s383, %s384
      %s386 = smul.addr %s385, 4
      %s387 = scalar_lea.vmem %s2, %s386
      %p388 = pneg %p91
      %p389 = pneg %p88
      %s390 = sadd.s32 %s31, 2
      %p391 = scmp.lt.s32.totalorder %s30, 1
      %s392 = scalar_select %p391, %s30, 1
      %p393 = scmp.lt.s32.totalorder %s390, 7
      %s394 = scalar_select %p393, %s390, 7
      %s395 = smul.addr %s394, 30
      %s396 = smul.addr %s392, 240
      %s397 = sadd.s32 %s395, %s396
      %s398 = smul.addr %s397, 4
      %s399 = scalar_lea.vmem %s3, %s398
      %p400 = pneg %p121
      %p401 = pneg %p118
      %p402 = pneg %p142
      %p403 = pneg %p139
      %p404 = pneg %p163
      %p405 = pneg %p160
      %p406 = pneg %p184
      %p407 = pneg %p181
      %p408 = scmp.lt.s32.totalorder %s30, 1
      %s409 = scalar_select %p408, %s30, 1
      %p410 = scmp.lt.s32.totalorder %s31, 5
      %s411 = scalar_select %p410, %s31, 5
      %s412 = smul.addr %s411, 16
      %s413 = smul.addr %s409, 96
      %s414 = sadd.s32 %s412, %s413
      %s415 = smul.addr %s414, 4
      %s416 = scalar_lea.vmem %s7, %s415
      %p417 = pneg %p212
      %p418 = pneg %p209
      %p419 = scmp.lt.s32.totalorder %s30, 1
      %s420 = scalar_select %p419, %s30, 1
      %p421 = scmp.lt.s32.totalorder %s31, 5
      %s422 = scalar_select %p421, %s31, 5
      %s423 = smul.addr %s422, 16
      %s424 = smul.addr %s420, 96
      %s425 = sadd.s32 %s423, %s424
      %s426 = smul.addr %s425, 4
      %s427 = scalar_lea.vmem %s8, %s426
      %p428 = pneg %p240
      %p429 = pneg %p237
      %p430 = pneg %p268
      %p431 = pneg %p265
      %p432 = scmp.lt.s32.totalorder %s30, 1
      %s433 = scalar_select %p432, %s30, 1
      %p434 = scmp.lt.s32.totalorder %s31, 5
      %s435 = scalar_select %p434, %s31, 5
      %s436 = smul.addr %s435, 16
      %s437 = smul.addr %s433, 96
      %s438 = sadd.s32 %s436, %s437
      %s439 = smul.addr %s438, 4
      %s440 = scalar_lea.vmem %s9, %s439
      %p441 = scmp.lt.s32.totalorder %s30, 1
      %s442 = scalar_select %p441, %s30, 1
      %p443 = scmp.lt.s32.totalorder %s31, 7
      %s444 = scalar_select %p443, %s31, 7
      %s445 = smul.addr %s444, 30
      %s446 = smul.addr %s442, 240
      %s447 = sadd.s32 %s445, %s446
      %s448 = smul.addr %s447, 4
      %s449 = scalar_lea.vmem %s1, %s448
      %s450 = sadd.s32 %s31, 1
      %p451 = scmp.lt.s32.totalorder %s30, 1
      %s452 = scalar_select %p451, %s30, 1
      %p453 = scmp.lt.s32.totalorder %s450, 7
      %s454 = scalar_select %p453, %s450, 7
      %s455 = smul.addr %s454, 30
      %s456 = smul.addr %s452, 240
      %s457 = sadd.s32 %s455, %s456
      %s458 = smul.addr %s457, 4
      %s459 = scalar_lea.vmem %s2, %s458
      %s460 = sadd.s32 %s31, 1
      %s461 = sadd.s32 %s31, 2
      %p462 = scmp.lt.s32.totalorder %s30, 1
      %s463 = scalar_select %p462, %s30, 1
      %p464 = scmp.lt.s32.totalorder %s461, 7
      %s465 = scalar_select %p464, %s461, 7
      %s466 = smul.addr %s465, 30
      %s467 = smul.addr %s463, 240
      %s468 = sadd.s32 %s466, %s467
      %s469 = smul.addr %s468, 4
      %s470 = scalar_lea.vmem %s3, %s469
      %s471 = sadd.s32 %s31, 2
      %p472 = scmp.lt.s32.totalorder %s30, 1
      %s473 = scalar_select %p472, %s30, 1
      %p474 = scmp.lt.s32.totalorder %s31, 5
      %s475 = scalar_select %p474, %s31, 5
      %s476 = smul.addr %s475, 16
      %s477 = smul.addr %s473, 96
      %s478 = sadd.s32 %s476, %s477
      %s479 = smul.addr %s478, 4
      %s480 = scalar_lea.vmem %s7, %s479
      %p481 = scmp.lt.s32.totalorder %s30, 1
      %s482 = scalar_select %p481, %s30, 1
      %p483 = scmp.lt.s32.totalorder %s31, 5
      %s484 = scalar_select %p483, %s31, 5
      %s485 = smul.addr %s484, 16
      %s486 = smul.addr %s482, 96
      %s487 = sadd.s32 %s485, %s486
      %s488 = smul.addr %s487, 4
      %s489 = scalar_lea.vmem %s8, %s488
      %p490 = scmp.lt.s32.totalorder %s30, 1
      %s491 = scalar_select %p490, %s30, 1
      %p492 = scmp.lt.s32.totalorder %s31, 5
      %s493 = scalar_select %p492, %s31, 5
      %s494 = smul.addr %s493, 16
      %s495 = smul.addr %s491, 96
      %s496 = sadd.s32 %s494, %s495
      %s497 = smul.addr %s496, 4
      %s498 = scalar_lea.vmem %s9, %s497
      %s500 = smul.u32 %s30, 6
      %s501 = sadd.s32 %s500, %s31
      %s502 = sld [smem:[#allocation3 + %s501]]
      %p503 = scmp.gt.s32.totalorder %s502, 0
      // Predicated region
      $region53: #{tpu_custom_call.1} parent=51 // pred_check
        %p504 = pneg %p503
      $region54: #{tpu_custom_call.1} parent=51 // pred_check_branch
        %506 = sbr.rel (%p504) target = $region56
      $region55: #{tpu_custom_call.1} parent=51 // pred_region
        %v507 = vld [vmem:[%s449] sm:$0xf]
        %v508 = vld [vmem:[%s449 + $0x4] sm:$0xf]
        %v509 = vld [vmem:[%s449 + $0xc] sm:$0xf]
        %v510 = vld [vmem:[%s449 + $0x10] sm:$0xf]
        %v511 = vld [vmem:[%s449 + $0x18] sm:$0xf]
        %v512 = vld [vmem:[%s449 + $0x1c] sm:$0xf]
        %v513 = vld [vmem:[%s449 + $0x24] sm:$0xf]
        %v514 = vld [vmem:[%s449 + $0x28] sm:$0xf]
        %v515 = vld [vmem:[%s449 + $0x30] sm:$0xf]
        %v516 = vld [vmem:[%s449 + $0x34] sm:$0xf]
        %v517 = vld [vmem:[%s449 + $0x3c] sm:$0xf]
        %v518 = vld [vmem:[%s449 + $0x40] sm:$0xf]
        %v519 = vld [vmem:[%s449 + $0x48] sm:$0xf]
        %v520 = vld [vmem:[%s449 + $0x4c] sm:$0xf]
        %v521 = vld [vmem:[%s449 + $0x54] sm:$0xf]
        %v522 = vld [vmem:[%s449 + $0x58] sm:$0xf]
        %v523 = vld [vmem:[%s449 + $0x8] sm:$0x1]
        %v524 = vld [vmem:[%s449 + $0x14] sm:$0x1]
        %v525 = vld [vmem:[%s449 + $0x20] sm:$0x1]
        %v526 = vld [vmem:[%s449 + $0x2c] sm:$0x1]
        %v527 = vld [vmem:[%s449 + $0x38] sm:$0x1]
        %v528 = vld [vmem:[%s449 + $0x44] sm:$0x1]
        %v529 = vld [vmem:[%s449 + $0x50] sm:$0x1]
        %v530 = vld [vmem:[%s449 + $0x5c] sm:$0x1]
        %vm531 = vsmask.f32 3328
        %vm532 = vsmask.f32 7440
        %vm533 = vmor %vm531, %vm532
        %v535 = vshrl.u32 %v507, 16
        %v537 = vrot.slane %v535, 4
        %v538 = vshll.u32 %v507, 16
        %v540 = vrot.slane %v538, 5
        %v541 = vor.u32 %v537, %v540
        %v542 = vrot.slane %v541, 4
        %v544 = vshll.u32 %v508, 16
        %v546 = vrot.slane %v544, 5
        %v547 = vsel %vm533, %v542, %v546
        %v548 = vshrl.u32 %v508, 16
        %v550 = vrot.slane %v548, 4
        %v551 = vor.u32 %v550, %v546
        %v552 = vrot.slane %v551, 4
        %v554 = vshll.u32 %v523, 16
        %v556 = vrot.slane %v554, 5
        %v557 = vsel %vm533, %v552, %v556
        %v559 = vshrl.u32 %v509, 16
        %v561 = vrot.slane %v559, 4
        %v562 = vshll.u32 %v509, 16
        %v564 = vrot.slane %v562, 5
        %v565 = vor.u32 %v561, %v564
        %v566 = vrot.slane %v565, 4
        %v568 = vshll.u32 %v510, 16
        %v570 = vrot.slane %v568, 5
        %v571 = vsel %vm533, %v566, %v570
        %v572 = vshrl.u32 %v510, 16
        %v574 = vrot.slane %v572, 4
        %v575 = vor.u32 %v574, %v570
        %v576 = vrot.slane %v575, 4
        %v578 = vshll.u32 %v524, 16
        %v580 = vrot.slane %v578, 5
        %v581 = vsel %vm533, %v576, %v580
        %v583 = vshrl.u32 %v511, 16
        %v585 = vrot.slane %v583, 4
        %v586 = vshll.u32 %v511, 16
        %v588 = vrot.slane %v586, 5
        %v589 = vor.u32 %v585, %v588
        %v590 = vrot.slane %v589, 4
        %v592 = vshll.u32 %v512, 16
        %v594 = vrot.slane %v592, 5
        %v595 = vsel %vm533, %v590, %v594
        %v596 = vshrl.u32 %v512, 16
        %v598 = vrot.slane %v596, 4
        %v599 = vor.u32 %v598, %v594
        %v600 = vrot.slane %v599, 4
        %v602 = vshll.u32 %v525, 16
        %v604 = vrot.slane %v602, 5
        %v605 = vsel %vm533, %v600, %v604
        %v607 = vshrl.u32 %v513, 16
        %v609 = vrot.slane %v607, 4
        %v610 = vshll.u32 %v513, 16
        %v612 = vrot.slane %v610, 5
        %v613 = vor.u32 %v609, %v612
        %v614 = vrot.slane %v613, 4
        %v616 = vshll.u32 %v514, 16
        %v618 = vrot.slane %v616, 5
        %v619 = vsel %vm533, %v614, %v618
        %v620 = vshrl.u32 %v514, 16
        %v622 = vrot.slane %v620, 4
        %v623 = vor.u32 %v622, %v618
        %v624 = vrot.slane %v623, 4
        %v626 = vshll.u32 %v526, 16
        %v628 = vrot.slane %v626, 5
        %v629 = vsel %vm533, %v624, %v628
        %v631 = vshrl.u32 %v515, 16
        %v633 = vrot.slane %v631, 4
        %v634 = vshll.u32 %v515, 16
        %v636 = vrot.slane %v634, 5
        %v637 = vor.u32 %v633, %v636
        %v638 = vrot.slane %v637, 4
        %v640 = vshll.u32 %v516, 16
        %v642 = vrot.slane %v640, 5
        %v643 = vsel %vm533, %v638, %v642
        %v644 = vshrl.u32 %v516, 16
        %v646 = vrot.slane %v644, 4
        %v647 = vor.u32 %v646, %v642
        %v648 = vrot.slane %v647, 4
        %v650 = vshll.u32 %v527, 16
        %v652 = vrot.slane %v650, 5
        %v653 = vsel %vm533, %v648, %v652
        %v655 = vshrl.u32 %v517, 16
        %v657 = vrot.slane %v655, 4
        %v658 = vshll.u32 %v517, 16
        %v660 = vrot.slane %v658, 5
        %v661 = vor.u32 %v657, %v660
        %v662 = vrot.slane %v661, 4
        %v664 = vshll.u32 %v518, 16
        %v666 = vrot.slane %v664, 5
        %v667 = vsel %vm533, %v662, %v666
        %v668 = vshrl.u32 %v518, 16
        %v670 = vrot.slane %v668, 4
        %v671 = vor.u32 %v670, %v666
        %v672 = vrot.slane %v671, 4
        %v674 = vshll.u32 %v528, 16
        %v676 = vrot.slane %v674, 5
        %v677 = vsel %vm533, %v672, %v676
        %v679 = vshrl.u32 %v519, 16
        %v681 = vrot.slane %v679, 4
        %v682 = vshll.u32 %v519, 16
        %v684 = vrot.slane %v682, 5
        %v685 = vor.u32 %v681, %v684
        %v686 = vrot.slane %v685, 4
        %v688 = vshll.u32 %v520, 16
        %v690 = vrot.slane %v688, 5
        %v691 = vsel %vm533, %v686, %v690
        %v692 = vshrl.u32 %v520, 16
        %v694 = vrot.slane %v692, 4
        %v695 = vor.u32 %v694, %v690
        %v696 = vrot.slane %v695, 4
        %v698 = vshll.u32 %v529, 16
        %v700 = vrot.slane %v698, 5
        %v701 = vsel %vm533, %v696, %v700
        %v703 = vshrl.u32 %v521, 16
        %v705 = vrot.slane %v703, 4
        %v706 = vshll.u32 %v521, 16
        %v708 = vrot.slane %v706, 5
        %v709 = vor.u32 %v705, %v708
        %v710 = vrot.slane %v709, 4
        %v712 = vshll.u32 %v522, 16
        %v714 = vrot.slane %v712, 5
        %v715 = vsel %vm533, %v710, %v714
        %v716 = vshrl.u32 %v522, 16
        %v718 = vrot.slane %v716, 4
        %v719 = vor.u32 %v718, %v714
        %v720 = vrot.slane %v719, 4
        %v722 = vshll.u32 %v530, 16
        %v724 = vrot.slane %v722, 5
        %v725 = vsel %vm533, %v720, %v724
        %v726 = vld [vmem:[%s449] sm:$0xe]
        %v727 = vld [vmem:[%s449 + $0xc] sm:$0xe]
        %v728 = vld [vmem:[%s449 + $0x18] sm:$0xe]
        %v729 = vld [vmem:[%s449 + $0x24] sm:$0xe]
        %v730 = vld [vmem:[%s449 + $0x30] sm:$0xe]
        %v731 = vld [vmem:[%s449 + $0x3c] sm:$0xe]
        %v732 = vld [vmem:[%s449 + $0x48] sm:$0xe]
        %v733 = vld [vmem:[%s449 + $0x54] sm:$0xe]
        %vm758 = vcmask 1042432
        %vm759 = vcmask 1046532
        %vm760 = vmor %vm758, %vm759
        %v761 = vrot.slane %v726, 5
        %v762 = vrot.slane %v761, 4
        %v763 = vrot.slane %v508, 5
        %v764 = vsel %vm760, %v762, %v763
        %v765 = vrot.slane %v763, 4
        %v766 = vrot.slane %v523, 5
        %v767 = vsel %vm760, %v765, %v766
        %v768 = vrot.slane %v727, 5
        %v769 = vrot.slane %v768, 4
        %v770 = vrot.slane %v510, 5
        %v771 = vsel %vm760, %v769, %v770
        %v772 = vrot.slane %v770, 4
        %v773 = vrot.slane %v524, 5
        %v774 = vsel %vm760, %v772, %v773
        %v775 = vrot.slane %v728, 5
        %v776 = vrot.slane %v775, 4
        %v777 = vrot.slane %v512, 5
        %v778 = vsel %vm760, %v776, %v777
        %v779 = vrot.slane %v777, 4
        %v780 = vrot.slane %v525, 5
        %v781 = vsel %vm760, %v779, %v780
        %v782 = vrot.slane %v729, 5
        %v783 = vrot.slane %v782, 4
        %v784 = vrot.slane %v514, 5
        %v785 = vsel %vm760, %v783, %v784
        %v786 = vrot.slane %v784, 4
        %v787 = vrot.slane %v526, 5
        %v788 = vsel %vm760, %v786, %v787
        %v789 = vrot.slane %v730, 5
        %v790 = vrot.slane %v789, 4
        %v791 = vrot.slane %v516, 5
        %v792 = vsel %vm760, %v790, %v791
        %v793 = vrot.slane %v791, 4
        %v794 = vrot.slane %v527, 5
        %v795 = vsel %vm760, %v793, %v794
        %v796 = vrot.slane %v731, 5
        %v797 = vrot.slane %v796, 4
        %v798 = vrot.slane %v518, 5
        %v799 = vsel %vm760, %v797, %v798
        %v800 = vrot.slane %v798, 4
        %v801 = vrot.slane %v528, 5
        %v802 = vsel %vm760, %v800, %v801
        %v803 = vrot.slane %v732, 5
        %v804 = vrot.slane %v803, 4
        %v805 = vrot.slane %v520, 5
        %v806 = vsel %vm760, %v804, %v805
        %v807 = vrot.slane %v805, 4
        %v808 = vrot.slane %v529, 5
        %v809 = vsel %vm760, %v807, %v808
        %v810 = vrot.slane %v733, 5
        %v811 = vrot.slane %v810, 4
        %v812 = vrot.slane %v522, 5
        %v813 = vsel %vm760, %v811, %v812
        %v814 = vrot.slane %v812, 4
        %v815 = vrot.slane %v530, 5
        %v816 = vsel %vm760, %v814, %v815
        %s817 = scalar_lea.vmem %s449, 12
        %v818 = vld [vmem:[%s817] sm:$0xf]
        %v819 = vld [vmem:[%s817 + $0x4] sm:$0xf]
        %v820 = vld [vmem:[%s817 + $0xc] sm:$0xf]
        %v821 = vld [vmem:[%s817 + $0x10] sm:$0xf]
        %v822 = vld [vmem:[%s817 + $0x18] sm:$0xf]
        %v823 = vld [vmem:[%s817 + $0x1c] sm:$0xf]
        %v824 = vld [vmem:[%s817 + $0x24] sm:$0xf]
        %v825 = vld [vmem:[%s817 + $0x28] sm:$0xf]
        %v826 = vld [vmem:[%s817 + $0x30] sm:$0xf]
        %v827 = vld [vmem:[%s817 + $0x34] sm:$0xf]
        %v828 = vld [vmem:[%s817 + $0x3c] sm:$0xf]
        %v829 = vld [vmem:[%s817 + $0x40] sm:$0xf]
        %v830 = vld [vmem:[%s817 + $0x48] sm:$0xf]
        %v831 = vld [vmem:[%s817 + $0x4c] sm:$0xf]
        %v832 = vld [vmem:[%s817 + $0x54] sm:$0xf]
        %v833 = vld [vmem:[%s817 + $0x58] sm:$0xf]
        %v834 = vld [vmem:[%s817 + $0x8] sm:$0x1]
        %v835 = vld [vmem:[%s817 + $0x14] sm:$0x1]
        %v836 = vld [vmem:[%s817 + $0x20] sm:$0x1]
        %v837 = vld [vmem:[%s817 + $0x2c] sm:$0x1]
        %v838 = vld [vmem:[%s817 + $0x38] sm:$0x1]
        %v839 = vld [vmem:[%s817 + $0x44] sm:$0x1]
        %v840 = vld [vmem:[%s817 + $0x50] sm:$0x1]
        %v841 = vld [vmem:[%s817 + $0x5c] sm:$0x1]
        %v843 = vshrl.u32 %v818, 16
        %v845 = vrot.slane %v843, 4
        %v846 = vshll.u32 %v818, 16
        %v848 = vrot.slane %v846, 5
        %v849 = vor.u32 %v845, %v848
        %v850 = vrot.slane %v849, 4
        %v852 = vshll.u32 %v819, 16
        %v854 = vrot.slane %v852, 5
        %v855 = vsel %vm533, %v850, %v854
        %v856 = vshrl.u32 %v819, 16
        %v858 = vrot.slane %v856, 4
        %v859 = vor.u32 %v858, %v854
        %v860 = vrot.slane %v859, 4
        %v862 = vshll.u32 %v834, 16
        %v864 = vrot.slane %v862, 5
        %v865 = vsel %vm533, %v860, %v864
        %v867 = vshrl.u32 %v820, 16
        %v869 = vrot.slane %v867, 4
        %v870 = vshll.u32 %v820, 16
        %v872 = vrot.slane %v870, 5
        %v873 = vor.u32 %v869, %v872
        %v874 = vrot.slane %v873, 4
        %v876 = vshll.u32 %v821, 16
        %v878 = vrot.slane %v876, 5
        %v879 = vsel %vm533, %v874, %v878
        %v880 = vshrl.u32 %v821, 16
        %v882 = vrot.slane %v880, 4
        %v883 = vor.u32 %v882, %v878
        %v884 = vrot.slane %v883, 4
        %v886 = vshll.u32 %v835, 16
        %v888 = vrot.slane %v886, 5
        %v889 = vsel %vm533, %v884, %v888
        %v891 = vshrl.u32 %v822, 16
        %v893 = vrot.slane %v891, 4
        %v894 = vshll.u32 %v822, 16
        %v896 = vrot.slane %v894, 5
        %v897 = vor.u32 %v893, %v896
        %v898 = vrot.slane %v897, 4
        %v900 = vshll.u32 %v823, 16
        %v902 = vrot.slane %v900, 5
        %v903 = vsel %vm533, %v898, %v902
        %v904 = vshrl.u32 %v823, 16
        %v906 = vrot.slane %v904, 4
        %v907 = vor.u32 %v906, %v902
        %v908 = vrot.slane %v907, 4
        %v910 = vshll.u32 %v836, 16
        %v912 = vrot.slane %v910, 5
        %v913 = vsel %vm533, %v908, %v912
        %v915 = vshrl.u32 %v824, 16
        %v917 = vrot.slane %v915, 4
        %v918 = vshll.u32 %v824, 16
        %v920 = vrot.slane %v918, 5
        %v921 = vor.u32 %v917, %v920
        %v922 = vrot.slane %v921, 4
        %v924 = vshll.u32 %v825, 16
        %v926 = vrot.slane %v924, 5
        %v927 = vsel %vm533, %v922, %v926
        %v928 = vshrl.u32 %v825, 16
        %v930 = vrot.slane %v928, 4
        %v931 = vor.u32 %v930, %v926
        %v932 = vrot.slane %v931, 4
        %v934 = vshll.u32 %v837, 16
        %v936 = vrot.slane %v934, 5
        %v937 = vsel %vm533, %v932, %v936
        %v939 = vshrl.u32 %v826, 16
        %v941 = vrot.slane %v939, 4
        %v942 = vshll.u32 %v826, 16
        %v944 = vrot.slane %v942, 5
        %v945 = vor.u32 %v941, %v944
        %v946 = vrot.slane %v945, 4
        %v948 = vshll.u32 %v827, 16
        %v950 = vrot.slane %v948, 5
        %v951 = vsel %vm533, %v946, %v950
        %v952 = vshrl.u32 %v827, 16
        %v954 = vrot.slane %v952, 4
        %v955 = vor.u32 %v954, %v950
        %v956 = vrot.slane %v955, 4
        %v958 = vshll.u32 %v838, 16
        %v960 = vrot.slane %v958, 5
        %v961 = vsel %vm533, %v956, %v960
        %v963 = vshrl.u32 %v828, 16
        %v965 = vrot.slane %v963, 4
        %v966 = vshll.u32 %v828, 16
        %v968 = vrot.slane %v966, 5
        %v969 = vor.u32 %v965, %v968
        %v970 = vrot.slane %v969, 4
        %v972 = vshll.u32 %v829, 16
        %v974 = vrot.slane %v972, 5
        %v975 = vsel %vm533, %v970, %v974
        %v976 = vshrl.u32 %v829, 16
        %v978 = vrot.slane %v976, 4
        %v979 = vor.u32 %v978, %v974
        %v980 = vrot.slane %v979, 4
        %v982 = vshll.u32 %v839, 16
        %v984 = vrot.slane %v982, 5
        %v985 = vsel %vm533, %v980, %v984
        %v987 = vshrl.u32 %v830, 16
        %v989 = vrot.slane %v987, 4
        %v990 = vshll.u32 %v830, 16
        %v992 = vrot.slane %v990, 5
        %v993 = vor.u32 %v989, %v992
        %v994 = vrot.slane %v993, 4
        %v996 = vshll.u32 %v831, 16
        %v998 = vrot.slane %v996, 5
        %v999 = vsel %vm533, %v994, %v998
        %v1000 = vshrl.u32 %v831, 16
        %v1002 = vrot.slane %v1000, 4
        %v1003 = vor.u32 %v1002, %v998
        %v1004 = vrot.slane %v1003, 4
        %v1006 = vshll.u32 %v840, 16
        %v1008 = vrot.slane %v1006, 5
        %v1009 = vsel %vm533, %v1004, %v1008
        %v1011 = vshrl.u32 %v832, 16
        %v1013 = vrot.slane %v1011, 4
        %v1014 = vshll.u32 %v832, 16
        %v1016 = vrot.slane %v1014, 5
        %v1017 = vor.u32 %v1013, %v1016
        %v1018 = vrot.slane %v1017, 4
        %v1020 = vshll.u32 %v833, 16
        %v1022 = vrot.slane %v1020, 5
        %v1023 = vsel %vm533, %v1018, %v1022
        %v1024 = vshrl.u32 %v833, 16
        %v1026 = vrot.slane %v1024, 4
        %v1027 = vor.u32 %v1026, %v1022
        %v1028 = vrot.slane %v1027, 4
        %v1030 = vshll.u32 %v841, 16
        %v1032 = vrot.slane %v1030, 5
        %v1033 = vsel %vm533, %v1028, %v1032
        %v1034 = vld [vmem:[%s817] sm:$0xe]
        %v1035 = vld [vmem:[%s817 + $0xc] sm:$0xe]
        %v1036 = vld [vmem:[%s817 + $0x18] sm:$0xe]
        %v1037 = vld [vmem:[%s817 + $0x24] sm:$0xe]
        %v1038 = vld [vmem:[%s817 + $0x30] sm:$0xe]
        %v1039 = vld [vmem:[%s817 + $0x3c] sm:$0xe]
        %v1040 = vld [vmem:[%s817 + $0x48] sm:$0xe]
        %v1041 = vld [vmem:[%s817 + $0x54] sm:$0xe]
        %v1066 = vrot.slane %v1034, 5
        %v1067 = vrot.slane %v1066, 4
        %v1068 = vrot.slane %v819, 5
        %v1069 = vsel %vm760, %v1067, %v1068
        %v1070 = vrot.slane %v1068, 4
        %v1071 = vrot.slane %v834, 5
        %v1072 = vsel %vm760, %v1070, %v1071
        %v1073 = vrot.slane %v1035, 5
        %v1074 = vrot.slane %v1073, 4
        %v1075 = vrot.slane %v821, 5
        %v1076 = vsel %vm760, %v1074, %v1075
        %v1077 = vrot.slane %v1075, 4
        %v1078 = vrot.slane %v835, 5
        %v1079 = vsel %vm760, %v1077, %v1078
        %v1080 = vrot.slane %v1036, 5
        %v1081 = vrot.slane %v1080, 4
        %v1082 = vrot.slane %v823, 5
        %v1083 = vsel %vm760, %v1081, %v1082
        %v1084 = vrot.slane %v1082, 4
        %v1085 = vrot.slane %v836, 5
        %v1086 = vsel %vm760, %v1084, %v1085
        %v1087 = vrot.slane %v1037, 5
        %v1088 = vrot.slane %v1087, 4
        %v1089 = vrot.slane %v825, 5
        %v1090 = vsel %vm760, %v1088, %v1089
        %v1091 = vrot.slane %v1089, 4
        %v1092 = vrot.slane %v837, 5
        %v1093 = vsel %vm760, %v1091, %v1092
        %v1094 = vrot.slane %v1038, 5
        %v1095 = vrot.slane %v1094, 4
        %v1096 = vrot.slane %v827, 5
        %v1097 = vsel %vm760, %v1095, %v1096
        %v1098 = vrot.slane %v1096, 4
        %v1099 = vrot.slane %v838, 5
        %v1100 = vsel %vm760, %v1098, %v1099
        %v1101 = vrot.slane %v1039, 5
        %v1102 = vrot.slane %v1101, 4
        %v1103 = vrot.slane %v829, 5
        %v1104 = vsel %vm760, %v1102, %v1103
        %v1105 = vrot.slane %v1103, 4
        %v1106 = vrot.slane %v839, 5
        %v1107 = vsel %vm760, %v1105, %v1106
        %v1108 = vrot.slane %v1040, 5
        %v1109 = vrot.slane %v1108, 4
        %v1110 = vrot.slane %v831, 5
        %v1111 = vsel %vm760, %v1109, %v1110
        %v1112 = vrot.slane %v1110, 4
        %v1113 = vrot.slane %v840, 5
        %v1114 = vsel %vm760, %v1112, %v1113
        %v1115 = vrot.slane %v1041, 5
        %v1116 = vrot.slane %v1115, 4
        %v1117 = vrot.slane %v833, 5
        %v1118 = vsel %vm760, %v1116, %v1117
        %v1119 = vrot.slane %v1117, 4
        %v1120 = vrot.slane %v841, 5
        %v1121 = vsel %vm760, %v1119, %v1120
        %s1122 = scalar_lea.vmem %s449, 24
        %v1123 = vld [vmem:[%s1122] sm:$0xf]
        %v1124 = vld [vmem:[%s1122 + $0x4] sm:$0xf]
        %v1125 = vld [vmem:[%s1122 + $0xc] sm:$0xf]
        %v1126 = vld [vmem:[%s1122 + $0x10] sm:$0xf]
        %v1127 = vld [vmem:[%s1122 + $0x18] sm:$0xf]
        %v1128 = vld [vmem:[%s1122 + $0x1c] sm:$0xf]
        %v1129 = vld [vmem:[%s1122 + $0x24] sm:$0xf]
        %v1130 = vld [vmem:[%s1122 + $0x28] sm:$0xf]
        %v1131 = vld [vmem:[%s1122 + $0x30] sm:$0xf]
        %v1132 = vld [vmem:[%s1122 + $0x34] sm:$0xf]
        %v1133 = vld [vmem:[%s1122 + $0x3c] sm:$0xf]
        %v1134 = vld [vmem:[%s1122 + $0x40] sm:$0xf]
        %v1135 = vld [vmem:[%s1122 + $0x48] sm:$0xf]
        %v1136 = vld [vmem:[%s1122 + $0x4c] sm:$0xf]
        %v1137 = vld [vmem:[%s1122 + $0x54] sm:$0xf]
        %v1138 = vld [vmem:[%s1122 + $0x58] sm:$0xf]
        %v1139 = vld [vmem:[%s1122 + $0x8] sm:$0x1]
        %v1140 = vld [vmem:[%s1122 + $0x14] sm:$0x1]
        %v1141 = vld [vmem:[%s1122 + $0x20] sm:$0x1]
        %v1142 = vld [vmem:[%s1122 + $0x2c] sm:$0x1]
        %v1143 = vld [vmem:[%s1122 + $0x38] sm:$0x1]
        %v1144 = vld [vmem:[%s1122 + $0x44] sm:$0x1]
        %v1145 = vld [vmem:[%s1122 + $0x50] sm:$0x1]
        %v1146 = vld [vmem:[%s1122 + $0x5c] sm:$0x1]
        %v1148 = vshrl.u32 %v1123, 16
        %v1150 = vrot.slane %v1148, 4
        %v1151 = vshll.u32 %v1123, 16
        %v1153 = vrot.slane %v1151, 5
        %v1154 = vor.u32 %v1150, %v1153
        %v1155 = vrot.slane %v1154, 4
        %v1157 = vshll.u32 %v1124, 16
        %v1159 = vrot.slane %v1157, 5
        %v1160 = vsel %vm533, %v1155, %v1159
        %v1161 = vshrl.u32 %v1124, 16
        %v1163 = vrot.slane %v1161, 4
        %v1164 = vor.u32 %v1163, %v1159
        %v1165 = vrot.slane %v1164, 4
        %v1167 = vshll.u32 %v1139, 16
        %v1169 = vrot.slane %v1167, 5
        %v1170 = vsel %vm533, %v1165, %v1169
        %v1172 = vshrl.u32 %v1125, 16
        %v1174 = vrot.slane %v1172, 4
        %v1175 = vshll.u32 %v1125, 16
        %v1177 = vrot.slane %v1175, 5
        %v1178 = vor.u32 %v1174, %v1177
        %v1179 = vrot.slane %v1178, 4
        %v1181 = vshll.u32 %v1126, 16
        %v1183 = vrot.slane %v1181, 5
        %v1184 = vsel %vm533, %v1179, %v1183
        %v1185 = vshrl.u32 %v1126, 16
        %v1187 = vrot.slane %v1185, 4
        %v1188 = vor.u32 %v1187, %v1183
        %v1189 = vrot.slane %v1188, 4
        %v1191 = vshll.u32 %v1140, 16
        %v1193 = vrot.slane %v1191, 5
        %v1194 = vsel %vm533, %v1189, %v1193
        %v1196 = vshrl.u32 %v1127, 16
        %v1198 = vrot.slane %v1196, 4
        %v1199 = vshll.u32 %v1127, 16
        %v1201 = vrot.slane %v1199, 5
        %v1202 = vor.u32 %v1198, %v1201
        %v1203 = vrot.slane %v1202, 4
        %v1205 = vshll.u32 %v1128, 16
        %v1207 = vrot.slane %v1205, 5
        %v1208 = vsel %vm533, %v1203, %v1207
        %v1209 = vshrl.u32 %v1128, 16
        %v1211 = vrot.slane %v1209, 4
        %v1212 = vor.u32 %v1211, %v1207
        %v1213 = vrot.slane %v1212, 4
        %v1215 = vshll.u32 %v1141, 16
        %v1217 = vrot.slane %v1215, 5
        %v1218 = vsel %vm533, %v1213, %v1217
        %v1220 = vshrl.u32 %v1129, 16
        %v1222 = vrot.slane %v1220, 4
        %v1223 = vshll.u32 %v1129, 16
        %v1225 = vrot.slane %v1223, 5
        %v1226 = vor.u32 %v1222, %v1225
        %v1227 = vrot.slane %v1226, 4
        %v1229 = vshll.u32 %v1130, 16
        %v1231 = vrot.slane %v1229, 5
        %v1232 = vsel %vm533, %v1227, %v1231
        %v1233 = vshrl.u32 %v1130, 16
        %v1235 = vrot.slane %v1233, 4
        %v1236 = vor.u32 %v1235, %v1231
        %v1237 = vrot.slane %v1236, 4
        %v1239 = vshll.u32 %v1142, 16
        %v1241 = vrot.slane %v1239, 5
        %v1242 = vsel %vm533, %v1237, %v1241
        %v1244 = vshrl.u32 %v1131, 16
        %v1246 = vrot.slane %v1244, 4
        %v1247 = vshll.u32 %v1131, 16
        %v1249 = vrot.slane %v1247, 5
        %v1250 = vor.u32 %v1246, %v1249
        %v1251 = vrot.slane %v1250, 4
        %v1253 = vshll.u32 %v1132, 16
        %v1255 = vrot.slane %v1253, 5
        %v1256 = vsel %vm533, %v1251, %v1255
        %v1257 = vshrl.u32 %v1132, 16
        %v1259 = vrot.slane %v1257, 4
        %v1260 = vor.u32 %v1259, %v1255
        %v1261 = vrot.slane %v1260, 4
        %v1263 = vshll.u32 %v1143, 16
        %v1265 = vrot.slane %v1263, 5
        %v1266 = vsel %vm533, %v1261, %v1265
        %v1268 = vshrl.u32 %v1133, 16
        %v1270 = vrot.slane %v1268, 4
        %v1271 = vshll.u32 %v1133, 16
        %v1273 = vrot.slane %v1271, 5
        %v1274 = vor.u32 %v1270, %v1273
        %v1275 = vrot.slane %v1274, 4
        %v1277 = vshll.u32 %v1134, 16
        %v1279 = vrot.slane %v1277, 5
        %v1280 = vsel %vm533, %v1275, %v1279
        %v1281 = vshrl.u32 %v1134, 16
        %v1283 = vrot.slane %v1281, 4
        %v1284 = vor.u32 %v1283, %v1279
        %v1285 = vrot.slane %v1284, 4
        %v1287 = vshll.u32 %v1144, 16
        %v1289 = vrot.slane %v1287, 5
        %v1290 = vsel %vm533, %v1285, %v1289
        %v1292 = vshrl.u32 %v1135, 16
        %v1294 = vrot.slane %v1292, 4
        %v1295 = vshll.u32 %v1135, 16
        %v1297 = vrot.slane %v1295, 5
        %v1298 = vor.u32 %v1294, %v1297
        %v1299 = vrot.slane %v1298, 4
        %v1301 = vshll.u32 %v1136, 16
        %v1303 = vrot.slane %v1301, 5
        %v1304 = vsel %vm533, %v1299, %v1303
        %v1305 = vshrl.u32 %v1136, 16
        %v1307 = vrot.slane %v1305, 4
        %v1308 = vor.u32 %v1307, %v1303
        %v1309 = vrot.slane %v1308, 4
        %v1311 = vshll.u32 %v1145, 16
        %v1313 = vrot.slane %v1311, 5
        %v1314 = vsel %vm533, %v1309, %v1313
        %v1316 = vshrl.u32 %v1137, 16
        %v1318 = vrot.slane %v1316, 4
        %v1319 = vshll.u32 %v1137, 16
        %v1321 = vrot.slane %v1319, 5
        %v1322 = vor.u32 %v1318, %v1321
        %v1323 = vrot.slane %v1322, 4
        %v1325 = vshll.u32 %v1138, 16
        %v1327 = vrot.slane %v1325, 5
        %v1328 = vsel %vm533, %v1323, %v1327
        %v1329 = vshrl.u32 %v1138, 16
        %v1331 = vrot.slane %v1329, 4
        %v1332 = vor.u32 %v1331, %v1327
        %v1333 = vrot.slane %v1332, 4
        %v1335 = vshll.u32 %v1146, 16
        %v1337 = vrot.slane %v1335, 5
        %v1338 = vsel %vm533, %v1333, %v1337
        %v1339 = vld [vmem:[%s1122] sm:$0xe]
        %v1340 = vld [vmem:[%s1122 + $0xc] sm:$0xe]
        %v1341 = vld [vmem:[%s1122 + $0x18] sm:$0xe]
        %v1342 = vld [vmem:[%s1122 + $0x24] sm:$0xe]
        %v1343 = vld [vmem:[%s1122 + $0x30] sm:$0xe]
        %v1344 = vld [vmem:[%s1122 + $0x3c] sm:$0xe]
        %v1345 = vld [vmem:[%s1122 + $0x48] sm:$0xe]
        %v1346 = vld [vmem:[%s1122 + $0x54] sm:$0xe]
        %v1371 = vrot.slane %v1339, 5
        %v1372 = vrot.slane %v1371, 4
        %v1373 = vrot.slane %v1124, 5
        %v1374 = vsel %vm760, %v1372, %v1373
        %v1375 = vrot.slane %v1373, 4
        %v1376 = vrot.slane %v1139, 5
        %v1377 = vsel %vm760, %v1375, %v1376
        %v1378 = vrot.slane %v1340, 5
        %v1379 = vrot.slane %v1378, 4
        %v1380 = vrot.slane %v1126, 5
        %v1381 = vsel %vm760, %v1379, %v1380
        %v1382 = vrot.slane %v1380, 4
        %v1383 = vrot.slane %v1140, 5
        %v1384 = vsel %vm760, %v1382, %v1383
        %v1385 = vrot.slane %v1341, 5
        %v1386 = vrot.slane %v1385, 4
        %v1387 = vrot.slane %v1128, 5
        %v1388 = vsel %vm760, %v1386, %v1387
        %v1389 = vrot.slane %v1387, 4
        %v1390 = vrot.slane %v1141, 5
        %v1391 = vsel %vm760, %v1389, %v1390
        %v1392 = vrot.slane %v1342, 5
        %v1393 = vrot.slane %v1392, 4
        %v1394 = vrot.slane %v1130, 5
        %v1395 = vsel %vm760, %v1393, %v1394
        %v1396 = vrot.slane %v1394, 4
        %v1397 = vrot.slane %v1142, 5
        %v1398 = vsel %vm760, %v1396, %v1397
        %v1399 = vrot.slane %v1343, 5
        %v1400 = vrot.slane %v1399, 4
        %v1401 = vrot.slane %v1132, 5
        %v1402 = vsel %vm760, %v1400, %v1401
        %v1403 = vrot.slane %v1401, 4
        %v1404 = vrot.slane %v1143, 5
        %v1405 = vsel %vm760, %v1403, %v1404
        %v1406 = vrot.slane %v1344, 5
        %v1407 = vrot.slane %v1406, 4
        %v1408 = vrot.slane %v1134, 5
        %v1409 = vsel %vm760, %v1407, %v1408
        %v1410 = vrot.slane %v1408, 4
        %v1411 = vrot.slane %v1144, 5
        %v1412 = vsel %vm760, %v1410, %v1411
        %v1413 = vrot.slane %v1345, 5
        %v1414 = vrot.slane %v1413, 4
        %v1415 = vrot.slane %v1136, 5
        %v1416 = vsel %vm760, %v1414, %v1415
        %v1417 = vrot.slane %v1415, 4
        %v1418 = vrot.slane %v1145, 5
        %v1419 = vsel %vm760, %v1417, %v1418
        %v1420 = vrot.slane %v1346, 5
        %v1421 = vrot.slane %v1420, 4
        %v1422 = vrot.slane %v1138, 5
        %v1423 = vsel %vm760, %v1421, %v1422
        %v1424 = vrot.slane %v1422, 4
        %v1425 = vrot.slane %v1146, 5
        %v1426 = vsel %vm760, %v1424, %v1425
        %v1427 = vld [vmem:[%s459] sm:$0xf]
        %v1428 = vld [vmem:[%s459 + $0x4] sm:$0xf]
        %v1429 = vld [vmem:[%s459 + $0xc] sm:$0xf]
        %v1430 = vld [vmem:[%s459 + $0x10] sm:$0xf]
        %v1431 = vld [vmem:[%s459 + $0x18] sm:$0xf]
        %v1432 = vld [vmem:[%s459 + $0x1c] sm:$0xf]
        %v1433 = vld [vmem:[%s459 + $0x24] sm:$0xf]
        %v1434 = vld [vmem:[%s459 + $0x28] sm:$0xf]
        %v1435 = vld [vmem:[%s459 + $0x30] sm:$0xf]
        %v1436 = vld [vmem:[%s459 + $0x34] sm:$0xf]
        %v1437 = vld [vmem:[%s459 + $0x3c] sm:$0xf]
        %v1438 = vld [vmem:[%s459 + $0x40] sm:$0xf]
        %v1439 = vld [vmem:[%s459 + $0x48] sm:$0xf]
        %v1440 = vld [vmem:[%s459 + $0x4c] sm:$0xf]
        %v1441 = vld [vmem:[%s459 + $0x54] sm:$0xf]
        %v1442 = vld [vmem:[%s459 + $0x58] sm:$0xf]
        %v1443 = vld [vmem:[%s459 + $0x8] sm:$0x1]
        %v1444 = vld [vmem:[%s459 + $0x14] sm:$0x1]
        %v1445 = vld [vmem:[%s459 + $0x20] sm:$0x1]
        %v1446 = vld [vmem:[%s459 + $0x2c] sm:$0x1]
        %v1447 = vld [vmem:[%s459 + $0x38] sm:$0x1]
        %v1448 = vld [vmem:[%s459 + $0x44] sm:$0x1]
        %v1449 = vld [vmem:[%s459 + $0x50] sm:$0x1]
        %v1450 = vld [vmem:[%s459 + $0x5c] sm:$0x1]
        %v1452 = vshrl.u32 %v1427, 16
        %v1454 = vrot.slane %v1452, 4
        %v1455 = vshll.u32 %v1427, 16
        %v1457 = vrot.slane %v1455, 5
        %v1458 = vor.u32 %v1454, %v1457
        %v1459 = vrot.slane %v1458, 4
        %v1461 = vshll.u32 %v1428, 16
        %v1463 = vrot.slane %v1461, 5
        %v1464 = vsel %vm533, %v1459, %v1463
        %v1465 = vshrl.u32 %v1428, 16
        %v1467 = vrot.slane %v1465, 4
        %v1468 = vor.u32 %v1467, %v1463
        %v1469 = vrot.slane %v1468, 4
        %v1471 = vshll.u32 %v1443, 16
        %v1473 = vrot.slane %v1471, 5
        %v1474 = vsel %vm533, %v1469, %v1473
        %v1476 = vshrl.u32 %v1429, 16
        %v1478 = vrot.slane %v1476, 4
        %v1479 = vshll.u32 %v1429, 16
        %v1481 = vrot.slane %v1479, 5
        %v1482 = vor.u32 %v1478, %v1481
        %v1483 = vrot.slane %v1482, 4
        %v1485 = vshll.u32 %v1430, 16
        %v1487 = vrot.slane %v1485, 5
        %v1488 = vsel %vm533, %v1483, %v1487
        %v1489 = vshrl.u32 %v1430, 16
        %v1491 = vrot.slane %v1489, 4
        %v1492 = vor.u32 %v1491, %v1487
        %v1493 = vrot.slane %v1492, 4
        %v1495 = vshll.u32 %v1444, 16
        %v1497 = vrot.slane %v1495, 5
        %v1498 = vsel %vm533, %v1493, %v1497
        %v1500 = vshrl.u32 %v1431, 16
        %v1502 = vrot.slane %v1500, 4
        %v1503 = vshll.u32 %v1431, 16
        %v1505 = vrot.slane %v1503, 5
        %v1506 = vor.u32 %v1502, %v1505
        %v1507 = vrot.slane %v1506, 4
        %v1509 = vshll.u32 %v1432, 16
        %v1511 = vrot.slane %v1509, 5
        %v1512 = vsel %vm533, %v1507, %v1511
        %v1513 = vshrl.u32 %v1432, 16
        %v1515 = vrot.slane %v1513, 4
        %v1516 = vor.u32 %v1515, %v1511
        %v1517 = vrot.slane %v1516, 4
        %v1519 = vshll.u32 %v1445, 16
        %v1521 = vrot.slane %v1519, 5
        %v1522 = vsel %vm533, %v1517, %v1521
        %v1524 = vshrl.u32 %v1433, 16
        %v1526 = vrot.slane %v1524, 4
        %v1527 = vshll.u32 %v1433, 16
        %v1529 = vrot.slane %v1527, 5
        %v1530 = vor.u32 %v1526, %v1529
        %v1531 = vrot.slane %v1530, 4
        %v1533 = vshll.u32 %v1434, 16
        %v1535 = vrot.slane %v1533, 5
        %v1536 = vsel %vm533, %v1531, %v1535
        %v1537 = vshrl.u32 %v1434, 16
        %v1539 = vrot.slane %v1537, 4
        %v1540 = vor.u32 %v1539, %v1535
        %v1541 = vrot.slane %v1540, 4
        %v1543 = vshll.u32 %v1446, 16
        %v1545 = vrot.slane %v1543, 5
        %v1546 = vsel %vm533, %v1541, %v1545
        %v1548 = vshrl.u32 %v1435, 16
        %v1550 = vrot.slane %v1548, 4
        %v1551 = vshll.u32 %v1435, 16
        %v1553 = vrot.slane %v1551, 5
        %v1554 = vor.u32 %v1550, %v1553
        %v1555 = vrot.slane %v1554, 4
        %v1557 = vshll.u32 %v1436, 16
        %v1559 = vrot.slane %v1557, 5
        %v1560 = vsel %vm533, %v1555, %v1559
        %v1561 = vshrl.u32 %v1436, 16
        %v1563 = vrot.slane %v1561, 4
        %v1564 = vor.u32 %v1563, %v1559
        %v1565 = vrot.slane %v1564, 4
        %v1567 = vshll.u32 %v1447, 16
        %v1569 = vrot.slane %v1567, 5
        %v1570 = vsel %vm533, %v1565, %v1569
        %v1572 = vshrl.u32 %v1437, 16
        %v1574 = vrot.slane %v1572, 4
        %v1575 = vshll.u32 %v1437, 16
        %v1577 = vrot.slane %v1575, 5
        %v1578 = vor.u32 %v1574, %v1577
        %v1579 = vrot.slane %v1578, 4
        %v1581 = vshll.u32 %v1438, 16
        %v1583 = vrot.slane %v1581, 5
        %v1584 = vsel %vm533, %v1579, %v1583
        %v1585 = vshrl.u32 %v1438, 16
        %v1587 = vrot.slane %v1585, 4
        %v1588 = vor.u32 %v1587, %v1583
        %v1589 = vrot.slane %v1588, 4
        %v1591 = vshll.u32 %v1448, 16
        %v1593 = vrot.slane %v1591, 5
        %v1594 = vsel %vm533, %v1589, %v1593
        %v1596 = vshrl.u32 %v1439, 16
        %v1598 = vrot.slane %v1596, 4
        %v1599 = vshll.u32 %v1439, 16
        %v1601 = vrot.slane %v1599, 5
        %v1602 = vor.u32 %v1598, %v1601
        %v1603 = vrot.slane %v1602, 4
        %v1605 = vshll.u32 %v1440, 16
        %v1607 = vrot.slane %v1605, 5
        %v1608 = vsel %vm533, %v1603, %v1607
        %v1609 = vshrl.u32 %v1440, 16
        %v1611 = vrot.slane %v1609, 4
        %v1612 = vor.u32 %v1611, %v1607
        %v1613 = vrot.slane %v1612, 4
        %v1615 = vshll.u32 %v1449, 16
        %v1617 = vrot.slane %v1615, 5
        %v1618 = vsel %vm533, %v1613, %v1617
        %v1620 = vshrl.u32 %v1441, 16
        %v1622 = vrot.slane %v1620, 4
        %v1623 = vshll.u32 %v1441, 16
        %v1625 = vrot.slane %v1623, 5
        %v1626 = vor.u32 %v1622, %v1625
        %v1627 = vrot.slane %v1626, 4
        %v1629 = vshll.u32 %v1442, 16
        %v1631 = vrot.slane %v1629, 5
        %v1632 = vsel %vm533, %v1627, %v1631
        %v1633 = vshrl.u32 %v1442, 16
        %v1635 = vrot.slane %v1633, 4
        %v1636 = vor.u32 %v1635, %v1631
        %v1637 = vrot.slane %v1636, 4
        %v1639 = vshll.u32 %v1450, 16
        %v1641 = vrot.slane %v1639, 5
        %v1642 = vsel %vm533, %v1637, %v1641
        %v1643 = vld [vmem:[%s459] sm:$0xe]
        %v1644 = vld [vmem:[%s459 + $0xc] sm:$0xe]
        %v1645 = vld [vmem:[%s459 + $0x18] sm:$0xe]
        %v1646 = vld [vmem:[%s459 + $0x24] sm:$0xe]
        %v1647 = vld [vmem:[%s459 + $0x30] sm:$0xe]
        %v1648 = vld [vmem:[%s459 + $0x3c] sm:$0xe]
        %v1649 = vld [vmem:[%s459 + $0x48] sm:$0xe]
        %v1650 = vld [vmem:[%s459 + $0x54] sm:$0xe]
        %v1675 = vrot.slane %v1643, 5
        %v1676 = vrot.slane %v1675, 4
        %v1677 = vrot.slane %v1428, 5
        %v1678 = vsel %vm760, %v1676, %v1677
        %v1679 = vrot.slane %v1677, 4
        %v1680 = vrot.slane %v1443, 5
        %v1681 = vsel %vm760, %v1679, %v1680
        %v1682 = vrot.slane %v1644, 5
        %v1683 = vrot.slane %v1682, 4
        %v1684 = vrot.slane %v1430, 5
        %v1685 = vsel %vm760, %v1683, %v1684
        %v1686 = vrot.slane %v1684, 4
        %v1687 = vrot.slane %v1444, 5
        %v1688 = vsel %vm760, %v1686, %v1687
        %v1689 = vrot.slane %v1645, 5
        %v1690 = vrot.slane %v1689, 4
        %v1691 = vrot.slane %v1432, 5
        %v1692 = vsel %vm760, %v1690, %v1691
        %v1693 = vrot.slane %v1691, 4
        %v1694 = vrot.slane %v1445, 5
        %v1695 = vsel %vm760, %v1693, %v1694
        %v1696 = vrot.slane %v1646, 5
        %v1697 = vrot.slane %v1696, 4
        %v1698 = vrot.slane %v1434, 5
        %v1699 = vsel %vm760, %v1697, %v1698
        %v1700 = vrot.slane %v1698, 4
        %v1701 = vrot.slane %v1446, 5
        %v1702 = vsel %vm760, %v1700, %v1701
        %v1703 = vrot.slane %v1647, 5
        %v1704 = vrot.slane %v1703, 4
        %v1705 = vrot.slane %v1436, 5
        %v1706 = vsel %vm760, %v1704, %v1705
        %v1707 = vrot.slane %v1705, 4
        %v1708 = vrot.slane %v1447, 5
        %v1709 = vsel %vm760, %v1707, %v1708
        %v1710 = vrot.slane %v1648, 5
        %v1711 = vrot.slane %v1710, 4
        %v1712 = vrot.slane %v1438, 5
        %v1713 = vsel %vm760, %v1711, %v1712
        %v1714 = vrot.slane %v1712, 4
        %v1715 = vrot.slane %v1448, 5
        %v1716 = vsel %vm760, %v1714, %v1715
        %v1717 = vrot.slane %v1649, 5
        %v1718 = vrot.slane %v1717, 4
        %v1719 = vrot.slane %v1440, 5
        %v1720 = vsel %vm760, %v1718, %v1719
        %v1721 = vrot.slane %v1719, 4
        %v1722 = vrot.slane %v1449, 5
        %v1723 = vsel %vm760, %v1721, %v1722
        %v1724 = vrot.slane %v1650, 5
        %v1725 = vrot.slane %v1724, 4
        %v1726 = vrot.slane %v1442, 5
        %v1727 = vsel %vm760, %v1725, %v1726
        %v1728 = vrot.slane %v1726, 4
        %v1729 = vrot.slane %v1450, 5
        %v1730 = vsel %vm760, %v1728, %v1729
        %s1731 = scalar_lea.vmem %s459, 12
        %v1732 = vld [vmem:[%s1731] sm:$0xf]
        %v1733 = vld [vmem:[%s1731 + $0x4] sm:$0xf]
        %v1734 = vld [vmem:[%s1731 + $0xc] sm:$0xf]
        %v1735 = vld [vmem:[%s1731 + $0x10] sm:$0xf]
        %v1736 = vld [vmem:[%s1731 + $0x18] sm:$0xf]
        %v1737 = vld [vmem:[%s1731 + $0x1c] sm:$0xf]
        %v1738 = vld [vmem:[%s1731 + $0x24] sm:$0xf]
        %v1739 = vld [vmem:[%s1731 + $0x28] sm:$0xf]
        %v1740 = vld [vmem:[%s1731 + $0x30] sm:$0xf]
        %v1741 = vld [vmem:[%s1731 + $0x34] sm:$0xf]
        %v1742 = vld [vmem:[%s1731 + $0x3c] sm:$0xf]
        %v1743 = vld [vmem:[%s1731 + $0x40] sm:$0xf]
        %v1744 = vld [vmem:[%s1731 + $0x48] sm:$0xf]
        %v1745 = vld [vmem:[%s1731 + $0x4c] sm:$0xf]
        %v1746 = vld [vmem:[%s1731 + $0x54] sm:$0xf]
        %v1747 = vld [vmem:[%s1731 + $0x58] sm:$0xf]
        %v1748 = vld [vmem:[%s1731 + $0x8] sm:$0x1]
        %v1749 = vld [vmem:[%s1731 + $0x14] sm:$0x1]
        %v1750 = vld [vmem:[%s1731 + $0x20] sm:$0x1]
        %v1751 = vld [vmem:[%s1731 + $0x2c] sm:$0x1]
        %v1752 = vld [vmem:[%s1731 + $0x38] sm:$0x1]
        %v1753 = vld [vmem:[%s1731 + $0x44] sm:$0x1]
        %v1754 = vld [vmem:[%s1731 + $0x50] sm:$0x1]
        %v1755 = vld [vmem:[%s1731 + $0x5c] sm:$0x1]
        %v1757 = vshrl.u32 %v1732, 16
        %v1759 = vrot.slane %v1757, 4
        %v1760 = vshll.u32 %v1732, 16
        %v1762 = vrot.slane %v1760, 5
        %v1763 = vor.u32 %v1759, %v1762
        %v1764 = vrot.slane %v1763, 4
        %v1766 = vshll.u32 %v1733, 16
        %v1768 = vrot.slane %v1766, 5
        %v1769 = vsel %vm533, %v1764, %v1768
        %v1770 = vshrl.u32 %v1733, 16
        %v1772 = vrot.slane %v1770, 4
        %v1773 = vor.u32 %v1772, %v1768
        %v1774 = vrot.slane %v1773, 4
        %v1776 = vshll.u32 %v1748, 16
        %v1778 = vrot.slane %v1776, 5
        %v1779 = vsel %vm533, %v1774, %v1778
        %v1781 = vshrl.u32 %v1734, 16
        %v1783 = vrot.slane %v1781, 4
        %v1784 = vshll.u32 %v1734, 16
        %v1786 = vrot.slane %v1784, 5
        %v1787 = vor.u32 %v1783, %v1786
        %v1788 = vrot.slane %v1787, 4
        %v1790 = vshll.u32 %v1735, 16
        %v1792 = vrot.slane %v1790, 5
        %v1793 = vsel %vm533, %v1788, %v1792
        %v1794 = vshrl.u32 %v1735, 16
        %v1796 = vrot.slane %v1794, 4
        %v1797 = vor.u32 %v1796, %v1792
        %v1798 = vrot.slane %v1797, 4
        %v1800 = vshll.u32 %v1749, 16
        %v1802 = vrot.slane %v1800, 5
        %v1803 = vsel %vm533, %v1798, %v1802
        %v1805 = vshrl.u32 %v1736, 16
        %v1807 = vrot.slane %v1805, 4
        %v1808 = vshll.u32 %v1736, 16
        %v1810 = vrot.slane %v1808, 5
        %v1811 = vor.u32 %v1807, %v1810
        %v1812 = vrot.slane %v1811, 4
        %v1814 = vshll.u32 %v1737, 16
        %v1816 = vrot.slane %v1814, 5
        %v1817 = vsel %vm533, %v1812, %v1816
        %v1818 = vshrl.u32 %v1737, 16
        %v1820 = vrot.slane %v1818, 4
        %v1821 = vor.u32 %v1820, %v1816
        %v1822 = vrot.slane %v1821, 4
        %v1824 = vshll.u32 %v1750, 16
        %v1826 = vrot.slane %v1824, 5
        %v1827 = vsel %vm533, %v1822, %v1826
        %v1829 = vshrl.u32 %v1738, 16
        %v1831 = vrot.slane %v1829, 4
        %v1832 = vshll.u32 %v1738, 16
        %v1834 = vrot.slane %v1832, 5
        %v1835 = vor.u32 %v1831, %v1834
        %v1836 = vrot.slane %v1835, 4
        %v1838 = vshll.u32 %v1739, 16
        %v1840 = vrot.slane %v1838, 5
        %v1841 = vsel %vm533, %v1836, %v1840
        %v1842 = vshrl.u32 %v1739, 16
        %v1844 = vrot.slane %v1842, 4
        %v1845 = vor.u32 %v1844, %v1840
        %v1846 = vrot.slane %v1845, 4
        %v1848 = vshll.u32 %v1751, 16
        %v1850 = vrot.slane %v1848, 5
        %v1851 = vsel %vm533, %v1846, %v1850
        %v1853 = vshrl.u32 %v1740, 16
        %v1855 = vrot.slane %v1853, 4
        %v1856 = vshll.u32 %v1740, 16
        %v1858 = vrot.slane %v1856, 5
        %v1859 = vor.u32 %v1855, %v1858
        %v1860 = vrot.slane %v1859, 4
        %v1862 = vshll.u32 %v1741, 16
        %v1864 = vrot.slane %v1862, 5
        %v1865 = vsel %vm533, %v1860, %v1864
        %v1866 = vshrl.u32 %v1741, 16
        %v1868 = vrot.slane %v1866, 4
        %v1869 = vor.u32 %v1868, %v1864
        %v1870 = vrot.slane %v1869, 4
        %v1872 = vshll.u32 %v1752, 16
        %v1874 = vrot.slane %v1872, 5
        %v1875 = vsel %vm533, %v1870, %v1874
        %v1877 = vshrl.u32 %v1742, 16
        %v1879 = vrot.slane %v1877, 4
        %v1880 = vshll.u32 %v1742, 16
        %v1882 = vrot.slane %v1880, 5
        %v1883 = vor.u32 %v1879, %v1882
        %v1884 = vrot.slane %v1883, 4
        %v1886 = vshll.u32 %v1743, 16
        %v1888 = vrot.slane %v1886, 5
        %v1889 = vsel %vm533, %v1884, %v1888
        %v1890 = vshrl.u32 %v1743, 16
        %v1892 = vrot.slane %v1890, 4
        %v1893 = vor.u32 %v1892, %v1888
        %v1894 = vrot.slane %v1893, 4
        %v1896 = vshll.u32 %v1753, 16
        %v1898 = vrot.slane %v1896, 5
        %v1899 = vsel %vm533, %v1894, %v1898
        %v1901 = vshrl.u32 %v1744, 16
        %v1903 = vrot.slane %v1901, 4
        %v1904 = vshll.u32 %v1744, 16
        %v1906 = vrot.slane %v1904, 5
        %v1907 = vor.u32 %v1903, %v1906
        %v1908 = vrot.slane %v1907, 4
        %v1910 = vshll.u32 %v1745, 16
        %v1912 = vrot.slane %v1910, 5
        %v1913 = vsel %vm533, %v1908, %v1912
        %v1914 = vshrl.u32 %v1745, 16
        %v1916 = vrot.slane %v1914, 4
        %v1917 = vor.u32 %v1916, %v1912
        %v1918 = vrot.slane %v1917, 4
        %v1920 = vshll.u32 %v1754, 16
        %v1922 = vrot.slane %v1920, 5
        %v1923 = vsel %vm533, %v1918, %v1922
        %v1925 = vshrl.u32 %v1746, 16
        %v1927 = vrot.slane %v1925, 4
        %v1928 = vshll.u32 %v1746, 16
        %v1930 = vrot.slane %v1928, 5
        %v1931 = vor.u32 %v1927, %v1930
        %v1932 = vrot.slane %v1931, 4
        %v1934 = vshll.u32 %v1747, 16
        %v1936 = vrot.slane %v1934, 5
        %v1937 = vsel %vm533, %v1932, %v1936
        %v1938 = vshrl.u32 %v1747, 16
        %v1940 = vrot.slane %v1938, 4
        %v1941 = vor.u32 %v1940, %v1936
        %v1942 = vrot.slane %v1941, 4
        %v1944 = vshll.u32 %v1755, 16
        %v1946 = vrot.slane %v1944, 5
        %v1947 = vsel %vm533, %v1942, %v1946
        %v1948 = vld [vmem:[%s1731] sm:$0xe]
        %v1949 = vld [vmem:[%s1731 + $0xc] sm:$0xe]
        %v1950 = vld [vmem:[%s1731 + $0x18] sm:$0xe]
        %v1951 = vld [vmem:[%s1731 + $0x24] sm:$0xe]
        %v1952 = vld [vmem:[%s1731 + $0x30] sm:$0xe]
        %v1953 = vld [vmem:[%s1731 + $0x3c] sm:$0xe]
        %v1954 = vld [vmem:[%s1731 + $0x48] sm:$0xe]
        %v1955 = vld [vmem:[%s1731 + $0x54] sm:$0xe]
        %v1980 = vrot.slane %v1948, 5
        %v1981 = vrot.slane %v1980, 4
        %v1982 = vrot.slane %v1733, 5
        %v1983 = vsel %vm760, %v1981, %v1982
        %v1984 = vrot.slane %v1982, 4
        %v1985 = vrot.slane %v1748, 5
        %v1986 = vsel %vm760, %v1984, %v1985
        %v1987 = vrot.slane %v1949, 5
        %v1988 = vrot.slane %v1987, 4
        %v1989 = vrot.slane %v1735, 5
        %v1990 = vsel %vm760, %v1988, %v1989
        %v1991 = vrot.slane %v1989, 4
        %v1992 = vrot.slane %v1749, 5
        %v1993 = vsel %vm760, %v1991, %v1992
        %v1994 = vrot.slane %v1950, 5
        %v1995 = vrot.slane %v1994, 4
        %v1996 = vrot.slane %v1737, 5
        %v1997 = vsel %vm760, %v1995, %v1996
        %v1998 = vrot.slane %v1996, 4
        %v1999 = vrot.slane %v1750, 5
        %v2000 = vsel %vm760, %v1998, %v1999
        %v2001 = vrot.slane %v1951, 5
        %v2002 = vrot.slane %v2001, 4
        %v2003 = vrot.slane %v1739, 5
        %v2004 = vsel %vm760, %v2002, %v2003
        %v2005 = vrot.slane %v2003, 4
        %v2006 = vrot.slane %v1751, 5
        %v2007 = vsel %vm760, %v2005, %v2006
        %v2008 = vrot.slane %v1952, 5
        %v2009 = vrot.slane %v2008, 4
        %v2010 = vrot.slane %v1741, 5
        %v2011 = vsel %vm760, %v2009, %v2010
        %v2012 = vrot.slane %v2010, 4
        %v2013 = vrot.slane %v1752, 5
        %v2014 = vsel %vm760, %v2012, %v2013
        %v2015 = vrot.slane %v1953, 5
        %v2016 = vrot.slane %v2015, 4
        %v2017 = vrot.slane %v1743, 5
        %v2018 = vsel %vm760, %v2016, %v2017
        %v2019 = vrot.slane %v2017, 4
        %v2020 = vrot.slane %v1753, 5
        %v2021 = vsel %vm760, %v2019, %v2020
        %v2022 = vrot.slane %v1954, 5
        %v2023 = vrot.slane %v2022, 4
        %v2024 = vrot.slane %v1745, 5
        %v2025 = vsel %vm760, %v2023, %v2024
        %v2026 = vrot.slane %v2024, 4
        %v2027 = vrot.slane %v1754, 5
        %v2028 = vsel %vm760, %v2026, %v2027
        %v2029 = vrot.slane %v1955, 5
        %v2030 = vrot.slane %v2029, 4
        %v2031 = vrot.slane %v1747, 5
        %v2032 = vsel %vm760, %v2030, %v2031
        %v2033 = vrot.slane %v2031, 4
        %v2034 = vrot.slane %v1755, 5
        %v2035 = vsel %vm760, %v2033, %v2034
        %s2036 = scalar_lea.vmem %s459, 24
        %v2037 = vld [vmem:[%s2036] sm:$0xf]
        %v2038 = vld [vmem:[%s2036 + $0x4] sm:$0xf]
        %v2039 = vld [vmem:[%s2036 + $0xc] sm:$0xf]
        %v2040 = vld [vmem:[%s2036 + $0x10] sm:$0xf]
        %v2041 = vld [vmem:[%s2036 + $0x18] sm:$0xf]
        %v2042 = vld [vmem:[%s2036 + $0x1c] sm:$0xf]
        %v2043 = vld [vmem:[%s2036 + $0x24] sm:$0xf]
        %v2044 = vld [vmem:[%s2036 + $0x28] sm:$0xf]
        %v2045 = vld [vmem:[%s2036 + $0x30] sm:$0xf]
        %v2046 = vld [vmem:[%s2036 + $0x34] sm:$0xf]
        %v2047 = vld [vmem:[%s2036 + $0x3c] sm:$0xf]
        %v2048 = vld [vmem:[%s2036 + $0x40] sm:$0xf]
        %v2049 = vld [vmem:[%s2036 + $0x48] sm:$0xf]
        %v2050 = vld [vmem:[%s2036 + $0x4c] sm:$0xf]
        %v2051 = vld [vmem:[%s2036 + $0x54] sm:$0xf]
        %v2052 = vld [vmem:[%s2036 + $0x58] sm:$0xf]
        %v2053 = vld [vmem:[%s2036 + $0x8] sm:$0x1]
        %v2054 = vld [vmem:[%s2036 + $0x14] sm:$0x1]
        %v2055 = vld [vmem:[%s2036 + $0x20] sm:$0x1]
        %v2056 = vld [vmem:[%s2036 + $0x2c] sm:$0x1]
        %v2057 = vld [vmem:[%s2036 + $0x38] sm:$0x1]
        %v2058 = vld [vmem:[%s2036 + $0x44] sm:$0x1]
        %v2059 = vld [vmem:[%s2036 + $0x50] sm:$0x1]
        %v2060 = vld [vmem:[%s2036 + $0x5c] sm:$0x1]
        %v2062 = vshrl.u32 %v2037, 16
        %v2064 = vrot.slane %v2062, 4
        %v2065 = vshll.u32 %v2037, 16
        %v2067 = vrot.slane %v2065, 5
        %v2068 = vor.u32 %v2064, %v2067
        %v2069 = vrot.slane %v2068, 4
        %v2071 = vshll.u32 %v2038, 16
        %v2073 = vrot.slane %v2071, 5
        %v2074 = vsel %vm533, %v2069, %v2073
        %v2075 = vshrl.u32 %v2038, 16
        %v2077 = vrot.slane %v2075, 4
        %v2078 = vor.u32 %v2077, %v2073
        %v2079 = vrot.slane %v2078, 4
        %v2081 = vshll.u32 %v2053, 16
        %v2083 = vrot.slane %v2081, 5
        %v2084 = vsel %vm533, %v2079, %v2083
        %v2086 = vshrl.u32 %v2039, 16
        %v2088 = vrot.slane %v2086, 4
        %v2089 = vshll.u32 %v2039, 16
        %v2091 = vrot.slane %v2089, 5
        %v2092 = vor.u32 %v2088, %v2091
        %v2093 = vrot.slane %v2092, 4
        %v2095 = vshll.u32 %v2040, 16
        %v2097 = vrot.slane %v2095, 5
        %v2098 = vsel %vm533, %v2093, %v2097
        %v2099 = vshrl.u32 %v2040, 16
        %v2101 = vrot.slane %v2099, 4
        %v2102 = vor.u32 %v2101, %v2097
        %v2103 = vrot.slane %v2102, 4
        %v2105 = vshll.u32 %v2054, 16
        %v2107 = vrot.slane %v2105, 5
        %v2108 = vsel %vm533, %v2103, %v2107
        %v2110 = vshrl.u32 %v2041, 16
        %v2112 = vrot.slane %v2110, 4
        %v2113 = vshll.u32 %v2041, 16
        %v2115 = vrot.slane %v2113, 5
        %v2116 = vor.u32 %v2112, %v2115
        %v2117 = vrot.slane %v2116, 4
        %v2119 = vshll.u32 %v2042, 16
        %v2121 = vrot.slane %v2119, 5
        %v2122 = vsel %vm533, %v2117, %v2121
        %v2123 = vshrl.u32 %v2042, 16
        %v2125 = vrot.slane %v2123, 4
        %v2126 = vor.u32 %v2125, %v2121
        %v2127 = vrot.slane %v2126, 4
        %v2129 = vshll.u32 %v2055, 16
        %v2131 = vrot.slane %v2129, 5
        %v2132 = vsel %vm533, %v2127, %v2131
        %v2134 = vshrl.u32 %v2043, 16
        %v2136 = vrot.slane %v2134, 4
        %v2137 = vshll.u32 %v2043, 16
        %v2139 = vrot.slane %v2137, 5
        %v2140 = vor.u32 %v2136, %v2139
        %v2141 = vrot.slane %v2140, 4
        %v2143 = vshll.u32 %v2044, 16
        %v2145 = vrot.slane %v2143, 5
        %v2146 = vsel %vm533, %v2141, %v2145
        %v2147 = vshrl.u32 %v2044, 16
        %v2149 = vrot.slane %v2147, 4
        %v2150 = vor.u32 %v2149, %v2145
        %v2151 = vrot.slane %v2150, 4
        %v2153 = vshll.u32 %v2056, 16
        %v2155 = vrot.slane %v2153, 5
        %v2156 = vsel %vm533, %v2151, %v2155
        %v2158 = vshrl.u32 %v2045, 16
        %v2160 = vrot.slane %v2158, 4
        %v2161 = vshll.u32 %v2045, 16
        %v2163 = vrot.slane %v2161, 5
        %v2164 = vor.u32 %v2160, %v2163
        %v2165 = vrot.slane %v2164, 4
        %v2167 = vshll.u32 %v2046, 16
        %v2169 = vrot.slane %v2167, 5
        %v2170 = vsel %vm533, %v2165, %v2169
        %v2171 = vshrl.u32 %v2046, 16
        %v2173 = vrot.slane %v2171, 4
        %v2174 = vor.u32 %v2173, %v2169
        %v2175 = vrot.slane %v2174, 4
        %v2177 = vshll.u32 %v2057, 16
        %v2179 = vrot.slane %v2177, 5
        %v2180 = vsel %vm533, %v2175, %v2179
        %v2182 = vshrl.u32 %v2047, 16
        %v2184 = vrot.slane %v2182, 4
        %v2185 = vshll.u32 %v2047, 16
        %v2187 = vrot.slane %v2185, 5
        %v2188 = vor.u32 %v2184, %v2187
        %v2189 = vrot.slane %v2188, 4
        %v2191 = vshll.u32 %v2048, 16
        %v2193 = vrot.slane %v2191, 5
        %v2194 = vsel %vm533, %v2189, %v2193
        %v2195 = vshrl.u32 %v2048, 16
        %v2197 = vrot.slane %v2195, 4
        %v2198 = vor.u32 %v2197, %v2193
        %v2199 = vrot.slane %v2198, 4
        %v2201 = vshll.u32 %v2058, 16
        %v2203 = vrot.slane %v2201, 5
        %v2204 = vsel %vm533, %v2199, %v2203
        %v2206 = vshrl.u32 %v2049, 16
        %v2208 = vrot.slane %v2206, 4
        %v2209 = vshll.u32 %v2049, 16
        %v2211 = vrot.slane %v2209, 5
        %v2212 = vor.u32 %v2208, %v2211
        %v2213 = vrot.slane %v2212, 4
        %v2215 = vshll.u32 %v2050, 16
        %v2217 = vrot.slane %v2215, 5
        %v2218 = vsel %vm533, %v2213, %v2217
        %v2219 = vshrl.u32 %v2050, 16
        %v2221 = vrot.slane %v2219, 4
        %v2222 = vor.u32 %v2221, %v2217
        %v2223 = vrot.slane %v2222, 4
        %v2225 = vshll.u32 %v2059, 16
        %v2227 = vrot.slane %v2225, 5
        %v2228 = vsel %vm533, %v2223, %v2227
        %v2230 = vshrl.u32 %v2051, 16
        %v2232 = vrot.slane %v2230, 4
        %v2233 = vshll.u32 %v2051, 16
        %v2235 = vrot.slane %v2233, 5
        %v2236 = vor.u32 %v2232, %v2235
        %v2237 = vrot.slane %v2236, 4
        %v2239 = vshll.u32 %v2052, 16
        %v2241 = vrot.slane %v2239, 5
        %v2242 = vsel %vm533, %v2237, %v2241
        %v2243 = vshrl.u32 %v2052, 16
        %v2245 = vrot.slane %v2243, 4
        %v2246 = vor.u32 %v2245, %v2241
        %v2247 = vrot.slane %v2246, 4
        %v2249 = vshll.u32 %v2060, 16
        %v2251 = vrot.slane %v2249, 5
        %v2252 = vsel %vm533, %v2247, %v2251
        %v2253 = vld [vmem:[%s2036] sm:$0xe]
        %v2254 = vld [vmem:[%s2036 + $0xc] sm:$0xe]
        %v2255 = vld [vmem:[%s2036 + $0x18] sm:$0xe]
        %v2256 = vld [vmem:[%s2036 + $0x24] sm:$0xe]
        %v2257 = vld [vmem:[%s2036 + $0x30] sm:$0xe]
        %v2258 = vld [vmem:[%s2036 + $0x3c] sm:$0xe]
        %v2259 = vld [vmem:[%s2036 + $0x48] sm:$0xe]
        %v2260 = vld [vmem:[%s2036 + $0x54] sm:$0xe]
        %v2285 = vrot.slane %v2253, 5
        %v2286 = vrot.slane %v2285, 4
        %v2287 = vrot.slane %v2038, 5
        %v2288 = vsel %vm760, %v2286, %v2287
        %v2289 = vrot.slane %v2287, 4
        %v2290 = vrot.slane %v2053, 5
        %v2291 = vsel %vm760, %v2289, %v2290
        %v2292 = vrot.slane %v2254, 5
        %v2293 = vrot.slane %v2292, 4
        %v2294 = vrot.slane %v2040, 5
        %v2295 = vsel %vm760, %v2293, %v2294
        %v2296 = vrot.slane %v2294, 4
        %v2297 = vrot.slane %v2054, 5
        %v2298 = vsel %vm760, %v2296, %v2297
        %v2299 = vrot.slane %v2255, 5
        %v2300 = vrot.slane %v2299, 4
        %v2301 = vrot.slane %v2042, 5
        %v2302 = vsel %vm760, %v2300, %v2301
        %v2303 = vrot.slane %v2301, 4
        %v2304 = vrot.slane %v2055, 5
        %v2305 = vsel %vm760, %v2303, %v2304
        %v2306 = vrot.slane %v2256, 5
        %v2307 = vrot.slane %v2306, 4
        %v2308 = vrot.slane %v2044, 5
        %v2309 = vsel %vm760, %v2307, %v2308
        %v2310 = vrot.slane %v2308, 4
        %v2311 = vrot.slane %v2056, 5
        %v2312 = vsel %vm760, %v2310, %v2311
        %v2313 = vrot.slane %v2257, 5
        %v2314 = vrot.slane %v2313, 4
        %v2315 = vrot.slane %v2046, 5
        %v2316 = vsel %vm760, %v2314, %v2315
        %v2317 = vrot.slane %v2315, 4
        %v2318 = vrot.slane %v2057, 5
        %v2319 = vsel %vm760, %v2317, %v2318
        %v2320 = vrot.slane %v2258, 5
        %v2321 = vrot.slane %v2320, 4
        %v2322 = vrot.slane %v2048, 5
        %v2323 = vsel %vm760, %v2321, %v2322
        %v2324 = vrot.slane %v2322, 4
        %v2325 = vrot.slane %v2058, 5
        %v2326 = vsel %vm760, %v2324, %v2325
        %v2327 = vrot.slane %v2259, 5
        %v2328 = vrot.slane %v2327, 4
        %v2329 = vrot.slane %v2050, 5
        %v2330 = vsel %vm760, %v2328, %v2329
        %v2331 = vrot.slane %v2329, 4
        %v2332 = vrot.slane %v2059, 5
        %v2333 = vsel %vm760, %v2331, %v2332
        %v2334 = vrot.slane %v2260, 5
        %v2335 = vrot.slane %v2334, 4
        %v2336 = vrot.slane %v2052, 5
        %v2337 = vsel %vm760, %v2335, %v2336
        %v2338 = vrot.slane %v2336, 4
        %v2339 = vrot.slane %v2060, 5
        %v2340 = vsel %vm760, %v2338, %v2339
        %v2341 = vld [vmem:[%s470] sm:$0xf]
        %v2342 = vld [vmem:[%s470 + $0x4] sm:$0xf]
        %v2343 = vld [vmem:[%s470 + $0xc] sm:$0xf]
        %v2344 = vld [vmem:[%s470 + $0x10] sm:$0xf]
        %v2345 = vld [vmem:[%s470 + $0x18] sm:$0xf]
        %v2346 = vld [vmem:[%s470 + $0x1c] sm:$0xf]
        %v2347 = vld [vmem:[%s470 + $0x24] sm:$0xf]
        %v2348 = vld [vmem:[%s470 + $0x28] sm:$0xf]
        %v2349 = vld [vmem:[%s470 + $0x30] sm:$0xf]
        %v2350 = vld [vmem:[%s470 + $0x34] sm:$0xf]
        %v2351 = vld [vmem:[%s470 + $0x3c] sm:$0xf]
        %v2352 = vld [vmem:[%s470 + $0x40] sm:$0xf]
        %v2353 = vld [vmem:[%s470 + $0x48] sm:$0xf]
        %v2354 = vld [vmem:[%s470 + $0x4c] sm:$0xf]
        %v2355 = vld [vmem:[%s470 + $0x54] sm:$0xf]
        %v2356 = vld [vmem:[%s470 + $0x58] sm:$0xf]
        %v2357 = vld [vmem:[%s470 + $0x8] sm:$0x1]
        %v2358 = vld [vmem:[%s470 + $0x14] sm:$0x1]
        %v2359 = vld [vmem:[%s470 + $0x20] sm:$0x1]
        %v2360 = vld [vmem:[%s470 + $0x2c] sm:$0x1]
        %v2361 = vld [vmem:[%s470 + $0x38] sm:$0x1]
        %v2362 = vld [vmem:[%s470 + $0x44] sm:$0x1]
        %v2363 = vld [vmem:[%s470 + $0x50] sm:$0x1]
        %v2364 = vld [vmem:[%s470 + $0x5c] sm:$0x1]
        %v2366 = vshrl.u32 %v2341, 16
        %v2368 = vrot.slane %v2366, 4
        %v2369 = vshll.u32 %v2341, 16
        %v2371 = vrot.slane %v2369, 5
        %v2372 = vor.u32 %v2368, %v2371
        %v2373 = vrot.slane %v2372, 4
        %v2375 = vshll.u32 %v2342, 16
        %v2377 = vrot.slane %v2375, 5
        %v2378 = vsel %vm533, %v2373, %v2377
        %v2379 = vshrl.u32 %v2342, 16
        %v2381 = vrot.slane %v2379, 4
        %v2382 = vor.u32 %v2381, %v2377
        %v2383 = vrot.slane %v2382, 4
        %v2385 = vshll.u32 %v2357, 16
        %v2387 = vrot.slane %v2385, 5
        %v2388 = vsel %vm533, %v2383, %v2387
        %v2390 = vshrl.u32 %v2343, 16
        %v2392 = vrot.slane %v2390, 4
        %v2393 = vshll.u32 %v2343, 16
        %v2395 = vrot.slane %v2393, 5
        %v2396 = vor.u32 %v2392, %v2395
        %v2397 = vrot.slane %v2396, 4
        %v2399 = vshll.u32 %v2344, 16
        %v2401 = vrot.slane %v2399, 5
        %v2402 = vsel %vm533, %v2397, %v2401
        %v2403 = vshrl.u32 %v2344, 16
        %v2405 = vrot.slane %v2403, 4
        %v2406 = vor.u32 %v2405, %v2401
        %v2407 = vrot.slane %v2406, 4
        %v2409 = vshll.u32 %v2358, 16
        %v2411 = vrot.slane %v2409, 5
        %v2412 = vsel %vm533, %v2407, %v2411
        %v2414 = vshrl.u32 %v2345, 16
        %v2416 = vrot.slane %v2414, 4
        %v2417 = vshll.u32 %v2345, 16
        %v2419 = vrot.slane %v2417, 5
        %v2420 = vor.u32 %v2416, %v2419
        %v2421 = vrot.slane %v2420, 4
        %v2423 = vshll.u32 %v2346, 16
        %v2425 = vrot.slane %v2423, 5
        %v2426 = vsel %vm533, %v2421, %v2425
        %v2427 = vshrl.u32 %v2346, 16
        %v2429 = vrot.slane %v2427, 4
        %v2430 = vor.u32 %v2429, %v2425
        %v2431 = vrot.slane %v2430, 4
        %v2433 = vshll.u32 %v2359, 16
        %v2435 = vrot.slane %v2433, 5
        %v2436 = vsel %vm533, %v2431, %v2435
        %v2438 = vshrl.u32 %v2347, 16
        %v2440 = vrot.slane %v2438, 4
        %v2441 = vshll.u32 %v2347, 16
        %v2443 = vrot.slane %v2441, 5
        %v2444 = vor.u32 %v2440, %v2443
        %v2445 = vrot.slane %v2444, 4
        %v2447 = vshll.u32 %v2348, 16
        %v2449 = vrot.slane %v2447, 5
        %v2450 = vsel %vm533, %v2445, %v2449
        %v2451 = vshrl.u32 %v2348, 16
        %v2453 = vrot.slane %v2451, 4
        %v2454 = vor.u32 %v2453, %v2449
        %v2455 = vrot.slane %v2454, 4
        %v2457 = vshll.u32 %v2360, 16
        %v2459 = vrot.slane %v2457, 5
        %v2460 = vsel %vm533, %v2455, %v2459
        %v2462 = vshrl.u32 %v2349, 16
        %v2464 = vrot.slane %v2462, 4
        %v2465 = vshll.u32 %v2349, 16
        %v2467 = vrot.slane %v2465, 5
        %v2468 = vor.u32 %v2464, %v2467
        %v2469 = vrot.slane %v2468, 4
        %v2471 = vshll.u32 %v2350, 16
        %v2473 = vrot.slane %v2471, 5
        %v2474 = vsel %vm533, %v2469, %v2473
        %v2475 = vshrl.u32 %v2350, 16
        %v2477 = vrot.slane %v2475, 4
        %v2478 = vor.u32 %v2477, %v2473
        %v2479 = vrot.slane %v2478, 4
        %v2481 = vshll.u32 %v2361, 16
        %v2483 = vrot.slane %v2481, 5
        %v2484 = vsel %vm533, %v2479, %v2483
        %v2486 = vshrl.u32 %v2351, 16
        %v2488 = vrot.slane %v2486, 4
        %v2489 = vshll.u32 %v2351, 16
        %v2491 = vrot.slane %v2489, 5
        %v2492 = vor.u32 %v2488, %v2491
        %v2493 = vrot.slane %v2492, 4
        %v2495 = vshll.u32 %v2352, 16
        %v2497 = vrot.slane %v2495, 5
        %v2498 = vsel %vm533, %v2493, %v2497
        %v2499 = vshrl.u32 %v2352, 16
        %v2501 = vrot.slane %v2499, 4
        %v2502 = vor.u32 %v2501, %v2497
        %v2503 = vrot.slane %v2502, 4
        %v2505 = vshll.u32 %v2362, 16
        %v2507 = vrot.slane %v2505, 5
        %v2508 = vsel %vm533, %v2503, %v2507
        %v2510 = vshrl.u32 %v2353, 16
        %v2512 = vrot.slane %v2510, 4
        %v2513 = vshll.u32 %v2353, 16
        %v2515 = vrot.slane %v2513, 5
        %v2516 = vor.u32 %v2512, %v2515
        %v2517 = vrot.slane %v2516, 4
        %v2519 = vshll.u32 %v2354, 16
        %v2521 = vrot.slane %v2519, 5
        %v2522 = vsel %vm533, %v2517, %v2521
        %v2523 = vshrl.u32 %v2354, 16
        %v2525 = vrot.slane %v2523, 4
        %v2526 = vor.u32 %v2525, %v2521
        %v2527 = vrot.slane %v2526, 4
        %v2529 = vshll.u32 %v2363, 16
        %v2531 = vrot.slane %v2529, 5
        %v2532 = vsel %vm533, %v2527, %v2531
        %v2534 = vshrl.u32 %v2355, 16
        %v2536 = vrot.slane %v2534, 4
        %v2537 = vshll.u32 %v2355, 16
        %v2539 = vrot.slane %v2537, 5
        %v2540 = vor.u32 %v2536, %v2539
        %v2541 = vrot.slane %v2540, 4
        %v2543 = vshll.u32 %v2356, 16
        %v2545 = vrot.slane %v2543, 5
        %v2546 = vsel %vm533, %v2541, %v2545
        %v2547 = vshrl.u32 %v2356, 16
        %v2549 = vrot.slane %v2547, 4
        %v2550 = vor.u32 %v2549, %v2545
        %v2551 = vrot.slane %v2550, 4
        %v2553 = vshll.u32 %v2364, 16
        %v2555 = vrot.slane %v2553, 5
        %v2556 = vsel %vm533, %v2551, %v2555
        %v2557 = vld [vmem:[%s470] sm:$0xe]
        %v2558 = vld [vmem:[%s470 + $0xc] sm:$0xe]
        %v2559 = vld [vmem:[%s470 + $0x18] sm:$0xe]
        %v2560 = vld [vmem:[%s470 + $0x24] sm:$0xe]
        %v2561 = vld [vmem:[%s470 + $0x30] sm:$0xe]
        %v2562 = vld [vmem:[%s470 + $0x3c] sm:$0xe]
        %v2563 = vld [vmem:[%s470 + $0x48] sm:$0xe]
        %v2564 = vld [vmem:[%s470 + $0x54] sm:$0xe]
        %v2589 = vrot.slane %v2557, 5
        %v2590 = vrot.slane %v2589, 4
        %v2591 = vrot.slane %v2342, 5
        %v2592 = vsel %vm760, %v2590, %v2591
        %v2593 = vrot.slane %v2591, 4
        %v2594 = vrot.slane %v2357, 5
        %v2595 = vsel %vm760, %v2593, %v2594
        %v2596 = vrot.slane %v2558, 5
        %v2597 = vrot.slane %v2596, 4
        %v2598 = vrot.slane %v2344, 5
        %v2599 = vsel %vm760, %v2597, %v2598
        %v2600 = vrot.slane %v2598, 4
        %v2601 = vrot.slane %v2358, 5
        %v2602 = vsel %vm760, %v2600, %v2601
        %v2603 = vrot.slane %v2559, 5
        %v2604 = vrot.slane %v2603, 4
        %v2605 = vrot.slane %v2346, 5
        %v2606 = vsel %vm760, %v2604, %v2605
        %v2607 = vrot.slane %v2605, 4
        %v2608 = vrot.slane %v2359, 5
        %v2609 = vsel %vm760, %v2607, %v2608
        %v2610 = vrot.slane %v2560, 5
        %v2611 = vrot.slane %v2610, 4
        %v2612 = vrot.slane %v2348, 5
        %v2613 = vsel %vm760, %v2611, %v2612
        %v2614 = vrot.slane %v2612, 4
        %v2615 = vrot.slane %v2360, 5
        %v2616 = vsel %vm760, %v2614, %v2615
        %v2617 = vrot.slane %v2561, 5
        %v2618 = vrot.slane %v2617, 4
        %v2619 = vrot.slane %v2350, 5
        %v2620 = vsel %vm760, %v2618, %v2619
        %v2621 = vrot.slane %v2619, 4
        %v2622 = vrot.slane %v2361, 5
        %v2623 = vsel %vm760, %v2621, %v2622
        %v2624 = vrot.slane %v2562, 5
        %v2625 = vrot.slane %v2624, 4
        %v2626 = vrot.slane %v2352, 5
        %v2627 = vsel %vm760, %v2625, %v2626
        %v2628 = vrot.slane %v2626, 4
        %v2629 = vrot.slane %v2362, 5
        %v2630 = vsel %vm760, %v2628, %v2629
        %v2631 = vrot.slane %v2563, 5
        %v2632 = vrot.slane %v2631, 4
        %v2633 = vrot.slane %v2354, 5
        %v2634 = vsel %vm760, %v2632, %v2633
        %v2635 = vrot.slane %v2633, 4
        %v2636 = vrot.slane %v2363, 5
        %v2637 = vsel %vm760, %v2635, %v2636
        %v2638 = vrot.slane %v2564, 5
        %v2639 = vrot.slane %v2638, 4
        %v2640 = vrot.slane %v2356, 5
        %v2641 = vsel %vm760, %v2639, %v2640
        %v2642 = vrot.slane %v2640, 4
        %v2643 = vrot.slane %v2364, 5
        %v2644 = vsel %vm760, %v2642, %v2643
        %s2645 = scalar_lea.vmem %s470, 12
        %v2646 = vld [vmem:[%s2645] sm:$0xf]
        %v2647 = vld [vmem:[%s2645 + $0x4] sm:$0xf]
        %v2648 = vld [vmem:[%s2645 + $0xc] sm:$0xf]
        %v2649 = vld [vmem:[%s2645 + $0x10] sm:$0xf]
        %v2650 = vld [vmem:[%s2645 + $0x18] sm:$0xf]
        %v2651 = vld [vmem:[%s2645 + $0x1c] sm:$0xf]
        %v2652 = vld [vmem:[%s2645 + $0x24] sm:$0xf]
        %v2653 = vld [vmem:[%s2645 + $0x28] sm:$0xf]
        %v2654 = vld [vmem:[%s2645 + $0x30] sm:$0xf]
        %v2655 = vld [vmem:[%s2645 + $0x34] sm:$0xf]
        %v2656 = vld [vmem:[%s2645 + $0x3c] sm:$0xf]
        %v2657 = vld [vmem:[%s2645 + $0x40] sm:$0xf]
        %v2658 = vld [vmem:[%s2645 + $0x48] sm:$0xf]
        %v2659 = vld [vmem:[%s2645 + $0x4c] sm:$0xf]
        %v2660 = vld [vmem:[%s2645 + $0x54] sm:$0xf]
        %v2661 = vld [vmem:[%s2645 + $0x58] sm:$0xf]
        %v2662 = vld [vmem:[%s2645 + $0x8] sm:$0x1]
        %v2663 = vld [vmem:[%s2645 + $0x14] sm:$0x1]
        %v2664 = vld [vmem:[%s2645 + $0x20] sm:$0x1]
        %v2665 = vld [vmem:[%s2645 + $0x2c] sm:$0x1]
        %v2666 = vld [vmem:[%s2645 + $0x38] sm:$0x1]
        %v2667 = vld [vmem:[%s2645 + $0x44] sm:$0x1]
        %v2668 = vld [vmem:[%s2645 + $0x50] sm:$0x1]
        %v2669 = vld [vmem:[%s2645 + $0x5c] sm:$0x1]
        %v2671 = vshrl.u32 %v2646, 16
        %v2673 = vrot.slane %v2671, 4
        %v2674 = vshll.u32 %v2646, 16
        %v2676 = vrot.slane %v2674, 5
        %v2677 = vor.u32 %v2673, %v2676
        %v2678 = vrot.slane %v2677, 4
        %v2680 = vshll.u32 %v2647, 16
        %v2682 = vrot.slane %v2680, 5
        %v2683 = vsel %vm533, %v2678, %v2682
        %v2684 = vshrl.u32 %v2647, 16
        %v2686 = vrot.slane %v2684, 4
        %v2687 = vor.u32 %v2686, %v2682
        %v2688 = vrot.slane %v2687, 4
        %v2690 = vshll.u32 %v2662, 16
        %v2692 = vrot.slane %v2690, 5
        %v2693 = vsel %vm533, %v2688, %v2692
        %v2695 = vshrl.u32 %v2648, 16
        %v2697 = vrot.slane %v2695, 4
        %v2698 = vshll.u32 %v2648, 16
        %v2700 = vrot.slane %v2698, 5
        %v2701 = vor.u32 %v2697, %v2700
        %v2702 = vrot.slane %v2701, 4
        %v2704 = vshll.u32 %v2649, 16
        %v2706 = vrot.slane %v2704, 5
        %v2707 = vsel %vm533, %v2702, %v2706
        %v2708 = vshrl.u32 %v2649, 16
        %v2710 = vrot.slane %v2708, 4
        %v2711 = vor.u32 %v2710, %v2706
        %v2712 = vrot.slane %v2711, 4
        %v2714 = vshll.u32 %v2663, 16
        %v2716 = vrot.slane %v2714, 5
        %v2717 = vsel %vm533, %v2712, %v2716
        %v2719 = vshrl.u32 %v2650, 16
        %v2721 = vrot.slane %v2719, 4
        %v2722 = vshll.u32 %v2650, 16
        %v2724 = vrot.slane %v2722, 5
        %v2725 = vor.u32 %v2721, %v2724
        %v2726 = vrot.slane %v2725, 4
        %v2728 = vshll.u32 %v2651, 16
        %v2730 = vrot.slane %v2728, 5
        %v2731 = vsel %vm533, %v2726, %v2730
        %v2732 = vshrl.u32 %v2651, 16
        %v2734 = vrot.slane %v2732, 4
        %v2735 = vor.u32 %v2734, %v2730
        %v2736 = vrot.slane %v2735, 4
        %v2738 = vshll.u32 %v2664, 16
        %v2740 = vrot.slane %v2738, 5
        %v2741 = vsel %vm533, %v2736, %v2740
        %v2743 = vshrl.u32 %v2652, 16
        %v2745 = vrot.slane %v2743, 4
        %v2746 = vshll.u32 %v2652, 16
        %v2748 = vrot.slane %v2746, 5
        %v2749 = vor.u32 %v2745, %v2748
        %v2750 = vrot.slane %v2749, 4
        %v2752 = vshll.u32 %v2653, 16
        %v2754 = vrot.slane %v2752, 5
        %v2755 = vsel %vm533, %v2750, %v2754
        %v2756 = vshrl.u32 %v2653, 16
        %v2758 = vrot.slane %v2756, 4
        %v2759 = vor.u32 %v2758, %v2754
        %v2760 = vrot.slane %v2759, 4
        %v2762 = vshll.u32 %v2665, 16
        %v2764 = vrot.slane %v2762, 5
        %v2765 = vsel %vm533, %v2760, %v2764
        %v2767 = vshrl.u32 %v2654, 16
        %v2769 = vrot.slane %v2767, 4
        %v2770 = vshll.u32 %v2654, 16
        %v2772 = vrot.slane %v2770, 5
        %v2773 = vor.u32 %v2769, %v2772
        %v2774 = vrot.slane %v2773, 4
        %v2776 = vshll.u32 %v2655, 16
        %v2778 = vrot.slane %v2776, 5
        %v2779 = vsel %vm533, %v2774, %v2778
        %v2780 = vshrl.u32 %v2655, 16
        %v2782 = vrot.slane %v2780, 4
        %v2783 = vor.u32 %v2782, %v2778
        %v2784 = vrot.slane %v2783, 4
        %v2786 = vshll.u32 %v2666, 16
        %v2788 = vrot.slane %v2786, 5
        %v2789 = vsel %vm533, %v2784, %v2788
        %v2791 = vshrl.u32 %v2656, 16
        %v2793 = vrot.slane %v2791, 4
        %v2794 = vshll.u32 %v2656, 16
        %v2796 = vrot.slane %v2794, 5
        %v2797 = vor.u32 %v2793, %v2796
        %v2798 = vrot.slane %v2797, 4
        %v2800 = vshll.u32 %v2657, 16
        %v2802 = vrot.slane %v2800, 5
        %v2803 = vsel %vm533, %v2798, %v2802
        %v2804 = vshrl.u32 %v2657, 16
        %v2806 = vrot.slane %v2804, 4
        %v2807 = vor.u32 %v2806, %v2802
        %v2808 = vrot.slane %v2807, 4
        %v2810 = vshll.u32 %v2667, 16
        %v2812 = vrot.slane %v2810, 5
        %v2813 = vsel %vm533, %v2808, %v2812
        %v2815 = vshrl.u32 %v2658, 16
        %v2817 = vrot.slane %v2815, 4
        %v2818 = vshll.u32 %v2658, 16
        %v2820 = vrot.slane %v2818, 5
        %v2821 = vor.u32 %v2817, %v2820
        %v2822 = vrot.slane %v2821, 4
        %v2824 = vshll.u32 %v2659, 16
        %v2826 = vrot.slane %v2824, 5
        %v2827 = vsel %vm533, %v2822, %v2826
        %v2828 = vshrl.u32 %v2659, 16
        %v2830 = vrot.slane %v2828, 4
        %v2831 = vor.u32 %v2830, %v2826
        %v2832 = vrot.slane %v2831, 4
        %v2834 = vshll.u32 %v2668, 16
        %v2836 = vrot.slane %v2834, 5
        %v2837 = vsel %vm533, %v2832, %v2836
        %v2839 = vshrl.u32 %v2660, 16
        %v2841 = vrot.slane %v2839, 4
        %v2842 = vshll.u32 %v2660, 16
        %v2844 = vrot.slane %v2842, 5
        %v2845 = vor.u32 %v2841, %v2844
        %v2846 = vrot.slane %v2845, 4
        %v2848 = vshll.u32 %v2661, 16
        %v2850 = vrot.slane %v2848, 5
        %v2851 = vsel %vm533, %v2846, %v2850
        %v2852 = vshrl.u32 %v2661, 16
        %v2854 = vrot.slane %v2852, 4
        %v2855 = vor.u32 %v2854, %v2850
        %v2856 = vrot.slane %v2855, 4
        %v2858 = vshll.u32 %v2669, 16
        %v2860 = vrot.slane %v2858, 5
        %v2861 = vsel %vm533, %v2856, %v2860
        %v2862 = vld [vmem:[%s2645] sm:$0xe]
        %v2863 = vld [vmem:[%s2645 + $0xc] sm:$0xe]
        %v2864 = vld [vmem:[%s2645 + $0x18] sm:$0xe]
        %v2865 = vld [vmem:[%s2645 + $0x24] sm:$0xe]
        %v2866 = vld [vmem:[%s2645 + $0x30] sm:$0xe]
        %v2867 = vld [vmem:[%s2645 + $0x3c] sm:$0xe]
        %v2868 = vld [vmem:[%s2645 + $0x48] sm:$0xe]
        %v2869 = vld [vmem:[%s2645 + $0x54] sm:$0xe]
        %v2894 = vrot.slane %v2862, 5
        %v2895 = vrot.slane %v2894, 4
        %v2896 = vrot.slane %v2647, 5
        %v2897 = vsel %vm760, %v2895, %v2896
        %v2898 = vrot.slane %v2896, 4
        %v2899 = vrot.slane %v2662, 5
        %v2900 = vsel %vm760, %v2898, %v2899
        %v2901 = vrot.slane %v2863, 5
        %v2902 = vrot.slane %v2901, 4
        %v2903 = vrot.slane %v2649, 5
        %v2904 = vsel %vm760, %v2902, %v2903
        %v2905 = vrot.slane %v2903, 4
        %v2906 = vrot.slane %v2663, 5
        %v2907 = vsel %vm760, %v2905, %v2906
        %v2908 = vrot.slane %v2864, 5
        %v2909 = vrot.slane %v2908, 4
        %v2910 = vrot.slane %v2651, 5
        %v2911 = vsel %vm760, %v2909, %v2910
        %v2912 = vrot.slane %v2910, 4
        %v2913 = vrot.slane %v2664, 5
        %v2914 = vsel %vm760, %v2912, %v2913
        %v2915 = vrot.slane %v2865, 5
        %v2916 = vrot.slane %v2915, 4
        %v2917 = vrot.slane %v2653, 5
        %v2918 = vsel %vm760, %v2916, %v2917
        %v2919 = vrot.slane %v2917, 4
        %v2920 = vrot.slane %v2665, 5
        %v2921 = vsel %vm760, %v2919, %v2920
        %v2922 = vrot.slane %v2866, 5
        %v2923 = vrot.slane %v2922, 4
        %v2924 = vrot.slane %v2655, 5
        %v2925 = vsel %vm760, %v2923, %v2924
        %v2926 = vrot.slane %v2924, 4
        %v2927 = vrot.slane %v2666, 5
        %v2928 = vsel %vm760, %v2926, %v2927
        %v2929 = vrot.slane %v2867, 5
        %v2930 = vrot.slane %v2929, 4
        %v2931 = vrot.slane %v2657, 5
        %v2932 = vsel %vm760, %v2930, %v2931
        %v2933 = vrot.slane %v2931, 4
        %v2934 = vrot.slane %v2667, 5
        %v2935 = vsel %vm760, %v2933, %v2934
        %v2936 = vrot.slane %v2868, 5
        %v2937 = vrot.slane %v2936, 4
        %v2938 = vrot.slane %v2659, 5
        %v2939 = vsel %vm760, %v2937, %v2938
        %v2940 = vrot.slane %v2938, 4
        %v2941 = vrot.slane %v2668, 5
        %v2942 = vsel %vm760, %v2940, %v2941
        %v2943 = vrot.slane %v2869, 5
        %v2944 = vrot.slane %v2943, 4
        %v2945 = vrot.slane %v2661, 5
        %v2946 = vsel %vm760, %v2944, %v2945
        %v2947 = vrot.slane %v2945, 4
        %v2948 = vrot.slane %v2669, 5
        %v2949 = vsel %vm760, %v2947, %v2948
        %s2950 = scalar_lea.vmem %s470, 24
        %v2951 = vld [vmem:[%s2950] sm:$0xf]
        %v2952 = vld [vmem:[%s2950 + $0x4] sm:$0xf]
        %v2953 = vld [vmem:[%s2950 + $0xc] sm:$0xf]
        %v2954 = vld [vmem:[%s2950 + $0x10] sm:$0xf]
        %v2955 = vld [vmem:[%s2950 + $0x18] sm:$0xf]
        %v2956 = vld [vmem:[%s2950 + $0x1c] sm:$0xf]
        %v2957 = vld [vmem:[%s2950 + $0x24] sm:$0xf]
        %v2958 = vld [vmem:[%s2950 + $0x28] sm:$0xf]
        %v2959 = vld [vmem:[%s2950 + $0x30] sm:$0xf]
        %v2960 = vld [vmem:[%s2950 + $0x34] sm:$0xf]
        %v2961 = vld [vmem:[%s2950 + $0x3c] sm:$0xf]
        %v2962 = vld [vmem:[%s2950 + $0x40] sm:$0xf]
        %v2963 = vld [vmem:[%s2950 + $0x48] sm:$0xf]
        %v2964 = vld [vmem:[%s2950 + $0x4c] sm:$0xf]
        %v2965 = vld [vmem:[%s2950 + $0x54] sm:$0xf]
        %v2966 = vld [vmem:[%s2950 + $0x58] sm:$0xf]
        %v2967 = vld [vmem:[%s2950 + $0x8] sm:$0x1]
        %v2968 = vld [vmem:[%s2950 + $0x14] sm:$0x1]
        %v2969 = vld [vmem:[%s2950 + $0x20] sm:$0x1]
        %v2970 = vld [vmem:[%s2950 + $0x2c] sm:$0x1]
        %v2971 = vld [vmem:[%s2950 + $0x38] sm:$0x1]
        %v2972 = vld [vmem:[%s2950 + $0x44] sm:$0x1]
        %v2973 = vld [vmem:[%s2950 + $0x50] sm:$0x1]
        %v2974 = vld [vmem:[%s2950 + $0x5c] sm:$0x1]
        %v2976 = vshrl.u32 %v2951, 16
        %v2978 = vrot.slane %v2976, 4
        %v2979 = vshll.u32 %v2951, 16
        %v2981 = vrot.slane %v2979, 5
        %v2982 = vor.u32 %v2978, %v2981
        %v2983 = vrot.slane %v2982, 4
        %v2985 = vshll.u32 %v2952, 16
        %v2987 = vrot.slane %v2985, 5
        %v2988 = vsel %vm533, %v2983, %v2987
        %v2989 = vshrl.u32 %v2952, 16
        %v2991 = vrot.slane %v2989, 4
        %v2992 = vor.u32 %v2991, %v2987
        %v2993 = vrot.slane %v2992, 4
        %v2995 = vshll.u32 %v2967, 16
        %v2997 = vrot.slane %v2995, 5
        %v2998 = vsel %vm533, %v2993, %v2997
        %v3000 = vshrl.u32 %v2953, 16
        %v3002 = vrot.slane %v3000, 4
        %v3003 = vshll.u32 %v2953, 16
        %v3005 = vrot.slane %v3003, 5
        %v3006 = vor.u32 %v3002, %v3005
        %v3007 = vrot.slane %v3006, 4
        %v3009 = vshll.u32 %v2954, 16
        %v3011 = vrot.slane %v3009, 5
        %v3012 = vsel %vm533, %v3007, %v3011
        %v3013 = vshrl.u32 %v2954, 16
        %v3015 = vrot.slane %v3013, 4
        %v3016 = vor.u32 %v3015, %v3011
        %v3017 = vrot.slane %v3016, 4
        %v3019 = vshll.u32 %v2968, 16
        %v3021 = vrot.slane %v3019, 5
        %v3022 = vsel %vm533, %v3017, %v3021
        %v3024 = vshrl.u32 %v2955, 16
        %v3026 = vrot.slane %v3024, 4
        %v3027 = vshll.u32 %v2955, 16
        %v3029 = vrot.slane %v3027, 5
        %v3030 = vor.u32 %v3026, %v3029
        %v3031 = vrot.slane %v3030, 4
        %v3033 = vshll.u32 %v2956, 16
        %v3035 = vrot.slane %v3033, 5
        %v3036 = vsel %vm533, %v3031, %v3035
        %v3037 = vshrl.u32 %v2956, 16
        %v3039 = vrot.slane %v3037, 4
        %v3040 = vor.u32 %v3039, %v3035
        %v3041 = vrot.slane %v3040, 4
        %v3043 = vshll.u32 %v2969, 16
        %v3045 = vrot.slane %v3043, 5
        %v3046 = vsel %vm533, %v3041, %v3045
        %v3048 = vshrl.u32 %v2957, 16
        %v3050 = vrot.slane %v3048, 4
        %v3051 = vshll.u32 %v2957, 16
        %v3053 = vrot.slane %v3051, 5
        %v3054 = vor.u32 %v3050, %v3053
        %v3055 = vrot.slane %v3054, 4
        %v3057 = vshll.u32 %v2958, 16
        %v3059 = vrot.slane %v3057, 5
        %v3060 = vsel %vm533, %v3055, %v3059
        %v3061 = vshrl.u32 %v2958, 16
        %v3063 = vrot.slane %v3061, 4
        %v3064 = vor.u32 %v3063, %v3059
        %v3065 = vrot.slane %v3064, 4
        %v3067 = vshll.u32 %v2970, 16
        %v3069 = vrot.slane %v3067, 5
        %v3070 = vsel %vm533, %v3065, %v3069
        %v3072 = vshrl.u32 %v2959, 16
        %v3074 = vrot.slane %v3072, 4
        %v3075 = vshll.u32 %v2959, 16
        %v3077 = vrot.slane %v3075, 5
        %v3078 = vor.u32 %v3074, %v3077
        %v3079 = vrot.slane %v3078, 4
        %v3081 = vshll.u32 %v2960, 16
        %v3083 = vrot.slane %v3081, 5
        %v3084 = vsel %vm533, %v3079, %v3083
        %v3085 = vshrl.u32 %v2960, 16
        %v3087 = vrot.slane %v3085, 4
        %v3088 = vor.u32 %v3087, %v3083
        %v3089 = vrot.slane %v3088, 4
        %v3091 = vshll.u32 %v2971, 16
        %v3093 = vrot.slane %v3091, 5
        %v3094 = vsel %vm533, %v3089, %v3093
        %v3096 = vshrl.u32 %v2961, 16
        %v3098 = vrot.slane %v3096, 4
        %v3099 = vshll.u32 %v2961, 16
        %v3101 = vrot.slane %v3099, 5
        %v3102 = vor.u32 %v3098, %v3101
        %v3103 = vrot.slane %v3102, 4
        %v3105 = vshll.u32 %v2962, 16
        %v3107 = vrot.slane %v3105, 5
        %v3108 = vsel %vm533, %v3103, %v3107
        %v3109 = vshrl.u32 %v2962, 16
        %v3111 = vrot.slane %v3109, 4
        %v3112 = vor.u32 %v3111, %v3107
        %v3113 = vrot.slane %v3112, 4
        %v3115 = vshll.u32 %v2972, 16
        %v3117 = vrot.slane %v3115, 5
        %v3118 = vsel %vm533, %v3113, %v3117
        %v3120 = vshrl.u32 %v2963, 16
        %v3122 = vrot.slane %v3120, 4
        %v3123 = vshll.u32 %v2963, 16
        %v3125 = vrot.slane %v3123, 5
        %v3126 = vor.u32 %v3122, %v3125
        %v3127 = vrot.slane %v3126, 4
        %v3129 = vshll.u32 %v2964, 16
        %v3131 = vrot.slane %v3129, 5
        %v3132 = vsel %vm533, %v3127, %v3131
        %v3133 = vshrl.u32 %v2964, 16
        %v3135 = vrot.slane %v3133, 4
        %v3136 = vor.u32 %v3135, %v3131
        %v3137 = vrot.slane %v3136, 4
        %v3139 = vshll.u32 %v2973, 16
        %v3141 = vrot.slane %v3139, 5
        %v3142 = vsel %vm533, %v3137, %v3141
        %v3144 = vshrl.u32 %v2965, 16
        %v3146 = vrot.slane %v3144, 4
        %v3147 = vshll.u32 %v2965, 16
        %v3149 = vrot.slane %v3147, 5
        %v3150 = vor.u32 %v3146, %v3149
        %v3151 = vrot.slane %v3150, 4
        %v3153 = vshll.u32 %v2966, 16
        %v3155 = vrot.slane %v3153, 5
        %v3156 = vsel %vm533, %v3151, %v3155
        %v3157 = vshrl.u32 %v2966, 16
        %v3159 = vrot.slane %v3157, 4
        %v3160 = vor.u32 %v3159, %v3155
        %v3161 = vrot.slane %v3160, 4
        %v3163 = vshll.u32 %v2974, 16
        %v3165 = vrot.slane %v3163, 5
        %v3166 = vsel %vm533, %v3161, %v3165
        %v3167 = vld [vmem:[%s2950] sm:$0xe]
        %v3168 = vld [vmem:[%s2950 + $0xc] sm:$0xe]
        %v3169 = vld [vmem:[%s2950 + $0x18] sm:$0xe]
        %v3170 = vld [vmem:[%s2950 + $0x24] sm:$0xe]
        %v3171 = vld [vmem:[%s2950 + $0x30] sm:$0xe]
        %v3172 = vld [vmem:[%s2950 + $0x3c] sm:$0xe]
        %v3173 = vld [vmem:[%s2950 + $0x48] sm:$0xe]
        %v3174 = vld [vmem:[%s2950 + $0x54] sm:$0xe]
        %v3199 = vrot.slane %v3167, 5
        %v3200 = vrot.slane %v3199, 4
        %v3201 = vrot.slane %v2952, 5
        %v3202 = vsel %vm760, %v3200, %v3201
        %v3203 = vrot.slane %v3201, 4
        %v3204 = vrot.slane %v2967, 5
        %v3205 = vsel %vm760, %v3203, %v3204
        %v3206 = vrot.slane %v3168, 5
        %v3207 = vrot.slane %v3206, 4
        %v3208 = vrot.slane %v2954, 5
        %v3209 = vsel %vm760, %v3207, %v3208
        %v3210 = vrot.slane %v3208, 4
        %v3211 = vrot.slane %v2968, 5
        %v3212 = vsel %vm760, %v3210, %v3211
        %v3213 = vrot.slane %v3169, 5
        %v3214 = vrot.slane %v3213, 4
        %v3215 = vrot.slane %v2956, 5
        %v3216 = vsel %vm760, %v3214, %v3215
        %v3217 = vrot.slane %v3215, 4
        %v3218 = vrot.slane %v2969, 5
        %v3219 = vsel %vm760, %v3217, %v3218
        %v3220 = vrot.slane %v3170, 5
        %v3221 = vrot.slane %v3220, 4
        %v3222 = vrot.slane %v2958, 5
        %v3223 = vsel %vm760, %v3221, %v3222
        %v3224 = vrot.slane %v3222, 4
        %v3225 = vrot.slane %v2970, 5
        %v3226 = vsel %vm760, %v3224, %v3225
        %v3227 = vrot.slane %v3171, 5
        %v3228 = vrot.slane %v3227, 4
        %v3229 = vrot.slane %v2960, 5
        %v3230 = vsel %vm760, %v3228, %v3229
        %v3231 = vrot.slane %v3229, 4
        %v3232 = vrot.slane %v2971, 5
        %v3233 = vsel %vm760, %v3231, %v3232
        %v3234 = vrot.slane %v3172, 5
        %v3235 = vrot.slane %v3234, 4
        %v3236 = vrot.slane %v2962, 5
        %v3237 = vsel %vm760, %v3235, %v3236
        %v3238 = vrot.slane %v3236, 4
        %v3239 = vrot.slane %v2972, 5
        %v3240 = vsel %vm760, %v3238, %v3239
        %v3241 = vrot.slane %v3173, 5
        %v3242 = vrot.slane %v3241, 4
        %v3243 = vrot.slane %v2964, 5
        %v3244 = vsel %vm760, %v3242, %v3243
        %v3245 = vrot.slane %v3243, 4
        %v3246 = vrot.slane %v2973, 5
        %v3247 = vsel %vm760, %v3245, %v3246
        %v3248 = vrot.slane %v3174, 5
        %v3249 = vrot.slane %v3248, 4
        %v3250 = vrot.slane %v2966, 5
        %v3251 = vsel %vm760, %v3249, %v3250
        %v3252 = vrot.slane %v3250, 4
        %v3253 = vrot.slane %v2974, 5
        %v3254 = vsel %vm760, %v3252, %v3253
        %v3255 = vld [vmem:[%s4] sm:$0xf]
        %v3256 = vld [vmem:[%s4 + $0x4] sm:$0xf]
        %v3257 = vld [vmem:[%s4 + $0x8] sm:$0xf]
        %v3258 = vld [vmem:[%s4 + $0xc] sm:$0xf]
        %v3259 = vunpack.c.l.b16 %v547
        %v3260 = vunpack.c.l.b16 %v557
        %v3261 = vunpack.c.l.b16 %v571
        %v3262 = vunpack.c.l.b16 %v581
        %v3263 = vunpack.c.l.b16 %v595
        %v3264 = vunpack.c.l.b16 %v605
        %v3265 = vunpack.c.l.b16 %v619
        %v3266 = vunpack.c.l.b16 %v629
        %v3267 = vunpack.c.l.b16 %v643
        %v3268 = vunpack.c.l.b16 %v653
        %v3269 = vunpack.c.l.b16 %v667
        %v3270 = vunpack.c.l.b16 %v677
        %v3271 = vunpack.c.l.b16 %v691
        %v3272 = vunpack.c.l.b16 %v701
        %v3273 = vunpack.c.l.b16 %v715
        %v3274 = vunpack.c.l.b16 %v725
        %v3275 = vpack.c.b16 %v3260, %v3259
        %v3276 = vpack.c.b16 %v3262, %v3261
        %v3277 = vpack.c.b16 %v3264, %v3263
        %v3278 = vpack.c.b16 %v3266, %v3265
        %v3279 = vpack.c.b16 %v3268, %v3267
        %v3280 = vpack.c.b16 %v3270, %v3269
        %v3281 = vpack.c.b16 %v3272, %v3271
        %v3282 = vpack.c.b16 %v3274, %v3273
        %v3285 = vunpack.c.l.b16 %v3257
        %v3286 = vunpack.c.l.b16 %v3258
        %v3287 = vpack.c.b16 %v3286, %v3285
        %vm3289 = vcmask 130048
        %v3291 = vsel %vm3289, %v3275, 0
        %v3294 = vsel %vm3289, %v3276, 0
        %v3297 = vsel %vm3289, %v3277, 0
        %v3300 = vsel %vm3289, %v3278, 0
        %v3303 = vsel %vm3289, %v3279, 0
        %v3306 = vsel %vm3289, %v3280, 0
        %v3309 = vsel %vm3289, %v3281, 0
        %v3312 = vsel %vm3289, %v3282, 0
        %3314 = vmatprep.subr.bf16.mxu0 0
        %3315 = vmatpush1.bf16.msra.mxu0 %v3287
        %3316 = vmatprep.subr.bf16.mxu0 0
        %3317 = vmatpush1.bf16.msra.mxu0 0
        %3318 = vmatprep.subr.bf16.mxu0 0
        %3319 = vmatpush1.bf16.msra.mxu0 0
        %3320 = vmatprep.subr.bf16.mxu0 0
        %3321 = vmatpush1.bf16.msra.mxu0 0
        %3322 = vmatprep.subr.bf16.mxu0 0
        %3323 = vmatpush1.bf16.msra.mxu0 0
        %3324 = vmatprep.subr.bf16.mxu0 0
        %3325 = vmatpush1.bf16.msra.mxu0 0
        %3326 = vmatprep.subr.bf16.mxu0 0
        %3327 = vmatpush1.bf16.msra.mxu0 0
        %3328 = vmatprep.subr.bf16.mxu0 0
        %3329 = vmatpush1.bf16.msra.mxu0 0
        %3330 = vmatprep.subr.bf16.mxu0 0
        %3331 = vmatpush1.bf16.msra.mxu0 0
        %3332 = vmatprep.subr.bf16.mxu0 0
        %3333 = vmatpush1.bf16.msra.mxu0 0
        %3334 = vmatprep.subr.bf16.mxu0 0
        %3335 = vmatpush1.bf16.msra.mxu0 0
        %3336 = vmatprep.subr.bf16.mxu0 0
        %3337 = vmatpush1.bf16.msra.mxu0 0
        %3338 = vmatprep.subr.bf16.mxu0 0
        %3339 = vmatpush1.bf16.msra.mxu0 0
        %3340 = vmatprep.subr.bf16.mxu0 0
        %3341 = vmatpush1.bf16.msra.mxu0 0
        %3342 = vmatprep.subr.bf16.mxu0 0
        %3343 = vmatpush1.bf16.msra.mxu0 0
        %3344 = vmatprep.subr.bf16.mxu0 0
        %3345 = vmatpush1.bf16.msra.mxu0 0
        %3346 = vmatprep.mubr.bf16.mxu0 0
        %3347 = vmatmul.mubr.bf16.gmra.mrb[0].mxu0 %v3291
        %v3348 = vpop.f32.mrb[0].mxu0
        %v3349 = vadd.f32 0.0, %v3348
        %v3350 = vpop.f32.mrb[0].mxu0
        %v3351 = vpop.f32.mrb[0].mxu0
        %v3352 = vadd.f32 0.0, %v3351
        %v3353 = vpop.f32.mrb[0].mxu0
        %3354 = vmatprep.mubr.bf16.mxu0 0
        %3355 = vmatmul.mubr.bf16.gmra.mrb[0].mxu0 %v3294
        %v3356 = vpop.f32.mrb[0].mxu0
        %v3357 = vadd.f32 0.0, %v3356
        %v3358 = vpop.f32.mrb[0].mxu0
        %v3359 = vpop.f32.mrb[0].mxu0
        %v3360 = vadd.f32 0.0, %v3359
        %v3361 = vpop.f32.mrb[0].mxu0
        %3362 = vmatprep.mubr.bf16.mxu0 0
        %3363 = vmatmul.mubr.bf16.gmra.mrb[0].mxu0 %v3297
        %v3364 = vpop.f32.mrb[0].mxu0
        %v3365 = vadd.f32 0.0, %v3364
        %v3366 = vpop.f32.mrb[0].mxu0
        %v3367 = vpop.f32.mrb[0].mxu0
        %v3368 = vadd.f32 0.0, %v3367
        %v3369 = vpop.f32.mrb[0].mxu0
        %3370 = vmatprep.mubr.bf16.mxu0 0
        %3371 = vmatmul.mubr.bf16.gmra.mrb[0].mxu0 %v3300
        %v3372 = vpop.f32.mrb[0].mxu0
        %v3373 = vadd.f32 0.0, %v3372
        %v3374 = vpop.f32.mrb[0].mxu0
        %v3375 = vpop.f32.mrb[0].mxu0
        %v3376 = vadd.f32 0.0, %v3375
        %v3377 = vpop.f32.mrb[0].mxu0
        %3378 = vmatprep.mubr.bf16.mxu0 0
        %3379 = vmatmul.mubr.bf16.gmra.mrb[0].mxu0 %v3303
        %v3380 = vpop.f32.mrb[0].mxu0
        %v3381 = vadd.f32 0.0, %v3380
        %v3382 = vpop.f32.mrb[0].mxu0
        %v3383 = vpop.f32.mrb[0].mxu0
        %v3384 = vadd.f32 0.0, %v3383
        %v3385 = vpop.f32.mrb[0].mxu0
        %3386 = vmatprep.mubr.bf16.mxu0 0
        %3387 = vmatmul.mubr.bf16.gmra.mrb[0].mxu0 %v3306
        %v3388 = vpop.f32.mrb[0].mxu0
        %v3389 = vadd.f32 0.0, %v3388
        %v3390 = vpop.f32.mrb[0].mxu0
        %v3391 = vpop.f32.mrb[0].mxu0
        %v3392 = vadd.f32 0.0, %v3391
        %v3393 = vpop.f32.mrb[0].mxu0
        %3394 = vmatprep.mubr.bf16.mxu0 0
        %3395 = vmatmul.mubr.bf16.gmra.mrb[0].mxu0 %v3309
        %v3396 = vpop.f32.mrb[0].mxu0
        %v3397 = vadd.f32 0.0, %v3396
        %v3398 = vpop.f32.mrb[0].mxu0
        %v3399 = vpop.f32.mrb[0].mxu0
        %v3400 = vadd.f32 0.0, %v3399
        %v3401 = vpop.f32.mrb[0].mxu0
        %3402 = vmatprep.mubr.bf16.mxu0 0
        %3403 = vmatmul.mubr.bf16.gmra.mrb[0].mxu0 %v3312
        %v3404 = vpop.f32.mrb[0].mxu0
        %v3405 = vadd.f32 0.0, %v3404
        %v3406 = vpop.f32.mrb[0].mxu0
        %v3407 = vpop.f32.mrb[0].mxu0
        %v3408 = vadd.f32 0.0, %v3407
        %v3409 = vpop.f32.mrb[0].mxu0
        %3410 = vdwg.mxu0
        %v3419 = vunpack.c.l.b16 %v507
        %v3420 = vunpack.c.l.b16 %v508
        %v3421 = vunpack.c.l.b16 %v509
        %v3422 = vunpack.c.l.b16 %v510
        %v3423 = vunpack.c.l.b16 %v511
        %v3424 = vunpack.c.l.b16 %v512
        %v3425 = vunpack.c.l.b16 %v513
        %v3426 = vunpack.c.l.b16 %v514
        %v3427 = vunpack.c.l.b16 %v515
        %v3428 = vunpack.c.l.b16 %v516
        %v3429 = vunpack.c.l.b16 %v517
        %v3430 = vunpack.c.l.b16 %v518
        %v3431 = vunpack.c.l.b16 %v519
        %v3432 = vunpack.c.l.b16 %v520
        %v3433 = vunpack.c.l.b16 %v521
        %v3434 = vunpack.c.l.b16 %v522
        %v3435 = vpack.c.b16 %v3420, %v3419
        %v3436 = vpack.c.b16 %v3422, %v3421
        %v3437 = vpack.c.b16 %v3424, %v3423
        %v3438 = vpack.c.b16 %v3426, %v3425
        %v3439 = vpack.c.b16 %v3428, %v3427
        %v3440 = vpack.c.b16 %v3430, %v3429
        %v3441 = vpack.c.b16 %v3432, %v3431
        %v3442 = vpack.c.b16 %v3434, %v3433
        %v3445 = vunpack.c.l.b16 %v3255
        %v3446 = vunpack.c.l.b16 %v3256
        %v3447 = vpack.c.b16 %v3446, %v3445
        %v3450 = vsel %vm3289, %v3435, 0
        %v3453 = vsel %vm3289, %v3436, 0
        %v3456 = vsel %vm3289, %v3437, 0
        %v3459 = vsel %vm3289, %v3438, 0
        %v3462 = vsel %vm3289, %v3439, 0
        %v3465 = vsel %vm3289, %v3440, 0
        %v3468 = vsel %vm3289, %v3441, 0
        %v3471 = vsel %vm3289, %v3442, 0
        %3473 = vmatprep.subr.bf16.mxu0 0
        %3474 = vmatpush1.bf16.msra.mxu0 %v3447
        %3475 = vmatprep.subr.bf16.mxu0 0
        %3476 = vmatpush1.bf16.msra.mxu0 0
        %3477 = vmatprep.subr.bf16.mxu0 0
        %3478 = vmatpush1.bf16.msra.mxu0 0
        %3479 = vmatprep.subr.bf16.mxu0 0
        %3480 = vmatpush1.bf16.msra.mxu0 0
        %3481 = vmatprep.subr.bf16.mxu0 0
        %3482 = vmatpush1.bf16.msra.mxu0 0
        %3483 = vmatprep.subr.bf16.mxu0 0
        %3484 = vmatpush1.bf16.msra.mxu0 0
        %3485 = vmatprep.subr.bf16.mxu0 0
        %3486 = vmatpush1.bf16.msra.mxu0 0
        %3487 = vmatprep.subr.bf16.mxu0 0
        %3488 = vmatpush1.bf16.msra.mxu0 0
        %3489 = vmatprep.subr.bf16.mxu0 0
        %3490 = vmatpush1.bf16.msra.mxu0 0
        %3491 = vmatprep.subr.bf16.mxu0 0
        %3492 = vmatpush1.bf16.msra.mxu0 0
        %3493 = vmatprep.subr.bf16.mxu0 0
        %3494 = vmatpush1.bf16.msra.mxu0 0
        %3495 = vmatprep.subr.bf16.mxu0 0
        %3496 = vmatpush1.bf16.msra.mxu0 0
        %3497 = vmatprep.subr.bf16.mxu0 0
        %3498 = vmatpush1.bf16.msra.mxu0 0
        %3499 = vmatprep.subr.bf16.mxu0 0
        %3500 = vmatpush1.bf16.msra.mxu0 0
        %3501 = vmatprep.subr.bf16.mxu0 0
        %3502 = vmatpush1.bf16.msra.mxu0 0
        %3503 = vmatprep.subr.bf16.mxu0 0
        %3504 = vmatpush1.bf16.msra.mxu0 0
        %3505 = vmatprep.mubr.bf16.mxu0 0
        %3506 = vmatmul.mubr.bf16.gmra.mrb[0].mxu0 %v3450
        %v3507 = vpop.f32.mrb[0].mxu0
        %v3508 = vadd.f32 %v3349, %v3507
        %v3509 = vpop.f32.mrb[0].mxu0
        %v3510 = vpop.f32.mrb[0].mxu0
        %v3511 = vadd.f32 %v3352, %v3510
        %v3512 = vpop.f32.mrb[0].mxu0
        %3513 = vmatprep.mubr.bf16.mxu0 0
        %3514 = vmatmul.mubr.bf16.gmra.mrb[0].mxu0 %v3453
        %v3515 = vpop.f32.mrb[0].mxu0
        %v3516 = vadd.f32 %v3357, %v3515
        %v3517 = vpop.f32.mrb[0].mxu0
        %v3518 = vpop.f32.mrb[0].mxu0
        %v3519 = vadd.f32 %v3360, %v3518
        %v3520 = vpop.f32.mrb[0].mxu0
        %3521 = vmatprep.mubr.bf16.mxu0 0
        %3522 = vmatmul.mubr.bf16.gmra.mrb[0].mxu0 %v3456
        %v3523 = vpop.f32.mrb[0].mxu0
        %v3524 = vadd.f32 %v3365, %v3523
        %v3525 = vpop.f32.mrb[0].mxu0
        %v3526 = vpop.f32.mrb[0].mxu0
        %v3527 = vadd.f32 %v3368, %v3526
        %v3528 = vpop.f32.mrb[0].mxu0
        %3529 = vmatprep.mubr.bf16.mxu0 0
        %3530 = vmatmul.mubr.bf16.gmra.mrb[0].mxu0 %v3459
        %v3531 = vpop.f32.mrb[0].mxu0
        %v3532 = vadd.f32 %v3373, %v3531
        %v3533 = vpop.f32.mrb[0].mxu0
        %v3534 = vpop.f32.mrb[0].mxu0
        %v3535 = vadd.f32 %v3376, %v3534
        %v3536 = vpop.f32.mrb[0].mxu0
        %3537 = vmatprep.mubr.bf16.mxu0 0
        %3538 = vmatmul.mubr.bf16.gmra.mrb[0].mxu0 %v3462
        %v3539 = vpop.f32.mrb[0].mxu0
        %v3540 = vadd.f32 %v3381, %v3539
        %v3541 = vpop.f32.mrb[0].mxu0
        %v3542 = vpop.f32.mrb[0].mxu0
        %v3543 = vadd.f32 %v3384, %v3542
        %v3544 = vpop.f32.mrb[0].mxu0
        %3545 = vmatprep.mubr.bf16.mxu0 0
        %3546 = vmatmul.mubr.bf16.gmra.mrb[0].mxu0 %v3465
        %v3547 = vpop.f32.mrb[0].mxu0
        %v3548 = vadd.f32 %v3389, %v3547
        %v3549 = vpop.f32.mrb[0].mxu0
        %v3550 = vpop.f32.mrb[0].mxu0
        %v3551 = vadd.f32 %v3392, %v3550
        %v3552 = vpop.f32.mrb[0].mxu0
        %3553 = vmatprep.mubr.bf16.mxu0 0
        %3554 = vmatmul.mubr.bf16.gmra.mrb[0].mxu0 %v3468
        %v3555 = vpop.f32.mrb[0].mxu0
        %v3556 = vadd.f32 %v3397, %v3555
        %v3557 = vpop.f32.mrb[0].mxu0
        %v3558 = vpop.f32.mrb[0].mxu0
        %v3559 = vadd.f32 %v3400, %v3558
        %v3560 = vpop.f32.mrb[0].mxu0
        %3561 = vmatprep.mubr.bf16.mxu0 0
        %3562 = vmatmul.mubr.bf16.gmra.mrb[0].mxu0 %v3471
        %v3563 = vpop.f32.mrb[0].mxu0
        %v3564 = vadd.f32 %v3405, %v3563
        %v3565 = vpop.f32.mrb[0].mxu0
        %v3566 = vpop.f32.mrb[0].mxu0
        %v3567 = vadd.f32 %v3408, %v3566
        %v3568 = vpop.f32.mrb[0].mxu0
        %3569 = vdwg.mxu0
        %v3570 = vld [vmem:[%s4 + $0x10] sm:$0xf]
        %v3571 = vld [vmem:[%s4 + $0x14] sm:$0xf]
        %v3572 = vunpack.c.l.b16 %v764
        %v3573 = vunpack.c.l.b16 %v767
        %v3574 = vunpack.c.l.b16 %v771
        %v3575 = vunpack.c.l.b16 %v774
        %v3576 = vunpack.c.l.b16 %v778
        %v3577 = vunpack.c.l.b16 %v781
        %v3578 = vunpack.c.l.b16 %v785
        %v3579 = vunpack.c.l.b16 %v788
        %v3580 = vunpack.c.l.b16 %v792
        %v3581 = vunpack.c.l.b16 %v795
        %v3582 = vunpack.c.l.b16 %v799
        %v3583 = vunpack.c.l.b16 %v802
        %v3584 = vunpack.c.l.b16 %v806
        %v3585 = vunpack.c.l.b16 %v809
        %v3586 = vunpack.c.l.b16 %v813
        %v3587 = vunpack.c.l.b16 %v816
        %v3588 = vpack.c.b16 %v3573, %v3572
        %v3589 = vpack.c.b16 %v3575, %v3574
        %v3590 = vpack.c.b16 %v3577, %v3576
        %v3591 = vpack.c.b16 %v3579, %v3578
        %v3592 = vpack.c.b16 %v3581, %v3580
        %v3593 = vpack.c.b16 %v3583, %v3582
        %v3594 = vpack.c.b16 %v3585, %v3584
        %v3595 = vpack.c.b16 %v3587, %v3586
        %v3598 = vunpack.c.l.b16 %v3570
        %v3599 = vunpack.c.l.b16 %v3571
        %v3600 = vpack.c.b16 %v3599, %v3598
        %v3603 = vsel %vm3289, %v3588, 0
        %v3606 = vsel %vm3289, %v3589, 0
        %v3609 = vsel %vm3289, %v3590, 0
        %v3612 = vsel %vm3289, %v3591, 0
        %v3615 = vsel %vm3289, %v3592, 0
        %v3618 = vsel %vm3289, %v3593, 0
        %v3621 = vsel %vm3289, %v3594, 0
        %v3624 = vsel %vm3289, %v3595, 0
        %3626 = vmatprep.subr.bf16.mxu0 0
        %3627 = vmatpush1.bf16.msra.mxu0 %v3600
        %3628 = vmatprep.subr.bf16.mxu0 0
        %3629 = vmatpush1.bf16.msra.mxu0 0
        %3630 = vmatprep.subr.bf16.mxu0 0
        %3631 = vmatpush1.bf16.msra.mxu0 0
        %3632 = vmatprep.subr.bf16.mxu0 0
        %3633 = vmatpush1.bf16.msra.mxu0 0
        %3634 = vmatprep.subr.bf16.mxu0 0
        %3635 = vmatpush1.bf16.msra.mxu0 0
        %3636 = vmatprep.subr.bf16.mxu0 0
        %3637 = vmatpush1.bf16.msra.mxu0 0
        %3638 = vmatprep.subr.bf16.mxu0 0
        %3639 = vmatpush1.bf16.msra.mxu0 0
        %3640 = vmatprep.subr.bf16.mxu0 0
        %3641 = vmatpush1.bf16.msra.mxu0 0
        %3642 = vmatprep.subr.bf16.mxu0 0
        %3643 = vmatpush1.bf16.msra.mxu0 0
        %3644 = vmatprep.subr.bf16.mxu0 0
        %3645 = vmatpush1.bf16.msra.mxu0 0
        %3646 = vmatprep.subr.bf16.mxu0 0
        %3647 = vmatpush1.bf16.msra.mxu0 0
        %3648 = vmatprep.subr.bf16.mxu0 0
        %3649 = vmatpush1.bf16.msra.mxu0 0
        %3650 = vmatprep.subr.bf16.mxu0 0
        %3651 = vmatpush1.bf16.msra.mxu0 0
        %3652 = vmatprep.subr.bf16.mxu0 0
        %3653 = vmatpush1.bf16.msra.mxu0 0
        %3654 = vmatprep.subr.bf16.mxu0 0
        %3655 = vmatpush1.bf16.msra.mxu0 0
        %3656 = vmatprep.subr.bf16.mxu0 0
        %3657 = vmatpush1.bf16.msra.mxu0 0
        %3658 = vmatprep.mubr.bf16.mxu0 0
        %3659 = vmatmul.mubr.bf16.gmra.mrb[0].mxu0 %v3603
        %v3660 = vpop.f32.mrb[0].mxu0
        %v3661 = vadd.f32 0.0, %v3660
        %v3662 = vpop.f32.mrb[0].mxu0
        %v3663 = vpop.f32.mrb[0].mxu0
        %v3664 = vadd.f32 0.0, %v3663
        %v3665 = vpop.f32.mrb[0].mxu0
        %3666 = vmatprep.mubr.bf16.mxu0 0
        %3667 = vmatmul.mubr.bf16.gmra.mrb[0].mxu0 %v3606
        %v3668 = vpop.f32.mrb[0].mxu0
        %v3669 = vadd.f32 0.0, %v3668
        %v3670 = vpop.f32.mrb[0].mxu0
        %v3671 = vpop.f32.mrb[0].mxu0
        %v3672 = vadd.f32 0.0, %v3671
        %v3673 = vpop.f32.mrb[0].mxu0
        %3674 = vmatprep.mubr.bf16.mxu0 0
        %3675 = vmatmul.mubr.bf16.gmra.mrb[0].mxu0 %v3609
        %v3676 = vpop.f32.mrb[0].mxu0
        %v3677 = vadd.f32 0.0, %v3676
        %v3678 = vpop.f32.mrb[0].mxu0
        %v3679 = vpop.f32.mrb[0].mxu0
        %v3680 = vadd.f32 0.0, %v3679
        %v3681 = vpop.f32.mrb[0].mxu0
        %3682 = vmatprep.mubr.bf16.mxu0 0
        %3683 = vmatmul.mubr.bf16.gmra.mrb[0].mxu0 %v3612
        %v3684 = vpop.f32.mrb[0].mxu0
        %v3685 = vadd.f32 0.0, %v3684
        %v3686 = vpop.f32.mrb[0].mxu0
        %v3687 = vpop.f32.mrb[0].mxu0
        %v3688 = vadd.f32 0.0, %v3687
        %v3689 = vpop.f32.mrb[0].mxu0
        %3690 = vmatprep.mubr.bf16.mxu0 0
        %3691 = vmatmul.mubr.bf16.gmra.mrb[0].mxu0 %v3615
        %v3692 = vpop.f32.mrb[0].mxu0
        %v3693 = vadd.f32 0.0, %v3692
        %v3694 = vpop.f32.mrb[0].mxu0
        %v3695 = vpop.f32.mrb[0].mxu0
        %v3696 = vadd.f32 0.0, %v3695
        %v3697 = vpop.f32.mrb[0].mxu0
        %3698 = vmatprep.mubr.bf16.mxu0 0
        %3699 = vmatmul.mubr.bf16.gmra.mrb[0].mxu0 %v3618
        %v3700 = vpop.f32.mrb[0].mxu0
        %v3701 = vadd.f32 0.0, %v3700
        %v3702 = vpop.f32.mrb[0].mxu0
        %v3703 = vpop.f32.mrb[0].mxu0
        %v3704 = vadd.f32 0.0, %v3703
        %v3705 = vpop.f32.mrb[0].mxu0
        %3706 = vmatprep.mubr.bf16.mxu0 0
        %3707 = vmatmul.mubr.bf16.gmra.mrb[0].mxu0 %v3621
        %v3708 = vpop.f32.mrb[0].mxu0
        %v3709 = vadd.f32 0.0, %v3708
        %v3710 = vpop.f32.mrb[0].mxu0
        %v3711 = vpop.f32.mrb[0].mxu0
        %v3712 = vadd.f32 0.0, %v3711
        %v3713 = vpop.f32.mrb[0].mxu0
        %3714 = vmatprep.mubr.bf16.mxu0 0
        %3715 = vmatmul.mubr.bf16.gmra.mrb[0].mxu0 %v3624
        %v3716 = vpop.f32.mrb[0].mxu0
        %v3717 = vadd.f32 0.0, %v3716
        %v3718 = vpop.f32.mrb[0].mxu0
        %v3719 = vpop.f32.mrb[0].mxu0
        %v3720 = vadd.f32 0.0, %v3719
        %v3721 = vpop.f32.mrb[0].mxu0
        %3722 = vdwg.mxu0
        %v3723 = vadd.f32 %v3508, %v3661
        %v3724 = vadd.f32 %v3511, %v3664
        %v3725 = vadd.f32 %v3516, %v3669
        %v3726 = vadd.f32 %v3519, %v3672
        %v3727 = vadd.f32 %v3524, %v3677
        %v3728 = vadd.f32 %v3527, %v3680
        %v3729 = vadd.f32 %v3532, %v3685
        %v3730 = vadd.f32 %v3535, %v3688
        %v3731 = vadd.f32 %v3540, %v3693
        %v3732 = vadd.f32 %v3543, %v3696
        %v3733 = vadd.f32 %v3548, %v3701
        %v3734 = vadd.f32 %v3551, %v3704
        %v3735 = vadd.f32 %v3556, %v3709
        %v3736 = vadd.f32 %v3559, %v3712
        %v3737 = vadd.f32 %v3564, %v3717
        %v3738 = vadd.f32 %v3567, %v3720
        %v3739 = vld [vmem:[%s4 + $0x18] sm:$0xf]
        %v3740 = vld [vmem:[%s4 + $0x1c] sm:$0xf]
        %v3749 = vunpack.c.l.b16 %v818
        %v3750 = vunpack.c.l.b16 %v819
        %v3751 = vunpack.c.l.b16 %v820
        %v3752 = vunpack.c.l.b16 %v821
        %v3753 = vunpack.c.l.b16 %v822
        %v3754 = vunpack.c.l.b16 %v823
        %v3755 = vunpack.c.l.b16 %v824
        %v3756 = vunpack.c.l.b16 %v825
        %v3757 = vunpack.c.l.b16 %v826
        %v3758 = vunpack.c.l.b16 %v827
        %v3759 = vunpack.c.l.b16 %v828
        %v3760 = vunpack.c.l.b16 %v829
        %v3761 = vunpack.c.l.b16 %v830
        %v3762 = vunpack.c.l.b16 %v831
        %v3763 = vunpack.c.l.b16 %v832
        %v3764 = vunpack.c.l.b16 %v833
        %v3765 = vpack.c.b16 %v3750, %v3749
        %v3766 = vpack.c.b16 %v3752, %v3751
        %v3767 = vpack.c.b16 %v3754, %v3753
        %v3768 = vpack.c.b16 %v3756, %v3755
        %v3769 = vpack.c.b16 %v3758, %v3757
        %v3770 = vpack.c.b16 %v3760, %v3759
        %v3771 = vpack.c.b16 %v3762, %v3761
        %v3772 = vpack.c.b16 %v3764, %v3763
        %v3775 = vunpack.c.l.b16 %v3739
        %v3776 = vunpack.c.l.b16 %v3740
        %v3777 = vpack.c.b16 %v3776, %v3775
        %v3780 = vsel %vm3289, %v3765, 0
        %v3783 = vsel %vm3289, %v3766, 0
        %v3786 = vsel %vm3289, %v3767, 0
        %v3789 = vsel %vm3289, %v3768, 0
        %v3792 = vsel %vm3289, %v3769, 0
        %v3795 = vsel %vm3289, %v3770, 0
        %v3798 = vsel %vm3289, %v3771, 0
        %v3801 = vsel %vm3289, %v3772, 0
        %3803 = vmatprep.subr.bf16.mxu0 0
        %3804 = vmatpush1.bf16.msra.mxu0 %v3777
        %3805 = vmatprep.subr.bf16.mxu0 0
        %3806 = vmatpush1.bf16.msra.mxu0 0
        %3807 = vmatprep.subr.bf16.mxu0 0
        %3808 = vmatpush1.bf16.msra.mxu0 0
        %3809 = vmatprep.subr.bf16.mxu0 0
        %3810 = vmatpush1.bf16.msra.mxu0 0
        %3811 = vmatprep.subr.bf16.mxu0 0
        %3812 = vmatpush1.bf16.msra.mxu0 0
        %3813 = vmatprep.subr.bf16.mxu0 0
        %3814 = vmatpush1.bf16.msra.mxu0 0
        %3815 = vmatprep.subr.bf16.mxu0 0
        %3816 = vmatpush1.bf16.msra.mxu0 0
        %3817 = vmatprep.subr.bf16.mxu0 0
        %3818 = vmatpush1.bf16.msra.mxu0 0
        %3819 = vmatprep.subr.bf16.mxu0 0
        %3820 = vmatpush1.bf16.msra.mxu0 0
        %3821 = vmatprep.subr.bf16.mxu0 0
        %3822 = vmatpush1.bf16.msra.mxu0 0
        %3823 = vmatprep.subr.bf16.mxu0 0
        %3824 = vmatpush1.bf16.msra.mxu0 0
        %3825 = vmatprep.subr.bf16.mxu0 0
        %3826 = vmatpush1.bf16.msra.mxu0 0
        %3827 = vmatprep.subr.bf16.mxu0 0
        %3828 = vmatpush1.bf16.msra.mxu0 0
        %3829 = vmatprep.subr.bf16.mxu0 0
        %3830 = vmatpush1.bf16.msra.mxu0 0
        %3831 = vmatprep.subr.bf16.mxu0 0
        %3832 = vmatpush1.bf16.msra.mxu0 0
        %3833 = vmatprep.subr.bf16.mxu0 0
        %3834 = vmatpush1.bf16.msra.mxu0 0
        %3835 = vmatprep.mubr.bf16.mxu0 0
        %3836 = vmatmul.mubr.bf16.gmra.mrb[0].mxu0 %v3780
        %v3837 = vpop.f32.mrb[0].mxu0
        %v3838 = vadd.f32 0.0, %v3837
        %v3839 = vpop.f32.mrb[0].mxu0
        %v3840 = vpop.f32.mrb[0].mxu0
        %v3841 = vadd.f32 0.0, %v3840
        %v3842 = vpop.f32.mrb[0].mxu0
        %3843 = vmatprep.mubr.bf16.mxu0 0
        %3844 = vmatmul.mubr.bf16.gmra.mrb[0].mxu0 %v3783
        %v3845 = vpop.f32.mrb[0].mxu0
        %v3846 = vadd.f32 0.0, %v3845
        %v3847 = vpop.f32.mrb[0].mxu0
        %v3848 = vpop.f32.mrb[0].mxu0
        %v3849 = vadd.f32 0.0, %v3848
        %v3850 = vpop.f32.mrb[0].mxu0
        %3851 = vmatprep.mubr.bf16.mxu0 0
        %3852 = vmatmul.mubr.bf16.gmra.mrb[0].mxu0 %v3786
        %v3853 = vpop.f32.mrb[0].mxu0
        %v3854 = vadd.f32 0.0, %v3853
        %v3855 = vpop.f32.mrb[0].mxu0
        %v3856 = vpop.f32.mrb[0].mxu0
        %v3857 = vadd.f32 0.0, %v3856
        %v3858 = vpop.f32.mrb[0].mxu0
        %3859 = vmatprep.mubr.bf16.mxu0 0
        %3860 = vmatmul.mubr.bf16.gmra.mrb[0].mxu0 %v3789
        %v3861 = vpop.f32.mrb[0].mxu0
        %v3862 = vadd.f32 0.0, %v3861
        %v3863 = vpop.f32.mrb[0].mxu0
        %v3864 = vpop.f32.mrb[0].mxu0
        %v3865 = vadd.f32 0.0, %v3864
        %v3866 = vpop.f32.mrb[0].mxu0
        %3867 = vmatprep.mubr.bf16.mxu0 0
        %3868 = vmatmul.mubr.bf16.gmra.mrb[0].mxu0 %v3792
        %v3869 = vpop.f32.mrb[0].mxu0
        %v3870 = vadd.f32 0.0, %v3869
        %v3871 = vpop.f32.mrb[0].mxu0
        %v3872 = vpop.f32.mrb[0].mxu0
        %v3873 = vadd.f32 0.0, %v3872
        %v3874 = vpop.f32.mrb[0].mxu0
        %3875 = vmatprep.mubr.bf16.mxu0 0
        %3876 = vmatmul.mubr.bf16.gmra.mrb[0].mxu0 %v3795
        %v3877 = vpop.f32.mrb[0].mxu0
        %v3878 = vadd.f32 0.0, %v3877
        %v3879 = vpop.f32.mrb[0].mxu0
        %v3880 = vpop.f32.mrb[0].mxu0
        %v3881 = vadd.f32 0.0, %v3880
        %v3882 = vpop.f32.mrb[0].mxu0
        %3883 = vmatprep.mubr.bf16.mxu0 0
        %3884 = vmatmul.mubr.bf16.gmra.mrb[0].mxu0 %v3798
        %v3885 = vpop.f32.mrb[0].mxu0
        %v3886 = vadd.f32 0.0, %v3885
        %v3887 = vpop.f32.mrb[0].mxu0
        %v3888 = vpop.f32.mrb[0].mxu0
        %v3889 = vadd.f32 0.0, %v3888
        %v3890 = vpop.f32.mrb[0].mxu0
        %3891 = vmatprep.mubr.bf16.mxu0 0
        %3892 = vmatmul.mubr.bf16.gmra.mrb[0].mxu0 %v3801
        %v3893 = vpop.f32.mrb[0].mxu0
        %v3894 = vadd.f32 0.0, %v3893
        %v3895 = vpop.f32.mrb[0].mxu0
        %v3896 = vpop.f32.mrb[0].mxu0
        %v3897 = vadd.f32 0.0, %v3896
        %v3898 = vpop.f32.mrb[0].mxu0
        %3899 = vdwg.mxu0
        %v3900 = vadd.f32 %v3723, %v3838
        %v3901 = vadd.f32 %v3724, %v3841
        %v3902 = vadd.f32 %v3725, %v3846
        %v3903 = vadd.f32 %v3726, %v3849
        %v3904 = vadd.f32 %v3727, %v3854
        %v3905 = vadd.f32 %v3728, %v3857
        %v3906 = vadd.f32 %v3729, %v3862
        %v3907 = vadd.f32 %v3730, %v3865
        %v3908 = vadd.f32 %v3731, %v3870
        %v3909 = vadd.f32 %v3732, %v3873
        %v3910 = vadd.f32 %v3733, %v3878
        %v3911 = vadd.f32 %v3734, %v3881
        %v3912 = vadd.f32 %v3735, %v3886
        %v3913 = vadd.f32 %v3736, %v3889
        %v3914 = vadd.f32 %v3737, %v3894
        %v3915 = vadd.f32 %v3738, %v3897
        %v3916 = vld [vmem:[%s4 + $0x20] sm:$0xf]
        %v3917 = vld [vmem:[%s4 + $0x24] sm:$0xf]
        %v3918 = vunpack.c.l.b16 %v855
        %v3919 = vunpack.c.l.b16 %v865
        %v3920 = vunpack.c.l.b16 %v879
        %v3921 = vunpack.c.l.b16 %v889
        %v3922 = vunpack.c.l.b16 %v903
        %v3923 = vunpack.c.l.b16 %v913
        %v3924 = vunpack.c.l.b16 %v927
        %v3925 = vunpack.c.l.b16 %v937
        %v3926 = vunpack.c.l.b16 %v951
        %v3927 = vunpack.c.l.b16 %v961
        %v3928 = vunpack.c.l.b16 %v975
        %v3929 = vunpack.c.l.b16 %v985
        %v3930 = vunpack.c.l.b16 %v999
        %v3931 = vunpack.c.l.b16 %v1009
        %v3932 = vunpack.c.l.b16 %v1023
        %v3933 = vunpack.c.l.b16 %v1033
        %v3934 = vpack.c.b16 %v3919, %v3918
        %v3935 = vpack.c.b16 %v3921, %v3920
        %v3936 = vpack.c.b16 %v3923, %v3922
        %v3937 = vpack.c.b16 %v3925, %v3924
        %v3938 = vpack.c.b16 %v3927, %v3926
        %v3939 = vpack.c.b16 %v3929, %v3928
        %v3940 = vpack.c.b16 %v3931, %v3930
        %v3941 = vpack.c.b16 %v3933, %v3932
        %v3944 = vunpack.c.l.b16 %v3916
        %v3945 = vunpack.c.l.b16 %v3917
        %v3946 = vpack.c.b16 %v3945, %v3944
        %v3949 = vsel %vm3289, %v3934, 0
        %v3952 = vsel %vm3289, %v3935, 0
        %v3955 = vsel %vm3289, %v3936, 0
        %v3958 = vsel %vm3289, %v3937, 0
        %v3961 = vsel %vm3289, %v3938, 0
        %v3964 = vsel %vm3289, %v3939, 0
        %v3967 = vsel %vm3289, %v3940, 0
        %v3970 = vsel %vm3289, %v3941, 0
        %3972 = vmatprep.subr.bf16.mxu0 0
        %3973 = vmatpush1.bf16.msra.mxu0 %v3946
        %3974 = vmatprep.subr.bf16.mxu0 0
        %3975 = vmatpush1.bf16.msra.mxu0 0
        %3976 = vmatprep.subr.bf16.mxu0 0
        %3977 = vmatpush1.bf16.msra.mxu0 0
        %3978 = vmatprep.subr.bf16.mxu0 0
        %3979 = vmatpush1.bf16.msra.mxu0 0
        %3980 = vmatprep.subr.bf16.mxu0 0
        %3981 = vmatpush1.bf16.msra.mxu0 0
        %3982 = vmatprep.subr.bf16.mxu0 0
        %3983 = vmatpush1.bf16.msra.mxu0 0
        %3984 = vmatprep.subr.bf16.mxu0 0
        %3985 = vmatpush1.bf16.msra.mxu0 0
        %3986 = vmatprep.subr.bf16.mxu0 0
        %3987 = vmatpush1.bf16.msra.mxu0 0
        %3988 = vmatprep.subr.bf16.mxu0 0
        %3989 = vmatpush1.bf16.msra.mxu0 0
        %3990 = vmatprep.subr.bf16.mxu0 0
        %3991 = vmatpush1.bf16.msra.mxu0 0
        %3992 = vmatprep.subr.bf16.mxu0 0
        %3993 = vmatpush1.bf16.msra.mxu0 0
        %3994 = vmatprep.subr.bf16.mxu0 0
        %3995 = vmatpush1.bf16.msra.mxu0 0
        %3996 = vmatprep.subr.bf16.mxu0 0
        %3997 = vmatpush1.bf16.msra.mxu0 0
        %3998 = vmatprep.subr.bf16.mxu0 0
        %3999 = vmatpush1.bf16.msra.mxu0 0
        %4000 = vmatprep.subr.bf16.mxu0 0
        %4001 = vmatpush1.bf16.msra.mxu0 0
        %4002 = vmatprep.subr.bf16.mxu0 0
        %4003 = vmatpush1.bf16.msra.mxu0 0
        %4004 = vmatprep.mubr.bf16.mxu0 0
        %4005 = vmatmul.mubr.bf16.gmra.mrb[0].mxu0 %v3949
        %v4006 = vpop.f32.mrb[0].mxu0
        %v4007 = vadd.f32 0.0, %v4006
        %v4008 = vpop.f32.mrb[0].mxu0
        %v4009 = vpop.f32.mrb[0].mxu0
        %v4010 = vadd.f32 0.0, %v4009
        %v4011 = vpop.f32.mrb[0].mxu0
        %4012 = vmatprep.mubr.bf16.mxu0 0
        %4013 = vmatmul.mubr.bf16.gmra.mrb[0].mxu0 %v3952
        %v4014 = vpop.f32.mrb[0].mxu0
        %v4015 = vadd.f32 0.0, %v4014
        %v4016 = vpop.f32.mrb[0].mxu0
        %v4017 = vpop.f32.mrb[0].mxu0
        %v4018 = vadd.f32 0.0, %v4017
        %v4019 = vpop.f32.mrb[0].mxu0
        %4020 = vmatprep.mubr.bf16.mxu0 0
        %4021 = vmatmul.mubr.bf16.gmra.mrb[0].mxu0 %v3955
        %v4022 = vpop.f32.mrb[0].mxu0
        %v4023 = vadd.f32 0.0, %v4022
        %v4024 = vpop.f32.mrb[0].mxu0
        %v4025 = vpop.f32.mrb[0].mxu0
        %v4026 = vadd.f32 0.0, %v4025
        %v4027 = vpop.f32.mrb[0].mxu0
        %4028 = vmatprep.mubr.bf16.mxu0 0
        %4029 = vmatmul.mubr.bf16.gmra.mrb[0].mxu0 %v3958
        %v4030 = vpop.f32.mrb[0].mxu0
        %v4031 = vadd.f32 0.0, %v4030
        %v4032 = vpop.f32.mrb[0].mxu0
        %v4033 = vpop.f32.mrb[0].mxu0
        %v4034 = vadd.f32 0.0, %v4033
        %v4035 = vpop.f32.mrb[0].mxu0
        %4036 = vmatprep.mubr.bf16.mxu0 0
        %4037 = vmatmul.mubr.bf16.gmra.mrb[0].mxu0 %v3961
        %v4038 = vpop.f32.mrb[0].mxu0
        %v4039 = vadd.f32 0.0, %v4038
        %v4040 = vpop.f32.mrb[0].mxu0
        %v4041 = vpop.f32.mrb[0].mxu0
        %v4042 = vadd.f32 0.0, %v4041
        %v4043 = vpop.f32.mrb[0].mxu0
        %4044 = vmatprep.mubr.bf16.mxu0 0
        %4045 = vmatmul.mubr.bf16.gmra.mrb[0].mxu0 %v3964
        %v4046 = vpop.f32.mrb[0].mxu0
        %v4047 = vadd.f32 0.0, %v4046
        %v4048 = vpop.f32.mrb[0].mxu0
        %v4049 = vpop.f32.mrb[0].mxu0
        %v4050 = vadd.f32 0.0, %v4049
        %v4051 = vpop.f32.mrb[0].mxu0
        %4052 = vmatprep.mubr.bf16.mxu0 0
        %4053 = vmatmul.mubr.bf16.gmra.mrb[0].mxu0 %v3967
        %v4054 = vpop.f32.mrb[0].mxu0
        %v4055 = vadd.f32 0.0, %v4054
        %v4056 = vpop.f32.mrb[0].mxu0
        %v4057 = vpop.f32.mrb[0].mxu0
        %v4058 = vadd.f32 0.0, %v4057
        %v4059 = vpop.f32.mrb[0].mxu0
        %4060 = vmatprep.mubr.bf16.mxu0 0
        %4061 = vmatmul.mubr.bf16.gmra.mrb[0].mxu0 %v3970
        %v4062 = vpop.f32.mrb[0].mxu0
        %v4063 = vadd.f32 0.0, %v4062
        %v4064 = vpop.f32.mrb[0].mxu0
        %v4065 = vpop.f32.mrb[0].mxu0
        %v4066 = vadd.f32 0.0, %v4065
        %v4067 = vpop.f32.mrb[0].mxu0
        %4068 = vdwg.mxu0
        %v4069 = vadd.f32 %v3900, %v4007
        %v4070 = vadd.f32 %v3901, %v4010
        %v4071 = vadd.f32 %v3902, %v4015
        %v4072 = vadd.f32 %v3903, %v4018
        %v4073 = vadd.f32 %v3904, %v4023
        %v4074 = vadd.f32 %v3905, %v4026
        %v4075 = vadd.f32 %v3906, %v4031
        %v4076 = vadd.f32 %v3907, %v4034
        %v4077 = vadd.f32 %v3908, %v4039
        %v4078 = vadd.f32 %v3909, %v4042
        %v4079 = vadd.f32 %v3910, %v4047
        %v4080 = vadd.f32 %v3911, %v4050
        %v4081 = vadd.f32 %v3912, %v4055
        %v4082 = vadd.f32 %v3913, %v4058
        %v4083 = vadd.f32 %v3914, %v4063
        %v4084 = vadd.f32 %v3915, %v4066
        %v4085 = vld [vmem:[%s4 + $0x28] sm:$0xf]
        %v4086 = vld [vmem:[%s4 + $0x2c] sm:$0xf]
        %v4087 = vunpack.c.l.b16 %v1069
        %v4088 = vunpack.c.l.b16 %v1072
        %v4089 = vunpack.c.l.b16 %v1076
        %v4090 = vunpack.c.l.b16 %v1079
        %v4091 = vunpack.c.l.b16 %v1083
        %v4092 = vunpack.c.l.b16 %v1086
        %v4093 = vunpack.c.l.b16 %v1090
        %v4094 = vunpack.c.l.b16 %v1093
        %v4095 = vunpack.c.l.b16 %v1097
        %v4096 = vunpack.c.l.b16 %v1100
        %v4097 = vunpack.c.l.b16 %v1104
        %v4098 = vunpack.c.l.b16 %v1107
        %v4099 = vunpack.c.l.b16 %v1111
        %v4100 = vunpack.c.l.b16 %v1114
        %v4101 = vunpack.c.l.b16 %v1118
        %v4102 = vunpack.c.l.b16 %v1121
        %v4103 = vpack.c.b16 %v4088, %v4087
        %v4104 = vpack.c.b16 %v4090, %v4089
        %v4105 = vpack.c.b16 %v4092, %v4091
        %v4106 = vpack.c.b16 %v4094, %v4093
        %v4107 = vpack.c.b16 %v4096, %v4095
        %v4108 = vpack.c.b16 %v4098, %v4097
        %v4109 = vpack.c.b16 %v4100, %v4099
        %v4110 = vpack.c.b16 %v4102, %v4101
        %v4113 = vunpack.c.l.b16 %v4085
        %v4114 = vunpack.c.l.b16 %v4086
        %v4115 = vpack.c.b16 %v4114, %v4113
        %v4118 = vsel %vm3289, %v4103, 0
        %v4121 = vsel %vm3289, %v4104, 0
        %v4124 = vsel %vm3289, %v4105, 0
        %v4127 = vsel %vm3289, %v4106, 0
        %v4130 = vsel %vm3289, %v4107, 0
        %v4133 = vsel %vm3289, %v4108, 0
        %v4136 = vsel %vm3289, %v4109, 0
        %v4139 = vsel %vm3289, %v4110, 0
        %4141 = vmatprep.subr.bf16.mxu0 0
        %4142 = vmatpush1.bf16.msra.mxu0 %v4115
        %4143 = vmatprep.subr.bf16.mxu0 0
        %4144 = vmatpush1.bf16.msra.mxu0 0
        %4145 = vmatprep.subr.bf16.mxu0 0
        %4146 = vmatpush1.bf16.msra.mxu0 0
        %4147 = vmatprep.subr.bf16.mxu0 0
        %4148 = vmatpush1.bf16.msra.mxu0 0
        %4149 = vmatprep.subr.bf16.mxu0 0
        %4150 = vmatpush1.bf16.msra.mxu0 0
        %4151 = vmatprep.subr.bf16.mxu0 0
        %4152 = vmatpush1.bf16.msra.mxu0 0
        %4153 = vmatprep.subr.bf16.mxu0 0
        %4154 = vmatpush1.bf16.msra.mxu0 0
        %4155 = vmatprep.subr.bf16.mxu0 0
        %4156 = vmatpush1.bf16.msra.mxu0 0
        %4157 = vmatprep.subr.bf16.mxu0 0
        %4158 = vmatpush1.bf16.msra.mxu0 0
        %4159 = vmatprep.subr.bf16.mxu0 0
        %4160 = vmatpush1.bf16.msra.mxu0 0
        %4161 = vmatprep.subr.bf16.mxu0 0
        %4162 = vmatpush1.bf16.msra.mxu0 0
        %4163 = vmatprep.subr.bf16.mxu0 0
        %4164 = vmatpush1.bf16.msra.mxu0 0
        %4165 = vmatprep.subr.bf16.mxu0 0
        %4166 = vmatpush1.bf16.msra.mxu0 0
        %4167 = vmatprep.subr.bf16.mxu0 0
        %4168 = vmatpush1.bf16.msra.mxu0 0
        %4169 = vmatprep.subr.bf16.mxu0 0
        %4170 = vmatpush1.bf16.msra.mxu0 0
        %4171 = vmatprep.subr.bf16.mxu0 0
        %4172 = vmatpush1.bf16.msra.mxu0 0
        %4173 = vmatprep.mubr.bf16.mxu0 0
        %4174 = vmatmul.mubr.bf16.gmra.mrb[0].mxu0 %v4118
        %v4175 = vpop.f32.mrb[0].mxu0
        %v4176 = vadd.f32 0.0, %v4175
        %v4177 = vpop.f32.mrb[0].mxu0
        %v4178 = vpop.f32.mrb[0].mxu0
        %v4179 = vadd.f32 0.0, %v4178
        %v4180 = vpop.f32.mrb[0].mxu0
        %4181 = vmatprep.mubr.bf16.mxu0 0
        %4182 = vmatmul.mubr.bf16.gmra.mrb[0].mxu0 %v4121
        %v4183 = vpop.f32.mrb[0].mxu0
        %v4184 = vadd.f32 0.0, %v4183
        %v4185 = vpop.f32.mrb[0].mxu0
        %v4186 = vpop.f32.mrb[0].mxu0
        %v4187 = vadd.f32 0.0, %v4186
        %v4188 = vpop.f32.mrb[0].mxu0
        %4189 = vmatprep.mubr.bf16.mxu0 0
        %4190 = vmatmul.mubr.bf16.gmra.mrb[0].mxu0 %v4124
        %v4191 = vpop.f32.mrb[0].mxu0
        %v4192 = vadd.f32 0.0, %v4191
        %v4193 = vpop.f32.mrb[0].mxu0
        %v4194 = vpop.f32.mrb[0].mxu0
        %v4195 = vadd.f32 0.0, %v4194
        %v4196 = vpop.f32.mrb[0].mxu0
        %4197 = vmatprep.mubr.bf16.mxu0 0
        %4198 = vmatmul.mubr.bf16.gmra.mrb[0].mxu0 %v4127
        %v4199 = vpop.f32.mrb[0].mxu0
        %v4200 = vadd.f32 0.0, %v4199
        %v4201 = vpop.f32.mrb[0].mxu0
        %v4202 = vpop.f32.mrb[0].mxu0
        %v4203 = vadd.f32 0.0, %v4202
        %v4204 = vpop.f32.mrb[0].mxu0
        %4205 = vmatprep.mubr.bf16.mxu0 0
        %4206 = vmatmul.mubr.bf16.gmra.mrb[0].mxu0 %v4130
        %v4207 = vpop.f32.mrb[0].mxu0
        %v4208 = vadd.f32 0.0, %v4207
        %v4209 = vpop.f32.mrb[0].mxu0
        %v4210 = vpop.f32.mrb[0].mxu0
        %v4211 = vadd.f32 0.0, %v4210
        %v4212 = vpop.f32.mrb[0].mxu0
        %4213 = vmatprep.mubr.bf16.mxu0 0
        %4214 = vmatmul.mubr.bf16.gmra.mrb[0].mxu0 %v4133
        %v4215 = vpop.f32.mrb[0].mxu0
        %v4216 = vadd.f32 0.0, %v4215
        %v4217 = vpop.f32.mrb[0].mxu0
        %v4218 = vpop.f32.mrb[0].mxu0
        %v4219 = vadd.f32 0.0, %v4218
        %v4220 = vpop.f32.mrb[0].mxu0
        %4221 = vmatprep.mubr.bf16.mxu0 0
        %4222 = vmatmul.mubr.bf16.gmra.mrb[0].mxu0 %v4136
        %v4223 = vpop.f32.mrb[0].mxu0
        %v4224 = vadd.f32 0.0, %v4223
        %v4225 = vpop.f32.mrb[0].mxu0
        %v4226 = vpop.f32.mrb[0].mxu0
        %v4227 = vadd.f32 0.0, %v4226
        %v4228 = vpop.f32.mrb[0].mxu0
        %4229 = vmatprep.mubr.bf16.mxu0 0
        %4230 = vmatmul.mubr.bf16.gmra.mrb[0].mxu0 %v4139
        %v4231 = vpop.f32.mrb[0].mxu0
        %v4232 = vadd.f32 0.0, %v4231
        %v4233 = vpop.f32.mrb[0].mxu0
        %v4234 = vpop.f32.mrb[0].mxu0
        %v4235 = vadd.f32 0.0, %v4234
        %v4236 = vpop.f32.mrb[0].mxu0
        %4237 = vdwg.mxu0
        %v4238 = vadd.f32 %v4069, %v4176
        %v4239 = vadd.f32 %v4070, %v4179
        %v4240 = vadd.f32 %v4071, %v4184
        %v4241 = vadd.f32 %v4072, %v4187
        %v4242 = vadd.f32 %v4073, %v4192
        %v4243 = vadd.f32 %v4074, %v4195
        %v4244 = vadd.f32 %v4075, %v4200
        %v4245 = vadd.f32 %v4076, %v4203
        %v4246 = vadd.f32 %v4077, %v4208
        %v4247 = vadd.f32 %v4078, %v4211
        %v4248 = vadd.f32 %v4079, %v4216
        %v4249 = vadd.f32 %v4080, %v4219
        %v4250 = vadd.f32 %v4081, %v4224
        %v4251 = vadd.f32 %v4082, %v4227
        %v4252 = vadd.f32 %v4083, %v4232
        %v4253 = vadd.f32 %v4084, %v4235
        %v4254 = vld [vmem:[%s4 + $0x30] sm:$0xf]
        %v4255 = vld [vmem:[%s4 + $0x34] sm:$0xf]
        %v4264 = vunpack.c.l.b16 %v1123
        %v4265 = vunpack.c.l.b16 %v1124
        %v4266 = vunpack.c.l.b16 %v1125
        %v4267 = vunpack.c.l.b16 %v1126
        %v4268 = vunpack.c.l.b16 %v1127
        %v4269 = vunpack.c.l.b16 %v1128
        %v4270 = vunpack.c.l.b16 %v1129
        %v4271 = vunpack.c.l.b16 %v1130
        %v4272 = vunpack.c.l.b16 %v1131
        %v4273 = vunpack.c.l.b16 %v1132
        %v4274 = vunpack.c.l.b16 %v1133
        %v4275 = vunpack.c.l.b16 %v1134
        %v4276 = vunpack.c.l.b16 %v1135
        %v4277 = vunpack.c.l.b16 %v1136
        %v4278 = vunpack.c.l.b16 %v1137
        %v4279 = vunpack.c.l.b16 %v1138
        %v4280 = vpack.c.b16 %v4265, %v4264
        %v4281 = vpack.c.b16 %v4267, %v4266
        %v4282 = vpack.c.b16 %v4269, %v4268
        %v4283 = vpack.c.b16 %v4271, %v4270
        %v4284 = vpack.c.b16 %v4273, %v4272
        %v4285 = vpack.c.b16 %v4275, %v4274
        %v4286 = vpack.c.b16 %v4277, %v4276
        %v4287 = vpack.c.b16 %v4279, %v4278
        %v4290 = vunpack.c.l.b16 %v4254
        %v4291 = vunpack.c.l.b16 %v4255
        %v4292 = vpack.c.b16 %v4291, %v4290
        %v4295 = vsel %vm3289, %v4280, 0
        %v4298 = vsel %vm3289, %v4281, 0
        %v4301 = vsel %vm3289, %v4282, 0
        %v4304 = vsel %vm3289, %v4283, 0
        %v4307 = vsel %vm3289, %v4284, 0
        %v4310 = vsel %vm3289, %v4285, 0
        %v4313 = vsel %vm3289, %v4286, 0
        %v4316 = vsel %vm3289, %v4287, 0
        %4318 = vmatprep.subr.bf16.mxu0 0
        %4319 = vmatpush1.bf16.msra.mxu0 %v4292
        %4320 = vmatprep.subr.bf16.mxu0 0
        %4321 = vmatpush1.bf16.msra.mxu0 0
        %4322 = vmatprep.subr.bf16.mxu0 0
        %4323 = vmatpush1.bf16.msra.mxu0 0
        %4324 = vmatprep.subr.bf16.mxu0 0
        %4325 = vmatpush1.bf16.msra.mxu0 0
        %4326 = vmatprep.subr.bf16.mxu0 0
        %4327 = vmatpush1.bf16.msra.mxu0 0
        %4328 = vmatprep.subr.bf16.mxu0 0
        %4329 = vmatpush1.bf16.msra.mxu0 0
        %4330 = vmatprep.subr.bf16.mxu0 0
        %4331 = vmatpush1.bf16.msra.mxu0 0
        %4332 = vmatprep.subr.bf16.mxu0 0
        %4333 = vmatpush1.bf16.msra.mxu0 0
        %4334 = vmatprep.subr.bf16.mxu0 0
        %4335 = vmatpush1.bf16.msra.mxu0 0
        %4336 = vmatprep.subr.bf16.mxu0 0
        %4337 = vmatpush1.bf16.msra.mxu0 0
        %4338 = vmatprep.subr.bf16.mxu0 0
        %4339 = vmatpush1.bf16.msra.mxu0 0
        %4340 = vmatprep.subr.bf16.mxu0 0
        %4341 = vmatpush1.bf16.msra.mxu0 0
        %4342 = vmatprep.subr.bf16.mxu0 0
        %4343 = vmatpush1.bf16.msra.mxu0 0
        %4344 = vmatprep.subr.bf16.mxu0 0
        %4345 = vmatpush1.bf16.msra.mxu0 0
        %4346 = vmatprep.subr.bf16.mxu0 0
        %4347 = vmatpush1.bf16.msra.mxu0 0
        %4348 = vmatprep.subr.bf16.mxu0 0
        %4349 = vmatpush1.bf16.msra.mxu0 0
        %4350 = vmatprep.mubr.bf16.mxu0 0
        %4351 = vmatmul.mubr.bf16.gmra.mrb[0].mxu0 %v4295
        %v4352 = vpop.f32.mrb[0].mxu0
        %v4353 = vadd.f32 0.0, %v4352
        %v4354 = vpop.f32.mrb[0].mxu0
        %v4355 = vpop.f32.mrb[0].mxu0
        %v4356 = vadd.f32 0.0, %v4355
        %v4357 = vpop.f32.mrb[0].mxu0
        %4358 = vmatprep.mubr.bf16.mxu0 0
        %4359 = vmatmul.mubr.bf16.gmra.mrb[0].mxu0 %v4298
        %v4360 = vpop.f32.mrb[0].mxu0
        %v4361 = vadd.f32 0.0, %v4360
        %v4362 = vpop.f32.mrb[0].mxu0
        %v4363 = vpop.f32.mrb[0].mxu0
        %v4364 = vadd.f32 0.0, %v4363
        %v4365 = vpop.f32.mrb[0].mxu0
        %4366 = vmatprep.mubr.bf16.mxu0 0
        %4367 = vmatmul.mubr.bf16.gmra.mrb[0].mxu0 %v4301
        %v4368 = vpop.f32.mrb[0].mxu0
        %v4369 = vadd.f32 0.0, %v4368
        %v4370 = vpop.f32.mrb[0].mxu0
        %v4371 = vpop.f32.mrb[0].mxu0
        %v4372 = vadd.f32 0.0, %v4371
        %v4373 = vpop.f32.mrb[0].mxu0
        %4374 = vmatprep.mubr.bf16.mxu0 0
        %4375 = vmatmul.mubr.bf16.gmra.mrb[0].mxu0 %v4304
        %v4376 = vpop.f32.mrb[0].mxu0
        %v4377 = vadd.f32 0.0, %v4376
        %v4378 = vpop.f32.mrb[0].mxu0
        %v4379 = vpop.f32.mrb[0].mxu0
        %v4380 = vadd.f32 0.0, %v4379
        %v4381 = vpop.f32.mrb[0].mxu0
        %4382 = vmatprep.mubr.bf16.mxu0 0
        %4383 = vmatmul.mubr.bf16.gmra.mrb[0].mxu0 %v4307
        %v4384 = vpop.f32.mrb[0].mxu0
        %v4385 = vadd.f32 0.0, %v4384
        %v4386 = vpop.f32.mrb[0].mxu0
        %v4387 = vpop.f32.mrb[0].mxu0
        %v4388 = vadd.f32 0.0, %v4387
        %v4389 = vpop.f32.mrb[0].mxu0
        %4390 = vmatprep.mubr.bf16.mxu0 0
        %4391 = vmatmul.mubr.bf16.gmra.mrb[0].mxu0 %v4310
        %v4392 = vpop.f32.mrb[0].mxu0
        %v4393 = vadd.f32 0.0, %v4392
        %v4394 = vpop.f32.mrb[0].mxu0
        %v4395 = vpop.f32.mrb[0].mxu0
        %v4396 = vadd.f32 0.0, %v4395
        %v4397 = vpop.f32.mrb[0].mxu0
        %4398 = vmatprep.mubr.bf16.mxu0 0
        %4399 = vmatmul.mubr.bf16.gmra.mrb[0].mxu0 %v4313
        %v4400 = vpop.f32.mrb[0].mxu0
        %v4401 = vadd.f32 0.0, %v4400
        %v4402 = vpop.f32.mrb[0].mxu0
        %v4403 = vpop.f32.mrb[0].mxu0
        %v4404 = vadd.f32 0.0, %v4403
        %v4405 = vpop.f32.mrb[0].mxu0
        %4406 = vmatprep.mubr.bf16.mxu0 0
        %4407 = vmatmul.mubr.bf16.gmra.mrb[0].mxu0 %v4316
        %v4408 = vpop.f32.mrb[0].mxu0
        %v4409 = vadd.f32 0.0, %v4408
        %v4410 = vpop.f32.mrb[0].mxu0
        %v4411 = vpop.f32.mrb[0].mxu0
        %v4412 = vadd.f32 0.0, %v4411
        %v4413 = vpop.f32.mrb[0].mxu0
        %4414 = vdwg.mxu0
        %v4415 = vadd.f32 %v4238, %v4353
        %v4416 = vadd.f32 %v4239, %v4356
        %v4417 = vadd.f32 %v4240, %v4361
        %v4418 = vadd.f32 %v4241, %v4364
        %v4419 = vadd.f32 %v4242, %v4369
        %v4420 = vadd.f32 %v4243, %v4372
        %v4421 = vadd.f32 %v4244, %v4377
        %v4422 = vadd.f32 %v4245, %v4380
        %v4423 = vadd.f32 %v4246, %v4385
        %v4424 = vadd.f32 %v4247, %v4388
        %v4425 = vadd.f32 %v4248, %v4393
        %v4426 = vadd.f32 %v4249, %v4396
        %v4427 = vadd.f32 %v4250, %v4401
        %v4428 = vadd.f32 %v4251, %v4404
        %v4429 = vadd.f32 %v4252, %v4409
        %v4430 = vadd.f32 %v4253, %v4412
        %v4431 = vld [vmem:[%s4 + $0x38] sm:$0xf]
        %v4432 = vld [vmem:[%s4 + $0x3c] sm:$0xf]
        %v4433 = vunpack.c.l.b16 %v1160
        %v4434 = vunpack.c.l.b16 %v1170
        %v4435 = vunpack.c.l.b16 %v1184
        %v4436 = vunpack.c.l.b16 %v1194
        %v4437 = vunpack.c.l.b16 %v1208
        %v4438 = vunpack.c.l.b16 %v1218
        %v4439 = vunpack.c.l.b16 %v1232
        %v4440 = vunpack.c.l.b16 %v1242
        %v4441 = vunpack.c.l.b16 %v1256
        %v4442 = vunpack.c.l.b16 %v1266
        %v4443 = vunpack.c.l.b16 %v1280
        %v4444 = vunpack.c.l.b16 %v1290
        %v4445 = vunpack.c.l.b16 %v1304
        %v4446 = vunpack.c.l.b16 %v1314
        %v4447 = vunpack.c.l.b16 %v1328
        %v4448 = vunpack.c.l.b16 %v1338
        %v4449 = vpack.c.b16 %v4434, %v4433
        %v4450 = vpack.c.b16 %v4436, %v4435
        %v4451 = vpack.c.b16 %v4438, %v4437
        %v4452 = vpack.c.b16 %v4440, %v4439
        %v4453 = vpack.c.b16 %v4442, %v4441
        %v4454 = vpack.c.b16 %v4444, %v4443
        %v4455 = vpack.c.b16 %v4446, %v4445
        %v4456 = vpack.c.b16 %v4448, %v4447
        %v4459 = vunpack.c.l.b16 %v4431
        %v4460 = vunpack.c.l.b16 %v4432
        %v4461 = vpack.c.b16 %v4460, %v4459
        %v4464 = vsel %vm3289, %v4449, 0
        %v4467 = vsel %vm3289, %v4450, 0
        %v4470 = vsel %vm3289, %v4451, 0
        %v4473 = vsel %vm3289, %v4452, 0
        %v4476 = vsel %vm3289, %v4453, 0
        %v4479 = vsel %vm3289, %v4454, 0
        %v4482 = vsel %vm3289, %v4455, 0
        %v4485 = vsel %vm3289, %v4456, 0
        %4487 = vmatprep.subr.bf16.mxu0 0
        %4488 = vmatpush1.bf16.msra.mxu0 %v4461
        %4489 = vmatprep.subr.bf16.mxu0 0
        %4490 = vmatpush1.bf16.msra.mxu0 0
        %4491 = vmatprep.subr.bf16.mxu0 0
        %4492 = vmatpush1.bf16.msra.mxu0 0
        %4493 = vmatprep.subr.bf16.mxu0 0
        %4494 = vmatpush1.bf16.msra.mxu0 0
        %4495 = vmatprep.subr.bf16.mxu0 0
        %4496 = vmatpush1.bf16.msra.mxu0 0
        %4497 = vmatprep.subr.bf16.mxu0 0
        %4498 = vmatpush1.bf16.msra.mxu0 0
        %4499 = vmatprep.subr.bf16.mxu0 0
        %4500 = vmatpush1.bf16.msra.mxu0 0
        %4501 = vmatprep.subr.bf16.mxu0 0
        %4502 = vmatpush1.bf16.msra.mxu0 0
        %4503 = vmatprep.subr.bf16.mxu0 0
        %4504 = vmatpush1.bf16.msra.mxu0 0
        %4505 = vmatprep.subr.bf16.mxu0 0
        %4506 = vmatpush1.bf16.msra.mxu0 0
        %4507 = vmatprep.subr.bf16.mxu0 0
        %4508 = vmatpush1.bf16.msra.mxu0 0
        %4509 = vmatprep.subr.bf16.mxu0 0
        %4510 = vmatpush1.bf16.msra.mxu0 0
        %4511 = vmatprep.subr.bf16.mxu0 0
        %4512 = vmatpush1.bf16.msra.mxu0 0
        %4513 = vmatprep.subr.bf16.mxu0 0
        %4514 = vmatpush1.bf16.msra.mxu0 0
        %4515 = vmatprep.subr.bf16.mxu0 0
        %4516 = vmatpush1.bf16.msra.mxu0 0
        %4517 = vmatprep.subr.bf16.mxu0 0
        %4518 = vmatpush1.bf16.msra.mxu0 0
        %4519 = vmatprep.mubr.bf16.mxu0 0
        %4520 = vmatmul.mubr.bf16.gmra.mrb[0].mxu0 %v4464
        %v4521 = vpop.f32.mrb[0].mxu0
        %v4522 = vadd.f32 0.0, %v4521
        %v4523 = vpop.f32.mrb[0].mxu0
        %v4524 = vpop.f32.mrb[0].mxu0
        %v4525 = vadd.f32 0.0, %v4524
        %v4526 = vpop.f32.mrb[0].mxu0
        %4527 = vmatprep.mubr.bf16.mxu0 0
        %4528 = vmatmul.mubr.bf16.gmra.mrb[0].mxu0 %v4467
        %v4529 = vpop.f32.mrb[0].mxu0
        %v4530 = vadd.f32 0.0, %v4529
        %v4531 = vpop.f32.mrb[0].mxu0
        %v4532 = vpop.f32.mrb[0].mxu0
        %v4533 = vadd.f32 0.0, %v4532
        %v4534 = vpop.f32.mrb[0].mxu0
        %4535 = vmatprep.mubr.bf16.mxu0 0
        %4536 = vmatmul.mubr.bf16.gmra.mrb[0].mxu0 %v4470
        %v4537 = vpop.f32.mrb[0].mxu0
        %v4538 = vadd.f32 0.0, %v4537
        %v4539 = vpop.f32.mrb[0].mxu0
        %v4540 = vpop.f32.mrb[0].mxu0
        %v4541 = vadd.f32 0.0, %v4540
        %v4542 = vpop.f32.mrb[0].mxu0
        %4543 = vmatprep.mubr.bf16.mxu0 0
        %4544 = vmatmul.mubr.bf16.gmra.mrb[0].mxu0 %v4473
        %v4545 = vpop.f32.mrb[0].mxu0
        %v4546 = vadd.f32 0.0, %v4545
        %v4547 = vpop.f32.mrb[0].mxu0
        %v4548 = vpop.f32.mrb[0].mxu0
        %v4549 = vadd.f32 0.0, %v4548
        %v4550 = vpop.f32.mrb[0].mxu0
        %4551 = vmatprep.mubr.bf16.mxu0 0
        %4552 = vmatmul.mubr.bf16.gmra.mrb[0].mxu0 %v4476
        %v4553 = vpop.f32.mrb[0].mxu0
        %v4554 = vadd.f32 0.0, %v4553
        %v4555 = vpop.f32.mrb[0].mxu0
        %v4556 = vpop.f32.mrb[0].mxu0
        %v4557 = vadd.f32 0.0, %v4556
        %v4558 = vpop.f32.mrb[0].mxu0
        %4559 = vmatprep.mubr.bf16.mxu0 0
        %4560 = vmatmul.mubr.bf16.gmra.mrb[0].mxu0 %v4479
        %v4561 = vpop.f32.mrb[0].mxu0
        %v4562 = vadd.f32 0.0, %v4561
        %v4563 = vpop.f32.mrb[0].mxu0
        %v4564 = vpop.f32.mrb[0].mxu0
        %v4565 = vadd.f32 0.0, %v4564
        %v4566 = vpop.f32.mrb[0].mxu0
        %4567 = vmatprep.mubr.bf16.mxu0 0
        %4568 = vmatmul.mubr.bf16.gmra.mrb[0].mxu0 %v4482
        %v4569 = vpop.f32.mrb[0].mxu0
        %v4570 = vadd.f32 0.0, %v4569
        %v4571 = vpop.f32.mrb[0].mxu0
        %v4572 = vpop.f32.mrb[0].mxu0
        %v4573 = vadd.f32 0.0, %v4572
        %v4574 = vpop.f32.mrb[0].mxu0
        %4575 = vmatprep.mubr.bf16.mxu0 0
        %4576 = vmatmul.mubr.bf16.gmra.mrb[0].mxu0 %v4485
        %v4577 = vpop.f32.mrb[0].mxu0
        %v4578 = vadd.f32 0.0, %v4577
        %v4579 = vpop.f32.mrb[0].mxu0
        %v4580 = vpop.f32.mrb[0].mxu0
        %v4581 = vadd.f32 0.0, %v4580
        %v4582 = vpop.f32.mrb[0].mxu0
        %4583 = vdwg.mxu0
        %v4584 = vadd.f32 %v4415, %v4522
        %v4585 = vadd.f32 %v4416, %v4525
        %v4586 = vadd.f32 %v4417, %v4530
        %v4587 = vadd.f32 %v4418, %v4533
        %v4588 = vadd.f32 %v4419, %v4538
        %v4589 = vadd.f32 %v4420, %v4541
        %v4590 = vadd.f32 %v4421, %v4546
        %v4591 = vadd.f32 %v4422, %v4549
        %v4592 = vadd.f32 %v4423, %v4554
        %v4593 = vadd.f32 %v4424, %v4557
        %v4594 = vadd.f32 %v4425, %v4562
        %v4595 = vadd.f32 %v4426, %v4565
        %v4596 = vadd.f32 %v4427, %v4570
        %v4597 = vadd.f32 %v4428, %v4573
        %v4598 = vadd.f32 %v4429, %v4578
        %v4599 = vadd.f32 %v4430, %v4581
        %v4600 = vld [vmem:[%s4 + $0x40] sm:$0xf]
        %v4601 = vld [vmem:[%s4 + $0x44] sm:$0xf]
        %v4602 = vunpack.c.l.b16 %v1374
        %v4603 = vunpack.c.l.b16 %v1377
        %v4604 = vunpack.c.l.b16 %v1381
        %v4605 = vunpack.c.l.b16 %v1384
        %v4606 = vunpack.c.l.b16 %v1388
        %v4607 = vunpack.c.l.b16 %v1391
        %v4608 = vunpack.c.l.b16 %v1395
        %v4609 = vunpack.c.l.b16 %v1398
        %v4610 = vunpack.c.l.b16 %v1402
        %v4611 = vunpack.c.l.b16 %v1405
        %v4612 = vunpack.c.l.b16 %v1409
        %v4613 = vunpack.c.l.b16 %v1412
        %v4614 = vunpack.c.l.b16 %v1416
        %v4615 = vunpack.c.l.b16 %v1419
        %v4616 = vunpack.c.l.b16 %v1423
        %v4617 = vunpack.c.l.b16 %v1426
        %v4618 = vpack.c.b16 %v4603, %v4602
        %v4619 = vpack.c.b16 %v4605, %v4604
        %v4620 = vpack.c.b16 %v4607, %v4606
        %v4621 = vpack.c.b16 %v4609, %v4608
        %v4622 = vpack.c.b16 %v4611, %v4610
        %v4623 = vpack.c.b16 %v4613, %v4612
        %v4624 = vpack.c.b16 %v4615, %v4614
        %v4625 = vpack.c.b16 %v4617, %v4616
        %v4628 = vunpack.c.l.b16 %v4600
        %v4629 = vunpack.c.l.b16 %v4601
        %v4630 = vpack.c.b16 %v4629, %v4628
        %v4633 = vsel %vm3289, %v4618, 0
        %v4636 = vsel %vm3289, %v4619, 0
        %v4639 = vsel %vm3289, %v4620, 0
        %v4642 = vsel %vm3289, %v4621, 0
        %v4645 = vsel %vm3289, %v4622, 0
        %v4648 = vsel %vm3289, %v4623, 0
        %v4651 = vsel %vm3289, %v4624, 0
        %v4654 = vsel %vm3289, %v4625, 0
        %4656 = vmatprep.subr.bf16.mxu0 0
        %4657 = vmatpush1.bf16.msra.mxu0 %v4630
        %4658 = vmatprep.subr.bf16.mxu0 0
        %4659 = vmatpush1.bf16.msra.mxu0 0
        %4660 = vmatprep.subr.bf16.mxu0 0
        %4661 = vmatpush1.bf16.msra.mxu0 0
        %4662 = vmatprep.subr.bf16.mxu0 0
        %4663 = vmatpush1.bf16.msra.mxu0 0
        %4664 = vmatprep.subr.bf16.mxu0 0
        %4665 = vmatpush1.bf16.msra.mxu0 0
        %4666 = vmatprep.subr.bf16.mxu0 0
        %4667 = vmatpush1.bf16.msra.mxu0 0
        %4668 = vmatprep.subr.bf16.mxu0 0
        %4669 = vmatpush1.bf16.msra.mxu0 0
        %4670 = vmatprep.subr.bf16.mxu0 0
        %4671 = vmatpush1.bf16.msra.mxu0 0
        %4672 = vmatprep.subr.bf16.mxu0 0
        %4673 = vmatpush1.bf16.msra.mxu0 0
        %4674 = vmatprep.subr.bf16.mxu0 0
        %4675 = vmatpush1.bf16.msra.mxu0 0
        %4676 = vmatprep.subr.bf16.mxu0 0
        %4677 = vmatpush1.bf16.msra.mxu0 0
        %4678 = vmatprep.subr.bf16.mxu0 0
        %4679 = vmatpush1.bf16.msra.mxu0 0
        %4680 = vmatprep.subr.bf16.mxu0 0
        %4681 = vmatpush1.bf16.msra.mxu0 0
        %4682 = vmatprep.subr.bf16.mxu0 0
        %4683 = vmatpush1.bf16.msra.mxu0 0
        %4684 = vmatprep.subr.bf16.mxu0 0
        %4685 = vmatpush1.bf16.msra.mxu0 0
        %4686 = vmatprep.subr.bf16.mxu0 0
        %4687 = vmatpush1.bf16.msra.mxu0 0
        %4688 = vmatprep.mubr.bf16.mxu0 0
        %4689 = vmatmul.mubr.bf16.gmra.mrb[0].mxu0 %v4633
        %v4690 = vpop.f32.mrb[0].mxu0
        %v4691 = vadd.f32 0.0, %v4690
        %v4692 = vpop.f32.mrb[0].mxu0
        %v4693 = vpop.f32.mrb[0].mxu0
        %v4694 = vadd.f32 0.0, %v4693
        %v4695 = vpop.f32.mrb[0].mxu0
        %4696 = vmatprep.mubr.bf16.mxu0 0
        %4697 = vmatmul.mubr.bf16.gmra.mrb[0].mxu0 %v4636
        %v4698 = vpop.f32.mrb[0].mxu0
        %v4699 = vadd.f32 0.0, %v4698
        %v4700 = vpop.f32.mrb[0].mxu0
        %v4701 = vpop.f32.mrb[0].mxu0
        %v4702 = vadd.f32 0.0, %v4701
        %v4703 = vpop.f32.mrb[0].mxu0
        %4704 = vmatprep.mubr.bf16.mxu0 0
        %4705 = vmatmul.mubr.bf16.gmra.mrb[0].mxu0 %v4639
        %v4706 = vpop.f32.mrb[0].mxu0
        %v4707 = vadd.f32 0.0, %v4706
        %v4708 = vpop.f32.mrb[0].mxu0
        %v4709 = vpop.f32.mrb[0].mxu0
        %v4710 = vadd.f32 0.0, %v4709
        %v4711 = vpop.f32.mrb[0].mxu0
        %4712 = vmatprep.mubr.bf16.mxu0 0
        %4713 = vmatmul.mubr.bf16.gmra.mrb[0].mxu0 %v4642
        %v4714 = vpop.f32.mrb[0].mxu0
        %v4715 = vadd.f32 0.0, %v4714
        %v4716 = vpop.f32.mrb[0].mxu0
        %v4717 = vpop.f32.mrb[0].mxu0
        %v4718 = vadd.f32 0.0, %v4717
        %v4719 = vpop.f32.mrb[0].mxu0
        %4720 = vmatprep.mubr.bf16.mxu0 0
        %4721 = vmatmul.mubr.bf16.gmra.mrb[0].mxu0 %v4645
        %v4722 = vpop.f32.mrb[0].mxu0
        %v4723 = vadd.f32 0.0, %v4722
        %v4724 = vpop.f32.mrb[0].mxu0
        %v4725 = vpop.f32.mrb[0].mxu0
        %v4726 = vadd.f32 0.0, %v4725
        %v4727 = vpop.f32.mrb[0].mxu0
        %4728 = vmatprep.mubr.bf16.mxu0 0
        %4729 = vmatmul.mubr.bf16.gmra.mrb[0].mxu0 %v4648
        %v4730 = vpop.f32.mrb[0].mxu0
        %v4731 = vadd.f32 0.0, %v4730
        %v4732 = vpop.f32.mrb[0].mxu0
        %v4733 = vpop.f32.mrb[0].mxu0
        %v4734 = vadd.f32 0.0, %v4733
        %v4735 = vpop.f32.mrb[0].mxu0
        %4736 = vmatprep.mubr.bf16.mxu0 0
        %4737 = vmatmul.mubr.bf16.gmra.mrb[0].mxu0 %v4651
        %v4738 = vpop.f32.mrb[0].mxu0
        %v4739 = vadd.f32 0.0, %v4738
        %v4740 = vpop.f32.mrb[0].mxu0
        %v4741 = vpop.f32.mrb[0].mxu0
        %v4742 = vadd.f32 0.0, %v4741
        %v4743 = vpop.f32.mrb[0].mxu0
        %4744 = vmatprep.mubr.bf16.mxu0 0
        %4745 = vmatmul.mubr.bf16.gmra.mrb[0].mxu0 %v4654
        %v4746 = vpop.f32.mrb[0].mxu0
        %v4747 = vadd.f32 0.0, %v4746
        %v4748 = vpop.f32.mrb[0].mxu0
        %v4749 = vpop.f32.mrb[0].mxu0
        %v4750 = vadd.f32 0.0, %v4749
        %v4751 = vpop.f32.mrb[0].mxu0
        %4752 = vdwg.mxu0
        %v4753 = vadd.f32 %v4584, %v4691
        %v4754 = vadd.f32 %v4585, %v4694
        %v4755 = vadd.f32 %v4586, %v4699
        %v4756 = vadd.f32 %v4587, %v4702
        %v4757 = vadd.f32 %v4588, %v4707
        %v4758 = vadd.f32 %v4589, %v4710
        %v4759 = vadd.f32 %v4590, %v4715
        %v4760 = vadd.f32 %v4591, %v4718
        %v4761 = vadd.f32 %v4592, %v4723
        %v4762 = vadd.f32 %v4593, %v4726
        %v4763 = vadd.f32 %v4594, %v4731
        %v4764 = vadd.f32 %v4595, %v4734
        %v4765 = vadd.f32 %v4596, %v4739
        %v4766 = vadd.f32 %v4597, %v4742
        %v4767 = vadd.f32 %v4598, %v4747
        %v4768 = vadd.f32 %v4599, %v4750
        %v4769 = vld [vmem:[%s4 + $0x48] sm:$0xf]
        %v4770 = vld [vmem:[%s4 + $0x4c] sm:$0xf]
        %v4779 = vunpack.c.l.b16 %v1427
        %v4780 = vunpack.c.l.b16 %v1428
        %v4781 = vunpack.c.l.b16 %v1429
        %v4782 = vunpack.c.l.b16 %v1430
        %v4783 = vunpack.c.l.b16 %v1431
        %v4784 = vunpack.c.l.b16 %v1432
        %v4785 = vunpack.c.l.b16 %v1433
        %v4786 = vunpack.c.l.b16 %v1434
        %v4787 = vunpack.c.l.b16 %v1435
        %v4788 = vunpack.c.l.b16 %v1436
        %v4789 = vunpack.c.l.b16 %v1437
        %v4790 = vunpack.c.l.b16 %v1438
        %v4791 = vunpack.c.l.b16 %v1439
        %v4792 = vunpack.c.l.b16 %v1440
        %v4793 = vunpack.c.l.b16 %v1441
        %v4794 = vunpack.c.l.b16 %v1442
        %v4795 = vpack.c.b16 %v4780, %v4779
        %v4796 = vpack.c.b16 %v4782, %v4781
        %v4797 = vpack.c.b16 %v4784, %v4783
        %v4798 = vpack.c.b16 %v4786, %v4785
        %v4799 = vpack.c.b16 %v4788, %v4787
        %v4800 = vpack.c.b16 %v4790, %v4789
        %v4801 = vpack.c.b16 %v4792, %v4791
        %v4802 = vpack.c.b16 %v4794, %v4793
        %v4805 = vunpack.c.l.b16 %v4769
        %v4806 = vunpack.c.l.b16 %v4770
        %v4807 = vpack.c.b16 %v4806, %v4805
        %v4810 = vsel %vm3289, %v4795, 0
        %v4813 = vsel %vm3289, %v4796, 0
        %v4816 = vsel %vm3289, %v4797, 0
        %v4819 = vsel %vm3289, %v4798, 0
        %v4822 = vsel %vm3289, %v4799, 0
        %v4825 = vsel %vm3289, %v4800, 0
        %v4828 = vsel %vm3289, %v4801, 0
        %v4831 = vsel %vm3289, %v4802, 0
        %4833 = vmatprep.subr.bf16.mxu0 0
        %4834 = vmatpush1.bf16.msra.mxu0 %v4807
        %4835 = vmatprep.subr.bf16.mxu0 0
        %4836 = vmatpush1.bf16.msra.mxu0 0
        %4837 = vmatprep.subr.bf16.mxu0 0
        %4838 = vmatpush1.bf16.msra.mxu0 0
        %4839 = vmatprep.subr.bf16.mxu0 0
        %4840 = vmatpush1.bf16.msra.mxu0 0
        %4841 = vmatprep.subr.bf16.mxu0 0
        %4842 = vmatpush1.bf16.msra.mxu0 0
        %4843 = vmatprep.subr.bf16.mxu0 0
        %4844 = vmatpush1.bf16.msra.mxu0 0
        %4845 = vmatprep.subr.bf16.mxu0 0
        %4846 = vmatpush1.bf16.msra.mxu0 0
        %4847 = vmatprep.subr.bf16.mxu0 0
        %4848 = vmatpush1.bf16.msra.mxu0 0
        %4849 = vmatprep.subr.bf16.mxu0 0
        %4850 = vmatpush1.bf16.msra.mxu0 0
        %4851 = vmatprep.subr.bf16.mxu0 0
        %4852 = vmatpush1.bf16.msra.mxu0 0
        %4853 = vmatprep.subr.bf16.mxu0 0
        %4854 = vmatpush1.bf16.msra.mxu0 0
        %4855 = vmatprep.subr.bf16.mxu0 0
        %4856 = vmatpush1.bf16.msra.mxu0 0
        %4857 = vmatprep.subr.bf16.mxu0 0
        %4858 = vmatpush1.bf16.msra.mxu0 0
        %4859 = vmatprep.subr.bf16.mxu0 0
        %4860 = vmatpush1.bf16.msra.mxu0 0
        %4861 = vmatprep.subr.bf16.mxu0 0
        %4862 = vmatpush1.bf16.msra.mxu0 0
        %4863 = vmatprep.subr.bf16.mxu0 0
        %4864 = vmatpush1.bf16.msra.mxu0 0
        %4865 = vmatprep.mubr.bf16.mxu0 0
        %4866 = vmatmul.mubr.bf16.gmra.mrb[0].mxu0 %v4810
        %v4867 = vpop.f32.mrb[0].mxu0
        %v4868 = vadd.f32 0.0, %v4867
        %v4869 = vpop.f32.mrb[0].mxu0
        %v4870 = vpop.f32.mrb[0].mxu0
        %v4871 = vadd.f32 0.0, %v4870
        %v4872 = vpop.f32.mrb[0].mxu0
        %4873 = vmatprep.mubr.bf16.mxu0 0
        %4874 = vmatmul.mubr.bf16.gmra.mrb[0].mxu0 %v4813
        %v4875 = vpop.f32.mrb[0].mxu0
        %v4876 = vadd.f32 0.0, %v4875
        %v4877 = vpop.f32.mrb[0].mxu0
        %v4878 = vpop.f32.mrb[0].mxu0
        %v4879 = vadd.f32 0.0, %v4878
        %v4880 = vpop.f32.mrb[0].mxu0
        %4881 = vmatprep.mubr.bf16.mxu0 0
        %4882 = vmatmul.mubr.bf16.gmra.mrb[0].mxu0 %v4816
        %v4883 = vpop.f32.mrb[0].mxu0
        %v4884 = vadd.f32 0.0, %v4883
        %v4885 = vpop.f32.mrb[0].mxu0
        %v4886 = vpop.f32.mrb[0].mxu0
        %v4887 = vadd.f32 0.0, %v4886
        %v4888 = vpop.f32.mrb[0].mxu0
        %4889 = vmatprep.mubr.bf16.mxu0 0
        %4890 = vmatmul.mubr.bf16.gmra.mrb[0].mxu0 %v4819
        %v4891 = vpop.f32.mrb[0].mxu0
        %v4892 = vadd.f32 0.0, %v4891
        %v4893 = vpop.f32.mrb[0].mxu0
        %v4894 = vpop.f32.mrb[0].mxu0
        %v4895 = vadd.f32 0.0, %v4894
        %v4896 = vpop.f32.mrb[0].mxu0
        %4897 = vmatprep.mubr.bf16.mxu0 0
        %4898 = vmatmul.mubr.bf16.gmra.mrb[0].mxu0 %v4822
        %v4899 = vpop.f32.mrb[0].mxu0
        %v4900 = vadd.f32 0.0, %v4899
        %v4901 = vpop.f32.mrb[0].mxu0
        %v4902 = vpop.f32.mrb[0].mxu0
        %v4903 = vadd.f32 0.0, %v4902
        %v4904 = vpop.f32.mrb[0].mxu0
        %4905 = vmatprep.mubr.bf16.mxu0 0
        %4906 = vmatmul.mubr.bf16.gmra.mrb[0].mxu0 %v4825
        %v4907 = vpop.f32.mrb[0].mxu0
        %v4908 = vadd.f32 0.0, %v4907
        %v4909 = vpop.f32.mrb[0].mxu0
        %v4910 = vpop.f32.mrb[0].mxu0
        %v4911 = vadd.f32 0.0, %v4910
        %v4912 = vpop.f32.mrb[0].mxu0
        %4913 = vmatprep.mubr.bf16.mxu0 0
        %4914 = vmatmul.mubr.bf16.gmra.mrb[0].mxu0 %v4828
        %v4915 = vpop.f32.mrb[0].mxu0
        %v4916 = vadd.f32 0.0, %v4915
        %v4917 = vpop.f32.mrb[0].mxu0
        %v4918 = vpop.f32.mrb[0].mxu0
        %v4919 = vadd.f32 0.0, %v4918
        %v4920 = vpop.f32.mrb[0].mxu0
        %4921 = vmatprep.mubr.bf16.mxu0 0
        %4922 = vmatmul.mubr.bf16.gmra.mrb[0].mxu0 %v4831
        %v4923 = vpop.f32.mrb[0].mxu0
        %v4924 = vadd.f32 0.0, %v4923
        %v4925 = vpop.f32.mrb[0].mxu0
        %v4926 = vpop.f32.mrb[0].mxu0
        %v4927 = vadd.f32 0.0, %v4926
        %v4928 = vpop.f32.mrb[0].mxu0
        %4929 = vdwg.mxu0
        %v4930 = vadd.f32 %v4753, %v4868
        %v4931 = vadd.f32 %v4754, %v4871
        %v4932 = vadd.f32 %v4755, %v4876
        %v4933 = vadd.f32 %v4756, %v4879
        %v4934 = vadd.f32 %v4757, %v4884
        %v4935 = vadd.f32 %v4758, %v4887
        %v4936 = vadd.f32 %v4759, %v4892
        %v4937 = vadd.f32 %v4760, %v4895
        %v4938 = vadd.f32 %v4761, %v4900
        %v4939 = vadd.f32 %v4762, %v4903
        %v4940 = vadd.f32 %v4763, %v4908
        %v4941 = vadd.f32 %v4764, %v4911
        %v4942 = vadd.f32 %v4765, %v4916
        %v4943 = vadd.f32 %v4766, %v4919
        %v4944 = vadd.f32 %v4767, %v4924
        %v4945 = vadd.f32 %v4768, %v4927
        %v4946 = vld [vmem:[%s4 + $0x50] sm:$0xf]
        %v4947 = vld [vmem:[%s4 + $0x54] sm:$0xf]
        %v4948 = vunpack.c.l.b16 %v1464
        %v4949 = vunpack.c.l.b16 %v1474
        %v4950 = vunpack.c.l.b16 %v1488
        %v4951 = vunpack.c.l.b16 %v1498
        %v4952 = vunpack.c.l.b16 %v1512
        %v4953 = vunpack.c.l.b16 %v1522
        %v4954 = vunpack.c.l.b16 %v1536
        %v4955 = vunpack.c.l.b16 %v1546
        %v4956 = vunpack.c.l.b16 %v1560
        %v4957 = vunpack.c.l.b16 %v1570
        %v4958 = vunpack.c.l.b16 %v1584
        %v4959 = vunpack.c.l.b16 %v1594
        %v4960 = vunpack.c.l.b16 %v1608
        %v4961 = vunpack.c.l.b16 %v1618
        %v4962 = vunpack.c.l.b16 %v1632
        %v4963 = vunpack.c.l.b16 %v1642
        %v4964 = vpack.c.b16 %v4949, %v4948
        %v4965 = vpack.c.b16 %v4951, %v4950
        %v4966 = vpack.c.b16 %v4953, %v4952
        %v4967 = vpack.c.b16 %v4955, %v4954
        %v4968 = vpack.c.b16 %v4957, %v4956
        %v4969 = vpack.c.b16 %v4959, %v4958
        %v4970 = vpack.c.b16 %v4961, %v4960
        %v4971 = vpack.c.b16 %v4963, %v4962
        %v4974 = vunpack.c.l.b16 %v4946
        %v4975 = vunpack.c.l.b16 %v4947
        %v4976 = vpack.c.b16 %v4975, %v4974
        %v4979 = vsel %vm3289, %v4964, 0
        %v4982 = vsel %vm3289, %v4965, 0
        %v4985 = vsel %vm3289, %v4966, 0
        %v4988 = vsel %vm3289, %v4967, 0
        %v4991 = vsel %vm3289, %v4968, 0
        %v4994 = vsel %vm3289, %v4969, 0
        %v4997 = vsel %vm3289, %v4970, 0
        %v5000 = vsel %vm3289, %v4971, 0
        %5002 = vmatprep.subr.bf16.mxu0 0
        %5003 = vmatpush1.bf16.msra.mxu0 %v4976
        %5004 = vmatprep.subr.bf16.mxu0 0
        %5005 = vmatpush1.bf16.msra.mxu0 0
        %5006 = vmatprep.subr.bf16.mxu0 0
        %5007 = vmatpush1.bf16.msra.mxu0 0
        %5008 = vmatprep.subr.bf16.mxu0 0
        %5009 = vmatpush1.bf16.msra.mxu0 0
        %5010 = vmatprep.subr.bf16.mxu0 0
        %5011 = vmatpush1.bf16.msra.mxu0 0
        %5012 = vmatprep.subr.bf16.mxu0 0
        %5013 = vmatpush1.bf16.msra.mxu0 0
        %5014 = vmatprep.subr.bf16.mxu0 0
        %5015 = vmatpush1.bf16.msra.mxu0 0
        %5016 = vmatprep.subr.bf16.mxu0 0
        %5017 = vmatpush1.bf16.msra.mxu0 0
        %5018 = vmatprep.subr.bf16.mxu0 0
        %5019 = vmatpush1.bf16.msra.mxu0 0
        %5020 = vmatprep.subr.bf16.mxu0 0
        %5021 = vmatpush1.bf16.msra.mxu0 0
        %5022 = vmatprep.subr.bf16.mxu0 0
        %5023 = vmatpush1.bf16.msra.mxu0 0
        %5024 = vmatprep.subr.bf16.mxu0 0
        %5025 = vmatpush1.bf16.msra.mxu0 0
        %5026 = vmatprep.subr.bf16.mxu0 0
        %5027 = vmatpush1.bf16.msra.mxu0 0
        %5028 = vmatprep.subr.bf16.mxu0 0
        %5029 = vmatpush1.bf16.msra.mxu0 0
        %5030 = vmatprep.subr.bf16.mxu0 0
        %5031 = vmatpush1.bf16.msra.mxu0 0
        %5032 = vmatprep.subr.bf16.mxu0 0
        %5033 = vmatpush1.bf16.msra.mxu0 0
        %5034 = vmatprep.mubr.bf16.mxu0 0
        %5035 = vmatmul.mubr.bf16.gmra.mrb[0].mxu0 %v4979
        %v5036 = vpop.f32.mrb[0].mxu0
        %v5037 = vadd.f32 0.0, %v5036
        %v5038 = vpop.f32.mrb[0].mxu0
        %v5039 = vpop.f32.mrb[0].mxu0
        %v5040 = vadd.f32 0.0, %v5039
        %v5041 = vpop.f32.mrb[0].mxu0
        %5042 = vmatprep.mubr.bf16.mxu0 0
        %5043 = vmatmul.mubr.bf16.gmra.mrb[0].mxu0 %v4982
        %v5044 = vpop.f32.mrb[0].mxu0
        %v5045 = vadd.f32 0.0, %v5044
        %v5046 = vpop.f32.mrb[0].mxu0
        %v5047 = vpop.f32.mrb[0].mxu0
        %v5048 = vadd.f32 0.0, %v5047
        %v5049 = vpop.f32.mrb[0].mxu0
        %5050 = vmatprep.mubr.bf16.mxu0 0
        %5051 = vmatmul.mubr.bf16.gmra.mrb[0].mxu0 %v4985
        %v5052 = vpop.f32.mrb[0].mxu0
        %v5053 = vadd.f32 0.0, %v5052
        %v5054 = vpop.f32.mrb[0].mxu0
        %v5055 = vpop.f32.mrb[0].mxu0
        %v5056 = vadd.f32 0.0, %v5055
        %v5057 = vpop.f32.mrb[0].mxu0
        %5058 = vmatprep.mubr.bf16.mxu0 0
        %5059 = vmatmul.mubr.bf16.gmra.mrb[0].mxu0 %v4988
        %v5060 = vpop.f32.mrb[0].mxu0
        %v5061 = vadd.f32 0.0, %v5060
        %v5062 = vpop.f32.mrb[0].mxu0
        %v5063 = vpop.f32.mrb[0].mxu0
        %v5064 = vadd.f32 0.0, %v5063
        %v5065 = vpop.f32.mrb[0].mxu0
        %5066 = vmatprep.mubr.bf16.mxu0 0
        %5067 = vmatmul.mubr.bf16.gmra.mrb[0].mxu0 %v4991
        %v5068 = vpop.f32.mrb[0].mxu0
        %v5069 = vadd.f32 0.0, %v5068
        %v5070 = vpop.f32.mrb[0].mxu0
        %v5071 = vpop.f32.mrb[0].mxu0
        %v5072 = vadd.f32 0.0, %v5071
        %v5073 = vpop.f32.mrb[0].mxu0
        %5074 = vmatprep.mubr.bf16.mxu0 0
        %5075 = vmatmul.mubr.bf16.gmra.mrb[0].mxu0 %v4994
        %v5076 = vpop.f32.mrb[0].mxu0
        %v5077 = vadd.f32 0.0, %v5076
        %v5078 = vpop.f32.mrb[0].mxu0
        %v5079 = vpop.f32.mrb[0].mxu0
        %v5080 = vadd.f32 0.0, %v5079
        %v5081 = vpop.f32.mrb[0].mxu0
        %5082 = vmatprep.mubr.bf16.mxu0 0
        %5083 = vmatmul.mubr.bf16.gmra.mrb[0].mxu0 %v4997
        %v5084 = vpop.f32.mrb[0].mxu0
        %v5085 = vadd.f32 0.0, %v5084
        %v5086 = vpop.f32.mrb[0].mxu0
        %v5087 = vpop.f32.mrb[0].mxu0
        %v5088 = vadd.f32 0.0, %v5087
        %v5089 = vpop.f32.mrb[0].mxu0
        %5090 = vmatprep.mubr.bf16.mxu0 0
        %5091 = vmatmul.mubr.bf16.gmra.mrb[0].mxu0 %v5000
        %v5092 = vpop.f32.mrb[0].mxu0
        %v5093 = vadd.f32 0.0, %v5092
        %v5094 = vpop.f32.mrb[0].mxu0
        %v5095 = vpop.f32.mrb[0].mxu0
        %v5096 = vadd.f32 0.0, %v5095
        %v5097 = vpop.f32.mrb[0].mxu0
        %5098 = vdwg.mxu0
        %v5099 = vadd.f32 %v4930, %v5037
        %v5100 = vadd.f32 %v4931, %v5040
        %v5101 = vadd.f32 %v4932, %v5045
        %v5102 = vadd.f32 %v4933, %v5048
        %v5103 = vadd.f32 %v4934, %v5053
        %v5104 = vadd.f32 %v4935, %v5056
        %v5105 = vadd.f32 %v4936, %v5061
        %v5106 = vadd.f32 %v4937, %v5064
        %v5107 = vadd.f32 %v4938, %v5069
        %v5108 = vadd.f32 %v4939, %v5072
        %v5109 = vadd.f32 %v4940, %v5077
        %v5110 = vadd.f32 %v4941, %v5080
        %v5111 = vadd.f32 %v4942, %v5085
        %v5112 = vadd.f32 %v4943, %v5088
        %v5113 = vadd.f32 %v4944, %v5093
        %v5114 = vadd.f32 %v4945, %v5096
        %v5115 = vld [vmem:[%s4 + $0x58] sm:$0xf]
        %v5116 = vld [vmem:[%s4 + $0x5c] sm:$0xf]
        %v5117 = vunpack.c.l.b16 %v1678
        %v5118 = vunpack.c.l.b16 %v1681
        %v5119 = vunpack.c.l.b16 %v1685
        %v5120 = vunpack.c.l.b16 %v1688
        %v5121 = vunpack.c.l.b16 %v1692
        %v5122 = vunpack.c.l.b16 %v1695
        %v5123 = vunpack.c.l.b16 %v1699
        %v5124 = vunpack.c.l.b16 %v1702
        %v5125 = vunpack.c.l.b16 %v1706
        %v5126 = vunpack.c.l.b16 %v1709
        %v5127 = vunpack.c.l.b16 %v1713
        %v5128 = vunpack.c.l.b16 %v1716
        %v5129 = vunpack.c.l.b16 %v1720
        %v5130 = vunpack.c.l.b16 %v1723
        %v5131 = vunpack.c.l.b16 %v1727
        %v5132 = vunpack.c.l.b16 %v1730
        %v5133 = vpack.c.b16 %v5118, %v5117
        %v5134 = vpack.c.b16 %v5120, %v5119
        %v5135 = vpack.c.b16 %v5122, %v5121
        %v5136 = vpack.c.b16 %v5124, %v5123
        %v5137 = vpack.c.b16 %v5126, %v5125
        %v5138 = vpack.c.b16 %v5128, %v5127
        %v5139 = vpack.c.b16 %v5130, %v5129
        %v5140 = vpack.c.b16 %v5132, %v5131
        %v5143 = vunpack.c.l.b16 %v5115
        %v5144 = vunpack.c.l.b16 %v5116
        %v5145 = vpack.c.b16 %v5144, %v5143
        %v5148 = vsel %vm3289, %v5133, 0
        %v5151 = vsel %vm3289, %v5134, 0
        %v5154 = vsel %vm3289, %v5135, 0
        %v5157 = vsel %vm3289, %v5136, 0
        %v5160 = vsel %vm3289, %v5137, 0
        %v5163 = vsel %vm3289, %v5138, 0
        %v5166 = vsel %vm3289, %v5139, 0
        %v5169 = vsel %vm3289, %v5140, 0
        %5171 = vmatprep.subr.bf16.mxu0 0
        %5172 = vmatpush1.bf16.msra.mxu0 %v5145
        %5173 = vmatprep.subr.bf16.mxu0 0
        %5174 = vmatpush1.bf16.msra.mxu0 0
        %5175 = vmatprep.subr.bf16.mxu0 0
        %5176 = vmatpush1.bf16.msra.mxu0 0
        %5177 = vmatprep.subr.bf16.mxu0 0
        %5178 = vmatpush1.bf16.msra.mxu0 0
        %5179 = vmatprep.subr.bf16.mxu0 0
        %5180 = vmatpush1.bf16.msra.mxu0 0
        %5181 = vmatprep.subr.bf16.mxu0 0
        %5182 = vmatpush1.bf16.msra.mxu0 0
        %5183 = vmatprep.subr.bf16.mxu0 0
        %5184 = vmatpush1.bf16.msra.mxu0 0
        %5185 = vmatprep.subr.bf16.mxu0 0
        %5186 = vmatpush1.bf16.msra.mxu0 0
        %5187 = vmatprep.subr.bf16.mxu0 0
        %5188 = vmatpush1.bf16.msra.mxu0 0
        %5189 = vmatprep.subr.bf16.mxu0 0
        %5190 = vmatpush1.bf16.msra.mxu0 0
        %5191 = vmatprep.subr.bf16.mxu0 0
        %5192 = vmatpush1.bf16.msra.mxu0 0
        %5193 = vmatprep.subr.bf16.mxu0 0
        %5194 = vmatpush1.bf16.msra.mxu0 0
        %5195 = vmatprep.subr.bf16.mxu0 0
        %5196 = vmatpush1.bf16.msra.mxu0 0
        %5197 = vmatprep.subr.bf16.mxu0 0
        %5198 = vmatpush1.bf16.msra.mxu0 0
        %5199 = vmatprep.subr.bf16.mxu0 0
        %5200 = vmatpush1.bf16.msra.mxu0 0
        %5201 = vmatprep.subr.bf16.mxu0 0
        %5202 = vmatpush1.bf16.msra.mxu0 0
        %5203 = vmatprep.mubr.bf16.mxu0 0
        %5204 = vmatmul.mubr.bf16.gmra.mrb[0].mxu0 %v5148
        %v5205 = vpop.f32.mrb[0].mxu0
        %v5206 = vadd.f32 0.0, %v5205
        %v5207 = vpop.f32.mrb[0].mxu0
        %v5208 = vpop.f32.mrb[0].mxu0
        %v5209 = vadd.f32 0.0, %v5208
        %v5210 = vpop.f32.mrb[0].mxu0
        %5211 = vmatprep.mubr.bf16.mxu0 0
        %5212 = vmatmul.mubr.bf16.gmra.mrb[0].mxu0 %v5151
        %v5213 = vpop.f32.mrb[0].mxu0
        %v5214 = vadd.f32 0.0, %v5213
        %v5215 = vpop.f32.mrb[0].mxu0
        %v5216 = vpop.f32.mrb[0].mxu0
        %v5217 = vadd.f32 0.0, %v5216
        %v5218 = vpop.f32.mrb[0].mxu0
        %5219 = vmatprep.mubr.bf16.mxu0 0
        %5220 = vmatmul.mubr.bf16.gmra.mrb[0].mxu0 %v5154
        %v5221 = vpop.f32.mrb[0].mxu0
        %v5222 = vadd.f32 0.0, %v5221
        %v5223 = vpop.f32.mrb[0].mxu0
        %v5224 = vpop.f32.mrb[0].mxu0
        %v5225 = vadd.f32 0.0, %v5224
        %v5226 = vpop.f32.mrb[0].mxu0
        %5227 = vmatprep.mubr.bf16.mxu0 0
        %5228 = vmatmul.mubr.bf16.gmra.mrb[0].mxu0 %v5157
        %v5229 = vpop.f32.mrb[0].mxu0
        %v5230 = vadd.f32 0.0, %v5229
        %v5231 = vpop.f32.mrb[0].mxu0
        %v5232 = vpop.f32.mrb[0].mxu0
        %v5233 = vadd.f32 0.0, %v5232
        %v5234 = vpop.f32.mrb[0].mxu0
        %5235 = vmatprep.mubr.bf16.mxu0 0
        %5236 = vmatmul.mubr.bf16.gmra.mrb[0].mxu0 %v5160
        %v5237 = vpop.f32.mrb[0].mxu0
        %v5238 = vadd.f32 0.0, %v5237
        %v5239 = vpop.f32.mrb[0].mxu0
        %v5240 = vpop.f32.mrb[0].mxu0
        %v5241 = vadd.f32 0.0, %v5240
        %v5242 = vpop.f32.mrb[0].mxu0
        %5243 = vmatprep.mubr.bf16.mxu0 0
        %5244 = vmatmul.mubr.bf16.gmra.mrb[0].mxu0 %v5163
        %v5245 = vpop.f32.mrb[0].mxu0
        %v5246 = vadd.f32 0.0, %v5245
        %v5247 = vpop.f32.mrb[0].mxu0
        %v5248 = vpop.f32.mrb[0].mxu0
        %v5249 = vadd.f32 0.0, %v5248
        %v5250 = vpop.f32.mrb[0].mxu0
        %5251 = vmatprep.mubr.bf16.mxu0 0
        %5252 = vmatmul.mubr.bf16.gmra.mrb[0].mxu0 %v5166
        %v5253 = vpop.f32.mrb[0].mxu0
        %v5254 = vadd.f32 0.0, %v5253
        %v5255 = vpop.f32.mrb[0].mxu0
        %v5256 = vpop.f32.mrb[0].mxu0
        %v5257 = vadd.f32 0.0, %v5256
        %v5258 = vpop.f32.mrb[0].mxu0
        %5259 = vmatprep.mubr.bf16.mxu0 0
        %5260 = vmatmul.mubr.bf16.gmra.mrb[0].mxu0 %v5169
        %v5261 = vpop.f32.mrb[0].mxu0
        %v5262 = vadd.f32 0.0, %v5261
        %v5263 = vpop.f32.mrb[0].mxu0
        %v5264 = vpop.f32.mrb[0].mxu0
        %v5265 = vadd.f32 0.0, %v5264
        %v5266 = vpop.f32.mrb[0].mxu0
        %5267 = vdwg.mxu0
        %v5268 = vadd.f32 %v5099, %v5206
        %v5269 = vadd.f32 %v5100, %v5209
        %v5270 = vadd.f32 %v5101, %v5214
        %v5271 = vadd.f32 %v5102, %v5217
        %v5272 = vadd.f32 %v5103, %v5222
        %v5273 = vadd.f32 %v5104, %v5225
        %v5274 = vadd.f32 %v5105, %v5230
        %v5275 = vadd.f32 %v5106, %v5233
        %v5276 = vadd.f32 %v5107, %v5238
        %v5277 = vadd.f32 %v5108, %v5241
        %v5278 = vadd.f32 %v5109, %v5246
        %v5279 = vadd.f32 %v5110, %v5249
        %v5280 = vadd.f32 %v5111, %v5254
        %v5281 = vadd.f32 %v5112, %v5257
        %v5282 = vadd.f32 %v5113, %v5262
        %v5283 = vadd.f32 %v5114, %v5265
        %v5284 = vld [vmem:[%s4 + $0x60] sm:$0xf]
        %v5285 = vld [vmem:[%s4 + $0x64] sm:$0xf]
        %v5294 = vunpack.c.l.b16 %v1732
        %v5295 = vunpack.c.l.b16 %v1733
        %v5296 = vunpack.c.l.b16 %v1734
        %v5297 = vunpack.c.l.b16 %v1735
        %v5298 = vunpack.c.l.b16 %v1736
        %v5299 = vunpack.c.l.b16 %v1737
        %v5300 = vunpack.c.l.b16 %v1738
        %v5301 = vunpack.c.l.b16 %v1739
        %v5302 = vunpack.c.l.b16 %v1740
        %v5303 = vunpack.c.l.b16 %v1741
        %v5304 = vunpack.c.l.b16 %v1742
        %v5305 = vunpack.c.l.b16 %v1743
        %v5306 = vunpack.c.l.b16 %v1744
        %v5307 = vunpack.c.l.b16 %v1745
        %v5308 = vunpack.c.l.b16 %v1746
        %v5309 = vunpack.c.l.b16 %v1747
        %v5310 = vpack.c.b16 %v5295, %v5294
        %v5311 = vpack.c.b16 %v5297, %v5296
        %v5312 = vpack.c.b16 %v5299, %v5298
        %v5313 = vpack.c.b16 %v5301, %v5300
        %v5314 = vpack.c.b16 %v5303, %v5302
        %v5315 = vpack.c.b16 %v5305, %v5304
        %v5316 = vpack.c.b16 %v5307, %v5306
        %v5317 = vpack.c.b16 %v5309, %v5308
        %v5320 = vunpack.c.l.b16 %v5284
        %v5321 = vunpack.c.l.b16 %v5285
        %v5322 = vpack.c.b16 %v5321, %v5320
        %v5325 = vsel %vm3289, %v5310, 0
        %v5328 = vsel %vm3289, %v5311, 0
        %v5331 = vsel %vm3289, %v5312, 0
        %v5334 = vsel %vm3289, %v5313, 0
        %v5337 = vsel %vm3289, %v5314, 0
        %v5340 = vsel %vm3289, %v5315, 0
        %v5343 = vsel %vm3289, %v5316, 0
        %v5346 = vsel %vm3289, %v5317, 0
        %5348 = vmatprep.subr.bf16.mxu0 0
        %5349 = vmatpush1.bf16.msra.mxu0 %v5322
        %5350 = vmatprep.subr.bf16.mxu0 0
        %5351 = vmatpush1.bf16.msra.mxu0 0
        %5352 = vmatprep.subr.bf16.mxu0 0
        %5353 = vmatpush1.bf16.msra.mxu0 0
        %5354 = vmatprep.subr.bf16.mxu0 0
        %5355 = vmatpush1.bf16.msra.mxu0 0
        %5356 = vmatprep.subr.bf16.mxu0 0
        %5357 = vmatpush1.bf16.msra.mxu0 0
        %5358 = vmatprep.subr.bf16.mxu0 0
        %5359 = vmatpush1.bf16.msra.mxu0 0
        %5360 = vmatprep.subr.bf16.mxu0 0
        %5361 = vmatpush1.bf16.msra.mxu0 0
        %5362 = vmatprep.subr.bf16.mxu0 0
        %5363 = vmatpush1.bf16.msra.mxu0 0
        %5364 = vmatprep.subr.bf16.mxu0 0
        %5365 = vmatpush1.bf16.msra.mxu0 0
        %5366 = vmatprep.subr.bf16.mxu0 0
        %5367 = vmatpush1.bf16.msra.mxu0 0
        %5368 = vmatprep.subr.bf16.mxu0 0
        %5369 = vmatpush1.bf16.msra.mxu0 0
        %5370 = vmatprep.subr.bf16.mxu0 0
        %5371 = vmatpush1.bf16.msra.mxu0 0
        %5372 = vmatprep.subr.bf16.mxu0 0
        %5373 = vmatpush1.bf16.msra.mxu0 0
        %5374 = vmatprep.subr.bf16.mxu0 0
        %5375 = vmatpush1.bf16.msra.mxu0 0
        %5376 = vmatprep.subr.bf16.mxu0 0
        %5377 = vmatpush1.bf16.msra.mxu0 0
        %5378 = vmatprep.subr.bf16.mxu0 0
        %5379 = vmatpush1.bf16.msra.mxu0 0
        %5380 = vmatprep.mubr.bf16.mxu0 0
        %5381 = vmatmul.mubr.bf16.gmra.mrb[0].mxu0 %v5325
        %v5382 = vpop.f32.mrb[0].mxu0
        %v5383 = vadd.f32 0.0, %v5382
        %v5384 = vpop.f32.mrb[0].mxu0
        %v5385 = vpop.f32.mrb[0].mxu0
        %v5386 = vadd.f32 0.0, %v5385
        %v5387 = vpop.f32.mrb[0].mxu0
        %5388 = vmatprep.mubr.bf16.mxu0 0
        %5389 = vmatmul.mubr.bf16.gmra.mrb[0].mxu0 %v5328
        %v5390 = vpop.f32.mrb[0].mxu0
        %v5391 = vadd.f32 0.0, %v5390
        %v5392 = vpop.f32.mrb[0].mxu0
        %v5393 = vpop.f32.mrb[0].mxu0
        %v5394 = vadd.f32 0.0, %v5393
        %v5395 = vpop.f32.mrb[0].mxu0
        %5396 = vmatprep.mubr.bf16.mxu0 0
        %5397 = vmatmul.mubr.bf16.gmra.mrb[0].mxu0 %v5331
        %v5398 = vpop.f32.mrb[0].mxu0
        %v5399 = vadd.f32 0.0, %v5398
        %v5400 = vpop.f32.mrb[0].mxu0
        %v5401 = vpop.f32.mrb[0].mxu0
        %v5402 = vadd.f32 0.0, %v5401
        %v5403 = vpop.f32.mrb[0].mxu0
        %5404 = vmatprep.mubr.bf16.mxu0 0
        %5405 = vmatmul.mubr.bf16.gmra.mrb[0].mxu0 %v5334
        %v5406 = vpop.f32.mrb[0].mxu0
        %v5407 = vadd.f32 0.0, %v5406
        %v5408 = vpop.f32.mrb[0].mxu0
        %v5409 = vpop.f32.mrb[0].mxu0
        %v5410 = vadd.f32 0.0, %v5409
        %v5411 = vpop.f32.mrb[0].mxu0
        %5412 = vmatprep.mubr.bf16.mxu0 0
        %5413 = vmatmul.mubr.bf16.gmra.mrb[0].mxu0 %v5337
        %v5414 = vpop.f32.mrb[0].mxu0
        %v5415 = vadd.f32 0.0, %v5414
        %v5416 = vpop.f32.mrb[0].mxu0
        %v5417 = vpop.f32.mrb[0].mxu0
        %v5418 = vadd.f32 0.0, %v5417
        %v5419 = vpop.f32.mrb[0].mxu0
        %5420 = vmatprep.mubr.bf16.mxu0 0
        %5421 = vmatmul.mubr.bf16.gmra.mrb[0].mxu0 %v5340
        %v5422 = vpop.f32.mrb[0].mxu0
        %v5423 = vadd.f32 0.0, %v5422
        %v5424 = vpop.f32.mrb[0].mxu0
        %v5425 = vpop.f32.mrb[0].mxu0
        %v5426 = vadd.f32 0.0, %v5425
        %v5427 = vpop.f32.mrb[0].mxu0
        %5428 = vmatprep.mubr.bf16.mxu0 0
        %5429 = vmatmul.mubr.bf16.gmra.mrb[0].mxu0 %v5343
        %v5430 = vpop.f32.mrb[0].mxu0
        %v5431 = vadd.f32 0.0, %v5430
        %v5432 = vpop.f32.mrb[0].mxu0
        %v5433 = vpop.f32.mrb[0].mxu0
        %v5434 = vadd.f32 0.0, %v5433
        %v5435 = vpop.f32.mrb[0].mxu0
        %5436 = vmatprep.mubr.bf16.mxu0 0
        %5437 = vmatmul.mubr.bf16.gmra.mrb[0].mxu0 %v5346
        %v5438 = vpop.f32.mrb[0].mxu0
        %v5439 = vadd.f32 0.0, %v5438
        %v5440 = vpop.f32.mrb[0].mxu0
        %v5441 = vpop.f32.mrb[0].mxu0
        %v5442 = vadd.f32 0.0, %v5441
        %v5443 = vpop.f32.mrb[0].mxu0
        %5444 = vdwg.mxu0
        %v5445 = vadd.f32 %v5268, %v5383
        %v5446 = vadd.f32 %v5269, %v5386
        %v5447 = vadd.f32 %v5270, %v5391
        %v5448 = vadd.f32 %v5271, %v5394
        %v5449 = vadd.f32 %v5272, %v5399
        %v5450 = vadd.f32 %v5273, %v5402
        %v5451 = vadd.f32 %v5274, %v5407
        %v5452 = vadd.f32 %v5275, %v5410
        %v5453 = vadd.f32 %v5276, %v5415
        %v5454 = vadd.f32 %v5277, %v5418
        %v5455 = vadd.f32 %v5278, %v5423
        %v5456 = vadd.f32 %v5279, %v5426
        %v5457 = vadd.f32 %v5280, %v5431
        %v5458 = vadd.f32 %v5281, %v5434
        %v5459 = vadd.f32 %v5282, %v5439
        %v5460 = vadd.f32 %v5283, %v5442
        %v5461 = vld [vmem:[%s4 + $0x68] sm:$0xf]
        %v5462 = vld [vmem:[%s4 + $0x6c] sm:$0xf]
        %v5463 = vunpack.c.l.b16 %v1769
        %v5464 = vunpack.c.l.b16 %v1779
        %v5465 = vunpack.c.l.b16 %v1793
        %v5466 = vunpack.c.l.b16 %v1803
        %v5467 = vunpack.c.l.b16 %v1817
        %v5468 = vunpack.c.l.b16 %v1827
        %v5469 = vunpack.c.l.b16 %v1841
        %v5470 = vunpack.c.l.b16 %v1851
        %v5471 = vunpack.c.l.b16 %v1865
        %v5472 = vunpack.c.l.b16 %v1875
        %v5473 = vunpack.c.l.b16 %v1889
        %v5474 = vunpack.c.l.b16 %v1899
        %v5475 = vunpack.c.l.b16 %v1913
        %v5476 = vunpack.c.l.b16 %v1923
        %v5477 = vunpack.c.l.b16 %v1937
        %v5478 = vunpack.c.l.b16 %v1947
        %v5479 = vpack.c.b16 %v5464, %v5463
        %v5480 = vpack.c.b16 %v5466, %v5465
        %v5481 = vpack.c.b16 %v5468, %v5467
        %v5482 = vpack.c.b16 %v5470, %v5469
        %v5483 = vpack.c.b16 %v5472, %v5471
        %v5484 = vpack.c.b16 %v5474, %v5473
        %v5485 = vpack.c.b16 %v5476, %v5475
        %v5486 = vpack.c.b16 %v5478, %v5477
        %v5489 = vunpack.c.l.b16 %v5461
        %v5490 = vunpack.c.l.b16 %v5462
        %v5491 = vpack.c.b16 %v5490, %v5489
        %v5494 = vsel %vm3289, %v5479, 0
        %v5497 = vsel %vm3289, %v5480, 0
        %v5500 = vsel %vm3289, %v5481, 0
        %v5503 = vsel %vm3289, %v5482, 0
        %v5506 = vsel %vm3289, %v5483, 0
        %v5509 = vsel %vm3289, %v5484, 0
        %v5512 = vsel %vm3289, %v5485, 0
        %v5515 = vsel %vm3289, %v5486, 0
        %5517 = vmatprep.subr.bf16.mxu0 0
        %5518 = vmatpush1.bf16.msra.mxu0 %v5491
        %5519 = vmatprep.subr.bf16.mxu0 0
        %5520 = vmatpush1.bf16.msra.mxu0 0
        %5521 = vmatprep.subr.bf16.mxu0 0
        %5522 = vmatpush1.bf16.msra.mxu0 0
        %5523 = vmatprep.subr.bf16.mxu0 0
        %5524 = vmatpush1.bf16.msra.mxu0 0
        %5525 = vmatprep.subr.bf16.mxu0 0
        %5526 = vmatpush1.bf16.msra.mxu0 0
        %5527 = vmatprep.subr.bf16.mxu0 0
        %5528 = vmatpush1.bf16.msra.mxu0 0
        %5529 = vmatprep.subr.bf16.mxu0 0
        %5530 = vmatpush1.bf16.msra.mxu0 0
        %5531 = vmatprep.subr.bf16.mxu0 0
        %5532 = vmatpush1.bf16.msra.mxu0 0
        %5533 = vmatprep.subr.bf16.mxu0 0
        %5534 = vmatpush1.bf16.msra.mxu0 0
        %5535 = vmatprep.subr.bf16.mxu0 0
        %5536 = vmatpush1.bf16.msra.mxu0 0
        %5537 = vmatprep.subr.bf16.mxu0 0
        %5538 = vmatpush1.bf16.msra.mxu0 0
        %5539 = vmatprep.subr.bf16.mxu0 0
        %5540 = vmatpush1.bf16.msra.mxu0 0
        %5541 = vmatprep.subr.bf16.mxu0 0
        %5542 = vmatpush1.bf16.msra.mxu0 0
        %5543 = vmatprep.subr.bf16.mxu0 0
        %5544 = vmatpush1.bf16.msra.mxu0 0
        %5545 = vmatprep.subr.bf16.mxu0 0
        %5546 = vmatpush1.bf16.msra.mxu0 0
        %5547 = vmatprep.subr.bf16.mxu0 0
        %5548 = vmatpush1.bf16.msra.mxu0 0
        %5549 = vmatprep.mubr.bf16.mxu0 0
        %5550 = vmatmul.mubr.bf16.gmra.mrb[0].mxu0 %v5494
        %v5551 = vpop.f32.mrb[0].mxu0
        %v5552 = vadd.f32 0.0, %v5551
        %v5553 = vpop.f32.mrb[0].mxu0
        %v5554 = vpop.f32.mrb[0].mxu0
        %v5555 = vadd.f32 0.0, %v5554
        %v5556 = vpop.f32.mrb[0].mxu0
        %5557 = vmatprep.mubr.bf16.mxu0 0
        %5558 = vmatmul.mubr.bf16.gmra.mrb[0].mxu0 %v5497
        %v5559 = vpop.f32.mrb[0].mxu0
        %v5560 = vadd.f32 0.0, %v5559
        %v5561 = vpop.f32.mrb[0].mxu0
        %v5562 = vpop.f32.mrb[0].mxu0
        %v5563 = vadd.f32 0.0, %v5562
        %v5564 = vpop.f32.mrb[0].mxu0
        %5565 = vmatprep.mubr.bf16.mxu0 0
        %5566 = vmatmul.mubr.bf16.gmra.mrb[0].mxu0 %v5500
        %v5567 = vpop.f32.mrb[0].mxu0
        %v5568 = vadd.f32 0.0, %v5567
        %v5569 = vpop.f32.mrb[0].mxu0
        %v5570 = vpop.f32.mrb[0].mxu0
        %v5571 = vadd.f32 0.0, %v5570
        %v5572 = vpop.f32.mrb[0].mxu0
        %5573 = vmatprep.mubr.bf16.mxu0 0
        %5574 = vmatmul.mubr.bf16.gmra.mrb[0].mxu0 %v5503
        %v5575 = vpop.f32.mrb[0].mxu0
        %v5576 = vadd.f32 0.0, %v5575
        %v5577 = vpop.f32.mrb[0].mxu0
        %v5578 = vpop.f32.mrb[0].mxu0
        %v5579 = vadd.f32 0.0, %v5578
        %v5580 = vpop.f32.mrb[0].mxu0
        %5581 = vmatprep.mubr.bf16.mxu0 0
        %5582 = vmatmul.mubr.bf16.gmra.mrb[0].mxu0 %v5506
        %v5583 = vpop.f32.mrb[0].mxu0
        %v5584 = vadd.f32 0.0, %v5583
        %v5585 = vpop.f32.mrb[0].mxu0
        %v5586 = vpop.f32.mrb[0].mxu0
        %v5587 = vadd.f32 0.0, %v5586
        %v5588 = vpop.f32.mrb[0].mxu0
        %5589 = vmatprep.mubr.bf16.mxu0 0
        %5590 = vmatmul.mubr.bf16.gmra.mrb[0].mxu0 %v5509
        %v5591 = vpop.f32.mrb[0].mxu0
        %v5592 = vadd.f32 0.0, %v5591
        %v5593 = vpop.f32.mrb[0].mxu0
        %v5594 = vpop.f32.mrb[0].mxu0
        %v5595 = vadd.f32 0.0, %v5594
        %v5596 = vpop.f32.mrb[0].mxu0
        %5597 = vmatprep.mubr.bf16.mxu0 0
        %5598 = vmatmul.mubr.bf16.gmra.mrb[0].mxu0 %v5512
        %v5599 = vpop.f32.mrb[0].mxu0
        %v5600 = vadd.f32 0.0, %v5599
        %v5601 = vpop.f32.mrb[0].mxu0
        %v5602 = vpop.f32.mrb[0].mxu0
        %v5603 = vadd.f32 0.0, %v5602
        %v5604 = vpop.f32.mrb[0].mxu0
        %5605 = vmatprep.mubr.bf16.mxu0 0
        %5606 = vmatmul.mubr.bf16.gmra.mrb[0].mxu0 %v5515
        %v5607 = vpop.f32.mrb[0].mxu0
        %v5608 = vadd.f32 0.0, %v5607
        %v5609 = vpop.f32.mrb[0].mxu0
        %v5610 = vpop.f32.mrb[0].mxu0
        %v5611 = vadd.f32 0.0, %v5610
        %v5612 = vpop.f32.mrb[0].mxu0
        %5613 = vdwg.mxu0
        %v5614 = vadd.f32 %v5445, %v5552
        %v5615 = vadd.f32 %v5446, %v5555
        %v5616 = vadd.f32 %v5447, %v5560
        %v5617 = vadd.f32 %v5448, %v5563
        %v5618 = vadd.f32 %v5449, %v5568
        %v5619 = vadd.f32 %v5450, %v5571
        %v5620 = vadd.f32 %v5451, %v5576
        %v5621 = vadd.f32 %v5452, %v5579
        %v5622 = vadd.f32 %v5453, %v5584
        %v5623 = vadd.f32 %v5454, %v5587
        %v5624 = vadd.f32 %v5455, %v5592
        %v5625 = vadd.f32 %v5456, %v5595
        %v5626 = vadd.f32 %v5457, %v5600
        %v5627 = vadd.f32 %v5458, %v5603
        %v5628 = vadd.f32 %v5459, %v5608
        %v5629 = vadd.f32 %v5460, %v5611
        %v5630 = vld [vmem:[%s4 + $0x70] sm:$0xf]
        %v5631 = vld [vmem:[%s4 + $0x74] sm:$0xf]
        %v5632 = vunpack.c.l.b16 %v1983
        %v5633 = vunpack.c.l.b16 %v1986
        %v5634 = vunpack.c.l.b16 %v1990
        %v5635 = vunpack.c.l.b16 %v1993
        %v5636 = vunpack.c.l.b16 %v1997
        %v5637 = vunpack.c.l.b16 %v2000
        %v5638 = vunpack.c.l.b16 %v2004
        %v5639 = vunpack.c.l.b16 %v2007
        %v5640 = vunpack.c.l.b16 %v2011
        %v5641 = vunpack.c.l.b16 %v2014
        %v5642 = vunpack.c.l.b16 %v2018
        %v5643 = vunpack.c.l.b16 %v2021
        %v5644 = vunpack.c.l.b16 %v2025
        %v5645 = vunpack.c.l.b16 %v2028
        %v5646 = vunpack.c.l.b16 %v2032
        %v5647 = vunpack.c.l.b16 %v2035
        %v5648 = vpack.c.b16 %v5633, %v5632
        %v5649 = vpack.c.b16 %v5635, %v5634
        %v5650 = vpack.c.b16 %v5637, %v5636
        %v5651 = vpack.c.b16 %v5639, %v5638
        %v5652 = vpack.c.b16 %v5641, %v5640
        %v5653 = vpack.c.b16 %v5643, %v5642
        %v5654 = vpack.c.b16 %v5645, %v5644
        %v5655 = vpack.c.b16 %v5647, %v5646
        %v5658 = vunpack.c.l.b16 %v5630
        %v5659 = vunpack.c.l.b16 %v5631
        %v5660 = vpack.c.b16 %v5659, %v5658
        %v5663 = vsel %vm3289, %v5648, 0
        %v5666 = vsel %vm3289, %v5649, 0
        %v5669 = vsel %vm3289, %v5650, 0
        %v5672 = vsel %vm3289, %v5651, 0
        %v5675 = vsel %vm3289, %v5652, 0
        %v5678 = vsel %vm3289, %v5653, 0
        %v5681 = vsel %vm3289, %v5654, 0
        %v5684 = vsel %vm3289, %v5655, 0
        %5686 = vmatprep.subr.bf16.mxu0 0
        %5687 = vmatpush1.bf16.msra.mxu0 %v5660
        %5688 = vmatprep.subr.bf16.mxu0 0
        %5689 = vmatpush1.bf16.msra.mxu0 0
        %5690 = vmatprep.subr.bf16.mxu0 0
        %5691 = vmatpush1.bf16.msra.mxu0 0
        %5692 = vmatprep.subr.bf16.mxu0 0
        %5693 = vmatpush1.bf16.msra.mxu0 0
        %5694 = vmatprep.subr.bf16.mxu0 0
        %5695 = vmatpush1.bf16.msra.mxu0 0
        %5696 = vmatprep.subr.bf16.mxu0 0
        %5697 = vmatpush1.bf16.msra.mxu0 0
        %5698 = vmatprep.subr.bf16.mxu0 0
        %5699 = vmatpush1.bf16.msra.mxu0 0
        %5700 = vmatprep.subr.bf16.mxu0 0
        %5701 = vmatpush1.bf16.msra.mxu0 0
        %5702 = vmatprep.subr.bf16.mxu0 0
        %5703 = vmatpush1.bf16.msra.mxu0 0
        %5704 = vmatprep.subr.bf16.mxu0 0
        %5705 = vmatpush1.bf16.msra.mxu0 0
        %5706 = vmatprep.subr.bf16.mxu0 0
        %5707 = vmatpush1.bf16.msra.mxu0 0
        %5708 = vmatprep.subr.bf16.mxu0 0
        %5709 = vmatpush1.bf16.msra.mxu0 0
        %5710 = vmatprep.subr.bf16.mxu0 0
        %5711 = vmatpush1.bf16.msra.mxu0 0
        %5712 = vmatprep.subr.bf16.mxu0 0
        %5713 = vmatpush1.bf16.msra.mxu0 0
        %5714 = vmatprep.subr.bf16.mxu0 0
        %5715 = vmatpush1.bf16.msra.mxu0 0
        %5716 = vmatprep.subr.bf16.mxu0 0
        %5717 = vmatpush1.bf16.msra.mxu0 0
        %5718 = vmatprep.mubr.bf16.mxu0 0
        %5719 = vmatmul.mubr.bf16.gmra.mrb[0].mxu0 %v5663
        %v5720 = vpop.f32.mrb[0].mxu0
        %v5721 = vadd.f32 0.0, %v5720
        %v5722 = vpop.f32.mrb[0].mxu0
        %v5723 = vpop.f32.mrb[0].mxu0
        %v5724 = vadd.f32 0.0, %v5723
        %v5725 = vpop.f32.mrb[0].mxu0
        %5726 = vmatprep.mubr.bf16.mxu0 0
        %5727 = vmatmul.mubr.bf16.gmra.mrb[0].mxu0 %v5666
        %v5728 = vpop.f32.mrb[0].mxu0
        %v5729 = vadd.f32 0.0, %v5728
        %v5730 = vpop.f32.mrb[0].mxu0
        %v5731 = vpop.f32.mrb[0].mxu0
        %v5732 = vadd.f32 0.0, %v5731
        %v5733 = vpop.f32.mrb[0].mxu0
        %5734 = vmatprep.mubr.bf16.mxu0 0
        %5735 = vmatmul.mubr.bf16.gmra.mrb[0].mxu0 %v5669
        %v5736 = vpop.f32.mrb[0].mxu0
        %v5737 = vadd.f32 0.0, %v5736
        %v5738 = vpop.f32.mrb[0].mxu0
        %v5739 = vpop.f32.mrb[0].mxu0
        %v5740 = vadd.f32 0.0, %v5739
        %v5741 = vpop.f32.mrb[0].mxu0
        %5742 = vmatprep.mubr.bf16.mxu0 0
        %5743 = vmatmul.mubr.bf16.gmra.mrb[0].mxu0 %v5672
        %v5744 = vpop.f32.mrb[0].mxu0
        %v5745 = vadd.f32 0.0, %v5744
        %v5746 = vpop.f32.mrb[0].mxu0
        %v5747 = vpop.f32.mrb[0].mxu0
        %v5748 = vadd.f32 0.0, %v5747
        %v5749 = vpop.f32.mrb[0].mxu0
        %5750 = vmatprep.mubr.bf16.mxu0 0
        %5751 = vmatmul.mubr.bf16.gmra.mrb[0].mxu0 %v5675
        %v5752 = vpop.f32.mrb[0].mxu0
        %v5753 = vadd.f32 0.0, %v5752
        %v5754 = vpop.f32.mrb[0].mxu0
        %v5755 = vpop.f32.mrb[0].mxu0
        %v5756 = vadd.f32 0.0, %v5755
        %v5757 = vpop.f32.mrb[0].mxu0
        %5758 = vmatprep.mubr.bf16.mxu0 0
        %5759 = vmatmul.mubr.bf16.gmra.mrb[0].mxu0 %v5678
        %v5760 = vpop.f32.mrb[0].mxu0
        %v5761 = vadd.f32 0.0, %v5760
        %v5762 = vpop.f32.mrb[0].mxu0
        %v5763 = vpop.f32.mrb[0].mxu0
        %v5764 = vadd.f32 0.0, %v5763
        %v5765 = vpop.f32.mrb[0].mxu0
        %5766 = vmatprep.mubr.bf16.mxu0 0
        %5767 = vmatmul.mubr.bf16.gmra.mrb[0].mxu0 %v5681
        %v5768 = vpop.f32.mrb[0].mxu0
        %v5769 = vadd.f32 0.0, %v5768
        %v5770 = vpop.f32.mrb[0].mxu0
        %v5771 = vpop.f32.mrb[0].mxu0
        %v5772 = vadd.f32 0.0, %v5771
        %v5773 = vpop.f32.mrb[0].mxu0
        %5774 = vmatprep.mubr.bf16.mxu0 0
        %5775 = vmatmul.mubr.bf16.gmra.mrb[0].mxu0 %v5684
        %v5776 = vpop.f32.mrb[0].mxu0
        %v5777 = vadd.f32 0.0, %v5776
        %v5778 = vpop.f32.mrb[0].mxu0
        %v5779 = vpop.f32.mrb[0].mxu0
        %v5780 = vadd.f32 0.0, %v5779
        %v5781 = vpop.f32.mrb[0].mxu0
        %5782 = vdwg.mxu0
        %v5783 = vadd.f32 %v5614, %v5721
        %v5784 = vadd.f32 %v5615, %v5724
        %v5785 = vadd.f32 %v5616, %v5729
        %v5786 = vadd.f32 %v5617, %v5732
        %v5787 = vadd.f32 %v5618, %v5737
        %v5788 = vadd.f32 %v5619, %v5740
        %v5789 = vadd.f32 %v5620, %v5745
        %v5790 = vadd.f32 %v5621, %v5748
        %v5791 = vadd.f32 %v5622, %v5753
        %v5792 = vadd.f32 %v5623, %v5756
        %v5793 = vadd.f32 %v5624, %v5761
        %v5794 = vadd.f32 %v5625, %v5764
        %v5795 = vadd.f32 %v5626, %v5769
        %v5796 = vadd.f32 %v5627, %v5772
        %v5797 = vadd.f32 %v5628, %v5777
        %v5798 = vadd.f32 %v5629, %v5780
        %v5799 = vld [vmem:[%s4 + $0x78] sm:$0xf]
        %v5800 = vld [vmem:[%s4 + $0x7c] sm:$0xf]
        %v5809 = vunpack.c.l.b16 %v2037
        %v5810 = vunpack.c.l.b16 %v2038
        %v5811 = vunpack.c.l.b16 %v2039
        %v5812 = vunpack.c.l.b16 %v2040
        %v5813 = vunpack.c.l.b16 %v2041
        %v5814 = vunpack.c.l.b16 %v2042
        %v5815 = vunpack.c.l.b16 %v2043
        %v5816 = vunpack.c.l.b16 %v2044
        %v5817 = vunpack.c.l.b16 %v2045
        %v5818 = vunpack.c.l.b16 %v2046
        %v5819 = vunpack.c.l.b16 %v2047
        %v5820 = vunpack.c.l.b16 %v2048
        %v5821 = vunpack.c.l.b16 %v2049
        %v5822 = vunpack.c.l.b16 %v2050
        %v5823 = vunpack.c.l.b16 %v2051
        %v5824 = vunpack.c.l.b16 %v2052
        %v5825 = vpack.c.b16 %v5810, %v5809
        %v5826 = vpack.c.b16 %v5812, %v5811
        %v5827 = vpack.c.b16 %v5814, %v5813
        %v5828 = vpack.c.b16 %v5816, %v5815
        %v5829 = vpack.c.b16 %v5818, %v5817
        %v5830 = vpack.c.b16 %v5820, %v5819
        %v5831 = vpack.c.b16 %v5822, %v5821
        %v5832 = vpack.c.b16 %v5824, %v5823
        %v5835 = vunpack.c.l.b16 %v5799
        %v5836 = vunpack.c.l.b16 %v5800
        %v5837 = vpack.c.b16 %v5836, %v5835
        %v5840 = vsel %vm3289, %v5825, 0
        %v5843 = vsel %vm3289, %v5826, 0
        %v5846 = vsel %vm3289, %v5827, 0
        %v5849 = vsel %vm3289, %v5828, 0
        %v5852 = vsel %vm3289, %v5829, 0
        %v5855 = vsel %vm3289, %v5830, 0
        %v5858 = vsel %vm3289, %v5831, 0
        %v5861 = vsel %vm3289, %v5832, 0
        %5863 = vmatprep.subr.bf16.mxu0 0
        %5864 = vmatpush1.bf16.msra.mxu0 %v5837
        %5865 = vmatprep.subr.bf16.mxu0 0
        %5866 = vmatpush1.bf16.msra.mxu0 0
        %5867 = vmatprep.subr.bf16.mxu0 0
        %5868 = vmatpush1.bf16.msra.mxu0 0
        %5869 = vmatprep.subr.bf16.mxu0 0
        %5870 = vmatpush1.bf16.msra.mxu0 0
        %5871 = vmatprep.subr.bf16.mxu0 0
        %5872 = vmatpush1.bf16.msra.mxu0 0
        %5873 = vmatprep.subr.bf16.mxu0 0
        %5874 = vmatpush1.bf16.msra.mxu0 0
        %5875 = vmatprep.subr.bf16.mxu0 0
        %5876 = vmatpush1.bf16.msra.mxu0 0
        %5877 = vmatprep.subr.bf16.mxu0 0
        %5878 = vmatpush1.bf16.msra.mxu0 0
        %5879 = vmatprep.subr.bf16.mxu0 0
        %5880 = vmatpush1.bf16.msra.mxu0 0
        %5881 = vmatprep.subr.bf16.mxu0 0
        %5882 = vmatpush1.bf16.msra.mxu0 0
        %5883 = vmatprep.subr.bf16.mxu0 0
        %5884 = vmatpush1.bf16.msra.mxu0 0
        %5885 = vmatprep.subr.bf16.mxu0 0
        %5886 = vmatpush1.bf16.msra.mxu0 0
        %5887 = vmatprep.subr.bf16.mxu0 0
        %5888 = vmatpush1.bf16.msra.mxu0 0
        %5889 = vmatprep.subr.bf16.mxu0 0
        %5890 = vmatpush1.bf16.msra.mxu0 0
        %5891 = vmatprep.subr.bf16.mxu0 0
        %5892 = vmatpush1.bf16.msra.mxu0 0
        %5893 = vmatprep.subr.bf16.mxu0 0
        %5894 = vmatpush1.bf16.msra.mxu0 0
        %5895 = vmatprep.mubr.bf16.mxu0 0
        %5896 = vmatmul.mubr.bf16.gmra.mrb[0].mxu0 %v5840
        %v5897 = vpop.f32.mrb[0].mxu0
        %v5898 = vadd.f32 0.0, %v5897
        %v5899 = vpop.f32.mrb[0].mxu0
        %v5900 = vpop.f32.mrb[0].mxu0
        %v5901 = vadd.f32 0.0, %v5900
        %v5902 = vpop.f32.mrb[0].mxu0
        %5903 = vmatprep.mubr.bf16.mxu0 0
        %5904 = vmatmul.mubr.bf16.gmra.mrb[0].mxu0 %v5843
        %v5905 = vpop.f32.mrb[0].mxu0
        %v5906 = vadd.f32 0.0, %v5905
        %v5907 = vpop.f32.mrb[0].mxu0
        %v5908 = vpop.f32.mrb[0].mxu0
        %v5909 = vadd.f32 0.0, %v5908
        %v5910 = vpop.f32.mrb[0].mxu0
        %5911 = vmatprep.mubr.bf16.mxu0 0
        %5912 = vmatmul.mubr.bf16.gmra.mrb[0].mxu0 %v5846
        %v5913 = vpop.f32.mrb[0].mxu0
        %v5914 = vadd.f32 0.0, %v5913
        %v5915 = vpop.f32.mrb[0].mxu0
        %v5916 = vpop.f32.mrb[0].mxu0
        %v5917 = vadd.f32 0.0, %v5916
        %v5918 = vpop.f32.mrb[0].mxu0
        %5919 = vmatprep.mubr.bf16.mxu0 0
        %5920 = vmatmul.mubr.bf16.gmra.mrb[0].mxu0 %v5849
        %v5921 = vpop.f32.mrb[0].mxu0
        %v5922 = vadd.f32 0.0, %v5921
        %v5923 = vpop.f32.mrb[0].mxu0
        %v5924 = vpop.f32.mrb[0].mxu0
        %v5925 = vadd.f32 0.0, %v5924
        %v5926 = vpop.f32.mrb[0].mxu0
        %5927 = vmatprep.mubr.bf16.mxu0 0
        %5928 = vmatmul.mubr.bf16.gmra.mrb[0].mxu0 %v5852
        %v5929 = vpop.f32.mrb[0].mxu0
        %v5930 = vadd.f32 0.0, %v5929
        %v5931 = vpop.f32.mrb[0].mxu0
        %v5932 = vpop.f32.mrb[0].mxu0
        %v5933 = vadd.f32 0.0, %v5932
        %v5934 = vpop.f32.mrb[0].mxu0
        %5935 = vmatprep.mubr.bf16.mxu0 0
        %5936 = vmatmul.mubr.bf16.gmra.mrb[0].mxu0 %v5855
        %v5937 = vpop.f32.mrb[0].mxu0
        %v5938 = vadd.f32 0.0, %v5937
        %v5939 = vpop.f32.mrb[0].mxu0
        %v5940 = vpop.f32.mrb[0].mxu0
        %v5941 = vadd.f32 0.0, %v5940
        %v5942 = vpop.f32.mrb[0].mxu0
        %5943 = vmatprep.mubr.bf16.mxu0 0
        %5944 = vmatmul.mubr.bf16.gmra.mrb[0].mxu0 %v5858
        %v5945 = vpop.f32.mrb[0].mxu0
        %v5946 = vadd.f32 0.0, %v5945
        %v5947 = vpop.f32.mrb[0].mxu0
        %v5948 = vpop.f32.mrb[0].mxu0
        %v5949 = vadd.f32 0.0, %v5948
        %v5950 = vpop.f32.mrb[0].mxu0
        %5951 = vmatprep.mubr.bf16.mxu0 0
        %5952 = vmatmul.mubr.bf16.gmra.mrb[0].mxu0 %v5861
        %v5953 = vpop.f32.mrb[0].mxu0
        %v5954 = vadd.f32 0.0, %v5953
        %v5955 = vpop.f32.mrb[0].mxu0
        %v5956 = vpop.f32.mrb[0].mxu0
        %v5957 = vadd.f32 0.0, %v5956
        %v5958 = vpop.f32.mrb[0].mxu0
        %5959 = vdwg.mxu0
        %v5960 = vadd.f32 %v5783, %v5898
        %v5961 = vadd.f32 %v5784, %v5901
        %v5962 = vadd.f32 %v5785, %v5906
        %v5963 = vadd.f32 %v5786, %v5909
        %v5964 = vadd.f32 %v5787, %v5914
        %v5965 = vadd.f32 %v5788, %v5917
        %v5966 = vadd.f32 %v5789, %v5922
        %v5967 = vadd.f32 %v5790, %v5925
        %v5968 = vadd.f32 %v5791, %v5930
        %v5969 = vadd.f32 %v5792, %v5933
        %v5970 = vadd.f32 %v5793, %v5938
        %v5971 = vadd.f32 %v5794, %v5941
        %v5972 = vadd.f32 %v5795, %v5946
        %v5973 = vadd.f32 %v5796, %v5949
        %v5974 = vadd.f32 %v5797, %v5954
        %v5975 = vadd.f32 %v5798, %v5957
        %v5976 = vld [vmem:[%s4 + $0x80] sm:$0xf]
        %v5977 = vld [vmem:[%s4 + $0x84] sm:$0xf]
        %v5978 = vunpack.c.l.b16 %v2074
        %v5979 = vunpack.c.l.b16 %v2084
        %v5980 = vunpack.c.l.b16 %v2098
        %v5981 = vunpack.c.l.b16 %v2108
        %v5982 = vunpack.c.l.b16 %v2122
        %v5983 = vunpack.c.l.b16 %v2132
        %v5984 = vunpack.c.l.b16 %v2146
        %v5985 = vunpack.c.l.b16 %v2156
        %v5986 = vunpack.c.l.b16 %v2170
        %v5987 = vunpack.c.l.b16 %v2180
        %v5988 = vunpack.c.l.b16 %v2194
        %v5989 = vunpack.c.l.b16 %v2204
        %v5990 = vunpack.c.l.b16 %v2218
        %v5991 = vunpack.c.l.b16 %v2228
        %v5992 = vunpack.c.l.b16 %v2242
        %v5993 = vunpack.c.l.b16 %v2252
        %v5994 = vpack.c.b16 %v5979, %v5978
        %v5995 = vpack.c.b16 %v5981, %v5980
        %v5996 = vpack.c.b16 %v5983, %v5982
        %v5997 = vpack.c.b16 %v5985, %v5984
        %v5998 = vpack.c.b16 %v5987, %v5986
        %v5999 = vpack.c.b16 %v5989, %v5988
        %v6000 = vpack.c.b16 %v5991, %v5990
        %v6001 = vpack.c.b16 %v5993, %v5992
        %v6004 = vunpack.c.l.b16 %v5976
        %v6005 = vunpack.c.l.b16 %v5977
        %v6006 = vpack.c.b16 %v6005, %v6004
        %v6009 = vsel %vm3289, %v5994, 0
        %v6012 = vsel %vm3289, %v5995, 0
        %v6015 = vsel %vm3289, %v5996, 0
        %v6018 = vsel %vm3289, %v5997, 0
        %v6021 = vsel %vm3289, %v5998, 0
        %v6024 = vsel %vm3289, %v5999, 0
        %v6027 = vsel %vm3289, %v6000, 0
        %v6030 = vsel %vm3289, %v6001, 0
        %6032 = vmatprep.subr.bf16.mxu0 0
        %6033 = vmatpush1.bf16.msra.mxu0 %v6006
        %6034 = vmatprep.subr.bf16.mxu0 0
        %6035 = vmatpush1.bf16.msra.mxu0 0
        %6036 = vmatprep.subr.bf16.mxu0 0
        %6037 = vmatpush1.bf16.msra.mxu0 0
        %6038 = vmatprep.subr.bf16.mxu0 0
        %6039 = vmatpush1.bf16.msra.mxu0 0
        %6040 = vmatprep.subr.bf16.mxu0 0
        %6041 = vmatpush1.bf16.msra.mxu0 0
        %6042 = vmatprep.subr.bf16.mxu0 0
        %6043 = vmatpush1.bf16.msra.mxu0 0
        %6044 = vmatprep.subr.bf16.mxu0 0
        %6045 = vmatpush1.bf16.msra.mxu0 0
        %6046 = vmatprep.subr.bf16.mxu0 0
        %6047 = vmatpush1.bf16.msra.mxu0 0
        %6048 = vmatprep.subr.bf16.mxu0 0
        %6049 = vmatpush1.bf16.msra.mxu0 0
        %6050 = vmatprep.subr.bf16.mxu0 0
        %6051 = vmatpush1.bf16.msra.mxu0 0
        %6052 = vmatprep.subr.bf16.mxu0 0
        %6053 = vmatpush1.bf16.msra.mxu0 0
        %6054 = vmatprep.subr.bf16.mxu0 0
        %6055 = vmatpush1.bf16.msra.mxu0 0
        %6056 = vmatprep.subr.bf16.mxu0 0
        %6057 = vmatpush1.bf16.msra.mxu0 0
        %6058 = vmatprep.subr.bf16.mxu0 0
        %6059 = vmatpush1.bf16.msra.mxu0 0
        %6060 = vmatprep.subr.bf16.mxu0 0
        %6061 = vmatpush1.bf16.msra.mxu0 0
        %6062 = vmatprep.subr.bf16.mxu0 0
        %6063 = vmatpush1.bf16.msra.mxu0 0
        %6064 = vmatprep.mubr.bf16.mxu0 0
        %6065 = vmatmul.mubr.bf16.gmra.mrb[0].mxu0 %v6009
        %v6066 = vpop.f32.mrb[0].mxu0
        %v6067 = vadd.f32 0.0, %v6066
        %v6068 = vpop.f32.mrb[0].mxu0
        %v6069 = vpop.f32.mrb[0].mxu0
        %v6070 = vadd.f32 0.0, %v6069
        %v6071 = vpop.f32.mrb[0].mxu0
        %6072 = vmatprep.mubr.bf16.mxu0 0
        %6073 = vmatmul.mubr.bf16.gmra.mrb[0].mxu0 %v6012
        %v6074 = vpop.f32.mrb[0].mxu0
        %v6075 = vadd.f32 0.0, %v6074
        %v6076 = vpop.f32.mrb[0].mxu0
        %v6077 = vpop.f32.mrb[0].mxu0
        %v6078 = vadd.f32 0.0, %v6077
        %v6079 = vpop.f32.mrb[0].mxu0
        %6080 = vmatprep.mubr.bf16.mxu0 0
        %6081 = vmatmul.mubr.bf16.gmra.mrb[0].mxu0 %v6015
        %v6082 = vpop.f32.mrb[0].mxu0
        %v6083 = vadd.f32 0.0, %v6082
        %v6084 = vpop.f32.mrb[0].mxu0
        %v6085 = vpop.f32.mrb[0].mxu0
        %v6086 = vadd.f32 0.0, %v6085
        %v6087 = vpop.f32.mrb[0].mxu0
        %6088 = vmatprep.mubr.bf16.mxu0 0
        %6089 = vmatmul.mubr.bf16.gmra.mrb[0].mxu0 %v6018
        %v6090 = vpop.f32.mrb[0].mxu0
        %v6091 = vadd.f32 0.0, %v6090
        %v6092 = vpop.f32.mrb[0].mxu0
        %v6093 = vpop.f32.mrb[0].mxu0
        %v6094 = vadd.f32 0.0, %v6093
        %v6095 = vpop.f32.mrb[0].mxu0
        %6096 = vmatprep.mubr.bf16.mxu0 0
        %6097 = vmatmul.mubr.bf16.gmra.mrb[0].mxu0 %v6021
        %v6098 = vpop.f32.mrb[0].mxu0
        %v6099 = vadd.f32 0.0, %v6098
        %v6100 = vpop.f32.mrb[0].mxu0
        %v6101 = vpop.f32.mrb[0].mxu0
        %v6102 = vadd.f32 0.0, %v6101
        %v6103 = vpop.f32.mrb[0].mxu0
        %6104 = vmatprep.mubr.bf16.mxu0 0
        %6105 = vmatmul.mubr.bf16.gmra.mrb[0].mxu0 %v6024
        %v6106 = vpop.f32.mrb[0].mxu0
        %v6107 = vadd.f32 0.0, %v6106
        %v6108 = vpop.f32.mrb[0].mxu0
        %v6109 = vpop.f32.mrb[0].mxu0
        %v6110 = vadd.f32 0.0, %v6109
        %v6111 = vpop.f32.mrb[0].mxu0
        %6112 = vmatprep.mubr.bf16.mxu0 0
        %6113 = vmatmul.mubr.bf16.gmra.mrb[0].mxu0 %v6027
        %v6114 = vpop.f32.mrb[0].mxu0
        %v6115 = vadd.f32 0.0, %v6114
        %v6116 = vpop.f32.mrb[0].mxu0
        %v6117 = vpop.f32.mrb[0].mxu0
        %v6118 = vadd.f32 0.0, %v6117
        %v6119 = vpop.f32.mrb[0].mxu0
        %6120 = vmatprep.mubr.bf16.mxu0 0
        %6121 = vmatmul.mubr.bf16.gmra.mrb[0].mxu0 %v6030
        %v6122 = vpop.f32.mrb[0].mxu0
        %v6123 = vadd.f32 0.0, %v6122
        %v6124 = vpop.f32.mrb[0].mxu0
        %v6125 = vpop.f32.mrb[0].mxu0
        %v6126 = vadd.f32 0.0, %v6125
        %v6127 = vpop.f32.mrb[0].mxu0
        %6128 = vdwg.mxu0
        %v6129 = vadd.f32 %v5960, %v6067
        %v6130 = vadd.f32 %v5961, %v6070
        %v6131 = vadd.f32 %v5962, %v6075
        %v6132 = vadd.f32 %v5963, %v6078
        %v6133 = vadd.f32 %v5964, %v6083
        %v6134 = vadd.f32 %v5965, %v6086
        %v6135 = vadd.f32 %v5966, %v6091
        %v6136 = vadd.f32 %v5967, %v6094
        %v6137 = vadd.f32 %v5968, %v6099
        %v6138 = vadd.f32 %v5969, %v6102
        %v6139 = vadd.f32 %v5970, %v6107
        %v6140 = vadd.f32 %v5971, %v6110
        %v6141 = vadd.f32 %v5972, %v6115
        %v6142 = vadd.f32 %v5973, %v6118
        %v6143 = vadd.f32 %v5974, %v6123
        %v6144 = vadd.f32 %v5975, %v6126
        %v6145 = vld [vmem:[%s4 + $0x88] sm:$0xf]
        %v6146 = vld [vmem:[%s4 + $0x8c] sm:$0xf]
        %v6147 = vunpack.c.l.b16 %v2288
        %v6148 = vunpack.c.l.b16 %v2291
        %v6149 = vunpack.c.l.b16 %v2295
        %v6150 = vunpack.c.l.b16 %v2298
        %v6151 = vunpack.c.l.b16 %v2302
        %v6152 = vunpack.c.l.b16 %v2305
        %v6153 = vunpack.c.l.b16 %v2309
        %v6154 = vunpack.c.l.b16 %v2312
        %v6155 = vunpack.c.l.b16 %v2316
        %v6156 = vunpack.c.l.b16 %v2319
        %v6157 = vunpack.c.l.b16 %v2323
        %v6158 = vunpack.c.l.b16 %v2326
        %v6159 = vunpack.c.l.b16 %v2330
        %v6160 = vunpack.c.l.b16 %v2333
        %v6161 = vunpack.c.l.b16 %v2337
        %v6162 = vunpack.c.l.b16 %v2340
        %v6163 = vpack.c.b16 %v6148, %v6147
        %v6164 = vpack.c.b16 %v6150, %v6149
        %v6165 = vpack.c.b16 %v6152, %v6151
        %v6166 = vpack.c.b16 %v6154, %v6153
        %v6167 = vpack.c.b16 %v6156, %v6155
        %v6168 = vpack.c.b16 %v6158, %v6157
        %v6169 = vpack.c.b16 %v6160, %v6159
        %v6170 = vpack.c.b16 %v6162, %v6161
        %v6173 = vunpack.c.l.b16 %v6145
        %v6174 = vunpack.c.l.b16 %v6146
        %v6175 = vpack.c.b16 %v6174, %v6173
        %v6178 = vsel %vm3289, %v6163, 0
        %v6181 = vsel %vm3289, %v6164, 0
        %v6184 = vsel %vm3289, %v6165, 0
        %v6187 = vsel %vm3289, %v6166, 0
        %v6190 = vsel %vm3289, %v6167, 0
        %v6193 = vsel %vm3289, %v6168, 0
        %v6196 = vsel %vm3289, %v6169, 0
        %v6199 = vsel %vm3289, %v6170, 0
        %6201 = vmatprep.subr.bf16.mxu0 0
        %6202 = vmatpush1.bf16.msra.mxu0 %v6175
        %6203 = vmatprep.subr.bf16.mxu0 0
        %6204 = vmatpush1.bf16.msra.mxu0 0
        %6205 = vmatprep.subr.bf16.mxu0 0
        %6206 = vmatpush1.bf16.msra.mxu0 0
        %6207 = vmatprep.subr.bf16.mxu0 0
        %6208 = vmatpush1.bf16.msra.mxu0 0
        %6209 = vmatprep.subr.bf16.mxu0 0
        %6210 = vmatpush1.bf16.msra.mxu0 0
        %6211 = vmatprep.subr.bf16.mxu0 0
        %6212 = vmatpush1.bf16.msra.mxu0 0
        %6213 = vmatprep.subr.bf16.mxu0 0
        %6214 = vmatpush1.bf16.msra.mxu0 0
        %6215 = vmatprep.subr.bf16.mxu0 0
        %6216 = vmatpush1.bf16.msra.mxu0 0
        %6217 = vmatprep.subr.bf16.mxu0 0
        %6218 = vmatpush1.bf16.msra.mxu0 0
        %6219 = vmatprep.subr.bf16.mxu0 0
        %6220 = vmatpush1.bf16.msra.mxu0 0
        %6221 = vmatprep.subr.bf16.mxu0 0
        %6222 = vmatpush1.bf16.msra.mxu0 0
        %6223 = vmatprep.subr.bf16.mxu0 0
        %6224 = vmatpush1.bf16.msra.mxu0 0
        %6225 = vmatprep.subr.bf16.mxu0 0
        %6226 = vmatpush1.bf16.msra.mxu0 0
        %6227 = vmatprep.subr.bf16.mxu0 0
        %6228 = vmatpush1.bf16.msra.mxu0 0
        %6229 = vmatprep.subr.bf16.mxu0 0
        %6230 = vmatpush1.bf16.msra.mxu0 0
        %6231 = vmatprep.subr.bf16.mxu0 0
        %6232 = vmatpush1.bf16.msra.mxu0 0
        %6233 = vmatprep.mubr.bf16.mxu0 0
        %6234 = vmatmul.mubr.bf16.gmra.mrb[0].mxu0 %v6178
        %v6235 = vpop.f32.mrb[0].mxu0
        %v6236 = vadd.f32 0.0, %v6235
        %v6237 = vpop.f32.mrb[0].mxu0
        %v6238 = vpop.f32.mrb[0].mxu0
        %v6239 = vadd.f32 0.0, %v6238
        %v6240 = vpop.f32.mrb[0].mxu0
        %6241 = vmatprep.mubr.bf16.mxu0 0
        %6242 = vmatmul.mubr.bf16.gmra.mrb[0].mxu0 %v6181
        %v6243 = vpop.f32.mrb[0].mxu0
        %v6244 = vadd.f32 0.0, %v6243
        %v6245 = vpop.f32.mrb[0].mxu0
        %v6246 = vpop.f32.mrb[0].mxu0
        %v6247 = vadd.f32 0.0, %v6246
        %v6248 = vpop.f32.mrb[0].mxu0
        %6249 = vmatprep.mubr.bf16.mxu0 0
        %6250 = vmatmul.mubr.bf16.gmra.mrb[0].mxu0 %v6184
        %v6251 = vpop.f32.mrb[0].mxu0
        %v6252 = vadd.f32 0.0, %v6251
        %v6253 = vpop.f32.mrb[0].mxu0
        %v6254 = vpop.f32.mrb[0].mxu0
        %v6255 = vadd.f32 0.0, %v6254
        %v6256 = vpop.f32.mrb[0].mxu0
        %6257 = vmatprep.mubr.bf16.mxu0 0
        %6258 = vmatmul.mubr.bf16.gmra.mrb[0].mxu0 %v6187
        %v6259 = vpop.f32.mrb[0].mxu0
        %v6260 = vadd.f32 0.0, %v6259
        %v6261 = vpop.f32.mrb[0].mxu0
        %v6262 = vpop.f32.mrb[0].mxu0
        %v6263 = vadd.f32 0.0, %v6262
        %v6264 = vpop.f32.mrb[0].mxu0
        %6265 = vmatprep.mubr.bf16.mxu0 0
        %6266 = vmatmul.mubr.bf16.gmra.mrb[0].mxu0 %v6190
        %v6267 = vpop.f32.mrb[0].mxu0
        %v6268 = vadd.f32 0.0, %v6267
        %v6269 = vpop.f32.mrb[0].mxu0
        %v6270 = vpop.f32.mrb[0].mxu0
        %v6271 = vadd.f32 0.0, %v6270
        %v6272 = vpop.f32.mrb[0].mxu0
        %6273 = vmatprep.mubr.bf16.mxu0 0
        %6274 = vmatmul.mubr.bf16.gmra.mrb[0].mxu0 %v6193
        %v6275 = vpop.f32.mrb[0].mxu0
        %v6276 = vadd.f32 0.0, %v6275
        %v6277 = vpop.f32.mrb[0].mxu0
        %v6278 = vpop.f32.mrb[0].mxu0
        %v6279 = vadd.f32 0.0, %v6278
        %v6280 = vpop.f32.mrb[0].mxu0
        %6281 = vmatprep.mubr.bf16.mxu0 0
        %6282 = vmatmul.mubr.bf16.gmra.mrb[0].mxu0 %v6196
        %v6283 = vpop.f32.mrb[0].mxu0
        %v6284 = vadd.f32 0.0, %v6283
        %v6285 = vpop.f32.mrb[0].mxu0
        %v6286 = vpop.f32.mrb[0].mxu0
        %v6287 = vadd.f32 0.0, %v6286
        %v6288 = vpop.f32.mrb[0].mxu0
        %6289 = vmatprep.mubr.bf16.mxu0 0
        %6290 = vmatmul.mubr.bf16.gmra.mrb[0].mxu0 %v6199
        %v6291 = vpop.f32.mrb[0].mxu0
        %v6292 = vadd.f32 0.0, %v6291
        %v6293 = vpop.f32.mrb[0].mxu0
        %v6294 = vpop.f32.mrb[0].mxu0
        %v6295 = vadd.f32 0.0, %v6294
        %v6296 = vpop.f32.mrb[0].mxu0
        %6297 = vdwg.mxu0
        %v6298 = vadd.f32 %v6129, %v6236
        %v6299 = vadd.f32 %v6130, %v6239
        %v6300 = vadd.f32 %v6131, %v6244
        %v6301 = vadd.f32 %v6132, %v6247
        %v6302 = vadd.f32 %v6133, %v6252
        %v6303 = vadd.f32 %v6134, %v6255
        %v6304 = vadd.f32 %v6135, %v6260
        %v6305 = vadd.f32 %v6136, %v6263
        %v6306 = vadd.f32 %v6137, %v6268
        %v6307 = vadd.f32 %v6138, %v6271
        %v6308 = vadd.f32 %v6139, %v6276
        %v6309 = vadd.f32 %v6140, %v6279
        %v6310 = vadd.f32 %v6141, %v6284
        %v6311 = vadd.f32 %v6142, %v6287
        %v6312 = vadd.f32 %v6143, %v6292
        %v6313 = vadd.f32 %v6144, %v6295
        %v6314 = vld [vmem:[%s4 + $0x90] sm:$0xf]
        %v6315 = vld [vmem:[%s4 + $0x94] sm:$0xf]
        %v6324 = vunpack.c.l.b16 %v2341
        %v6325 = vunpack.c.l.b16 %v2342
        %v6326 = vunpack.c.l.b16 %v2343
        %v6327 = vunpack.c.l.b16 %v2344
        %v6328 = vunpack.c.l.b16 %v2345
        %v6329 = vunpack.c.l.b16 %v2346
        %v6330 = vunpack.c.l.b16 %v2347
        %v6331 = vunpack.c.l.b16 %v2348
        %v6332 = vunpack.c.l.b16 %v2349
        %v6333 = vunpack.c.l.b16 %v2350
        %v6334 = vunpack.c.l.b16 %v2351
        %v6335 = vunpack.c.l.b16 %v2352
        %v6336 = vunpack.c.l.b16 %v2353
        %v6337 = vunpack.c.l.b16 %v2354
        %v6338 = vunpack.c.l.b16 %v2355
        %v6339 = vunpack.c.l.b16 %v2356
        %v6340 = vpack.c.b16 %v6325, %v6324
        %v6341 = vpack.c.b16 %v6327, %v6326
        %v6342 = vpack.c.b16 %v6329, %v6328
        %v6343 = vpack.c.b16 %v6331, %v6330
        %v6344 = vpack.c.b16 %v6333, %v6332
        %v6345 = vpack.c.b16 %v6335, %v6334
        %v6346 = vpack.c.b16 %v6337, %v6336
        %v6347 = vpack.c.b16 %v6339, %v6338
        %v6350 = vunpack.c.l.b16 %v6314
        %v6351 = vunpack.c.l.b16 %v6315
        %v6352 = vpack.c.b16 %v6351, %v6350
        %v6355 = vsel %vm3289, %v6340, 0
        %v6358 = vsel %vm3289, %v6341, 0
        %v6361 = vsel %vm3289, %v6342, 0
        %v6364 = vsel %vm3289, %v6343, 0
        %v6367 = vsel %vm3289, %v6344, 0
        %v6370 = vsel %vm3289, %v6345, 0
        %v6373 = vsel %vm3289, %v6346, 0
        %v6376 = vsel %vm3289, %v6347, 0
        %6378 = vmatprep.subr.bf16.mxu0 0
        %6379 = vmatpush1.bf16.msra.mxu0 %v6352
        %6380 = vmatprep.subr.bf16.mxu0 0
        %6381 = vmatpush1.bf16.msra.mxu0 0
        %6382 = vmatprep.subr.bf16.mxu0 0
        %6383 = vmatpush1.bf16.msra.mxu0 0
        %6384 = vmatprep.subr.bf16.mxu0 0
        %6385 = vmatpush1.bf16.msra.mxu0 0
        %6386 = vmatprep.subr.bf16.mxu0 0
        %6387 = vmatpush1.bf16.msra.mxu0 0
        %6388 = vmatprep.subr.bf16.mxu0 0
        %6389 = vmatpush1.bf16.msra.mxu0 0
        %6390 = vmatprep.subr.bf16.mxu0 0
        %6391 = vmatpush1.bf16.msra.mxu0 0
        %6392 = vmatprep.subr.bf16.mxu0 0
        %6393 = vmatpush1.bf16.msra.mxu0 0
        %6394 = vmatprep.subr.bf16.mxu0 0
        %6395 = vmatpush1.bf16.msra.mxu0 0
        %6396 = vmatprep.subr.bf16.mxu0 0
        %6397 = vmatpush1.bf16.msra.mxu0 0
        %6398 = vmatprep.subr.bf16.mxu0 0
        %6399 = vmatpush1.bf16.msra.mxu0 0
        %6400 = vmatprep.subr.bf16.mxu0 0
        %6401 = vmatpush1.bf16.msra.mxu0 0
        %6402 = vmatprep.subr.bf16.mxu0 0
        %6403 = vmatpush1.bf16.msra.mxu0 0
        %6404 = vmatprep.subr.bf16.mxu0 0
        %6405 = vmatpush1.bf16.msra.mxu0 0
        %6406 = vmatprep.subr.bf16.mxu0 0
        %6407 = vmatpush1.bf16.msra.mxu0 0
        %6408 = vmatprep.subr.bf16.mxu0 0
        %6409 = vmatpush1.bf16.msra.mxu0 0
        %6410 = vmatprep.mubr.bf16.mxu0 0
        %6411 = vmatmul.mubr.bf16.gmra.mrb[0].mxu0 %v6355
        %v6412 = vpop.f32.mrb[0].mxu0
        %v6413 = vadd.f32 0.0, %v6412
        %v6414 = vpop.f32.mrb[0].mxu0
        %v6415 = vpop.f32.mrb[0].mxu0
        %v6416 = vadd.f32 0.0, %v6415
        %v6417 = vpop.f32.mrb[0].mxu0
        %6418 = vmatprep.mubr.bf16.mxu0 0
        %6419 = vmatmul.mubr.bf16.gmra.mrb[0].mxu0 %v6358
        %v6420 = vpop.f32.mrb[0].mxu0
        %v6421 = vadd.f32 0.0, %v6420
        %v6422 = vpop.f32.mrb[0].mxu0
        %v6423 = vpop.f32.mrb[0].mxu0
        %v6424 = vadd.f32 0.0, %v6423
        %v6425 = vpop.f32.mrb[0].mxu0
        %6426 = vmatprep.mubr.bf16.mxu0 0
        %6427 = vmatmul.mubr.bf16.gmra.mrb[0].mxu0 %v6361
        %v6428 = vpop.f32.mrb[0].mxu0
        %v6429 = vadd.f32 0.0, %v6428
        %v6430 = vpop.f32.mrb[0].mxu0
        %v6431 = vpop.f32.mrb[0].mxu0
        %v6432 = vadd.f32 0.0, %v6431
        %v6433 = vpop.f32.mrb[0].mxu0
        %6434 = vmatprep.mubr.bf16.mxu0 0
        %6435 = vmatmul.mubr.bf16.gmra.mrb[0].mxu0 %v6364
        %v6436 = vpop.f32.mrb[0].mxu0
        %v6437 = vadd.f32 0.0, %v6436
        %v6438 = vpop.f32.mrb[0].mxu0
        %v6439 = vpop.f32.mrb[0].mxu0
        %v6440 = vadd.f32 0.0, %v6439
        %v6441 = vpop.f32.mrb[0].mxu0
        %6442 = vmatprep.mubr.bf16.mxu0 0
        %6443 = vmatmul.mubr.bf16.gmra.mrb[0].mxu0 %v6367
        %v6444 = vpop.f32.mrb[0].mxu0
        %v6445 = vadd.f32 0.0, %v6444
        %v6446 = vpop.f32.mrb[0].mxu0
        %v6447 = vpop.f32.mrb[0].mxu0
        %v6448 = vadd.f32 0.0, %v6447
        %v6449 = vpop.f32.mrb[0].mxu0
        %6450 = vmatprep.mubr.bf16.mxu0 0
        %6451 = vmatmul.mubr.bf16.gmra.mrb[0].mxu0 %v6370
        %v6452 = vpop.f32.mrb[0].mxu0
        %v6453 = vadd.f32 0.0, %v6452
        %v6454 = vpop.f32.mrb[0].mxu0
        %v6455 = vpop.f32.mrb[0].mxu0
        %v6456 = vadd.f32 0.0, %v6455
        %v6457 = vpop.f32.mrb[0].mxu0
        %6458 = vmatprep.mubr.bf16.mxu0 0
        %6459 = vmatmul.mubr.bf16.gmra.mrb[0].mxu0 %v6373
        %v6460 = vpop.f32.mrb[0].mxu0
        %v6461 = vadd.f32 0.0, %v6460
        %v6462 = vpop.f32.mrb[0].mxu0
        %v6463 = vpop.f32.mrb[0].mxu0
        %v6464 = vadd.f32 0.0, %v6463
        %v6465 = vpop.f32.mrb[0].mxu0
        %6466 = vmatprep.mubr.bf16.mxu0 0
        %6467 = vmatmul.mubr.bf16.gmra.mrb[0].mxu0 %v6376
        %v6468 = vpop.f32.mrb[0].mxu0
        %v6469 = vadd.f32 0.0, %v6468
        %v6470 = vpop.f32.mrb[0].mxu0
        %v6471 = vpop.f32.mrb[0].mxu0
        %v6472 = vadd.f32 0.0, %v6471
        %v6473 = vpop.f32.mrb[0].mxu0
        %6474 = vdwg.mxu0
        %v6475 = vadd.f32 %v6298, %v6413
        %v6476 = vadd.f32 %v6299, %v6416
        %v6477 = vadd.f32 %v6300, %v6421
        %v6478 = vadd.f32 %v6301, %v6424
        %v6479 = vadd.f32 %v6302, %v6429
        %v6480 = vadd.f32 %v6303, %v6432
        %v6481 = vadd.f32 %v6304, %v6437
        %v6482 = vadd.f32 %v6305, %v6440
        %v6483 = vadd.f32 %v6306, %v6445
        %v6484 = vadd.f32 %v6307, %v6448
        %v6485 = vadd.f32 %v6308, %v6453
        %v6486 = vadd.f32 %v6309, %v6456
        %v6487 = vadd.f32 %v6310, %v6461
        %v6488 = vadd.f32 %v6311, %v6464
        %v6489 = vadd.f32 %v6312, %v6469
        %v6490 = vadd.f32 %v6313, %v6472
        %v6491 = vld [vmem:[%s4 + $0x98] sm:$0xf]
        %v6492 = vld [vmem:[%s4 + $0x9c] sm:$0xf]
        %v6493 = vunpack.c.l.b16 %v2378
        %v6494 = vunpack.c.l.b16 %v2388
        %v6495 = vunpack.c.l.b16 %v2402
        %v6496 = vunpack.c.l.b16 %v2412
        %v6497 = vunpack.c.l.b16 %v2426
        %v6498 = vunpack.c.l.b16 %v2436
        %v6499 = vunpack.c.l.b16 %v2450
        %v6500 = vunpack.c.l.b16 %v2460
        %v6501 = vunpack.c.l.b16 %v2474
        %v6502 = vunpack.c.l.b16 %v2484
        %v6503 = vunpack.c.l.b16 %v2498
        %v6504 = vunpack.c.l.b16 %v2508
        %v6505 = vunpack.c.l.b16 %v2522
        %v6506 = vunpack.c.l.b16 %v2532
        %v6507 = vunpack.c.l.b16 %v2546
        %v6508 = vunpack.c.l.b16 %v2556
        %v6509 = vpack.c.b16 %v6494, %v6493
        %v6510 = vpack.c.b16 %v6496, %v6495
        %v6511 = vpack.c.b16 %v6498, %v6497
        %v6512 = vpack.c.b16 %v6500, %v6499
        %v6513 = vpack.c.b16 %v6502, %v6501
        %v6514 = vpack.c.b16 %v6504, %v6503
        %v6515 = vpack.c.b16 %v6506, %v6505
        %v6516 = vpack.c.b16 %v6508, %v6507
        %v6519 = vunpack.c.l.b16 %v6491
        %v6520 = vunpack.c.l.b16 %v6492
        %v6521 = vpack.c.b16 %v6520, %v6519
        %v6524 = vsel %vm3289, %v6509, 0
        %v6527 = vsel %vm3289, %v6510, 0
        %v6530 = vsel %vm3289, %v6511, 0
        %v6533 = vsel %vm3289, %v6512, 0
        %v6536 = vsel %vm3289, %v6513, 0
        %v6539 = vsel %vm3289, %v6514, 0
        %v6542 = vsel %vm3289, %v6515, 0
        %v6545 = vsel %vm3289, %v6516, 0
        %6547 = vmatprep.subr.bf16.mxu0 0
        %6548 = vmatpush1.bf16.msra.mxu0 %v6521
        %6549 = vmatprep.subr.bf16.mxu0 0
        %6550 = vmatpush1.bf16.msra.mxu0 0
        %6551 = vmatprep.subr.bf16.mxu0 0
        %6552 = vmatpush1.bf16.msra.mxu0 0
        %6553 = vmatprep.subr.bf16.mxu0 0
        %6554 = vmatpush1.bf16.msra.mxu0 0
        %6555 = vmatprep.subr.bf16.mxu0 0
        %6556 = vmatpush1.bf16.msra.mxu0 0
        %6557 = vmatprep.subr.bf16.mxu0 0
        %6558 = vmatpush1.bf16.msra.mxu0 0
        %6559 = vmatprep.subr.bf16.mxu0 0
        %6560 = vmatpush1.bf16.msra.mxu0 0
        %6561 = vmatprep.subr.bf16.mxu0 0
        %6562 = vmatpush1.bf16.msra.mxu0 0
        %6563 = vmatprep.subr.bf16.mxu0 0
        %6564 = vmatpush1.bf16.msra.mxu0 0
        %6565 = vmatprep.subr.bf16.mxu0 0
        %6566 = vmatpush1.bf16.msra.mxu0 0
        %6567 = vmatprep.subr.bf16.mxu0 0
        %6568 = vmatpush1.bf16.msra.mxu0 0
        %6569 = vmatprep.subr.bf16.mxu0 0
        %6570 = vmatpush1.bf16.msra.mxu0 0
        %6571 = vmatprep.subr.bf16.mxu0 0
        %6572 = vmatpush1.bf16.msra.mxu0 0
        %6573 = vmatprep.subr.bf16.mxu0 0
        %6574 = vmatpush1.bf16.msra.mxu0 0
        %6575 = vmatprep.subr.bf16.mxu0 0
        %6576 = vmatpush1.bf16.msra.mxu0 0
        %6577 = vmatprep.subr.bf16.mxu0 0
        %6578 = vmatpush1.bf16.msra.mxu0 0
        %6579 = vmatprep.mubr.bf16.mxu0 0
        %6580 = vmatmul.mubr.bf16.gmra.mrb[0].mxu0 %v6524
        %v6581 = vpop.f32.mrb[0].mxu0
        %v6582 = vadd.f32 0.0, %v6581
        %v6583 = vpop.f32.mrb[0].mxu0
        %v6584 = vpop.f32.mrb[0].mxu0
        %v6585 = vadd.f32 0.0, %v6584
        %v6586 = vpop.f32.mrb[0].mxu0
        %6587 = vmatprep.mubr.bf16.mxu0 0
        %6588 = vmatmul.mubr.bf16.gmra.mrb[0].mxu0 %v6527
        %v6589 = vpop.f32.mrb[0].mxu0
        %v6590 = vadd.f32 0.0, %v6589
        %v6591 = vpop.f32.mrb[0].mxu0
        %v6592 = vpop.f32.mrb[0].mxu0
        %v6593 = vadd.f32 0.0, %v6592
        %v6594 = vpop.f32.mrb[0].mxu0
        %6595 = vmatprep.mubr.bf16.mxu0 0
        %6596 = vmatmul.mubr.bf16.gmra.mrb[0].mxu0 %v6530
        %v6597 = vpop.f32.mrb[0].mxu0
        %v6598 = vadd.f32 0.0, %v6597
        %v6599 = vpop.f32.mrb[0].mxu0
        %v6600 = vpop.f32.mrb[0].mxu0
        %v6601 = vadd.f32 0.0, %v6600
        %v6602 = vpop.f32.mrb[0].mxu0
        %6603 = vmatprep.mubr.bf16.mxu0 0
        %6604 = vmatmul.mubr.bf16.gmra.mrb[0].mxu0 %v6533
        %v6605 = vpop.f32.mrb[0].mxu0
        %v6606 = vadd.f32 0.0, %v6605
        %v6607 = vpop.f32.mrb[0].mxu0
        %v6608 = vpop.f32.mrb[0].mxu0
        %v6609 = vadd.f32 0.0, %v6608
        %v6610 = vpop.f32.mrb[0].mxu0
        %6611 = vmatprep.mubr.bf16.mxu0 0
        %6612 = vmatmul.mubr.bf16.gmra.mrb[0].mxu0 %v6536
        %v6613 = vpop.f32.mrb[0].mxu0
        %v6614 = vadd.f32 0.0, %v6613
        %v6615 = vpop.f32.mrb[0].mxu0
        %v6616 = vpop.f32.mrb[0].mxu0
        %v6617 = vadd.f32 0.0, %v6616
        %v6618 = vpop.f32.mrb[0].mxu0
        %6619 = vmatprep.mubr.bf16.mxu0 0
        %6620 = vmatmul.mubr.bf16.gmra.mrb[0].mxu0 %v6539
        %v6621 = vpop.f32.mrb[0].mxu0
        %v6622 = vadd.f32 0.0, %v6621
        %v6623 = vpop.f32.mrb[0].mxu0
        %v6624 = vpop.f32.mrb[0].mxu0
        %v6625 = vadd.f32 0.0, %v6624
        %v6626 = vpop.f32.mrb[0].mxu0
        %6627 = vmatprep.mubr.bf16.mxu0 0
        %6628 = vmatmul.mubr.bf16.gmra.mrb[0].mxu0 %v6542
        %v6629 = vpop.f32.mrb[0].mxu0
        %v6630 = vadd.f32 0.0, %v6629
        %v6631 = vpop.f32.mrb[0].mxu0
        %v6632 = vpop.f32.mrb[0].mxu0
        %v6633 = vadd.f32 0.0, %v6632
        %v6634 = vpop.f32.mrb[0].mxu0
        %6635 = vmatprep.mubr.bf16.mxu0 0
        %6636 = vmatmul.mubr.bf16.gmra.mrb[0].mxu0 %v6545
        %v6637 = vpop.f32.mrb[0].mxu0
        %v6638 = vadd.f32 0.0, %v6637
        %v6639 = vpop.f32.mrb[0].mxu0
        %v6640 = vpop.f32.mrb[0].mxu0
        %v6641 = vadd.f32 0.0, %v6640
        %v6642 = vpop.f32.mrb[0].mxu0
        %6643 = vdwg.mxu0
        %v6644 = vadd.f32 %v6475, %v6582
        %v6645 = vadd.f32 %v6476, %v6585
        %v6646 = vadd.f32 %v6477, %v6590
        %v6647 = vadd.f32 %v6478, %v6593
        %v6648 = vadd.f32 %v6479, %v6598
        %v6649 = vadd.f32 %v6480, %v6601
        %v6650 = vadd.f32 %v6481, %v6606
        %v6651 = vadd.f32 %v6482, %v6609
        %v6652 = vadd.f32 %v6483, %v6614
        %v6653 = vadd.f32 %v6484, %v6617
        %v6654 = vadd.f32 %v6485, %v6622
        %v6655 = vadd.f32 %v6486, %v6625
        %v6656 = vadd.f32 %v6487, %v6630
        %v6657 = vadd.f32 %v6488, %v6633
        %v6658 = vadd.f32 %v6489, %v6638
        %v6659 = vadd.f32 %v6490, %v6641
        %v6660 = vld [vmem:[%s4 + $0xa0] sm:$0xf]
        %v6661 = vld [vmem:[%s4 + $0xa4] sm:$0xf]
        %v6662 = vunpack.c.l.b16 %v2592
        %v6663 = vunpack.c.l.b16 %v2595
        %v6664 = vunpack.c.l.b16 %v2599
        %v6665 = vunpack.c.l.b16 %v2602
        %v6666 = vunpack.c.l.b16 %v2606
        %v6667 = vunpack.c.l.b16 %v2609
        %v6668 = vunpack.c.l.b16 %v2613
        %v6669 = vunpack.c.l.b16 %v2616
        %v6670 = vunpack.c.l.b16 %v2620
        %v6671 = vunpack.c.l.b16 %v2623
        %v6672 = vunpack.c.l.b16 %v2627
        %v6673 = vunpack.c.l.b16 %v2630
        %v6674 = vunpack.c.l.b16 %v2634
        %v6675 = vunpack.c.l.b16 %v2637
        %v6676 = vunpack.c.l.b16 %v2641
        %v6677 = vunpack.c.l.b16 %v2644
        %v6678 = vpack.c.b16 %v6663, %v6662
        %v6679 = vpack.c.b16 %v6665, %v6664
        %v6680 = vpack.c.b16 %v6667, %v6666
        %v6681 = vpack.c.b16 %v6669, %v6668
        %v6682 = vpack.c.b16 %v6671, %v6670
        %v6683 = vpack.c.b16 %v6673, %v6672
        %v6684 = vpack.c.b16 %v6675, %v6674
        %v6685 = vpack.c.b16 %v6677, %v6676
        %v6688 = vunpack.c.l.b16 %v6660
        %v6689 = vunpack.c.l.b16 %v6661
        %v6690 = vpack.c.b16 %v6689, %v6688
        %v6693 = vsel %vm3289, %v6678, 0
        %v6696 = vsel %vm3289, %v6679, 0
        %v6699 = vsel %vm3289, %v6680, 0
        %v6702 = vsel %vm3289, %v6681, 0
        %v6705 = vsel %vm3289, %v6682, 0
        %v6708 = vsel %vm3289, %v6683, 0
        %v6711 = vsel %vm3289, %v6684, 0
        %v6714 = vsel %vm3289, %v6685, 0
        %6716 = vmatprep.subr.bf16.mxu0 0
        %6717 = vmatpush1.bf16.msra.mxu0 %v6690
        %6718 = vmatprep.subr.bf16.mxu0 0
        %6719 = vmatpush1.bf16.msra.mxu0 0
        %6720 = vmatprep.subr.bf16.mxu0 0
        %6721 = vmatpush1.bf16.msra.mxu0 0
        %6722 = vmatprep.subr.bf16.mxu0 0
        %6723 = vmatpush1.bf16.msra.mxu0 0
        %6724 = vmatprep.subr.bf16.mxu0 0
        %6725 = vmatpush1.bf16.msra.mxu0 0
        %6726 = vmatprep.subr.bf16.mxu0 0
        %6727 = vmatpush1.bf16.msra.mxu0 0
        %6728 = vmatprep.subr.bf16.mxu0 0
        %6729 = vmatpush1.bf16.msra.mxu0 0
        %6730 = vmatprep.subr.bf16.mxu0 0
        %6731 = vmatpush1.bf16.msra.mxu0 0
        %6732 = vmatprep.subr.bf16.mxu0 0
        %6733 = vmatpush1.bf16.msra.mxu0 0
        %6734 = vmatprep.subr.bf16.mxu0 0
        %6735 = vmatpush1.bf16.msra.mxu0 0
        %6736 = vmatprep.subr.bf16.mxu0 0
        %6737 = vmatpush1.bf16.msra.mxu0 0
        %6738 = vmatprep.subr.bf16.mxu0 0
        %6739 = vmatpush1.bf16.msra.mxu0 0
        %6740 = vmatprep.subr.bf16.mxu0 0
        %6741 = vmatpush1.bf16.msra.mxu0 0
        %6742 = vmatprep.subr.bf16.mxu0 0
        %6743 = vmatpush1.bf16.msra.mxu0 0
        %6744 = vmatprep.subr.bf16.mxu0 0
        %6745 = vmatpush1.bf16.msra.mxu0 0
        %6746 = vmatprep.subr.bf16.mxu0 0
        %6747 = vmatpush1.bf16.msra.mxu0 0
        %6748 = vmatprep.mubr.bf16.mxu0 0
        %6749 = vmatmul.mubr.bf16.gmra.mrb[0].mxu0 %v6693
        %v6750 = vpop.f32.mrb[0].mxu0
        %v6751 = vadd.f32 0.0, %v6750
        %v6752 = vpop.f32.mrb[0].mxu0
        %v6753 = vpop.f32.mrb[0].mxu0
        %v6754 = vadd.f32 0.0, %v6753
        %v6755 = vpop.f32.mrb[0].mxu0
        %6756 = vmatprep.mubr.bf16.mxu0 0
        %6757 = vmatmul.mubr.bf16.gmra.mrb[0].mxu0 %v6696
        %v6758 = vpop.f32.mrb[0].mxu0
        %v6759 = vadd.f32 0.0, %v6758
        %v6760 = vpop.f32.mrb[0].mxu0
        %v6761 = vpop.f32.mrb[0].mxu0
        %v6762 = vadd.f32 0.0, %v6761
        %v6763 = vpop.f32.mrb[0].mxu0
        %6764 = vmatprep.mubr.bf16.mxu0 0
        %6765 = vmatmul.mubr.bf16.gmra.mrb[0].mxu0 %v6699
        %v6766 = vpop.f32.mrb[0].mxu0
        %v6767 = vadd.f32 0.0, %v6766
        %v6768 = vpop.f32.mrb[0].mxu0
        %v6769 = vpop.f32.mrb[0].mxu0
        %v6770 = vadd.f32 0.0, %v6769
        %v6771 = vpop.f32.mrb[0].mxu0
        %6772 = vmatprep.mubr.bf16.mxu0 0
        %6773 = vmatmul.mubr.bf16.gmra.mrb[0].mxu0 %v6702
        %v6774 = vpop.f32.mrb[0].mxu0
        %v6775 = vadd.f32 0.0, %v6774
        %v6776 = vpop.f32.mrb[0].mxu0
        %v6777 = vpop.f32.mrb[0].mxu0
        %v6778 = vadd.f32 0.0, %v6777
        %v6779 = vpop.f32.mrb[0].mxu0
        %6780 = vmatprep.mubr.bf16.mxu0 0
        %6781 = vmatmul.mubr.bf16.gmra.mrb[0].mxu0 %v6705
        %v6782 = vpop.f32.mrb[0].mxu0
        %v6783 = vadd.f32 0.0, %v6782
        %v6784 = vpop.f32.mrb[0].mxu0
        %v6785 = vpop.f32.mrb[0].mxu0
        %v6786 = vadd.f32 0.0, %v6785
        %v6787 = vpop.f32.mrb[0].mxu0
        %6788 = vmatprep.mubr.bf16.mxu0 0
        %6789 = vmatmul.mubr.bf16.gmra.mrb[0].mxu0 %v6708
        %v6790 = vpop.f32.mrb[0].mxu0
        %v6791 = vadd.f32 0.0, %v6790
        %v6792 = vpop.f32.mrb[0].mxu0
        %v6793 = vpop.f32.mrb[0].mxu0
        %v6794 = vadd.f32 0.0, %v6793
        %v6795 = vpop.f32.mrb[0].mxu0
        %6796 = vmatprep.mubr.bf16.mxu0 0
        %6797 = vmatmul.mubr.bf16.gmra.mrb[0].mxu0 %v6711
        %v6798 = vpop.f32.mrb[0].mxu0
        %v6799 = vadd.f32 0.0, %v6798
        %v6800 = vpop.f32.mrb[0].mxu0
        %v6801 = vpop.f32.mrb[0].mxu0
        %v6802 = vadd.f32 0.0, %v6801
        %v6803 = vpop.f32.mrb[0].mxu0
        %6804 = vmatprep.mubr.bf16.mxu0 0
        %6805 = vmatmul.mubr.bf16.gmra.mrb[0].mxu0 %v6714
        %v6806 = vpop.f32.mrb[0].mxu0
        %v6807 = vadd.f32 0.0, %v6806
        %v6808 = vpop.f32.mrb[0].mxu0
        %v6809 = vpop.f32.mrb[0].mxu0
        %v6810 = vadd.f32 0.0, %v6809
        %v6811 = vpop.f32.mrb[0].mxu0
        %6812 = vdwg.mxu0
        %v6813 = vadd.f32 %v6644, %v6751
        %v6814 = vadd.f32 %v6645, %v6754
        %v6815 = vadd.f32 %v6646, %v6759
        %v6816 = vadd.f32 %v6647, %v6762
        %v6817 = vadd.f32 %v6648, %v6767
        %v6818 = vadd.f32 %v6649, %v6770
        %v6819 = vadd.f32 %v6650, %v6775
        %v6820 = vadd.f32 %v6651, %v6778
        %v6821 = vadd.f32 %v6652, %v6783
        %v6822 = vadd.f32 %v6653, %v6786
        %v6823 = vadd.f32 %v6654, %v6791
        %v6824 = vadd.f32 %v6655, %v6794
        %v6825 = vadd.f32 %v6656, %v6799
        %v6826 = vadd.f32 %v6657, %v6802
        %v6827 = vadd.f32 %v6658, %v6807
        %v6828 = vadd.f32 %v6659, %v6810
        %v6829 = vld [vmem:[%s4 + $0xa8] sm:$0xf]
        %v6830 = vld [vmem:[%s4 + $0xac] sm:$0xf]
        %v6839 = vunpack.c.l.b16 %v2646
        %v6840 = vunpack.c.l.b16 %v2647
        %v6841 = vunpack.c.l.b16 %v2648
        %v6842 = vunpack.c.l.b16 %v2649
        %v6843 = vunpack.c.l.b16 %v2650
        %v6844 = vunpack.c.l.b16 %v2651
        %v6845 = vunpack.c.l.b16 %v2652
        %v6846 = vunpack.c.l.b16 %v2653
        %v6847 = vunpack.c.l.b16 %v2654
        %v6848 = vunpack.c.l.b16 %v2655
        %v6849 = vunpack.c.l.b16 %v2656
        %v6850 = vunpack.c.l.b16 %v2657
        %v6851 = vunpack.c.l.b16 %v2658
        %v6852 = vunpack.c.l.b16 %v2659
        %v6853 = vunpack.c.l.b16 %v2660
        %v6854 = vunpack.c.l.b16 %v2661
        %v6855 = vpack.c.b16 %v6840, %v6839
        %v6856 = vpack.c.b16 %v6842, %v6841
        %v6857 = vpack.c.b16 %v6844, %v6843
        %v6858 = vpack.c.b16 %v6846, %v6845
        %v6859 = vpack.c.b16 %v6848, %v6847
        %v6860 = vpack.c.b16 %v6850, %v6849
        %v6861 = vpack.c.b16 %v6852, %v6851
        %v6862 = vpack.c.b16 %v6854, %v6853
        %v6865 = vunpack.c.l.b16 %v6829
        %v6866 = vunpack.c.l.b16 %v6830
        %v6867 = vpack.c.b16 %v6866, %v6865
        %v6870 = vsel %vm3289, %v6855, 0
        %v6873 = vsel %vm3289, %v6856, 0
        %v6876 = vsel %vm3289, %v6857, 0
        %v6879 = vsel %vm3289, %v6858, 0
        %v6882 = vsel %vm3289, %v6859, 0
        %v6885 = vsel %vm3289, %v6860, 0
        %v6888 = vsel %vm3289, %v6861, 0
        %v6891 = vsel %vm3289, %v6862, 0
        %6893 = vmatprep.subr.bf16.mxu0 0
        %6894 = vmatpush1.bf16.msra.mxu0 %v6867
        %6895 = vmatprep.subr.bf16.mxu0 0
        %6896 = vmatpush1.bf16.msra.mxu0 0
        %6897 = vmatprep.subr.bf16.mxu0 0
        %6898 = vmatpush1.bf16.msra.mxu0 0
        %6899 = vmatprep.subr.bf16.mxu0 0
        %6900 = vmatpush1.bf16.msra.mxu0 0
        %6901 = vmatprep.subr.bf16.mxu0 0
        %6902 = vmatpush1.bf16.msra.mxu0 0
        %6903 = vmatprep.subr.bf16.mxu0 0
        %6904 = vmatpush1.bf16.msra.mxu0 0
        %6905 = vmatprep.subr.bf16.mxu0 0
        %6906 = vmatpush1.bf16.msra.mxu0 0
        %6907 = vmatprep.subr.bf16.mxu0 0
        %6908 = vmatpush1.bf16.msra.mxu0 0
        %6909 = vmatprep.subr.bf16.mxu0 0
        %6910 = vmatpush1.bf16.msra.mxu0 0
        %6911 = vmatprep.subr.bf16.mxu0 0
        %6912 = vmatpush1.bf16.msra.mxu0 0
        %6913 = vmatprep.subr.bf16.mxu0 0
        %6914 = vmatpush1.bf16.msra.mxu0 0
        %6915 = vmatprep.subr.bf16.mxu0 0
        %6916 = vmatpush1.bf16.msra.mxu0 0
        %6917 = vmatprep.subr.bf16.mxu0 0
        %6918 = vmatpush1.bf16.msra.mxu0 0
        %6919 = vmatprep.subr.bf16.mxu0 0
        %6920 = vmatpush1.bf16.msra.mxu0 0
        %6921 = vmatprep.subr.bf16.mxu0 0
        %6922 = vmatpush1.bf16.msra.mxu0 0
        %6923 = vmatprep.subr.bf16.mxu0 0
        %6924 = vmatpush1.bf16.msra.mxu0 0
        %6925 = vmatprep.mubr.bf16.mxu0 0
        %6926 = vmatmul.mubr.bf16.gmra.mrb[0].mxu0 %v6870
        %v6927 = vpop.f32.mrb[0].mxu0
        %v6928 = vadd.f32 0.0, %v6927
        %v6929 = vpop.f32.mrb[0].mxu0
        %v6930 = vpop.f32.mrb[0].mxu0
        %v6931 = vadd.f32 0.0, %v6930
        %v6932 = vpop.f32.mrb[0].mxu0
        %6933 = vmatprep.mubr.bf16.mxu0 0
        %6934 = vmatmul.mubr.bf16.gmra.mrb[0].mxu0 %v6873
        %v6935 = vpop.f32.mrb[0].mxu0
        %v6936 = vadd.f32 0.0, %v6935
        %v6937 = vpop.f32.mrb[0].mxu0
        %v6938 = vpop.f32.mrb[0].mxu0
        %v6939 = vadd.f32 0.0, %v6938
        %v6940 = vpop.f32.mrb[0].mxu0
        %6941 = vmatprep.mubr.bf16.mxu0 0
        %6942 = vmatmul.mubr.bf16.gmra.mrb[0].mxu0 %v6876
        %v6943 = vpop.f32.mrb[0].mxu0
        %v6944 = vadd.f32 0.0, %v6943
        %v6945 = vpop.f32.mrb[0].mxu0
        %v6946 = vpop.f32.mrb[0].mxu0
        %v6947 = vadd.f32 0.0, %v6946
        %v6948 = vpop.f32.mrb[0].mxu0
        %6949 = vmatprep.mubr.bf16.mxu0 0
        %6950 = vmatmul.mubr.bf16.gmra.mrb[0].mxu0 %v6879
        %v6951 = vpop.f32.mrb[0].mxu0
        %v6952 = vadd.f32 0.0, %v6951
        %v6953 = vpop.f32.mrb[0].mxu0
        %v6954 = vpop.f32.mrb[0].mxu0
        %v6955 = vadd.f32 0.0, %v6954
        %v6956 = vpop.f32.mrb[0].mxu0
        %6957 = vmatprep.mubr.bf16.mxu0 0
        %6958 = vmatmul.mubr.bf16.gmra.mrb[0].mxu0 %v6882
        %v6959 = vpop.f32.mrb[0].mxu0
        %v6960 = vadd.f32 0.0, %v6959
        %v6961 = vpop.f32.mrb[0].mxu0
        %v6962 = vpop.f32.mrb[0].mxu0
        %v6963 = vadd.f32 0.0, %v6962
        %v6964 = vpop.f32.mrb[0].mxu0
        %6965 = vmatprep.mubr.bf16.mxu0 0
        %6966 = vmatmul.mubr.bf16.gmra.mrb[0].mxu0 %v6885
        %v6967 = vpop.f32.mrb[0].mxu0
        %v6968 = vadd.f32 0.0, %v6967
        %v6969 = vpop.f32.mrb[0].mxu0
        %v6970 = vpop.f32.mrb[0].mxu0
        %v6971 = vadd.f32 0.0, %v6970
        %v6972 = vpop.f32.mrb[0].mxu0
        %6973 = vmatprep.mubr.bf16.mxu0 0
        %6974 = vmatmul.mubr.bf16.gmra.mrb[0].mxu0 %v6888
        %v6975 = vpop.f32.mrb[0].mxu0
        %v6976 = vadd.f32 0.0, %v6975
        %v6977 = vpop.f32.mrb[0].mxu0
        %v6978 = vpop.f32.mrb[0].mxu0
        %v6979 = vadd.f32 0.0, %v6978
        %v6980 = vpop.f32.mrb[0].mxu0
        %6981 = vmatprep.mubr.bf16.mxu0 0
        %6982 = vmatmul.mubr.bf16.gmra.mrb[0].mxu0 %v6891
        %v6983 = vpop.f32.mrb[0].mxu0
        %v6984 = vadd.f32 0.0, %v6983
        %v6985 = vpop.f32.mrb[0].mxu0
        %v6986 = vpop.f32.mrb[0].mxu0
        %v6987 = vadd.f32 0.0, %v6986
        %v6988 = vpop.f32.mrb[0].mxu0
        %6989 = vdwg.mxu0
        %v6990 = vadd.f32 %v6813, %v6928
        %v6991 = vadd.f32 %v6814, %v6931
        %v6992 = vadd.f32 %v6815, %v6936
        %v6993 = vadd.f32 %v6816, %v6939
        %v6994 = vadd.f32 %v6817, %v6944
        %v6995 = vadd.f32 %v6818, %v6947
        %v6996 = vadd.f32 %v6819, %v6952
        %v6997 = vadd.f32 %v6820, %v6955
        %v6998 = vadd.f32 %v6821, %v6960
        %v6999 = vadd.f32 %v6822, %v6963
        %v7000 = vadd.f32 %v6823, %v6968
        %v7001 = vadd.f32 %v6824, %v6971
        %v7002 = vadd.f32 %v6825, %v6976
        %v7003 = vadd.f32 %v6826, %v6979
        %v7004 = vadd.f32 %v6827, %v6984
        %v7005 = vadd.f32 %v6828, %v6987
        %v7006 = vld [vmem:[%s4 + $0xb0] sm:$0xf]
        %v7007 = vld [vmem:[%s4 + $0xb4] sm:$0xf]
        %v7008 = vunpack.c.l.b16 %v2683
        %v7009 = vunpack.c.l.b16 %v2693
        %v7010 = vunpack.c.l.b16 %v2707
        %v7011 = vunpack.c.l.b16 %v2717
        %v7012 = vunpack.c.l.b16 %v2731
        %v7013 = vunpack.c.l.b16 %v2741
        %v7014 = vunpack.c.l.b16 %v2755
        %v7015 = vunpack.c.l.b16 %v2765
        %v7016 = vunpack.c.l.b16 %v2779
        %v7017 = vunpack.c.l.b16 %v2789
        %v7018 = vunpack.c.l.b16 %v2803
        %v7019 = vunpack.c.l.b16 %v2813
        %v7020 = vunpack.c.l.b16 %v2827
        %v7021 = vunpack.c.l.b16 %v2837
        %v7022 = vunpack.c.l.b16 %v2851
        %v7023 = vunpack.c.l.b16 %v2861
        %v7024 = vpack.c.b16 %v7009, %v7008
        %v7025 = vpack.c.b16 %v7011, %v7010
        %v7026 = vpack.c.b16 %v7013, %v7012
        %v7027 = vpack.c.b16 %v7015, %v7014
        %v7028 = vpack.c.b16 %v7017, %v7016
        %v7029 = vpack.c.b16 %v7019, %v7018
        %v7030 = vpack.c.b16 %v7021, %v7020
        %v7031 = vpack.c.b16 %v7023, %v7022
        %v7034 = vunpack.c.l.b16 %v7006
        %v7035 = vunpack.c.l.b16 %v7007
        %v7036 = vpack.c.b16 %v7035, %v7034
        %v7039 = vsel %vm3289, %v7024, 0
        %v7042 = vsel %vm3289, %v7025, 0
        %v7045 = vsel %vm3289, %v7026, 0
        %v7048 = vsel %vm3289, %v7027, 0
        %v7051 = vsel %vm3289, %v7028, 0
        %v7054 = vsel %vm3289, %v7029, 0
        %v7057 = vsel %vm3289, %v7030, 0
        %v7060 = vsel %vm3289, %v7031, 0
        %7062 = vmatprep.subr.bf16.mxu0 0
        %7063 = vmatpush1.bf16.msra.mxu0 %v7036
        %7064 = vmatprep.subr.bf16.mxu0 0
        %7065 = vmatpush1.bf16.msra.mxu0 0
        %7066 = vmatprep.subr.bf16.mxu0 0
        %7067 = vmatpush1.bf16.msra.mxu0 0
        %7068 = vmatprep.subr.bf16.mxu0 0
        %7069 = vmatpush1.bf16.msra.mxu0 0
        %7070 = vmatprep.subr.bf16.mxu0 0
        %7071 = vmatpush1.bf16.msra.mxu0 0
        %7072 = vmatprep.subr.bf16.mxu0 0
        %7073 = vmatpush1.bf16.msra.mxu0 0
        %7074 = vmatprep.subr.bf16.mxu0 0
        %7075 = vmatpush1.bf16.msra.mxu0 0
        %7076 = vmatprep.subr.bf16.mxu0 0
        %7077 = vmatpush1.bf16.msra.mxu0 0
        %7078 = vmatprep.subr.bf16.mxu0 0
        %7079 = vmatpush1.bf16.msra.mxu0 0
        %7080 = vmatprep.subr.bf16.mxu0 0
        %7081 = vmatpush1.bf16.msra.mxu0 0
        %7082 = vmatprep.subr.bf16.mxu0 0
        %7083 = vmatpush1.bf16.msra.mxu0 0
        %7084 = vmatprep.subr.bf16.mxu0 0
        %7085 = vmatpush1.bf16.msra.mxu0 0
        %7086 = vmatprep.subr.bf16.mxu0 0
        %7087 = vmatpush1.bf16.msra.mxu0 0
        %7088 = vmatprep.subr.bf16.mxu0 0
        %7089 = vmatpush1.bf16.msra.mxu0 0
        %7090 = vmatprep.subr.bf16.mxu0 0
        %7091 = vmatpush1.bf16.msra.mxu0 0
        %7092 = vmatprep.subr.bf16.mxu0 0
        %7093 = vmatpush1.bf16.msra.mxu0 0
        %7094 = vmatprep.mubr.bf16.mxu0 0
        %7095 = vmatmul.mubr.bf16.gmra.mrb[0].mxu0 %v7039
        %v7096 = vpop.f32.mrb[0].mxu0
        %v7097 = vadd.f32 0.0, %v7096
        %v7098 = vpop.f32.mrb[0].mxu0
        %v7099 = vpop.f32.mrb[0].mxu0
        %v7100 = vadd.f32 0.0, %v7099
        %v7101 = vpop.f32.mrb[0].mxu0
        %7102 = vmatprep.mubr.bf16.mxu0 0
        %7103 = vmatmul.mubr.bf16.gmra.mrb[0].mxu0 %v7042
        %v7104 = vpop.f32.mrb[0].mxu0
        %v7105 = vadd.f32 0.0, %v7104
        %v7106 = vpop.f32.mrb[0].mxu0
        %v7107 = vpop.f32.mrb[0].mxu0
        %v7108 = vadd.f32 0.0, %v7107
        %v7109 = vpop.f32.mrb[0].mxu0
        %7110 = vmatprep.mubr.bf16.mxu0 0
        %7111 = vmatmul.mubr.bf16.gmra.mrb[0].mxu0 %v7045
        %v7112 = vpop.f32.mrb[0].mxu0
        %v7113 = vadd.f32 0.0, %v7112
        %v7114 = vpop.f32.mrb[0].mxu0
        %v7115 = vpop.f32.mrb[0].mxu0
        %v7116 = vadd.f32 0.0, %v7115
        %v7117 = vpop.f32.mrb[0].mxu0
        %7118 = vmatprep.mubr.bf16.mxu0 0
        %7119 = vmatmul.mubr.bf16.gmra.mrb[0].mxu0 %v7048
        %v7120 = vpop.f32.mrb[0].mxu0
        %v7121 = vadd.f32 0.0, %v7120
        %v7122 = vpop.f32.mrb[0].mxu0
        %v7123 = vpop.f32.mrb[0].mxu0
        %v7124 = vadd.f32 0.0, %v7123
        %v7125 = vpop.f32.mrb[0].mxu0
        %7126 = vmatprep.mubr.bf16.mxu0 0
        %7127 = vmatmul.mubr.bf16.gmra.mrb[0].mxu0 %v7051
        %v7128 = vpop.f32.mrb[0].mxu0
        %v7129 = vadd.f32 0.0, %v7128
        %v7130 = vpop.f32.mrb[0].mxu0
        %v7131 = vpop.f32.mrb[0].mxu0
        %v7132 = vadd.f32 0.0, %v7131
        %v7133 = vpop.f32.mrb[0].mxu0
        %7134 = vmatprep.mubr.bf16.mxu0 0
        %7135 = vmatmul.mubr.bf16.gmra.mrb[0].mxu0 %v7054
        %v7136 = vpop.f32.mrb[0].mxu0
        %v7137 = vadd.f32 0.0, %v7136
        %v7138 = vpop.f32.mrb[0].mxu0
        %v7139 = vpop.f32.mrb[0].mxu0
        %v7140 = vadd.f32 0.0, %v7139
        %v7141 = vpop.f32.mrb[0].mxu0
        %7142 = vmatprep.mubr.bf16.mxu0 0
        %7143 = vmatmul.mubr.bf16.gmra.mrb[0].mxu0 %v7057
        %v7144 = vpop.f32.mrb[0].mxu0
        %v7145 = vadd.f32 0.0, %v7144
        %v7146 = vpop.f32.mrb[0].mxu0
        %v7147 = vpop.f32.mrb[0].mxu0
        %v7148 = vadd.f32 0.0, %v7147
        %v7149 = vpop.f32.mrb[0].mxu0
        %7150 = vmatprep.mubr.bf16.mxu0 0
        %7151 = vmatmul.mubr.bf16.gmra.mrb[0].mxu0 %v7060
        %v7152 = vpop.f32.mrb[0].mxu0
        %v7153 = vadd.f32 0.0, %v7152
        %v7154 = vpop.f32.mrb[0].mxu0
        %v7155 = vpop.f32.mrb[0].mxu0
        %v7156 = vadd.f32 0.0, %v7155
        %v7157 = vpop.f32.mrb[0].mxu0
        %7158 = vdwg.mxu0
        %v7159 = vadd.f32 %v6990, %v7097
        %v7160 = vadd.f32 %v6991, %v7100
        %v7161 = vadd.f32 %v6992, %v7105
        %v7162 = vadd.f32 %v6993, %v7108
        %v7163 = vadd.f32 %v6994, %v7113
        %v7164 = vadd.f32 %v6995, %v7116
        %v7165 = vadd.f32 %v6996, %v7121
        %v7166 = vadd.f32 %v6997, %v7124
        %v7167 = vadd.f32 %v6998, %v7129
        %v7168 = vadd.f32 %v6999, %v7132
        %v7169 = vadd.f32 %v7000, %v7137
        %v7170 = vadd.f32 %v7001, %v7140
        %v7171 = vadd.f32 %v7002, %v7145
        %v7172 = vadd.f32 %v7003, %v7148
        %v7173 = vadd.f32 %v7004, %v7153
        %v7174 = vadd.f32 %v7005, %v7156
        %v7175 = vld [vmem:[%s4 + $0xb8] sm:$0xf]
        %v7176 = vld [vmem:[%s4 + $0xbc] sm:$0xf]
        %v7177 = vunpack.c.l.b16 %v2897
        %v7178 = vunpack.c.l.b16 %v2900
        %v7179 = vunpack.c.l.b16 %v2904
        %v7180 = vunpack.c.l.b16 %v2907
        %v7181 = vunpack.c.l.b16 %v2911
        %v7182 = vunpack.c.l.b16 %v2914
        %v7183 = vunpack.c.l.b16 %v2918
        %v7184 = vunpack.c.l.b16 %v2921
        %v7185 = vunpack.c.l.b16 %v2925
        %v7186 = vunpack.c.l.b16 %v2928
        %v7187 = vunpack.c.l.b16 %v2932
        %v7188 = vunpack.c.l.b16 %v2935
        %v7189 = vunpack.c.l.b16 %v2939
        %v7190 = vunpack.c.l.b16 %v2942
        %v7191 = vunpack.c.l.b16 %v2946
        %v7192 = vunpack.c.l.b16 %v2949
        %v7193 = vpack.c.b16 %v7178, %v7177
        %v7194 = vpack.c.b16 %v7180, %v7179
        %v7195 = vpack.c.b16 %v7182, %v7181
        %v7196 = vpack.c.b16 %v7184, %v7183
        %v7197 = vpack.c.b16 %v7186, %v7185
        %v7198 = vpack.c.b16 %v7188, %v7187
        %v7199 = vpack.c.b16 %v7190, %v7189
        %v7200 = vpack.c.b16 %v7192, %v7191
        %v7203 = vunpack.c.l.b16 %v7175
        %v7204 = vunpack.c.l.b16 %v7176
        %v7205 = vpack.c.b16 %v7204, %v7203
        %v7208 = vsel %vm3289, %v7193, 0
        %v7211 = vsel %vm3289, %v7194, 0
        %v7214 = vsel %vm3289, %v7195, 0
        %v7217 = vsel %vm3289, %v7196, 0
        %v7220 = vsel %vm3289, %v7197, 0
        %v7223 = vsel %vm3289, %v7198, 0
        %v7226 = vsel %vm3289, %v7199, 0
        %v7229 = vsel %vm3289, %v7200, 0
        %7231 = vmatprep.subr.bf16.mxu0 0
        %7232 = vmatpush1.bf16.msra.mxu0 %v7205
        %7233 = vmatprep.subr.bf16.mxu0 0
        %7234 = vmatpush1.bf16.msra.mxu0 0
        %7235 = vmatprep.subr.bf16.mxu0 0
        %7236 = vmatpush1.bf16.msra.mxu0 0
        %7237 = vmatprep.subr.bf16.mxu0 0
        %7238 = vmatpush1.bf16.msra.mxu0 0
        %7239 = vmatprep.subr.bf16.mxu0 0
        %7240 = vmatpush1.bf16.msra.mxu0 0
        %7241 = vmatprep.subr.bf16.mxu0 0
        %7242 = vmatpush1.bf16.msra.mxu0 0
        %7243 = vmatprep.subr.bf16.mxu0 0
        %7244 = vmatpush1.bf16.msra.mxu0 0
        %7245 = vmatprep.subr.bf16.mxu0 0
        %7246 = vmatpush1.bf16.msra.mxu0 0
        %7247 = vmatprep.subr.bf16.mxu0 0
        %7248 = vmatpush1.bf16.msra.mxu0 0
        %7249 = vmatprep.subr.bf16.mxu0 0
        %7250 = vmatpush1.bf16.msra.mxu0 0
        %7251 = vmatprep.subr.bf16.mxu0 0
        %7252 = vmatpush1.bf16.msra.mxu0 0
        %7253 = vmatprep.subr.bf16.mxu0 0
        %7254 = vmatpush1.bf16.msra.mxu0 0
        %7255 = vmatprep.subr.bf16.mxu0 0
        %7256 = vmatpush1.bf16.msra.mxu0 0
        %7257 = vmatprep.subr.bf16.mxu0 0
        %7258 = vmatpush1.bf16.msra.mxu0 0
        %7259 = vmatprep.subr.bf16.mxu0 0
        %7260 = vmatpush1.bf16.msra.mxu0 0
        %7261 = vmatprep.subr.bf16.mxu0 0
        %7262 = vmatpush1.bf16.msra.mxu0 0
        %7263 = vmatprep.mubr.bf16.mxu0 0
        %7264 = vmatmul.mubr.bf16.gmra.mrb[0].mxu0 %v7208
        %v7265 = vpop.f32.mrb[0].mxu0
        %v7266 = vadd.f32 0.0, %v7265
        %v7267 = vpop.f32.mrb[0].mxu0
        %v7268 = vpop.f32.mrb[0].mxu0
        %v7269 = vadd.f32 0.0, %v7268
        %v7270 = vpop.f32.mrb[0].mxu0
        %7271 = vmatprep.mubr.bf16.mxu0 0
        %7272 = vmatmul.mubr.bf16.gmra.mrb[0].mxu0 %v7211
        %v7273 = vpop.f32.mrb[0].mxu0
        %v7274 = vadd.f32 0.0, %v7273
        %v7275 = vpop.f32.mrb[0].mxu0
        %v7276 = vpop.f32.mrb[0].mxu0
        %v7277 = vadd.f32 0.0, %v7276
        %v7278 = vpop.f32.mrb[0].mxu0
        %7279 = vmatprep.mubr.bf16.mxu0 0
        %7280 = vmatmul.mubr.bf16.gmra.mrb[0].mxu0 %v7214
        %v7281 = vpop.f32.mrb[0].mxu0
        %v7282 = vadd.f32 0.0, %v7281
        %v7283 = vpop.f32.mrb[0].mxu0
        %v7284 = vpop.f32.mrb[0].mxu0
        %v7285 = vadd.f32 0.0, %v7284
        %v7286 = vpop.f32.mrb[0].mxu0
        %7287 = vmatprep.mubr.bf16.mxu0 0
        %7288 = vmatmul.mubr.bf16.gmra.mrb[0].mxu0 %v7217
        %v7289 = vpop.f32.mrb[0].mxu0
        %v7290 = vadd.f32 0.0, %v7289
        %v7291 = vpop.f32.mrb[0].mxu0
        %v7292 = vpop.f32.mrb[0].mxu0
        %v7293 = vadd.f32 0.0, %v7292
        %v7294 = vpop.f32.mrb[0].mxu0
        %7295 = vmatprep.mubr.bf16.mxu0 0
        %7296 = vmatmul.mubr.bf16.gmra.mrb[0].mxu0 %v7220
        %v7297 = vpop.f32.mrb[0].mxu0
        %v7298 = vadd.f32 0.0, %v7297
        %v7299 = vpop.f32.mrb[0].mxu0
        %v7300 = vpop.f32.mrb[0].mxu0
        %v7301 = vadd.f32 0.0, %v7300
        %v7302 = vpop.f32.mrb[0].mxu0
        %7303 = vmatprep.mubr.bf16.mxu0 0
        %7304 = vmatmul.mubr.bf16.gmra.mrb[0].mxu0 %v7223
        %v7305 = vpop.f32.mrb[0].mxu0
        %v7306 = vadd.f32 0.0, %v7305
        %v7307 = vpop.f32.mrb[0].mxu0
        %v7308 = vpop.f32.mrb[0].mxu0
        %v7309 = vadd.f32 0.0, %v7308
        %v7310 = vpop.f32.mrb[0].mxu0
        %7311 = vmatprep.mubr.bf16.mxu0 0
        %7312 = vmatmul.mubr.bf16.gmra.mrb[0].mxu0 %v7226
        %v7313 = vpop.f32.mrb[0].mxu0
        %v7314 = vadd.f32 0.0, %v7313
        %v7315 = vpop.f32.mrb[0].mxu0
        %v7316 = vpop.f32.mrb[0].mxu0
        %v7317 = vadd.f32 0.0, %v7316
        %v7318 = vpop.f32.mrb[0].mxu0
        %7319 = vmatprep.mubr.bf16.mxu0 0
        %7320 = vmatmul.mubr.bf16.gmra.mrb[0].mxu0 %v7229
        %v7321 = vpop.f32.mrb[0].mxu0
        %v7322 = vadd.f32 0.0, %v7321
        %v7323 = vpop.f32.mrb[0].mxu0
        %v7324 = vpop.f32.mrb[0].mxu0
        %v7325 = vadd.f32 0.0, %v7324
        %v7326 = vpop.f32.mrb[0].mxu0
        %7327 = vdwg.mxu0
        %v7328 = vadd.f32 %v7159, %v7266
        %v7329 = vadd.f32 %v7160, %v7269
        %v7330 = vadd.f32 %v7161, %v7274
        %v7331 = vadd.f32 %v7162, %v7277
        %v7332 = vadd.f32 %v7163, %v7282
        %v7333 = vadd.f32 %v7164, %v7285
        %v7334 = vadd.f32 %v7165, %v7290
        %v7335 = vadd.f32 %v7166, %v7293
        %v7336 = vadd.f32 %v7167, %v7298
        %v7337 = vadd.f32 %v7168, %v7301
        %v7338 = vadd.f32 %v7169, %v7306
        %v7339 = vadd.f32 %v7170, %v7309
        %v7340 = vadd.f32 %v7171, %v7314
        %v7341 = vadd.f32 %v7172, %v7317
        %v7342 = vadd.f32 %v7173, %v7322
        %v7343 = vadd.f32 %v7174, %v7325
        %v7344 = vld [vmem:[%s4 + $0xc0] sm:$0xf]
        %v7345 = vld [vmem:[%s4 + $0xc4] sm:$0xf]
        %v7354 = vunpack.c.l.b16 %v2951
        %v7355 = vunpack.c.l.b16 %v2952
        %v7356 = vunpack.c.l.b16 %v2953
        %v7357 = vunpack.c.l.b16 %v2954
        %v7358 = vunpack.c.l.b16 %v2955
        %v7359 = vunpack.c.l.b16 %v2956
        %v7360 = vunpack.c.l.b16 %v2957
        %v7361 = vunpack.c.l.b16 %v2958
        %v7362 = vunpack.c.l.b16 %v2959
        %v7363 = vunpack.c.l.b16 %v2960
        %v7364 = vunpack.c.l.b16 %v2961
        %v7365 = vunpack.c.l.b16 %v2962
        %v7366 = vunpack.c.l.b16 %v2963
        %v7367 = vunpack.c.l.b16 %v2964
        %v7368 = vunpack.c.l.b16 %v2965
        %v7369 = vunpack.c.l.b16 %v2966
        %v7370 = vpack.c.b16 %v7355, %v7354
        %v7371 = vpack.c.b16 %v7357, %v7356
        %v7372 = vpack.c.b16 %v7359, %v7358
        %v7373 = vpack.c.b16 %v7361, %v7360
        %v7374 = vpack.c.b16 %v7363, %v7362
        %v7375 = vpack.c.b16 %v7365, %v7364
        %v7376 = vpack.c.b16 %v7367, %v7366
        %v7377 = vpack.c.b16 %v7369, %v7368
        %v7380 = vunpack.c.l.b16 %v7344
        %v7381 = vunpack.c.l.b16 %v7345
        %v7382 = vpack.c.b16 %v7381, %v7380
        %v7385 = vsel %vm3289, %v7370, 0
        %v7388 = vsel %vm3289, %v7371, 0
        %v7391 = vsel %vm3289, %v7372, 0
        %v7394 = vsel %vm3289, %v7373, 0
        %v7397 = vsel %vm3289, %v7374, 0
        %v7400 = vsel %vm3289, %v7375, 0
        %v7403 = vsel %vm3289, %v7376, 0
        %v7406 = vsel %vm3289, %v7377, 0
        %7408 = vmatprep.subr.bf16.mxu0 0
        %7409 = vmatpush1.bf16.msra.mxu0 %v7382
        %7410 = vmatprep.subr.bf16.mxu0 0
        %7411 = vmatpush1.bf16.msra.mxu0 0
        %7412 = vmatprep.subr.bf16.mxu0 0
        %7413 = vmatpush1.bf16.msra.mxu0 0
        %7414 = vmatprep.subr.bf16.mxu0 0
        %7415 = vmatpush1.bf16.msra.mxu0 0
        %7416 = vmatprep.subr.bf16.mxu0 0
        %7417 = vmatpush1.bf16.msra.mxu0 0
        %7418 = vmatprep.subr.bf16.mxu0 0
        %7419 = vmatpush1.bf16.msra.mxu0 0
        %7420 = vmatprep.subr.bf16.mxu0 0
        %7421 = vmatpush1.bf16.msra.mxu0 0
        %7422 = vmatprep.subr.bf16.mxu0 0
        %7423 = vmatpush1.bf16.msra.mxu0 0
        %7424 = vmatprep.subr.bf16.mxu0 0
        %7425 = vmatpush1.bf16.msra.mxu0 0
        %7426 = vmatprep.subr.bf16.mxu0 0
        %7427 = vmatpush1.bf16.msra.mxu0 0
        %7428 = vmatprep.subr.bf16.mxu0 0
        %7429 = vmatpush1.bf16.msra.mxu0 0
        %7430 = vmatprep.subr.bf16.mxu0 0
        %7431 = vmatpush1.bf16.msra.mxu0 0
        %7432 = vmatprep.subr.bf16.mxu0 0
        %7433 = vmatpush1.bf16.msra.mxu0 0
        %7434 = vmatprep.subr.bf16.mxu0 0
        %7435 = vmatpush1.bf16.msra.mxu0 0
        %7436 = vmatprep.subr.bf16.mxu0 0
        %7437 = vmatpush1.bf16.msra.mxu0 0
        %7438 = vmatprep.subr.bf16.mxu0 0
        %7439 = vmatpush1.bf16.msra.mxu0 0
        %7440 = vmatprep.mubr.bf16.mxu0 0
        %7441 = vmatmul.mubr.bf16.gmra.mrb[0].mxu0 %v7385
        %v7442 = vpop.f32.mrb[0].mxu0
        %v7443 = vadd.f32 0.0, %v7442
        %v7444 = vpop.f32.mrb[0].mxu0
        %v7445 = vpop.f32.mrb[0].mxu0
        %v7446 = vadd.f32 0.0, %v7445
        %v7447 = vpop.f32.mrb[0].mxu0
        %7448 = vmatprep.mubr.bf16.mxu0 0
        %7449 = vmatmul.mubr.bf16.gmra.mrb[0].mxu0 %v7388
        %v7450 = vpop.f32.mrb[0].mxu0
        %v7451 = vadd.f32 0.0, %v7450
        %v7452 = vpop.f32.mrb[0].mxu0
        %v7453 = vpop.f32.mrb[0].mxu0
        %v7454 = vadd.f32 0.0, %v7453
        %v7455 = vpop.f32.mrb[0].mxu0
        %7456 = vmatprep.mubr.bf16.mxu0 0
        %7457 = vmatmul.mubr.bf16.gmra.mrb[0].mxu0 %v7391
        %v7458 = vpop.f32.mrb[0].mxu0
        %v7459 = vadd.f32 0.0, %v7458
        %v7460 = vpop.f32.mrb[0].mxu0
        %v7461 = vpop.f32.mrb[0].mxu0
        %v7462 = vadd.f32 0.0, %v7461
        %v7463 = vpop.f32.mrb[0].mxu0
        %7464 = vmatprep.mubr.bf16.mxu0 0
        %7465 = vmatmul.mubr.bf16.gmra.mrb[0].mxu0 %v7394
        %v7466 = vpop.f32.mrb[0].mxu0
        %v7467 = vadd.f32 0.0, %v7466
        %v7468 = vpop.f32.mrb[0].mxu0
        %v7469 = vpop.f32.mrb[0].mxu0
        %v7470 = vadd.f32 0.0, %v7469
        %v7471 = vpop.f32.mrb[0].mxu0
        %7472 = vmatprep.mubr.bf16.mxu0 0
        %7473 = vmatmul.mubr.bf16.gmra.mrb[0].mxu0 %v7397
        %v7474 = vpop.f32.mrb[0].mxu0
        %v7475 = vadd.f32 0.0, %v7474
        %v7476 = vpop.f32.mrb[0].mxu0
        %v7477 = vpop.f32.mrb[0].mxu0
        %v7478 = vadd.f32 0.0, %v7477
        %v7479 = vpop.f32.mrb[0].mxu0
        %7480 = vmatprep.mubr.bf16.mxu0 0
        %7481 = vmatmul.mubr.bf16.gmra.mrb[0].mxu0 %v7400
        %v7482 = vpop.f32.mrb[0].mxu0
        %v7483 = vadd.f32 0.0, %v7482
        %v7484 = vpop.f32.mrb[0].mxu0
        %v7485 = vpop.f32.mrb[0].mxu0
        %v7486 = vadd.f32 0.0, %v7485
        %v7487 = vpop.f32.mrb[0].mxu0
        %7488 = vmatprep.mubr.bf16.mxu0 0
        %7489 = vmatmul.mubr.bf16.gmra.mrb[0].mxu0 %v7403
        %v7490 = vpop.f32.mrb[0].mxu0
        %v7491 = vadd.f32 0.0, %v7490
        %v7492 = vpop.f32.mrb[0].mxu0
        %v7493 = vpop.f32.mrb[0].mxu0
        %v7494 = vadd.f32 0.0, %v7493
        %v7495 = vpop.f32.mrb[0].mxu0
        %7496 = vmatprep.mubr.bf16.mxu0 0
        %7497 = vmatmul.mubr.bf16.gmra.mrb[0].mxu0 %v7406
        %v7498 = vpop.f32.mrb[0].mxu0
        %v7499 = vadd.f32 0.0, %v7498
        %v7500 = vpop.f32.mrb[0].mxu0
        %v7501 = vpop.f32.mrb[0].mxu0
        %v7502 = vadd.f32 0.0, %v7501
        %v7503 = vpop.f32.mrb[0].mxu0
        %7504 = vdwg.mxu0
        %v7505 = vadd.f32 %v7328, %v7443
        %v7506 = vadd.f32 %v7329, %v7446
        %v7507 = vadd.f32 %v7330, %v7451
        %v7508 = vadd.f32 %v7331, %v7454
        %v7509 = vadd.f32 %v7332, %v7459
        %v7510 = vadd.f32 %v7333, %v7462
        %v7511 = vadd.f32 %v7334, %v7467
        %v7512 = vadd.f32 %v7335, %v7470
        %v7513 = vadd.f32 %v7336, %v7475
        %v7514 = vadd.f32 %v7337, %v7478
        %v7515 = vadd.f32 %v7338, %v7483
        %v7516 = vadd.f32 %v7339, %v7486
        %v7517 = vadd.f32 %v7340, %v7491
        %v7518 = vadd.f32 %v7341, %v7494
        %v7519 = vadd.f32 %v7342, %v7499
        %v7520 = vadd.f32 %v7343, %v7502
        %v7521 = vld [vmem:[%s4 + $0xc8] sm:$0xf]
        %v7522 = vld [vmem:[%s4 + $0xcc] sm:$0xf]
        %v7523 = vunpack.c.l.b16 %v2988
        %v7524 = vunpack.c.l.b16 %v2998
        %v7525 = vunpack.c.l.b16 %v3012
        %v7526 = vunpack.c.l.b16 %v3022
        %v7527 = vunpack.c.l.b16 %v3036
        %v7528 = vunpack.c.l.b16 %v3046
        %v7529 = vunpack.c.l.b16 %v3060
        %v7530 = vunpack.c.l.b16 %v3070
        %v7531 = vunpack.c.l.b16 %v3084
        %v7532 = vunpack.c.l.b16 %v3094
        %v7533 = vunpack.c.l.b16 %v3108
        %v7534 = vunpack.c.l.b16 %v3118
        %v7535 = vunpack.c.l.b16 %v3132
        %v7536 = vunpack.c.l.b16 %v3142
        %v7537 = vunpack.c.l.b16 %v3156
        %v7538 = vunpack.c.l.b16 %v3166
        %v7539 = vpack.c.b16 %v7524, %v7523
        %v7540 = vpack.c.b16 %v7526, %v7525
        %v7541 = vpack.c.b16 %v7528, %v7527
        %v7542 = vpack.c.b16 %v7530, %v7529
        %v7543 = vpack.c.b16 %v7532, %v7531
        %v7544 = vpack.c.b16 %v7534, %v7533
        %v7545 = vpack.c.b16 %v7536, %v7535
        %v7546 = vpack.c.b16 %v7538, %v7537
        %v7549 = vunpack.c.l.b16 %v7521
        %v7550 = vunpack.c.l.b16 %v7522
        %v7551 = vpack.c.b16 %v7550, %v7549
        %v7554 = vsel %vm3289, %v7539, 0
        %v7557 = vsel %vm3289, %v7540, 0
        %v7560 = vsel %vm3289, %v7541, 0
        %v7563 = vsel %vm3289, %v7542, 0
        %v7566 = vsel %vm3289, %v7543, 0
        %v7569 = vsel %vm3289, %v7544, 0
        %v7572 = vsel %vm3289, %v7545, 0
        %v7575 = vsel %vm3289, %v7546, 0
        %7577 = vmatprep.subr.bf16.mxu0 0
        %7578 = vmatpush1.bf16.msra.mxu0 %v7551
        %7579 = vmatprep.subr.bf16.mxu0 0
        %7580 = vmatpush1.bf16.msra.mxu0 0
        %7581 = vmatprep.subr.bf16.mxu0 0
        %7582 = vmatpush1.bf16.msra.mxu0 0
        %7583 = vmatprep.subr.bf16.mxu0 0
        %7584 = vmatpush1.bf16.msra.mxu0 0
        %7585 = vmatprep.subr.bf16.mxu0 0
        %7586 = vmatpush1.bf16.msra.mxu0 0
        %7587 = vmatprep.subr.bf16.mxu0 0
        %7588 = vmatpush1.bf16.msra.mxu0 0
        %7589 = vmatprep.subr.bf16.mxu0 0
        %7590 = vmatpush1.bf16.msra.mxu0 0
        %7591 = vmatprep.subr.bf16.mxu0 0
        %7592 = vmatpush1.bf16.msra.mxu0 0
        %7593 = vmatprep.subr.bf16.mxu0 0
        %7594 = vmatpush1.bf16.msra.mxu0 0
        %7595 = vmatprep.subr.bf16.mxu0 0
        %7596 = vmatpush1.bf16.msra.mxu0 0
        %7597 = vmatprep.subr.bf16.mxu0 0
        %7598 = vmatpush1.bf16.msra.mxu0 0
        %7599 = vmatprep.subr.bf16.mxu0 0
        %7600 = vmatpush1.bf16.msra.mxu0 0
        %7601 = vmatprep.subr.bf16.mxu0 0
        %7602 = vmatpush1.bf16.msra.mxu0 0
        %7603 = vmatprep.subr.bf16.mxu0 0
        %7604 = vmatpush1.bf16.msra.mxu0 0
        %7605 = vmatprep.subr.bf16.mxu0 0
        %7606 = vmatpush1.bf16.msra.mxu0 0
        %7607 = vmatprep.subr.bf16.mxu0 0
        %7608 = vmatpush1.bf16.msra.mxu0 0
        %7609 = vmatprep.mubr.bf16.mxu0 0
        %7610 = vmatmul.mubr.bf16.gmra.mrb[0].mxu0 %v7554
        %v7611 = vpop.f32.mrb[0].mxu0
        %v7612 = vadd.f32 0.0, %v7611
        %v7613 = vpop.f32.mrb[0].mxu0
        %v7614 = vpop.f32.mrb[0].mxu0
        %v7615 = vadd.f32 0.0, %v7614
        %v7616 = vpop.f32.mrb[0].mxu0
        %7617 = vmatprep.mubr.bf16.mxu0 0
        %7618 = vmatmul.mubr.bf16.gmra.mrb[0].mxu0 %v7557
        %v7619 = vpop.f32.mrb[0].mxu0
        %v7620 = vadd.f32 0.0, %v7619
        %v7621 = vpop.f32.mrb[0].mxu0
        %v7622 = vpop.f32.mrb[0].mxu0
        %v7623 = vadd.f32 0.0, %v7622
        %v7624 = vpop.f32.mrb[0].mxu0
        %7625 = vmatprep.mubr.bf16.mxu0 0
        %7626 = vmatmul.mubr.bf16.gmra.mrb[0].mxu0 %v7560
        %v7627 = vpop.f32.mrb[0].mxu0
        %v7628 = vadd.f32 0.0, %v7627
        %v7629 = vpop.f32.mrb[0].mxu0
        %v7630 = vpop.f32.mrb[0].mxu0
        %v7631 = vadd.f32 0.0, %v7630
        %v7632 = vpop.f32.mrb[0].mxu0
        %7633 = vmatprep.mubr.bf16.mxu0 0
        %7634 = vmatmul.mubr.bf16.gmra.mrb[0].mxu0 %v7563
        %v7635 = vpop.f32.mrb[0].mxu0
        %v7636 = vadd.f32 0.0, %v7635
        %v7637 = vpop.f32.mrb[0].mxu0
        %v7638 = vpop.f32.mrb[0].mxu0
        %v7639 = vadd.f32 0.0, %v7638
        %v7640 = vpop.f32.mrb[0].mxu0
        %7641 = vmatprep.mubr.bf16.mxu0 0
        %7642 = vmatmul.mubr.bf16.gmra.mrb[0].mxu0 %v7566
        %v7643 = vpop.f32.mrb[0].mxu0
        %v7644 = vadd.f32 0.0, %v7643
        %v7645 = vpop.f32.mrb[0].mxu0
        %v7646 = vpop.f32.mrb[0].mxu0
        %v7647 = vadd.f32 0.0, %v7646
        %v7648 = vpop.f32.mrb[0].mxu0
        %7649 = vmatprep.mubr.bf16.mxu0 0
        %7650 = vmatmul.mubr.bf16.gmra.mrb[0].mxu0 %v7569
        %v7651 = vpop.f32.mrb[0].mxu0
        %v7652 = vadd.f32 0.0, %v7651
        %v7653 = vpop.f32.mrb[0].mxu0
        %v7654 = vpop.f32.mrb[0].mxu0
        %v7655 = vadd.f32 0.0, %v7654
        %v7656 = vpop.f32.mrb[0].mxu0
        %7657 = vmatprep.mubr.bf16.mxu0 0
        %7658 = vmatmul.mubr.bf16.gmra.mrb[0].mxu0 %v7572
        %v7659 = vpop.f32.mrb[0].mxu0
        %v7660 = vadd.f32 0.0, %v7659
        %v7661 = vpop.f32.mrb[0].mxu0
        %v7662 = vpop.f32.mrb[0].mxu0
        %v7663 = vadd.f32 0.0, %v7662
        %v7664 = vpop.f32.mrb[0].mxu0
        %7665 = vmatprep.mubr.bf16.mxu0 0
        %7666 = vmatmul.mubr.bf16.gmra.mrb[0].mxu0 %v7575
        %v7667 = vpop.f32.mrb[0].mxu0
        %v7668 = vadd.f32 0.0, %v7667
        %v7669 = vpop.f32.mrb[0].mxu0
        %v7670 = vpop.f32.mrb[0].mxu0
        %v7671 = vadd.f32 0.0, %v7670
        %v7672 = vpop.f32.mrb[0].mxu0
        %7673 = vdwg.mxu0
        %v7674 = vadd.f32 %v7505, %v7612
        %v7675 = vadd.f32 %v7506, %v7615
        %v7676 = vadd.f32 %v7507, %v7620
        %v7677 = vadd.f32 %v7508, %v7623
        %v7678 = vadd.f32 %v7509, %v7628
        %v7679 = vadd.f32 %v7510, %v7631
        %v7680 = vadd.f32 %v7511, %v7636
        %v7681 = vadd.f32 %v7512, %v7639
        %v7682 = vadd.f32 %v7513, %v7644
        %v7683 = vadd.f32 %v7514, %v7647
        %v7684 = vadd.f32 %v7515, %v7652
        %v7685 = vadd.f32 %v7516, %v7655
        %v7686 = vadd.f32 %v7517, %v7660
        %v7687 = vadd.f32 %v7518, %v7663
        %v7688 = vadd.f32 %v7519, %v7668
        %v7689 = vadd.f32 %v7520, %v7671
        %v7690 = vld [vmem:[%s4 + $0xd0] sm:$0xf]
        %v7691 = vld [vmem:[%s4 + $0xd4] sm:$0xf]
        %v7692 = vunpack.c.l.b16 %v3202
        %v7693 = vunpack.c.l.b16 %v3205
        %v7694 = vunpack.c.l.b16 %v3209
        %v7695 = vunpack.c.l.b16 %v3212
        %v7696 = vunpack.c.l.b16 %v3216
        %v7697 = vunpack.c.l.b16 %v3219
        %v7698 = vunpack.c.l.b16 %v3223
        %v7699 = vunpack.c.l.b16 %v3226
        %v7700 = vunpack.c.l.b16 %v3230
        %v7701 = vunpack.c.l.b16 %v3233
        %v7702 = vunpack.c.l.b16 %v3237
        %v7703 = vunpack.c.l.b16 %v3240
        %v7704 = vunpack.c.l.b16 %v3244
        %v7705 = vunpack.c.l.b16 %v3247
        %v7706 = vunpack.c.l.b16 %v3251
        %v7707 = vunpack.c.l.b16 %v3254
        %v7708 = vpack.c.b16 %v7693, %v7692
        %v7709 = vpack.c.b16 %v7695, %v7694
        %v7710 = vpack.c.b16 %v7697, %v7696
        %v7711 = vpack.c.b16 %v7699, %v7698
        %v7712 = vpack.c.b16 %v7701, %v7700
        %v7713 = vpack.c.b16 %v7703, %v7702
        %v7714 = vpack.c.b16 %v7705, %v7704
        %v7715 = vpack.c.b16 %v7707, %v7706
        %v7718 = vunpack.c.l.b16 %v7690
        %v7719 = vunpack.c.l.b16 %v7691
        %v7720 = vpack.c.b16 %v7719, %v7718
        %v7723 = vsel %vm3289, %v7708, 0
        %v7726 = vsel %vm3289, %v7709, 0
        %v7729 = vsel %vm3289, %v7710, 0
        %v7732 = vsel %vm3289, %v7711, 0
        %v7735 = vsel %vm3289, %v7712, 0
        %v7738 = vsel %vm3289, %v7713, 0
        %v7741 = vsel %vm3289, %v7714, 0
        %v7744 = vsel %vm3289, %v7715, 0
        %7746 = vmatprep.subr.bf16.mxu0 0
        %7747 = vmatpush1.bf16.msra.mxu0 %v7720
        %7748 = vmatprep.subr.bf16.mxu0 0
        %7749 = vmatpush1.bf16.msra.mxu0 0
        %7750 = vmatprep.subr.bf16.mxu0 0
        %7751 = vmatpush1.bf16.msra.mxu0 0
        %7752 = vmatprep.subr.bf16.mxu0 0
        %7753 = vmatpush1.bf16.msra.mxu0 0
        %7754 = vmatprep.subr.bf16.mxu0 0
        %7755 = vmatpush1.bf16.msra.mxu0 0
        %7756 = vmatprep.subr.bf16.mxu0 0
        %7757 = vmatpush1.bf16.msra.mxu0 0
        %7758 = vmatprep.subr.bf16.mxu0 0
        %7759 = vmatpush1.bf16.msra.mxu0 0
        %7760 = vmatprep.subr.bf16.mxu0 0
        %7761 = vmatpush1.bf16.msra.mxu0 0
        %7762 = vmatprep.subr.bf16.mxu0 0
        %7763 = vmatpush1.bf16.msra.mxu0 0
        %7764 = vmatprep.subr.bf16.mxu0 0
        %7765 = vmatpush1.bf16.msra.mxu0 0
        %7766 = vmatprep.subr.bf16.mxu0 0
        %7767 = vmatpush1.bf16.msra.mxu0 0
        %7768 = vmatprep.subr.bf16.mxu0 0
        %7769 = vmatpush1.bf16.msra.mxu0 0
        %7770 = vmatprep.subr.bf16.mxu0 0
        %7771 = vmatpush1.bf16.msra.mxu0 0
        %7772 = vmatprep.subr.bf16.mxu0 0
        %7773 = vmatpush1.bf16.msra.mxu0 0
        %7774 = vmatprep.subr.bf16.mxu0 0
        %7775 = vmatpush1.bf16.msra.mxu0 0
        %7776 = vmatprep.subr.bf16.mxu0 0
        %7777 = vmatpush1.bf16.msra.mxu0 0
        %7778 = vmatprep.mubr.bf16.mxu0 0
        %7779 = vmatmul.mubr.bf16.gmra.mrb[0].mxu0 %v7723
        %v7780 = vpop.f32.mrb[0].mxu0
        %v7781 = vadd.f32 0.0, %v7780
        %v7782 = vpop.f32.mrb[0].mxu0
        %v7783 = vpop.f32.mrb[0].mxu0
        %v7784 = vadd.f32 0.0, %v7783
        %v7785 = vpop.f32.mrb[0].mxu0
        %7786 = vmatprep.mubr.bf16.mxu0 0
        %7787 = vmatmul.mubr.bf16.gmra.mrb[0].mxu0 %v7726
        %v7788 = vpop.f32.mrb[0].mxu0
        %v7789 = vadd.f32 0.0, %v7788
        %v7790 = vpop.f32.mrb[0].mxu0
        %v7791 = vpop.f32.mrb[0].mxu0
        %v7792 = vadd.f32 0.0, %v7791
        %v7793 = vpop.f32.mrb[0].mxu0
        %7794 = vmatprep.mubr.bf16.mxu0 0
        %7795 = vmatmul.mubr.bf16.gmra.mrb[0].mxu0 %v7729
        %v7796 = vpop.f32.mrb[0].mxu0
        %v7797 = vadd.f32 0.0, %v7796
        %v7798 = vpop.f32.mrb[0].mxu0
        %v7799 = vpop.f32.mrb[0].mxu0
        %v7800 = vadd.f32 0.0, %v7799
        %v7801 = vpop.f32.mrb[0].mxu0
        %7802 = vmatprep.mubr.bf16.mxu0 0
        %7803 = vmatmul.mubr.bf16.gmra.mrb[0].mxu0 %v7732
        %v7804 = vpop.f32.mrb[0].mxu0
        %v7805 = vadd.f32 0.0, %v7804
        %v7806 = vpop.f32.mrb[0].mxu0
        %v7807 = vpop.f32.mrb[0].mxu0
        %v7808 = vadd.f32 0.0, %v7807
        %v7809 = vpop.f32.mrb[0].mxu0
        %7810 = vmatprep.mubr.bf16.mxu0 0
        %7811 = vmatmul.mubr.bf16.gmra.mrb[0].mxu0 %v7735
        %v7812 = vpop.f32.mrb[0].mxu0
        %v7813 = vadd.f32 0.0, %v7812
        %v7814 = vpop.f32.mrb[0].mxu0
        %v7815 = vpop.f32.mrb[0].mxu0
        %v7816 = vadd.f32 0.0, %v7815
        %v7817 = vpop.f32.mrb[0].mxu0
        %7818 = vmatprep.mubr.bf16.mxu0 0
        %7819 = vmatmul.mubr.bf16.gmra.mrb[0].mxu0 %v7738
        %v7820 = vpop.f32.mrb[0].mxu0
        %v7821 = vadd.f32 0.0, %v7820
        %v7822 = vpop.f32.mrb[0].mxu0
        %v7823 = vpop.f32.mrb[0].mxu0
        %v7824 = vadd.f32 0.0, %v7823
        %v7825 = vpop.f32.mrb[0].mxu0
        %7826 = vmatprep.mubr.bf16.mxu0 0
        %7827 = vmatmul.mubr.bf16.gmra.mrb[0].mxu0 %v7741
        %v7828 = vpop.f32.mrb[0].mxu0
        %v7829 = vadd.f32 0.0, %v7828
        %v7830 = vpop.f32.mrb[0].mxu0
        %v7831 = vpop.f32.mrb[0].mxu0
        %v7832 = vadd.f32 0.0, %v7831
        %v7833 = vpop.f32.mrb[0].mxu0
        %7834 = vmatprep.mubr.bf16.mxu0 0
        %7835 = vmatmul.mubr.bf16.gmra.mrb[0].mxu0 %v7744
        %v7836 = vpop.f32.mrb[0].mxu0
        %v7837 = vadd.f32 0.0, %v7836
        %v7838 = vpop.f32.mrb[0].mxu0
        %v7839 = vpop.f32.mrb[0].mxu0
        %v7840 = vadd.f32 0.0, %v7839
        %v7841 = vpop.f32.mrb[0].mxu0
        %7842 = vdwg.mxu0
        %v7843 = vadd.f32 %v7674, %v7781
        %v7844 = vadd.f32 %v7675, %v7784
        %v7845 = vadd.f32 %v7676, %v7789
        %v7846 = vadd.f32 %v7677, %v7792
        %v7847 = vadd.f32 %v7678, %v7797
        %v7848 = vadd.f32 %v7679, %v7800
        %v7849 = vadd.f32 %v7680, %v7805
        %v7850 = vadd.f32 %v7681, %v7808
        %v7851 = vadd.f32 %v7682, %v7813
        %v7852 = vadd.f32 %v7683, %v7816
        %v7853 = vadd.f32 %v7684, %v7821
        %v7854 = vadd.f32 %v7685, %v7824
        %v7855 = vadd.f32 %v7686, %v7829
        %v7856 = vadd.f32 %v7687, %v7832
        %v7857 = vadd.f32 %v7688, %v7837
        %v7858 = vadd.f32 %v7689, %v7840
        %v7859 = vld [vmem:[%s5] sm:$0x1]
        %v7861 = vlaneseq
        %v7862 = vshrl.u32 %v7861, 7
        %v7863 = vsub.s32 0, %v7862
        %v7864 = vrot.slane %v7859, %v7863
        %v7866 = vmul.f32 %v7843, %v7864
        %v7867 = vmul.f32 %v7844, %v7864
        %v7868 = vmul.f32 %v7845, %v7864
        %v7869 = vmul.f32 %v7846, %v7864
        %v7870 = vmul.f32 %v7847, %v7864
        %v7871 = vmul.f32 %v7848, %v7864
        %v7872 = vmul.f32 %v7849, %v7864
        %v7873 = vmul.f32 %v7850, %v7864
        %v7874 = vmul.f32 %v7851, %v7864
        %v7875 = vmul.f32 %v7852, %v7864
        %v7876 = vmul.f32 %v7853, %v7864
        %v7877 = vmul.f32 %v7854, %v7864
        %v7878 = vmul.f32 %v7855, %v7864
        %v7879 = vmul.f32 %v7856, %v7864
        %v7880 = vmul.f32 %v7857, %v7864
        %v7881 = vmul.f32 %v7858, %v7864
        %v7882 = vld [vmem:[%s6] sm:$0x1]
        %v7884 = vlaneseq
        %v7885 = vshrl.u32 %v7884, 7
        %v7886 = vsub.s32 0, %v7885
        %v7887 = vrot.slane %v7882, %v7886
        %v7889 = vadd.f32 %v7866, %v7887
        %v7890 = vadd.f32 %v7867, %v7887
        %v7891 = vadd.f32 %v7868, %v7887
        %v7892 = vadd.f32 %v7869, %v7887
        %v7893 = vadd.f32 %v7870, %v7887
        %v7894 = vadd.f32 %v7871, %v7887
        %v7895 = vadd.f32 %v7872, %v7887
        %v7896 = vadd.f32 %v7873, %v7887
        %v7897 = vadd.f32 %v7874, %v7887
        %v7898 = vadd.f32 %v7875, %v7887
        %v7899 = vadd.f32 %v7876, %v7887
        %v7900 = vadd.f32 %v7877, %v7887
        %v7901 = vadd.f32 %v7878, %v7887
        %v7902 = vadd.f32 %v7879, %v7887
        %v7903 = vadd.f32 %v7880, %v7887
        %v7904 = vadd.f32 %v7881, %v7887
        %v7905 = vld [vmem:[%s489] sm:$0xf]
        %v7906 = vld [vmem:[%s489 + $0x4] sm:$0xf]
        %v7907 = vld [vmem:[%s489 + $0x8] sm:$0xf]
        %v7908 = vld [vmem:[%s489 + $0xc] sm:$0xf]
        %v7909 = vld [vmem:[%s489 + $0x10] sm:$0xf]
        %v7910 = vld [vmem:[%s489 + $0x14] sm:$0xf]
        %v7911 = vld [vmem:[%s489 + $0x18] sm:$0xf]
        %v7912 = vld [vmem:[%s489 + $0x1c] sm:$0xf]
        %v7913 = vld [vmem:[%s489 + $0x20] sm:$0xf]
        %v7914 = vld [vmem:[%s489 + $0x24] sm:$0xf]
        %v7915 = vld [vmem:[%s489 + $0x28] sm:$0xf]
        %v7916 = vld [vmem:[%s489 + $0x2c] sm:$0xf]
        %v7917 = vld [vmem:[%s489 + $0x30] sm:$0xf]
        %v7918 = vld [vmem:[%s489 + $0x34] sm:$0xf]
        %v7919 = vld [vmem:[%s489 + $0x38] sm:$0xf]
        %v7920 = vld [vmem:[%s489 + $0x3c] sm:$0xf]
        %v7921 = vunpack.c.l.bf16 %v7905
        %v7922 = vunpack.c.l.bf16 %v7906
        %v7923 = vunpack.c.l.bf16 %v7907
        %v7924 = vunpack.c.l.bf16 %v7908
        %v7925 = vunpack.c.l.bf16 %v7909
        %v7926 = vunpack.c.l.bf16 %v7910
        %v7927 = vunpack.c.l.bf16 %v7911
        %v7928 = vunpack.c.l.bf16 %v7912
        %v7929 = vunpack.c.l.bf16 %v7913
        %v7930 = vunpack.c.l.bf16 %v7914
        %v7931 = vunpack.c.l.bf16 %v7915
        %v7932 = vunpack.c.l.bf16 %v7916
        %v7933 = vunpack.c.l.bf16 %v7917
        %v7934 = vunpack.c.l.bf16 %v7918
        %v7935 = vunpack.c.l.bf16 %v7919
        %v7936 = vunpack.c.l.bf16 %v7920
        %v7937 = vadd.f32 %v7889, %v7921
        %v7938 = vadd.f32 %v7890, %v7922
        %v7939 = vadd.f32 %v7891, %v7923
        %v7940 = vadd.f32 %v7892, %v7924
        %v7941 = vadd.f32 %v7893, %v7925
        %v7942 = vadd.f32 %v7894, %v7926
        %v7943 = vadd.f32 %v7895, %v7927
        %v7944 = vadd.f32 %v7896, %v7928
        %v7945 = vadd.f32 %v7897, %v7929
        %v7946 = vadd.f32 %v7898, %v7930
        %v7947 = vadd.f32 %v7899, %v7931
        %v7948 = vadd.f32 %v7900, %v7932
        %v7949 = vadd.f32 %v7901, %v7933
        %v7950 = vadd.f32 %v7902, %v7934
        %v7951 = vadd.f32 %v7903, %v7935
        %v7952 = vadd.f32 %v7904, %v7936
        %v7953 = vmax.f32 %v7937, 0.0
        %v7954 = vmax.f32 %v7938, 0.0
        %v7955 = vmax.f32 %v7939, 0.0
        %v7956 = vmax.f32 %v7940, 0.0
        %v7957 = vmax.f32 %v7941, 0.0
        %v7958 = vmax.f32 %v7942, 0.0
        %v7959 = vmax.f32 %v7943, 0.0
        %v7960 = vmax.f32 %v7944, 0.0
        %v7961 = vmax.f32 %v7945, 0.0
        %v7962 = vmax.f32 %v7946, 0.0
        %v7963 = vmax.f32 %v7947, 0.0
        %v7964 = vmax.f32 %v7948, 0.0
        %v7965 = vmax.f32 %v7949, 0.0
        %v7966 = vmax.f32 %v7950, 0.0
        %v7967 = vmax.f32 %v7951, 0.0
        %v7968 = vmax.f32 %v7952, 0.0
        %v7969 = vld [vmem:[%s480] sm:$0xf]
        %v7970 = vld [vmem:[%s480 + $0x4] sm:$0xf]
        %v7971 = vld [vmem:[%s480 + $0x8] sm:$0xf]
        %v7972 = vld [vmem:[%s480 + $0xc] sm:$0xf]
        %v7973 = vld [vmem:[%s480 + $0x10] sm:$0xf]
        %v7974 = vld [vmem:[%s480 + $0x14] sm:$0xf]
        %v7975 = vld [vmem:[%s480 + $0x18] sm:$0xf]
        %v7976 = vld [vmem:[%s480 + $0x1c] sm:$0xf]
        %v7977 = vld [vmem:[%s480 + $0x20] sm:$0xf]
        %v7978 = vld [vmem:[%s480 + $0x24] sm:$0xf]
        %v7979 = vld [vmem:[%s480 + $0x28] sm:$0xf]
        %v7980 = vld [vmem:[%s480 + $0x2c] sm:$0xf]
        %v7981 = vld [vmem:[%s480 + $0x30] sm:$0xf]
        %v7982 = vld [vmem:[%s480 + $0x34] sm:$0xf]
        %v7983 = vld [vmem:[%s480 + $0x38] sm:$0xf]
        %v7984 = vld [vmem:[%s480 + $0x3c] sm:$0xf]
        %v7985 = vunpack.c.l.bf16 %v7969
        %v7986 = vunpack.c.l.bf16 %v7970
        %v7987 = vunpack.c.l.bf16 %v7971
        %v7988 = vunpack.c.l.bf16 %v7972
        %v7989 = vunpack.c.l.bf16 %v7973
        %v7990 = vunpack.c.l.bf16 %v7974
        %v7991 = vunpack.c.l.bf16 %v7975
        %v7992 = vunpack.c.l.bf16 %v7976
        %v7993 = vunpack.c.l.bf16 %v7977
        %v7994 = vunpack.c.l.bf16 %v7978
        %v7995 = vunpack.c.l.bf16 %v7979
        %v7996 = vunpack.c.l.bf16 %v7980
        %v7997 = vunpack.c.l.bf16 %v7981
        %v7998 = vunpack.c.l.bf16 %v7982
        %v7999 = vunpack.c.l.bf16 %v7983
        %v8000 = vunpack.c.l.bf16 %v7984
        %8002 = vset.pattern.permute.xlu0 0
        %8003 = vperm.xlu0 %8002, %v7985
        %v8004 = vpop.permute.xlu0 %8003
        %8007 = vset.pattern.permute.xlu0 0
        %8008 = vperm.xlu0 %8007, %v7986
        %v8009 = vpop.permute.xlu0 %8008
        %8012 = vset.pattern.permute.xlu0 0
        %8013 = vperm.xlu0 %8012, %v7987
        %v8014 = vpop.permute.xlu0 %8013
        %8017 = vset.pattern.permute.xlu0 0
        %8018 = vperm.xlu0 %8017, %v7988
        %v8019 = vpop.permute.xlu0 %8018
        %8022 = vset.pattern.permute.xlu0 0
        %8023 = vperm.xlu0 %8022, %v7989
        %v8024 = vpop.permute.xlu0 %8023
        %8027 = vset.pattern.permute.xlu0 0
        %8028 = vperm.xlu0 %8027, %v7990
        %v8029 = vpop.permute.xlu0 %8028
        %8032 = vset.pattern.permute.xlu0 0
        %8033 = vperm.xlu0 %8032, %v7991
        %v8034 = vpop.permute.xlu0 %8033
        %8037 = vset.pattern.permute.xlu0 0
        %8038 = vperm.xlu0 %8037, %v7992
        %v8039 = vpop.permute.xlu0 %8038
        %8042 = vset.pattern.permute.xlu0 0
        %8043 = vperm.xlu0 %8042, %v7993
        %v8044 = vpop.permute.xlu0 %8043
        %8047 = vset.pattern.permute.xlu0 0
        %8048 = vperm.xlu0 %8047, %v7994
        %v8049 = vpop.permute.xlu0 %8048
        %8052 = vset.pattern.permute.xlu0 0
        %8053 = vperm.xlu0 %8052, %v7995
        %v8054 = vpop.permute.xlu0 %8053
        %8057 = vset.pattern.permute.xlu0 0
        %8058 = vperm.xlu0 %8057, %v7996
        %v8059 = vpop.permute.xlu0 %8058
        %8062 = vset.pattern.permute.xlu0 0
        %8063 = vperm.xlu0 %8062, %v7997
        %v8064 = vpop.permute.xlu0 %8063
        %8067 = vset.pattern.permute.xlu0 0
        %8068 = vperm.xlu0 %8067, %v7998
        %v8069 = vpop.permute.xlu0 %8068
        %8072 = vset.pattern.permute.xlu0 0
        %8073 = vperm.xlu0 %8072, %v7999
        %v8074 = vpop.permute.xlu0 %8073
        %8077 = vset.pattern.permute.xlu0 0
        %8078 = vperm.xlu0 %8077, %v8000
        %v8079 = vpop.permute.xlu0 %8078
        %v8081 = vmul.f32 %v7953, %v8004
        %v8082 = vmul.f32 %v7954, %v8009
        %v8083 = vmul.f32 %v7955, %v8014
        %v8084 = vmul.f32 %v7956, %v8019
        %v8085 = vmul.f32 %v7957, %v8024
        %v8086 = vmul.f32 %v7958, %v8029
        %v8087 = vmul.f32 %v7959, %v8034
        %v8088 = vmul.f32 %v7960, %v8039
        %v8089 = vmul.f32 %v7961, %v8044
        %v8090 = vmul.f32 %v7962, %v8049
        %v8091 = vmul.f32 %v7963, %v8054
        %v8092 = vmul.f32 %v7964, %v8059
        %v8093 = vmul.f32 %v7965, %v8064
        %v8094 = vmul.f32 %v7966, %v8069
        %v8095 = vmul.f32 %v7967, %v8074
        %v8096 = vmul.f32 %v7968, %v8079
        %v8097 = vpack.c.bf16 %v8082, %v8081
        %v8098 = vpack.c.bf16 %v8084, %v8083
        %v8099 = vpack.c.bf16 %v8086, %v8085
        %v8100 = vpack.c.bf16 %v8088, %v8087
        %v8101 = vpack.c.bf16 %v8090, %v8089
        %v8102 = vpack.c.bf16 %v8092, %v8091
        %v8103 = vpack.c.bf16 %v8094, %v8093
        %v8104 = vpack.c.bf16 %v8096, %v8095
        %v8113 = vunpack.c.l.b16 %v8097
        %v8114 = vunpack.c.h.b16 %v8097
        %v8115 = vunpack.c.l.b16 %v8098
        %v8116 = vunpack.c.h.b16 %v8098
        %v8117 = vunpack.c.l.b16 %v8099
        %v8118 = vunpack.c.h.b16 %v8099
        %v8119 = vunpack.c.l.b16 %v8100
        %v8120 = vunpack.c.h.b16 %v8100
        %v8121 = vunpack.c.l.b16 %v8101
        %v8122 = vunpack.c.h.b16 %v8101
        %v8123 = vunpack.c.l.b16 %v8102
        %v8124 = vunpack.c.h.b16 %v8102
        %v8125 = vunpack.c.l.b16 %v8103
        %v8126 = vunpack.c.h.b16 %v8103
        %v8127 = vunpack.c.l.b16 %v8104
        %v8128 = vunpack.c.h.b16 %v8104
        %v8129 = vpack.c.b16 %v8113, %v8113
        %v8130 = vpack.c.b16 %v8114, %v8114
        %v8131 = vpack.c.b16 %v8115, %v8115
        %v8132 = vpack.c.b16 %v8116, %v8116
        %v8133 = vpack.c.b16 %v8117, %v8117
        %v8134 = vpack.c.b16 %v8118, %v8118
        %v8135 = vpack.c.b16 %v8119, %v8119
        %v8136 = vpack.c.b16 %v8120, %v8120
        %v8137 = vpack.c.b16 %v8121, %v8121
        %v8138 = vpack.c.b16 %v8122, %v8122
        %v8139 = vpack.c.b16 %v8123, %v8123
        %v8140 = vpack.c.b16 %v8124, %v8124
        %v8141 = vpack.c.b16 %v8125, %v8125
        %v8142 = vpack.c.b16 %v8126, %v8126
        %v8143 = vpack.c.b16 %v8127, %v8127
        %v8144 = vpack.c.b16 %v8128, %v8128
        %vm8161 = vcmask 257024
        %8162 = vst.msk [vmem:[%s498] sm:$0xf] %vm8161, %v8129
        %8163 = vst.msk [vmem:[%s498 + $0x4] sm:$0xf] %vm8161, %v8130
        %8164 = vst.msk [vmem:[%s498 + $0x8] sm:$0xf] %vm8161, %v8131
        %8165 = vst.msk [vmem:[%s498 + $0xc] sm:$0xf] %vm8161, %v8132
        %8166 = vst.msk [vmem:[%s498 + $0x10] sm:$0xf] %vm8161, %v8133
        %8167 = vst.msk [vmem:[%s498 + $0x14] sm:$0xf] %vm8161, %v8134
        %8168 = vst.msk [vmem:[%s498 + $0x18] sm:$0xf] %vm8161, %v8135
        %8169 = vst.msk [vmem:[%s498 + $0x1c] sm:$0xf] %vm8161, %v8136
        %8170 = vst.msk [vmem:[%s498 + $0x20] sm:$0xf] %vm8161, %v8137
        %8171 = vst.msk [vmem:[%s498 + $0x24] sm:$0xf] %vm8161, %v8138
        %8172 = vst.msk [vmem:[%s498 + $0x28] sm:$0xf] %vm8161, %v8139
        %8173 = vst.msk [vmem:[%s498 + $0x2c] sm:$0xf] %vm8161, %v8140
        %8174 = vst.msk [vmem:[%s498 + $0x30] sm:$0xf] %vm8161, %v8141
        %8175 = vst.msk [vmem:[%s498 + $0x34] sm:$0xf] %vm8161, %v8142
        %8176 = vst.msk [vmem:[%s498 + $0x38] sm:$0xf] %vm8161, %v8143
        %8177 = vst.msk [vmem:[%s498 + $0x3c] sm:$0xf] %vm8161, %v8144
      $region56: #{tpu_custom_call.1} parent=51 // pred_fallthru
        _
      %p8178 = scmp.le.s32.totalorder %s502, 0
      // Predicated region
      $region57: #{tpu_custom_call.1} parent=51 // pred_check
        %p8179 = pneg %p8178
      $region58: #{tpu_custom_call.1} parent=51 // pred_check_branch
        %8181 = sbr.rel (%p8179) target = $region60
      $region59: #{tpu_custom_call.1} parent=51 // pred_region
        %vm8182 = vcmask 257024
        %8183 = vst.msk [vmem:[%s498] sm:$0xf] %vm8182, 0
        %8184 = vst.msk [vmem:[%s498 + $0x4] sm:$0xf] %vm8182, 0
        %8185 = vst.msk [vmem:[%s498 + $0x8] sm:$0xf] %vm8182, 0
        %8186 = vst.msk [vmem:[%s498 + $0xc] sm:$0xf] %vm8182, 0
        %8187 = vst.msk [vmem:[%s498 + $0x10] sm:$0xf] %vm8182, 0
        %8188 = vst.msk [vmem:[%s498 + $0x14] sm:$0xf] %vm8182, 0
        %8189 = vst.msk [vmem:[%s498 + $0x18] sm:$0xf] %vm8182, 0
        %8190 = vst.msk [vmem:[%s498 + $0x1c] sm:$0xf] %vm8182, 0
        %8191 = vst.msk [vmem:[%s498 + $0x20] sm:$0xf] %vm8182, 0
        %8192 = vst.msk [vmem:[%s498 + $0x24] sm:$0xf] %vm8182, 0
        %8193 = vst.msk [vmem:[%s498 + $0x28] sm:$0xf] %vm8182, 0
        %8194 = vst.msk [vmem:[%s498 + $0x2c] sm:$0xf] %vm8182, 0
        %8195 = vst.msk [vmem:[%s498 + $0x30] sm:$0xf] %vm8182, 0
        %8196 = vst.msk [vmem:[%s498 + $0x34] sm:$0xf] %vm8182, 0
        %8197 = vst.msk [vmem:[%s498 + $0x38] sm:$0xf] %vm8182, 0
        %8198 = vst.msk [vmem:[%s498 + $0x3c] sm:$0xf] %vm8182, 0
      $region60: #{tpu_custom_call.1} parent=51 // pred_fallthru
        _
      %p8199 = scmp.lt.s32.totalorder %s30, 1
      %s8200 = scalar_select %p8199, %s30, 1
      %p8201 = scmp.lt.s32.totalorder %s31, 5
      %s8202 = scalar_select %p8201, %s31, 5
      %s8203 = smul.addr %s8202, 16
      %s8204 = smul.addr %s8200, 96
      %s8205 = sadd.s32 %s8203, %s8204
      %s8206 = smul.addr %s8205, 4
      %s8207 = scalar_lea.vmem %s9, %s8206
      // Predicated region
      $region61: #{tpu_custom_call.1} parent=51 // pred_check
        %p8208 = pneg %p265
      $region62: #{tpu_custom_call.1} parent=51 // pred_check_branch
        %8210 = sbr.rel (%p8208) target = $region64
      $region63: #{tpu_custom_call.1} parent=51 // pred_region
        _
      $region64: #{tpu_custom_call.1} parent=51 // pred_fallthru
        _
    $region52: #{tpu_custom_call.1} parent=5 // pred_fallthru
      _
    %p8211 = scmp.le.s32.totalorder 2, %s21
    // Predicated region
    $region65: #{tpu_custom_call.1} parent=5 // pred_check
      %p8212 = pneg %p8211
    $region66: #{tpu_custom_call.1} parent=5 // pred_check_branch
      %8214 = sbr.rel (%p8212) target = $region68
    $region67: #{tpu_custom_call.1} parent=5 // pred_region
      %s8215 = ssub.s32 %s21, 2
      // Predicated region
      $region69: #{tpu_custom_call.1} parent=67 // pred_check
        %p8216 = pneg %p271
      $region70: #{tpu_custom_call.1} parent=67 // pred_check_branch
        %8218 = sbr.rel (%p8216) target = $region72
      $region71: #{tpu_custom_call.1} parent=67 // pred_region
        %p8219 = scmp.lt.s32.totalorder %s32, 1
        %s8220 = scalar_select %p8219, %s32, 1
        %p8221 = scmp.lt.s32.totalorder %s33, 5
        %s8222 = scalar_select %p8221, %s33, 5
        %s8223 = smul.addr %s8222, 16
        %s8224 = smul.addr %s8220, 96
        %s8225 = sadd.s32 %s8223, %s8224
        %s8226 = smul.addr %s8225, 4
        %s8227 = scalar_lea.vmem %s9, %s8226
      $region72: #{tpu_custom_call.1} parent=67 // pred_fallthru
        _
    $region68: #{tpu_custom_call.1} parent=5 // pred_fallthru
      _
  $region6: #{tpu_custom_call.1} parent=0 // loop_footer
    %s25 = sadd.s32 1, %s21
  $region7: #{tpu_custom_call.1} parent=0 // loop_footer_branch
    %20 = sbr.rel target = $region3
  $region8: #{tpu_custom_call.1} parent=0 // loop_exit
    _

</llo_original>
